<compile_context>
chip_gen: v6e
topology: v6e:2x2x1
jax: 0.10.0
libtpu: 0.0.40
codegen_flags: <defaults>
</compile_context>

<pallas_src>
import numpy as np
import jax
import jax.numpy as jnp
from jax import lax
from jax.experimental import pallas as pl
from jax.experimental.pallas import tpu as pltpu

N_POS = 17          # fixed by the module (positions has 17 rows)
LEAKY_SLOPE = 0.01  # torch.nn.LeakyReLU() default


# ----------------------------------------------------------------------------
# Kernel: full forward pass, single invocation, everything in VMEM.
# ----------------------------------------------------------------------------
def discriminator_kernel(x_ref, pos_ref, wux_ref, wup_ref, bu_ref,
                         wq_ref, bq_ref, wk_ref, bk_ref, wv_ref, bv_ref,
                         wd_ref, bd_ref, o_ref):
    B, N, in_dim = x_ref.shape
    h = pos_ref.shape[-1]
    scale = 1.0 / float(h) ** 0.5  # torch: dim ** 0.5 with dim = positions.shape[1]

    # Load all shared parameters once (hoisted out of the unrolled batch loop).
    pos = pos_ref[...]
    wux = wux_ref[...]                      # (in_dim, h): up_dim weight rows for x
    wq, bq = wq_ref[...], bq_ref[...]
    wk, bk = wk_ref[...], bk_ref[...]
    wv, bv = wv_ref[...], bv_ref[...]
    wd, bd = wd_ref[...], bd_ref[...]       # (1, h), (1, 1)

    # Batch-independent part of up_dim: positions @ W_p + b  (computed once).
    pos_proj = (jnp.dot(pos, wup_ref[...], preferred_element_type=jnp.float32)
                + bu_ref[...])              # (N, h)

    def leaky(u):
        return jnp.where(u >= 0, u, LEAKY_SLOPE * u)

    # B is tiny and static -> fully unrolled loop inside one grid step.
    for b in range(B):
        xb = x_ref[b]                       # (N, in_dim)

        # up_dim x-part: K = in_dim (=2) contraction on the VPU (broadcast FMAs).
        x_proj = xb[:, 0:1] * wux[0:1, :]
        for d in range(1, in_dim):
            x_proj = x_proj + xb[:, d:d + 1] * wux[d:d + 1, :]
        up = leaky(x_proj + pos_proj)       # (N, h)

        # Q / K / V projections (MXU, K = h).
        q = jnp.dot(up, wq, preferred_element_type=jnp.float32) + bq
        k = jnp.dot(up, wk, preferred_element_type=jnp.float32) + bk
        v = jnp.dot(up, wv, preferred_element_type=jnp.float32) + bv

        # Attention scores: contract the last dims of q and k (no explicit
        # transpose relayout needed).
        s = lax.dot_general(q, k, (((1,), (1,)), ((), ())),
                            preferred_element_type=jnp.float32) * scale  # (N, N)
        s = s - jnp.max(s, axis=-1, keepdims=True)
        p = jnp.exp(s)
        att = p / jnp.sum(p, axis=-1, keepdims=True)

        out1 = leaky(jnp.dot(att, v, preferred_element_type=jnp.float32))  # (N, h)

        # down_dim (h -> 1): VPU multiply + lane reduce instead of a width-1 matmul.
        logits = jnp.sum(out1 * wd, axis=-1, keepdims=True) + bd            # (N, 1)
        probs = 1.0 / (1.0 + jnp.exp(-logits))

        # Column store into the (N, B) output slab (pure 2-D store, no relayout).
        o_ref[:, b:b + 1] = probs.astype(o_ref.dtype)


# ----------------------------------------------------------------------------
# Wrapper
# ----------------------------------------------------------------------------
def discriminator_forward(params, x):
    (positions, w_up_x, w_up_p, b_up,
     w_q, b_q, w_k, b_k, w_v, b_v, w_d_row, b_d) = params
    B, N, in_dim = x.shape
    h = positions.shape[-1]

    args = (x, positions, w_up_x, w_up_p, b_up,
            w_q, b_q, w_k, b_k, w_v, b_v, w_d_row, b_d)

    flops = 2 * (N * h * h                 # positions projection (once)
                 + B * N * in_dim * h      # x part of up_dim
                 + 3 * B * N * h * h       # Q, K, V
                 + 2 * B * N * N * h       # scores + att @ v
                 + B * N * h)              # down_dim
    transcendentals = B * N * N + B * N    # softmax exps + sigmoids
    bytes_accessed = sum(int(np.prod(a.shape)) * a.dtype.itemsize for a in args) \
        + B * N * 4

    vmem_spec = pl.BlockSpec(memory_space=pltpu.MemorySpace.VMEM)
    out_nb = pl.pallas_call(
        discriminator_kernel,
        out_shape=jax.ShapeDtypeStruct((N, B), jnp.float32),
        in_specs=[vmem_spec] * len(args),
        out_specs=vmem_spec,
        cost_estimate=pl.CostEstimate(flops=flops,
                                      transcendentals=transcendentals,
                                      bytes_accessed=bytes_accessed),
    )(*args)
    return out_nb.T                        # (B, N)


# ----------------------------------------------------------------------------
# Deterministic parameter init mirroring the torch module's shapes.
# ----------------------------------------------------------------------------
def init_params(key, dim=2, h_dim=32):
    ks = jax.random.split(key, 11)

    def linear(kw, kb, fan_in, fan_out):
        bound = 1.0 / np.sqrt(fan_in)
        w = jax.random.uniform(kw, (fan_in, fan_out), jnp.float32, -bound, bound)
        b = jax.random.uniform(kb, (1, fan_out), jnp.float32, -bound, bound)
        return w, b

    positions = jax.random.normal(ks[0], (N_POS, h_dim), dtype=jnp.float32)
    w_up, b_up = linear(ks[1], ks[2], dim + h_dim, h_dim)
    w_q, b_q = linear(ks[3], ks[4], h_dim, h_dim)
    w_k, b_k = linear(ks[5], ks[6], h_dim, h_dim)
    w_v, b_v = linear(ks[7], ks[8], h_dim, h_dim)
    w_d, b_d = linear(ks[9], ks[10], h_dim, 1)

    # Split up_dim weight into x-part / positions-part (concat avoided in-kernel).
    w_up_x = w_up[:dim]                    # (dim, h)
    w_up_p = w_up[dim:]                    # (h, h)
    w_d_row = jnp.transpose(w_d)           # (1, h)
    b_d_sc = b_d.reshape(1, 1)             # (1, 1)

    return (positions, w_up_x, w_up_p, b_up,
            w_q, b_q, w_k, b_k, w_v, b_v, w_d_row, b_d_sc)


# ----------------------------------------------------------------------------
# Pure-JAX reference of the PyTorch forward.
# ----------------------------------------------------------------------------
def reference_forward(params, x):
    (positions, w_up_x, w_up_p, b_up,
     w_q, b_q, w_k, b_k, w_v, b_v, w_d_row, b_d) = params
    B = x.shape[0]
    h = positions.shape[-1]

    p = jnp.broadcast_to(positions[None], (B,) + positions.shape)
    w_up = jnp.concatenate([w_up_x, w_up_p], axis=0)
    up_x = jnp.concatenate([x, p], axis=-1)
    up_x = jax.nn.leaky_relu(up_x @ w_up + b_up)
    q = up_x @ w_q + b_q
    k = up_x @ w_k + b_k
    v = up_x @ w_v + b_v
    att = jax.nn.softmax(jnp.einsum('bqh,bkh->bqk', q, k) / h ** 0.5, axis=-1)
    out1 = jax.nn.leaky_relu(jnp.einsum('bqk,bkh->bqh', att, v))
    logits = jnp.einsum('bnh,h->bn', out1, w_d_row[0]) + b_d[0, 0]
    return jax.nn.sigmoid(logits)


if __name__ == "__main__":
    jax.config.update("jax_default_matmul_precision", "highest")

    B, in_dim, h_dim = 2, 2, 32
    key = jax.random.PRNGKey(0)
    k_params, k_x = jax.random.split(key)

    params = init_params(k_params, dim=in_dim, h_dim=h_dim)
    x = jax.random.normal(k_x, (B, N_POS, in_dim), dtype=jnp.float32)

    out = discriminator_forward(params, x)
    out = jax.block_until_ready(out)

    ref = reference_forward(params, x)

    assert out.shape == (B, N_POS)
    np.testing.assert_allclose(np.asarray(out), np.asarray(ref),
                               rtol=1e-5, atol=1e-5)

    print("KERNEL_OK")
</pallas_src>

<mosaic_0001>
module attributes {stable_mosaic.version = 11 : i64} {
  func.func @discriminator_kernel(%arg0: memref<2x17x2xf32, #tpu.memory_space<vmem>>, %arg1: memref<17x32xf32, #tpu.memory_space<vmem>>, %arg2: memref<2x32xf32, #tpu.memory_space<vmem>>, %arg3: memref<32x32xf32, #tpu.memory_space<vmem>>, %arg4: memref<1x32xf32, #tpu.memory_space<vmem>>, %arg5: memref<32x32xf32, #tpu.memory_space<vmem>>, %arg6: memref<1x32xf32, #tpu.memory_space<vmem>>, %arg7: memref<32x32xf32, #tpu.memory_space<vmem>>, %arg8: memref<1x32xf32, #tpu.memory_space<vmem>>, %arg9: memref<32x32xf32, #tpu.memory_space<vmem>>, %arg10: memref<1x32xf32, #tpu.memory_space<vmem>>, %arg11: memref<1x32xf32, #tpu.memory_space<vmem>>, %arg12: memref<1x1xf32, #tpu.memory_space<vmem>>, %arg13: memref<17x2xf32, #tpu.memory_space<vmem>>) attributes {dimension_semantics = [], scalar_prefetch = 0 : i64, scratch_operands = 0 : i64, tpu.core_type = #tpu.core_type<tc>} {
    %c0 = arith.constant 0 : index
    %c0_0 = arith.constant 0 : index
    %0 = vector.load %arg1[%c0, %c0_0] : memref<17x32xf32, #tpu.memory_space<vmem>>, vector<17x32xf32>
    %c0_1 = arith.constant 0 : index
    %c0_2 = arith.constant 0 : index
    %1 = vector.load %arg2[%c0_1, %c0_2] : memref<2x32xf32, #tpu.memory_space<vmem>>, vector<2x32xf32>
    %c0_3 = arith.constant 0 : index
    %c0_4 = arith.constant 0 : index
    %2 = vector.load %arg5[%c0_3, %c0_4] : memref<32x32xf32, #tpu.memory_space<vmem>>, vector<32x32xf32>
    %c0_5 = arith.constant 0 : index
    %c0_6 = arith.constant 0 : index
    %3 = vector.load %arg6[%c0_5, %c0_6] : memref<1x32xf32, #tpu.memory_space<vmem>>, vector<1x32xf32>
    %c0_7 = arith.constant 0 : index
    %c0_8 = arith.constant 0 : index
    %4 = vector.load %arg7[%c0_7, %c0_8] : memref<32x32xf32, #tpu.memory_space<vmem>>, vector<32x32xf32>
    %c0_9 = arith.constant 0 : index
    %c0_10 = arith.constant 0 : index
    %5 = vector.load %arg8[%c0_9, %c0_10] : memref<1x32xf32, #tpu.memory_space<vmem>>, vector<1x32xf32>
    %c0_11 = arith.constant 0 : index
    %c0_12 = arith.constant 0 : index
    %6 = vector.load %arg9[%c0_11, %c0_12] : memref<32x32xf32, #tpu.memory_space<vmem>>, vector<32x32xf32>
    %c0_13 = arith.constant 0 : index
    %c0_14 = arith.constant 0 : index
    %7 = vector.load %arg10[%c0_13, %c0_14] : memref<1x32xf32, #tpu.memory_space<vmem>>, vector<1x32xf32>
    %c0_15 = arith.constant 0 : index
    %c0_16 = arith.constant 0 : index
    %8 = vector.load %arg11[%c0_15, %c0_16] : memref<1x32xf32, #tpu.memory_space<vmem>>, vector<1x32xf32>
    %c0_17 = arith.constant 0 : index
    %c0_18 = arith.constant 0 : index
    %9 = vector.load %arg12[%c0_17, %c0_18] : memref<1x1xf32, #tpu.memory_space<vmem>>, vector<1x1xf32>
    %c0_19 = arith.constant 0 : index
    %c0_20 = arith.constant 0 : index
    %10 = vector.load %arg3[%c0_19, %c0_20] : memref<32x32xf32, #tpu.memory_space<vmem>>, vector<32x32xf32>
    %cst = arith.constant dense<0.000000e+00> : vector<17x32xf32>
    %11 = tpu.matmul %0, %10, %cst {dimension_numbers = #tpu.dot_dimension_numbers<[1], [0], [0], [1], [0, 0, 1, 1], [], []>, precision = #tpu.contract_precision<fp32>} : vector<17x32xf32>, vector<32x32xf32>, vector<17x32xf32> -> vector<17x32xf32>
    %c0_21 = arith.constant 0 : index
    %c0_22 = arith.constant 0 : index
    %12 = vector.load %arg4[%c0_21, %c0_22] : memref<1x32xf32, #tpu.memory_space<vmem>>, vector<1x32xf32>
    %13 = vector.broadcast %12 : vector<1x32xf32> to vector<17x32xf32>
    %14 = arith.addf %11, %13 : vector<17x32xf32>
    %c0_23 = arith.constant 0 : index
    %c0_24 = arith.constant 0 : index
    %c0_25 = arith.constant 0 : index
    %15 = vector.load %arg0[%c0_23, %c0_24, %c0_25] : memref<2x17x2xf32, #tpu.memory_space<vmem>>, vector<1x17x2xf32>
    %16 = vector.shape_cast %15 : vector<1x17x2xf32> to vector<17x2xf32>
    %17 = vector.extract_strided_slice %16 {offsets = [0, 0], sizes = [17, 1], strides = [1, 1]} : vector<17x2xf32> to vector<17x1xf32>
    %18 = vector.extract_strided_slice %1 {offsets = [0, 0], sizes = [1, 32], strides = [1, 1]} : vector<2x32xf32> to vector<1x32xf32>
    %19 = vector.broadcast %17 : vector<17x1xf32> to vector<17x32xf32>
    %20 = vector.broadcast %18 : vector<1x32xf32> to vector<17x32xf32>
    %21 = arith.mulf %19, %20 : vector<17x32xf32>
    %22 = vector.extract_strided_slice %16 {offsets = [0, 1], sizes = [17, 1], strides = [1, 1]} : vector<17x2xf32> to vector<17x1xf32>
    %23 = vector.extract_strided_slice %1 {offsets = [1, 0], sizes = [1, 32], strides = [1, 1]} : vector<2x32xf32> to vector<1x32xf32>
    %24 = vector.broadcast %22 : vector<17x1xf32> to vector<17x32xf32>
    %25 = vector.broadcast %23 : vector<1x32xf32> to vector<17x32xf32>
    %26 = arith.mulf %24, %25 : vector<17x32xf32>
    %27 = arith.addf %21, %26 : vector<17x32xf32>
    %28 = arith.addf %27, %14 : vector<17x32xf32>
    %cst_26 = arith.constant 0.000000e+00 : f32
    %29 = vector.broadcast %cst_26 : f32 to vector<17x32xf32>
    %30 = arith.cmpf oge, %28, %29 : vector<17x32xf32>
    %cst_27 = arith.constant 0.00999999977 : f32
    %31 = vector.broadcast %cst_27 : f32 to vector<17x32xf32>
    %32 = arith.mulf %31, %28 : vector<17x32xf32>
    %33 = arith.select %30, %28, %32 : vector<17x32xi1>, vector<17x32xf32>
    %cst_28 = arith.constant dense<0.000000e+00> : vector<17x32xf32>
    %34 = tpu.matmul %33, %2, %cst_28 {dimension_numbers = #tpu.dot_dimension_numbers<[1], [0], [0], [1], [0, 0, 1, 1], [], []>, precision = #tpu.contract_precision<fp32>} : vector<17x32xf32>, vector<32x32xf32>, vector<17x32xf32> -> vector<17x32xf32>
    %35 = vector.broadcast %3 : vector<1x32xf32> to vector<17x32xf32>
    %36 = arith.addf %34, %35 : vector<17x32xf32>
    %cst_29 = arith.constant dense<0.000000e+00> : vector<17x32xf32>
    %37 = tpu.matmul %33, %4, %cst_29 {dimension_numbers = #tpu.dot_dimension_numbers<[1], [0], [0], [1], [0, 0, 1, 1], [], []>, precision = #tpu.contract_precision<fp32>} : vector<17x32xf32>, vector<32x32xf32>, vector<17x32xf32> -> vector<17x32xf32>
    %38 = vector.broadcast %5 : vector<1x32xf32> to vector<17x32xf32>
    %39 = arith.addf %37, %38 : vector<17x32xf32>
    %cst_30 = arith.constant dense<0.000000e+00> : vector<17x32xf32>
    %40 = tpu.matmul %33, %6, %cst_30 {dimension_numbers = #tpu.dot_dimension_numbers<[1], [0], [0], [1], [0, 0, 1, 1], [], []>, precision = #tpu.contract_precision<fp32>} : vector<17x32xf32>, vector<32x32xf32>, vector<17x32xf32> -> vector<17x32xf32>
    %41 = vector.broadcast %7 : vector<1x32xf32> to vector<17x32xf32>
    %42 = arith.addf %40, %41 : vector<17x32xf32>
    %cst_31 = arith.constant dense<0.000000e+00> : vector<17x17xf32>
    %43 = tpu.matmul %36, %39, %cst_31 {dimension_numbers = #tpu.dot_dimension_numbers<[1], [1], [0], [0], [0, 0, 1, 0], [], []>, precision = #tpu.contract_precision<fp32>} : vector<17x32xf32>, vector<17x32xf32>, vector<17x17xf32> -> vector<17x17xf32>
    %cst_32 = arith.constant 0.176776692 : f32
    %44 = vector.broadcast %cst_32 : f32 to vector<17x17xf32>
    %45 = arith.mulf %43, %44 : vector<17x17xf32>
    %cst_33 = arith.constant dense<0xFF800000> : vector<17xf32>
    %46 = vector.multi_reduction <maximumf>, %45, %cst_33 [1] : vector<17x17xf32> to vector<17xf32>
    %47 = vector.shape_cast %46 : vector<17xf32> to vector<17x1xf32>
    %48 = vector.broadcast %47 : vector<17x1xf32> to vector<17x17xf32>
    %49 = arith.subf %45, %48 : vector<17x17xf32>
    %50 = math.exp %49 : vector<17x17xf32>
    %cst_34 = arith.constant dense<0.000000e+00> : vector<17xf32>
    %51 = vector.multi_reduction <add>, %50, %cst_34 [1] : vector<17x17xf32> to vector<17xf32>
    %52 = vector.shape_cast %51 : vector<17xf32> to vector<17x1xf32>
    %53 = vector.broadcast %52 : vector<17x1xf32> to vector<17x17xf32>
    %54 = arith.divf %50, %53 : vector<17x17xf32>
    %cst_35 = arith.constant dense<0.000000e+00> : vector<17x32xf32>
    %55 = tpu.matmul %54, %42, %cst_35 {dimension_numbers = #tpu.dot_dimension_numbers<[1], [0], [0], [1], [0, 0, 1, 1], [], []>, precision = #tpu.contract_precision<fp32>} : vector<17x17xf32>, vector<17x32xf32>, vector<17x32xf32> -> vector<17x32xf32>
    %cst_36 = arith.constant 0.000000e+00 : f32
    %56 = vector.broadcast %cst_36 : f32 to vector<17x32xf32>
    %57 = arith.cmpf oge, %55, %56 : vector<17x32xf32>
    %cst_37 = arith.constant 0.00999999977 : f32
    %58 = vector.broadcast %cst_37 : f32 to vector<17x32xf32>
    %59 = arith.mulf %58, %55 : vector<17x32xf32>
    %60 = arith.select %57, %55, %59 : vector<17x32xi1>, vector<17x32xf32>
    %61 = vector.broadcast %8 : vector<1x32xf32> to vector<17x32xf32>
    %62 = arith.mulf %60, %61 : vector<17x32xf32>
    %cst_38 = arith.constant dense<0.000000e+00> : vector<17xf32>
    %63 = vector.multi_reduction <add>, %62, %cst_38 [1] : vector<17x32xf32> to vector<17xf32>
    %64 = vector.shape_cast %63 : vector<17xf32> to vector<17x1xf32>
    %65 = vector.broadcast %9 : vector<1x1xf32> to vector<17x1xf32>
    %66 = arith.addf %64, %65 : vector<17x1xf32>
    %cst_39 = arith.constant 0.000000e+00 : f32
    %67 = vector.broadcast %cst_39 : f32 to vector<17x1xf32>
    %68 = arith.subf %67, %66 : vector<17x1xf32>
    %69 = math.exp %68 : vector<17x1xf32>
    %cst_40 = arith.constant 1.000000e+00 : f32
    %70 = vector.broadcast %cst_40 : f32 to vector<17x1xf32>
    %71 = arith.addf %70, %69 : vector<17x1xf32>
    %cst_41 = arith.constant 1.000000e+00 : f32
    %72 = vector.broadcast %cst_41 : f32 to vector<17x1xf32>
    %73 = arith.divf %72, %71 : vector<17x1xf32>
    %c0_42 = arith.constant 0 : index
    %c0_43 = arith.constant 0 : index
    %74 = vector.load %arg13[%c0_42, %c0_43] : memref<17x2xf32, #tpu.memory_space<vmem>>, vector<17x1xf32>
    tpu.vector_store %arg13[%c0_42, %c0_43], %73 {strides = array<i32>} : memref<17x2xf32, #tpu.memory_space<vmem>>, vector<17x1xf32>,
    %c1 = arith.constant 1 : index
    %c0_44 = arith.constant 0 : index
    %c0_45 = arith.constant 0 : index
    %75 = vector.load %arg0[%c1, %c0_44, %c0_45] : memref<2x17x2xf32, #tpu.memory_space<vmem>>, vector<1x17x2xf32>
    %76 = vector.shape_cast %75 : vector<1x17x2xf32> to vector<17x2xf32>
    %77 = vector.extract_strided_slice %76 {offsets = [0, 0], sizes = [17, 1], strides = [1, 1]} : vector<17x2xf32> to vector<17x1xf32>
    %78 = vector.extract_strided_slice %1 {offsets = [0, 0], sizes = [1, 32], strides = [1, 1]} : vector<2x32xf32> to vector<1x32xf32>
    %79 = vector.broadcast %77 : vector<17x1xf32> to vector<17x32xf32>
    %80 = vector.broadcast %78 : vector<1x32xf32> to vector<17x32xf32>
    %81 = arith.mulf %79, %80 : vector<17x32xf32>
    %82 = vector.extract_strided_slice %76 {offsets = [0, 1], sizes = [17, 1], strides = [1, 1]} : vector<17x2xf32> to vector<17x1xf32>
    %83 = vector.extract_strided_slice %1 {offsets = [1, 0], sizes = [1, 32], strides = [1, 1]} : vector<2x32xf32> to vector<1x32xf32>
    %84 = vector.broadcast %82 : vector<17x1xf32> to vector<17x32xf32>
    %85 = vector.broadcast %83 : vector<1x32xf32> to vector<17x32xf32>
    %86 = arith.mulf %84, %85 : vector<17x32xf32>
    %87 = arith.addf %81, %86 : vector<17x32xf32>
    %88 = arith.addf %87, %14 : vector<17x32xf32>
    %cst_46 = arith.constant 0.000000e+00 : f32
    %89 = vector.broadcast %cst_46 : f32 to vector<17x32xf32>
    %90 = arith.cmpf oge, %88, %89 : vector<17x32xf32>
    %cst_47 = arith.constant 0.00999999977 : f32
    %91 = vector.broadcast %cst_47 : f32 to vector<17x32xf32>
    %92 = arith.mulf %91, %88 : vector<17x32xf32>
    %93 = arith.select %90, %88, %92 : vector<17x32xi1>, vector<17x32xf32>
    %cst_48 = arith.constant dense<0.000000e+00> : vector<17x32xf32>
    %94 = tpu.matmul %93, %2, %cst_48 {dimension_numbers = #tpu.dot_dimension_numbers<[1], [0], [0], [1], [0, 0, 1, 1], [], []>, precision = #tpu.contract_precision<fp32>} : vector<17x32xf32>, vector<32x32xf32>, vector<17x32xf32> -> vector<17x32xf32>
    %95 = vector.broadcast %3 : vector<1x32xf32> to vector<17x32xf32>
    %96 = arith.addf %94, %95 : vector<17x32xf32>
    %cst_49 = arith.constant dense<0.000000e+00> : vector<17x32xf32>
    %97 = tpu.matmul %93, %4, %cst_49 {dimension_numbers = #tpu.dot_dimension_numbers<[1], [0], [0], [1], [0, 0, 1, 1], [], []>, precision = #tpu.contract_precision<fp32>} : vector<17x32xf32>, vector<32x32xf32>, vector<17x32xf32> -> vector<17x32xf32>
    %98 = vector.broadcast %5 : vector<1x32xf32> to vector<17x32xf32>
    %99 = arith.addf %97, %98 : vector<17x32xf32>
    %cst_50 = arith.constant dense<0.000000e+00> : vector<17x32xf32>
    %100 = tpu.matmul %93, %6, %cst_50 {dimension_numbers = #tpu.dot_dimension_numbers<[1], [0], [0], [1], [0, 0, 1, 1], [], []>, precision = #tpu.contract_precision<fp32>} : vector<17x32xf32>, vector<32x32xf32>, vector<17x32xf32> -> vector<17x32xf32>
    %101 = vector.broadcast %7 : vector<1x32xf32> to vector<17x32xf32>
    %102 = arith.addf %100, %101 : vector<17x32xf32>
    %cst_51 = arith.constant dense<0.000000e+00> : vector<17x17xf32>
    %103 = tpu.matmul %96, %99, %cst_51 {dimension_numbers = #tpu.dot_dimension_numbers<[1], [1], [0], [0], [0, 0, 1, 0], [], []>, precision = #tpu.contract_precision<fp32>} : vector<17x32xf32>, vector<17x32xf32>, vector<17x17xf32> -> vector<17x17xf32>
    %cst_52 = arith.constant 0.176776692 : f32
    %104 = vector.broadcast %cst_52 : f32 to vector<17x17xf32>
    %105 = arith.mulf %103, %104 : vector<17x17xf32>
    %cst_53 = arith.constant dense<0xFF800000> : vector<17xf32>
    %106 = vector.multi_reduction <maximumf>, %105, %cst_53 [1] : vector<17x17xf32> to vector<17xf32>
    %107 = vector.shape_cast %106 : vector<17xf32> to vector<17x1xf32>
    %108 = vector.broadcast %107 : vector<17x1xf32> to vector<17x17xf32>
    %109 = arith.subf %105, %108 : vector<17x17xf32>
    %110 = math.exp %109 : vector<17x17xf32>
    %cst_54 = arith.constant dense<0.000000e+00> : vector<17xf32>
    %111 = vector.multi_reduction <add>, %110, %cst_54 [1] : vector<17x17xf32> to vector<17xf32>
    %112 = vector.shape_cast %111 : vector<17xf32> to vector<17x1xf32>
    %113 = vector.broadcast %112 : vector<17x1xf32> to vector<17x17xf32>
    %114 = arith.divf %110, %113 : vector<17x17xf32>
    %cst_55 = arith.constant dense<0.000000e+00> : vector<17x32xf32>
    %115 = tpu.matmul %114, %102, %cst_55 {dimension_numbers = #tpu.dot_dimension_numbers<[1], [0], [0], [1], [0, 0, 1, 1], [], []>, precision = #tpu.contract_precision<fp32>} : vector<17x17xf32>, vector<17x32xf32>, vector<17x32xf32> -> vector<17x32xf32>
    %cst_56 = arith.constant 0.000000e+00 : f32
    %116 = vector.broadcast %cst_56 : f32 to vector<17x32xf32>
    %117 = arith.cmpf oge, %115, %116 : vector<17x32xf32>
    %cst_57 = arith.constant 0.00999999977 : f32
    %118 = vector.broadcast %cst_57 : f32 to vector<17x32xf32>
    %119 = arith.mulf %118, %115 : vector<17x32xf32>
    %120 = arith.select %117, %115, %119 : vector<17x32xi1>, vector<17x32xf32>
    %121 = vector.broadcast %8 : vector<1x32xf32> to vector<17x32xf32>
    %122 = arith.mulf %120, %121 : vector<17x32xf32>
    %cst_58 = arith.constant dense<0.000000e+00> : vector<17xf32>
    %123 = vector.multi_reduction <add>, %122, %cst_58 [1] : vector<17x32xf32> to vector<17xf32>
    %124 = vector.shape_cast %123 : vector<17xf32> to vector<17x1xf32>
    %125 = vector.broadcast %9 : vector<1x1xf32> to vector<17x1xf32>
    %126 = arith.addf %124, %125 : vector<17x1xf32>
    %cst_59 = arith.constant 0.000000e+00 : f32
    %127 = vector.broadcast %cst_59 : f32 to vector<17x1xf32>
    %128 = arith.subf %127, %126 : vector<17x1xf32>
    %129 = math.exp %128 : vector<17x1xf32>
    %cst_60 = arith.constant 1.000000e+00 : f32
    %130 = vector.broadcast %cst_60 : f32 to vector<17x1xf32>
    %131 = arith.addf %130, %129 : vector<17x1xf32>
    %cst_61 = arith.constant 1.000000e+00 : f32
    %132 = vector.broadcast %cst_61 : f32 to vector<17x1xf32>
    %133 = arith.divf %132, %131 : vector<17x1xf32>
    %c0_62 = arith.constant 0 : index
    %c1_63 = arith.constant 1 : index
    %134 = vector.load %arg13[%c0_62, %c1_63] : memref<17x2xf32, #tpu.memory_space<vmem>>, vector<17x1xf32>
    tpu.vector_store %arg13[%c0_62, %c1_63], %133 {strides = array<i32>} : memref<17x2xf32, #tpu.memory_space<vmem>>, vector<17x1xf32>,
    return
  }
}

</mosaic_0001>

<llo_original>
// kernel: tpu_custom_call.1
$region0: #{tpu_custom_call.1}
  #allocation0 [shape = 'u32[]', space=smem, size = 0x4, offset = 0x4, fixed_abs, tag = 'smem constant byte address 0x4 - core index']
  #allocation1 [shape = 'u32[144,128]{1,0:T(1,128)}', space=vmem, size = 0x12000, scoped, tag = 'internal scratch']
  #allocation2 [shape = 'f32[1,1]{1,0:T(1,128)S(1)}', space=vmem, size = 0x200, scoped, tag = 'scoped memory for tpu_custom_call.1']
  %s0 = inlined_call_operand.vmem [shape: f32[2,17,2], index: 0, kind: input, shape index: {}]
  %s1 = inlined_call_operand.hbm [shape: f32[17,32], index: 1, kind: input, shape index: {}]
  %s2 = inlined_call_operand.hbm [shape: f32[2,32], index: 2, kind: input, shape index: {}]
  %s3 = inlined_call_operand.vmem [shape: f32[32,32], index: 3, kind: input, shape index: {}]
  %s4 = inlined_call_operand.hbm [shape: f32[1,32], index: 4, kind: input, shape index: {}]
  %s5 = inlined_call_operand.hbm [shape: f32[32,32], index: 5, kind: input, shape index: {}]
  %s6 = inlined_call_operand.hbm [shape: f32[1,32], index: 6, kind: input, shape index: {}]
  %s7 = inlined_call_operand.vmem [shape: f32[32,32], index: 7, kind: input, shape index: {}]
  %s8 = inlined_call_operand.vmem [shape: f32[1,32], index: 8, kind: input, shape index: {}]
  %s9 = inlined_call_operand.hbm [shape: f32[32,32], index: 9, kind: input, shape index: {}]
  %s10 = inlined_call_operand.vmem [shape: f32[1,32], index: 10, kind: input, shape index: {}]
  %s11 = inlined_call_operand.vmem [shape: f32[1,32], index: 11, kind: input, shape index: {}]
  %s12 = inlined_call_operand.<no memory space> [shape: f32[1,1], index: 12, kind: input, shape index: {}]
  %s13 = inlined_call_operand.vmem [shape: f32[17,2], index: 13, kind: output, shape index: {}]
  %s14 = sld [smem:[#allocation0]]
  $region86: #{tpu_custom_call.1} parent=0
    _
  %s16 = ssub.s32 1, %s14
  %s17 = scalar_select 0, %s16, %s14
  %v18 = vstv %s12
  %19 = vst [vmem:[#allocation2] sm:$0x1] %v18
  $region1: #{tpu_custom_call.1} parent=0
    #allocation3 [shape = 'u8[12288]{0}', space=vmem, size = 0x3000, scoped, tag = 'input window, operand 1, single buffered']
    #allocation4 [shape = 's32[1]{0}', space=sflag, size = 0x4, scoped, tag = 'scoped memory for tpu_custom_call.1']
    #allocation5 [shape = 'u8[1024]{0}', space=vmem, size = 0x400, scoped, tag = 'input window, operand 2, single buffered']
    #allocation6 [shape = 's32[1]{0}', space=sflag, size = 0x4, scoped, tag = 'scoped memory for tpu_custom_call.1']
    #allocation7 [shape = 'u8[512]{0}', space=vmem, size = 0x400, scoped, tag = 'input window, operand 4, single buffered']
    #allocation8 [shape = 'u8[16384]{0}', space=vmem, size = 0x4000, scoped, tag = 'input window, operand 5, single buffered']
    #allocation9 [shape = 's32[1]{0}', space=sflag, size = 0x4, scoped, tag = 'scoped memory for tpu_custom_call.1']
    #allocation10 [shape = 'u8[512]{0}', space=vmem, size = 0x400, scoped, tag = 'input window, operand 6, single buffered']
    #allocation11 [shape = 'u8[16384]{0}', space=vmem, size = 0x4000, scoped, tag = 'input window, operand 9, single buffered']
    #allocation12 [shape = 's32[1]{0}', space=sflag, size = 0x4, scoped, tag = 'scoped memory for tpu_custom_call.1']
    %20 = vsyncpa [#allocation4], 0
    %21 = vsyncpa [#allocation6], 0
    %22 = vsyncpa [#allocation9], 0
    %23 = vsyncpa [#allocation12], 0
    // Predicated region
    $region2: #{tpu_custom_call.1} parent=1 // pred_check
      _
    $region3: #{tpu_custom_call.1} parent=1 // pred_check_branch
      %25 = sbr.rel (0) target = $region5
    $region4: #{tpu_custom_call.1} parent=1 // pred_region
      _
    $region5: #{tpu_custom_call.1} parent=1 // pred_fallthru
      _
    // Predicated region
    $region6: #{tpu_custom_call.1} parent=1 // pred_check
      _
    $region7: #{tpu_custom_call.1} parent=1 // pred_check_branch
      %27 = sbr.rel (0) target = $region9
    $region8: #{tpu_custom_call.1} parent=1 // pred_region
      %s29 = ssub.s32 384, 384
      %30 = vsyncadd [#allocation4], %s29
      %s31 = sshll.u32 [#allocation3], 4
      %s32 = int_to_ptr.vmem [resolvable:$true] %s31
      %37 = dma.hbm_to_vmem [thread:$0]  %s1, 384, %s32, [#allocation4], 128, 128, 8
    $region9: #{tpu_custom_call.1} parent=1 // pred_fallthru
      _
    // Predicated region
    $region10: #{tpu_custom_call.1} parent=1 // pred_check
      _
    $region11: #{tpu_custom_call.1} parent=1 // pred_check_branch
      %39 = sbr.rel (0) target = $region13
    $region12: #{tpu_custom_call.1} parent=1 // pred_region
      %s41 = ssub.s32 32, 32
      %42 = vsyncadd [#allocation6], %s41
      %s44 = sshll.u32 [#allocation5], 4
      %s45 = int_to_ptr.vmem [resolvable:$true] %s44
      %47 = dma.hbm_to_vmem [thread:$0]  %s2, 32, %s45, [#allocation6]
    $region13: #{tpu_custom_call.1} parent=1 // pred_fallthru
      _
    // Predicated region
    $region14: #{tpu_custom_call.1} parent=1 // pred_check
      _
    $region15: #{tpu_custom_call.1} parent=1 // pred_check_branch
      %49 = sbr.rel (0) target = $region17
    $region16: #{tpu_custom_call.1} parent=1 // pred_region
      _
    $region17: #{tpu_custom_call.1} parent=1 // pred_fallthru
      _
    // Predicated region
    $region18: #{tpu_custom_call.1} parent=1 // pred_check
      _
    $region19: #{tpu_custom_call.1} parent=1 // pred_check_branch
      %51 = sbr.rel (0) target = $region21
    $region20: #{tpu_custom_call.1} parent=1 // pred_region
      %s53 = ssub.s32 16, 16
      %54 = vsyncadd [#allocation6], %s53
      %s56 = sshll.u32 [#allocation7], 4
      %s57 = int_to_ptr.vmem [resolvable:$true] %s56
      %59 = dma.hbm_to_vmem [thread:$0]  %s4, 16, %s57, [#allocation6]
    $region21: #{tpu_custom_call.1} parent=1 // pred_fallthru
      _
    // Predicated region
    $region22: #{tpu_custom_call.1} parent=1 // pred_check
      _
    $region23: #{tpu_custom_call.1} parent=1 // pred_check_branch
      %61 = sbr.rel (0) target = $region25
    $region24: #{tpu_custom_call.1} parent=1 // pred_region
      %s63 = ssub.s32 512, 512
      %64 = vsyncadd [#allocation9], %s63
      %s65 = sshll.u32 [#allocation8], 4
      %s66 = int_to_ptr.vmem [resolvable:$true] %s65
      %71 = dma.hbm_to_vmem [thread:$0]  %s5, 512, %s66, [#allocation9], 128, 128, 8
    $region25: #{tpu_custom_call.1} parent=1 // pred_fallthru
      _
    // Predicated region
    $region26: #{tpu_custom_call.1} parent=1 // pred_check
      _
    $region27: #{tpu_custom_call.1} parent=1 // pred_check_branch
      %73 = sbr.rel (0) target = $region29
    $region28: #{tpu_custom_call.1} parent=1 // pred_region
      %s75 = ssub.s32 16, 16
      %76 = vsyncadd [#allocation9], %s75
      %s78 = sshll.u32 [#allocation10], 4
      %s79 = int_to_ptr.vmem [resolvable:$true] %s78
      %81 = dma.hbm_to_vmem [thread:$0]  %s6, 16, %s79, [#allocation9]
    $region29: #{tpu_custom_call.1} parent=1 // pred_fallthru
      _
    // Predicated region
    $region30: #{tpu_custom_call.1} parent=1 // pred_check
      _
    $region31: #{tpu_custom_call.1} parent=1 // pred_check_branch
      %83 = sbr.rel (0) target = $region33
    $region32: #{tpu_custom_call.1} parent=1 // pred_region
      _
    $region33: #{tpu_custom_call.1} parent=1 // pred_fallthru
      _
    // Predicated region
    $region34: #{tpu_custom_call.1} parent=1 // pred_check
      _
    $region35: #{tpu_custom_call.1} parent=1 // pred_check_branch
      %85 = sbr.rel (0) target = $region37
    $region36: #{tpu_custom_call.1} parent=1 // pred_region
      _
    $region37: #{tpu_custom_call.1} parent=1 // pred_fallthru
      _
    // Predicated region
    $region38: #{tpu_custom_call.1} parent=1 // pred_check
      _
    $region39: #{tpu_custom_call.1} parent=1 // pred_check_branch
      %87 = sbr.rel (0) target = $region41
    $region40: #{tpu_custom_call.1} parent=1 // pred_region
      %s89 = ssub.s32 512, 512
      %90 = vsyncadd [#allocation12], %s89
      %s91 = sshll.u32 [#allocation11], 4
      %s92 = int_to_ptr.vmem [resolvable:$true] %s91
      %97 = dma.hbm_to_vmem [thread:$0]  %s9, 512, %s92, [#allocation12], 128, 128, 8
    $region41: #{tpu_custom_call.1} parent=1 // pred_fallthru
      _
    // Predicated region
    $region42: #{tpu_custom_call.1} parent=1 // pred_check
      _
    $region43: #{tpu_custom_call.1} parent=1 // pred_check_branch
      %99 = sbr.rel (0) target = $region45
    $region44: #{tpu_custom_call.1} parent=1 // pred_region
      _
    $region45: #{tpu_custom_call.1} parent=1 // pred_fallthru
      _
    // Predicated region
    $region46: #{tpu_custom_call.1} parent=1 // pred_check
      _
    $region47: #{tpu_custom_call.1} parent=1 // pred_check_branch
      %101 = sbr.rel (0) target = $region49
    $region48: #{tpu_custom_call.1} parent=1 // pred_region
      _
    $region49: #{tpu_custom_call.1} parent=1 // pred_fallthru
      _
    // Predicated region
    $region50: #{tpu_custom_call.1} parent=1 // pred_check
      _
    $region51: #{tpu_custom_call.1} parent=1 // pred_check_branch
      %103 = sbr.rel (0) target = $region53
    $region52: #{tpu_custom_call.1} parent=1 // pred_region
      _
    $region53: #{tpu_custom_call.1} parent=1 // pred_fallthru
      _
    // Predicated region
    $region54: #{tpu_custom_call.1} parent=1 // pred_check
      _
    $region55: #{tpu_custom_call.1} parent=1 // pred_check_branch
      %105 = sbr.rel (0) target = $region57
    $region56: #{tpu_custom_call.1} parent=1 // pred_region
      %106 = dma.done [#allocation4], 384
    $region57: #{tpu_custom_call.1} parent=1 // pred_fallthru
      _
    // Predicated region
    $region58: #{tpu_custom_call.1} parent=1 // pred_check
      _
    $region59: #{tpu_custom_call.1} parent=1 // pred_check_branch
      %108 = sbr.rel (0) target = $region61
    $region60: #{tpu_custom_call.1} parent=1 // pred_region
      %109 = dma.done [#allocation6], 32
    $region61: #{tpu_custom_call.1} parent=1 // pred_fallthru
      _
    // Predicated region
    $region62: #{tpu_custom_call.1} parent=1 // pred_check
      _
    $region63: #{tpu_custom_call.1} parent=1 // pred_check_branch
      %111 = sbr.rel (0) target = $region65
    $region64: #{tpu_custom_call.1} parent=1 // pred_region
      %112 = dma.done [#allocation6], 16
    $region65: #{tpu_custom_call.1} parent=1 // pred_fallthru
      _
    // Predicated region
    $region66: #{tpu_custom_call.1} parent=1 // pred_check
      _
    $region67: #{tpu_custom_call.1} parent=1 // pred_check_branch
      %114 = sbr.rel (0) target = $region69
    $region68: #{tpu_custom_call.1} parent=1 // pred_region
      %115 = dma.done [#allocation9], 512
    $region69: #{tpu_custom_call.1} parent=1 // pred_fallthru
      _
    // Predicated region
    $region70: #{tpu_custom_call.1} parent=1 // pred_check
      _
    $region71: #{tpu_custom_call.1} parent=1 // pred_check_branch
      %117 = sbr.rel (0) target = $region73
    $region72: #{tpu_custom_call.1} parent=1 // pred_region
      %118 = dma.done [#allocation9], 16
    $region73: #{tpu_custom_call.1} parent=1 // pred_fallthru
      _
    // Predicated region
    $region74: #{tpu_custom_call.1} parent=1 // pred_check
      _
    $region75: #{tpu_custom_call.1} parent=1 // pred_check_branch
      %120 = sbr.rel (0) target = $region77
    $region76: #{tpu_custom_call.1} parent=1 // pred_region
      %121 = dma.done [#allocation12], 512
    $region77: #{tpu_custom_call.1} parent=1 // pred_fallthru
      _
    %v122 = vld [vmem:[#allocation3] sm:$0xff]
    %v123 = vld [vmem:[#allocation3 + $0x8] sm:$0xff]
    %v124 = vld [vmem:[#allocation3 + $0x10] sm:$0x1]
    %v125 = vld [vmem:[#allocation5] sm:$0x3]
    %v126 = vld [vmem:[#allocation8] sm:$0xff]
    %v127 = vld [vmem:[#allocation8 + $0x8] sm:$0xff]
    %v128 = vld [vmem:[#allocation8 + $0x10] sm:$0xff]
    %v129 = vld [vmem:[#allocation8 + $0x18] sm:$0xff]
    %v130 = vld [vmem:[#allocation10] sm:$0x1]
    %v131 = vld [vmem:[%s7] sm:$0xff]
    %v132 = vld [vmem:[%s7 + $0x8] sm:$0xff]
    %v133 = vld [vmem:[%s7 + $0x10] sm:$0xff]
    %v134 = vld [vmem:[%s7 + $0x18] sm:$0xff]
    %v135 = vld [vmem:[%s8] sm:$0x1]
    %v136 = vld [vmem:[#allocation11] sm:$0xff]
    %v137 = vld [vmem:[#allocation11 + $0x8] sm:$0xff]
    %v138 = vld [vmem:[#allocation11 + $0x10] sm:$0xff]
    %v139 = vld [vmem:[#allocation11 + $0x18] sm:$0xff]
    %v140 = vld [vmem:[%s10] sm:$0x1]
    %v141 = vld [vmem:[%s11] sm:$0x1]
    %v142 = vld [vmem:[#allocation2] sm:$0x1]
    %v143 = vld [vmem:[%s3] sm:$0xff]
    %v144 = vld [vmem:[%s3 + $0x8] sm:$0xff]
    %v145 = vld [vmem:[%s3 + $0x10] sm:$0xff]
    %v146 = vld [vmem:[%s3 + $0x18] sm:$0xff]
    %v147 = vld [vmem:[#allocation7] sm:$0x1]
    %v149 = vlaneseq
    %v150 = vshrl.u32 %v149, 7
    %v151 = vsub.s32 0, %v150
    %v152 = vrot.slane %v147, %v151
    %vm154 = vcmask 261120
    %v156 = vsel %vm154, %v122, 0
    %v159 = vsel %vm154, %v123, 0
    %v162 = vsel %vm154, %v124, 0
    %164 = vmatprep.subr.mxu0 0.0
    %165 = vmatpush1.msra.mxu0 0.0
    %166 = vmatprep.subr.mxu0 0.0
    %167 = vmatpush1.msra.mxu0 0.0
    %168 = vmatprep.subr.mxu0 0.0
    %169 = vmatpush1.msra.mxu0 0.0
    %170 = vmatprep.subr.mxu0 0.0
    %171 = vmatpush1.msra.mxu0 0.0
    %172 = vmatprep.subr.mxu0 0.0
    %173 = vmatpush1.msra.mxu0 0.0
    %174 = vmatprep.subr.mxu0 0.0
    %175 = vmatpush1.msra.mxu0 0.0
    %176 = vmatprep.subr.mxu0 0.0
    %177 = vmatpush1.msra.mxu0 0.0
    %178 = vmatprep.subr.mxu0 0.0
    %179 = vmatpush1.msra.mxu0 0.0
    %180 = vmatprep.subr.mxu0 0.0
    %181 = vmatpush1.msra.mxu0 0.0
    %182 = vmatprep.subr.mxu0 0.0
    %183 = vmatpush1.msra.mxu0 0.0
    %184 = vmatprep.subr.mxu0 0.0
    %185 = vmatpush1.msra.mxu0 0.0
    %186 = vmatprep.subr.mxu0 0.0
    %187 = vmatpush1.msra.mxu0 0.0
    %188 = vmatprep.subr.mxu0 0.0
    %v189 = vand.u32 %v146, 4294901760
    %190 = vmatpush1.msra.mxu0 %v189
    %191 = vmatprep.subr.mxu0 0.0
    %v192 = vand.u32 %v145, 4294901760
    %193 = vmatpush1.msra.mxu0 %v192
    %194 = vmatprep.subr.mxu0 0.0
    %v195 = vand.u32 %v144, 4294901760
    %196 = vmatpush1.msra.mxu0 %v195
    %197 = vmatprep.subr.mxu0 0.0
    %v198 = vand.u32 %v143, 4294901760
    %199 = vmatpush1.msra.mxu0 %v198
    %200 = vmatprep.subr.mxu0 0.0
    %201 = vmatpush2.msra.mxu0 0.0
    %202 = vmatprep.subr.mxu0 0.0
    %203 = vmatpush2.msra.mxu0 0.0
    %204 = vmatprep.subr.mxu0 0.0
    %205 = vmatpush2.msra.mxu0 0.0
    %206 = vmatprep.subr.mxu0 0.0
    %207 = vmatpush2.msra.mxu0 0.0
    %208 = vmatprep.subr.mxu0 0.0
    %209 = vmatpush2.msra.mxu0 0.0
    %210 = vmatprep.subr.mxu0 0.0
    %211 = vmatpush2.msra.mxu0 0.0
    %212 = vmatprep.subr.mxu0 0.0
    %213 = vmatpush2.msra.mxu0 0.0
    %214 = vmatprep.subr.mxu0 0.0
    %215 = vmatpush2.msra.mxu0 0.0
    %216 = vmatprep.subr.mxu0 0.0
    %217 = vmatpush2.msra.mxu0 0.0
    %218 = vmatprep.subr.mxu0 0.0
    %219 = vmatpush2.msra.mxu0 0.0
    %220 = vmatprep.subr.mxu0 0.0
    %221 = vmatpush2.msra.mxu0 0.0
    %222 = vmatprep.subr.mxu0 0.0
    %223 = vmatpush2.msra.mxu0 0.0
    %224 = vmatprep.subr.mxu0 0.0
    %225 = vmatpush2.msra.mxu0 0.0
    %226 = vmatprep.subr.mxu0 0.0
    %227 = vmatpush2.msra.mxu0 0.0
    %228 = vmatprep.subr.mxu0 0.0
    %229 = vmatpush2.msra.mxu0 0.0
    %230 = vmatprep.subr.mxu0 0.0
    %231 = vmatpush2.msra.mxu0 0.0
    %232 = vmatprep.mubr.f32.mxu0 0.0
    %v233 = vand.u32 %v156, 4294901760
    %v234 = vsub.f32 %v156, %v233
    %v235 = vand.u32 %v234, 4294901760
    %v236 = vsub.f32 %v234, %v235
    %v237 = vand.u32 %v236, 4294901760
    %238 = vmatmul.mubr.f32.gmra.mxu0 %v237
    %v239 = vpop.f32.mrf.mxu0
    %v240 = vadd.f32 %v152, %v239
    %v241 = vpop.f32.mrf.mxu0
    %242 = vmatprep.mubr.f32.mxu0 0.0
    %v243 = vand.u32 %v159, 4294901760
    %v244 = vsub.f32 %v159, %v243
    %v245 = vand.u32 %v244, 4294901760
    %v246 = vsub.f32 %v244, %v245
    %v247 = vand.u32 %v246, 4294901760
    %248 = vmatmul.mubr.f32.gmra.mxu0 %v247
    %v249 = vpop.f32.mrf.mxu0
    %v250 = vadd.f32 %v152, %v249
    %v251 = vpop.f32.mrf.mxu0
    %252 = vmatprep.mubr.f32.mxu0 0.0
    %v253 = vand.u32 %v162, 4294901760
    %v254 = vsub.f32 %v162, %v253
    %v255 = vand.u32 %v254, 4294901760
    %v256 = vsub.f32 %v254, %v255
    %v257 = vand.u32 %v256, 4294901760
    %258 = vmatmul.mubr.f32.gmra.mxu0 %v257
    %v259 = vpop.f32.mrf.mxu0
    %v260 = vadd.f32 %v152, %v259
    %v261 = vpop.f32.mrf.mxu0
    %262 = vdwg.mxu0
    %263 = vmatprep.subr.mxu0 0.0
    %264 = vmatpush1.msra.mxu0 0.0
    %265 = vmatprep.subr.mxu0 0.0
    %266 = vmatpush1.msra.mxu0 0.0
    %267 = vmatprep.subr.mxu0 0.0
    %268 = vmatpush1.msra.mxu0 0.0
    %269 = vmatprep.subr.mxu0 0.0
    %270 = vmatpush1.msra.mxu0 0.0
    %271 = vmatprep.subr.mxu0 0.0
    %272 = vmatpush1.msra.mxu0 0.0
    %273 = vmatprep.subr.mxu0 0.0
    %274 = vmatpush1.msra.mxu0 0.0
    %275 = vmatprep.subr.mxu0 0.0
    %276 = vmatpush1.msra.mxu0 0.0
    %277 = vmatprep.subr.mxu0 0.0
    %278 = vmatpush1.msra.mxu0 0.0
    %279 = vmatprep.subr.mxu0 0.0
    %280 = vmatpush1.msra.mxu0 0.0
    %281 = vmatprep.subr.mxu0 0.0
    %282 = vmatpush1.msra.mxu0 0.0
    %283 = vmatprep.subr.mxu0 0.0
    %284 = vmatpush1.msra.mxu0 0.0
    %285 = vmatprep.subr.mxu0 0.0
    %286 = vmatpush1.msra.mxu0 0.0
    %287 = vmatprep.subr.mxu0 0.0
    %v288 = vand.u32 %v146, 4294901760
    %v289 = vsub.f32 %v146, %v288
    %v290 = vand.u32 %v289, 4294901760
    %v291 = vsub.f32 %v289, %v290
    %v292 = vand.u32 %v291, 4294901760
    %293 = vmatpush1.msra.mxu0 %v292
    %294 = vmatprep.subr.mxu0 0.0
    %v295 = vand.u32 %v145, 4294901760
    %v296 = vsub.f32 %v145, %v295
    %v297 = vand.u32 %v296, 4294901760
    %v298 = vsub.f32 %v296, %v297
    %v299 = vand.u32 %v298, 4294901760
    %300 = vmatpush1.msra.mxu0 %v299
    %301 = vmatprep.subr.mxu0 0.0
    %v302 = vand.u32 %v144, 4294901760
    %v303 = vsub.f32 %v144, %v302
    %v304 = vand.u32 %v303, 4294901760
    %v305 = vsub.f32 %v303, %v304
    %v306 = vand.u32 %v305, 4294901760
    %307 = vmatpush1.msra.mxu0 %v306
    %308 = vmatprep.subr.mxu0 0.0
    %v309 = vand.u32 %v143, 4294901760
    %v310 = vsub.f32 %v143, %v309
    %v311 = vand.u32 %v310, 4294901760
    %v312 = vsub.f32 %v310, %v311
    %v313 = vand.u32 %v312, 4294901760
    %314 = vmatpush1.msra.mxu0 %v313
    %315 = vmatprep.subr.mxu0 0.0
    %316 = vmatpush2.msra.mxu0 0.0
    %317 = vmatprep.subr.mxu0 0.0
    %318 = vmatpush2.msra.mxu0 0.0
    %319 = vmatprep.subr.mxu0 0.0
    %320 = vmatpush2.msra.mxu0 0.0
    %321 = vmatprep.subr.mxu0 0.0
    %322 = vmatpush2.msra.mxu0 0.0
    %323 = vmatprep.subr.mxu0 0.0
    %324 = vmatpush2.msra.mxu0 0.0
    %325 = vmatprep.subr.mxu0 0.0
    %326 = vmatpush2.msra.mxu0 0.0
    %327 = vmatprep.subr.mxu0 0.0
    %328 = vmatpush2.msra.mxu0 0.0
    %329 = vmatprep.subr.mxu0 0.0
    %330 = vmatpush2.msra.mxu0 0.0
    %331 = vmatprep.subr.mxu0 0.0
    %332 = vmatpush2.msra.mxu0 0.0
    %333 = vmatprep.subr.mxu0 0.0
    %334 = vmatpush2.msra.mxu0 0.0
    %335 = vmatprep.subr.mxu0 0.0
    %336 = vmatpush2.msra.mxu0 0.0
    %337 = vmatprep.subr.mxu0 0.0
    %338 = vmatpush2.msra.mxu0 0.0
    %339 = vmatprep.subr.mxu0 0.0
    %340 = vmatpush2.msra.mxu0 0.0
    %341 = vmatprep.subr.mxu0 0.0
    %342 = vmatpush2.msra.mxu0 0.0
    %343 = vmatprep.subr.mxu0 0.0
    %344 = vmatpush2.msra.mxu0 0.0
    %345 = vmatprep.subr.mxu0 0.0
    %346 = vmatpush2.msra.mxu0 0.0
    %347 = vmatprep.mubr.f32.mxu0 0.0
    %v348 = vand.u32 %v156, 4294901760
    %349 = vmatmul.mubr.f32.gmra.mxu0 %v348
    %v350 = vpop.f32.mrf.mxu0
    %v351 = vadd.f32 %v240, %v350
    %v352 = vpop.f32.mrf.mxu0
    %353 = vmatprep.mubr.f32.mxu0 0.0
    %v354 = vand.u32 %v159, 4294901760
    %355 = vmatmul.mubr.f32.gmra.mxu0 %v354
    %v356 = vpop.f32.mrf.mxu0
    %v357 = vadd.f32 %v250, %v356
    %v358 = vpop.f32.mrf.mxu0
    %359 = vmatprep.mubr.f32.mxu0 0.0
    %v360 = vand.u32 %v162, 4294901760
    %361 = vmatmul.mubr.f32.gmra.mxu0 %v360
    %v362 = vpop.f32.mrf.mxu0
    %v363 = vadd.f32 %v260, %v362
    %v364 = vpop.f32.mrf.mxu0
    %365 = vdwg.mxu0
    %366 = vmatprep.subr.mxu0 0.0
    %367 = vmatpush1.msra.mxu0 0.0
    %368 = vmatprep.subr.mxu0 0.0
    %369 = vmatpush1.msra.mxu0 0.0
    %370 = vmatprep.subr.mxu0 0.0
    %371 = vmatpush1.msra.mxu0 0.0
    %372 = vmatprep.subr.mxu0 0.0
    %373 = vmatpush1.msra.mxu0 0.0
    %374 = vmatprep.subr.mxu0 0.0
    %375 = vmatpush1.msra.mxu0 0.0
    %376 = vmatprep.subr.mxu0 0.0
    %377 = vmatpush1.msra.mxu0 0.0
    %378 = vmatprep.subr.mxu0 0.0
    %379 = vmatpush1.msra.mxu0 0.0
    %380 = vmatprep.subr.mxu0 0.0
    %381 = vmatpush1.msra.mxu0 0.0
    %382 = vmatprep.subr.mxu0 0.0
    %383 = vmatpush1.msra.mxu0 0.0
    %384 = vmatprep.subr.mxu0 0.0
    %385 = vmatpush1.msra.mxu0 0.0
    %386 = vmatprep.subr.mxu0 0.0
    %387 = vmatpush1.msra.mxu0 0.0
    %388 = vmatprep.subr.mxu0 0.0
    %389 = vmatpush1.msra.mxu0 0.0
    %390 = vmatprep.subr.mxu0 0.0
    %v391 = vand.u32 %v146, 4294901760
    %v392 = vsub.f32 %v146, %v391
    %393 = vmatpush1.msra.mxu0 %v392
    %394 = vmatprep.subr.mxu0 0.0
    %v395 = vand.u32 %v145, 4294901760
    %v396 = vsub.f32 %v145, %v395
    %397 = vmatpush1.msra.mxu0 %v396
    %398 = vmatprep.subr.mxu0 0.0
    %v399 = vand.u32 %v144, 4294901760
    %v400 = vsub.f32 %v144, %v399
    %401 = vmatpush1.msra.mxu0 %v400
    %402 = vmatprep.subr.mxu0 0.0
    %v403 = vand.u32 %v143, 4294901760
    %v404 = vsub.f32 %v143, %v403
    %405 = vmatpush1.msra.mxu0 %v404
    %406 = vmatprep.subr.mxu0 0.0
    %407 = vmatpush2.msra.mxu0 0.0
    %408 = vmatprep.subr.mxu0 0.0
    %409 = vmatpush2.msra.mxu0 0.0
    %410 = vmatprep.subr.mxu0 0.0
    %411 = vmatpush2.msra.mxu0 0.0
    %412 = vmatprep.subr.mxu0 0.0
    %413 = vmatpush2.msra.mxu0 0.0
    %414 = vmatprep.subr.mxu0 0.0
    %415 = vmatpush2.msra.mxu0 0.0
    %416 = vmatprep.subr.mxu0 0.0
    %417 = vmatpush2.msra.mxu0 0.0
    %418 = vmatprep.subr.mxu0 0.0
    %419 = vmatpush2.msra.mxu0 0.0
    %420 = vmatprep.subr.mxu0 0.0
    %421 = vmatpush2.msra.mxu0 0.0
    %422 = vmatprep.subr.mxu0 0.0
    %423 = vmatpush2.msra.mxu0 0.0
    %424 = vmatprep.subr.mxu0 0.0
    %425 = vmatpush2.msra.mxu0 0.0
    %426 = vmatprep.subr.mxu0 0.0
    %427 = vmatpush2.msra.mxu0 0.0
    %428 = vmatprep.subr.mxu0 0.0
    %429 = vmatpush2.msra.mxu0 0.0
    %430 = vmatprep.subr.mxu0 0.0
    %431 = vmatpush2.msra.mxu0 0.0
    %432 = vmatprep.subr.mxu0 0.0
    %433 = vmatpush2.msra.mxu0 0.0
    %434 = vmatprep.subr.mxu0 0.0
    %435 = vmatpush2.msra.mxu0 0.0
    %436 = vmatprep.subr.mxu0 0.0
    %437 = vmatpush2.msra.mxu0 0.0
    %438 = vmatprep.mubr.f32.mxu0 0.0
    %v439 = vand.u32 %v156, 4294901760
    %v440 = vsub.f32 %v156, %v439
    %441 = vmatmul.mubr.f32.gmra.mxu0 %v440
    %v442 = vpop.f32.mrf.mxu0
    %v443 = vadd.f32 %v351, %v442
    %v444 = vpop.f32.mrf.mxu0
    %445 = vmatprep.mubr.f32.mxu0 0.0
    %v446 = vand.u32 %v159, 4294901760
    %v447 = vsub.f32 %v159, %v446
    %448 = vmatmul.mubr.f32.gmra.mxu0 %v447
    %v449 = vpop.f32.mrf.mxu0
    %v450 = vadd.f32 %v357, %v449
    %v451 = vpop.f32.mrf.mxu0
    %452 = vmatprep.mubr.f32.mxu0 0.0
    %v453 = vand.u32 %v162, 4294901760
    %v454 = vsub.f32 %v162, %v453
    %455 = vmatmul.mubr.f32.gmra.mxu0 %v454
    %v456 = vpop.f32.mrf.mxu0
    %v457 = vadd.f32 %v363, %v456
    %v458 = vpop.f32.mrf.mxu0
    %459 = vdwg.mxu0
    %460 = vmatprep.subr.mxu0 0.0
    %461 = vmatpush1.msra.mxu0 0.0
    %462 = vmatprep.subr.mxu0 0.0
    %463 = vmatpush1.msra.mxu0 0.0
    %464 = vmatprep.subr.mxu0 0.0
    %465 = vmatpush1.msra.mxu0 0.0
    %466 = vmatprep.subr.mxu0 0.0
    %467 = vmatpush1.msra.mxu0 0.0
    %468 = vmatprep.subr.mxu0 0.0
    %469 = vmatpush1.msra.mxu0 0.0
    %470 = vmatprep.subr.mxu0 0.0
    %471 = vmatpush1.msra.mxu0 0.0
    %472 = vmatprep.subr.mxu0 0.0
    %473 = vmatpush1.msra.mxu0 0.0
    %474 = vmatprep.subr.mxu0 0.0
    %475 = vmatpush1.msra.mxu0 0.0
    %476 = vmatprep.subr.mxu0 0.0
    %477 = vmatpush1.msra.mxu0 0.0
    %478 = vmatprep.subr.mxu0 0.0
    %479 = vmatpush1.msra.mxu0 0.0
    %480 = vmatprep.subr.mxu0 0.0
    %481 = vmatpush1.msra.mxu0 0.0
    %482 = vmatprep.subr.mxu0 0.0
    %483 = vmatpush1.msra.mxu0 0.0
    %484 = vmatprep.subr.mxu0 0.0
    %v485 = vand.u32 %v146, 4294901760
    %486 = vmatpush1.msra.mxu0 %v485
    %487 = vmatprep.subr.mxu0 0.0
    %v488 = vand.u32 %v145, 4294901760
    %489 = vmatpush1.msra.mxu0 %v488
    %490 = vmatprep.subr.mxu0 0.0
    %v491 = vand.u32 %v144, 4294901760
    %492 = vmatpush1.msra.mxu0 %v491
    %493 = vmatprep.subr.mxu0 0.0
    %v494 = vand.u32 %v143, 4294901760
    %495 = vmatpush1.msra.mxu0 %v494
    %496 = vmatprep.subr.mxu0 0.0
    %497 = vmatpush2.msra.mxu0 0.0
    %498 = vmatprep.subr.mxu0 0.0
    %499 = vmatpush2.msra.mxu0 0.0
    %500 = vmatprep.subr.mxu0 0.0
    %501 = vmatpush2.msra.mxu0 0.0
    %502 = vmatprep.subr.mxu0 0.0
    %503 = vmatpush2.msra.mxu0 0.0
    %504 = vmatprep.subr.mxu0 0.0
    %505 = vmatpush2.msra.mxu0 0.0
    %506 = vmatprep.subr.mxu0 0.0
    %507 = vmatpush2.msra.mxu0 0.0
    %508 = vmatprep.subr.mxu0 0.0
    %509 = vmatpush2.msra.mxu0 0.0
    %510 = vmatprep.subr.mxu0 0.0
    %511 = vmatpush2.msra.mxu0 0.0
    %512 = vmatprep.subr.mxu0 0.0
    %513 = vmatpush2.msra.mxu0 0.0
    %514 = vmatprep.subr.mxu0 0.0
    %515 = vmatpush2.msra.mxu0 0.0
    %516 = vmatprep.subr.mxu0 0.0
    %517 = vmatpush2.msra.mxu0 0.0
    %518 = vmatprep.subr.mxu0 0.0
    %519 = vmatpush2.msra.mxu0 0.0
    %520 = vmatprep.subr.mxu0 0.0
    %521 = vmatpush2.msra.mxu0 0.0
    %522 = vmatprep.subr.mxu0 0.0
    %523 = vmatpush2.msra.mxu0 0.0
    %524 = vmatprep.subr.mxu0 0.0
    %525 = vmatpush2.msra.mxu0 0.0
    %526 = vmatprep.subr.mxu0 0.0
    %527 = vmatpush2.msra.mxu0 0.0
    %528 = vmatprep.mubr.f32.mxu0 0.0
    %v529 = vand.u32 %v156, 4294901760
    %v530 = vsub.f32 %v156, %v529
    %v531 = vand.u32 %v530, 4294901760
    %532 = vmatmul.mubr.f32.gmra.mxu0 %v531
    %v533 = vpop.f32.mrf.mxu0
    %v534 = vadd.f32 %v443, %v533
    %v535 = vpop.f32.mrf.mxu0
    %536 = vmatprep.mubr.f32.mxu0 0.0
    %v537 = vand.u32 %v159, 4294901760
    %v538 = vsub.f32 %v159, %v537
    %v539 = vand.u32 %v538, 4294901760
    %540 = vmatmul.mubr.f32.gmra.mxu0 %v539
    %v541 = vpop.f32.mrf.mxu0
    %v542 = vadd.f32 %v450, %v541
    %v543 = vpop.f32.mrf.mxu0
    %544 = vmatprep.mubr.f32.mxu0 0.0
    %v545 = vand.u32 %v162, 4294901760
    %v546 = vsub.f32 %v162, %v545
    %v547 = vand.u32 %v546, 4294901760
    %548 = vmatmul.mubr.f32.gmra.mxu0 %v547
    %v549 = vpop.f32.mrf.mxu0
    %v550 = vadd.f32 %v457, %v549
    %v551 = vpop.f32.mrf.mxu0
    %552 = vdwg.mxu0
    %553 = vmatprep.subr.mxu0 0.0
    %554 = vmatpush1.msra.mxu0 0.0
    %555 = vmatprep.subr.mxu0 0.0
    %556 = vmatpush1.msra.mxu0 0.0
    %557 = vmatprep.subr.mxu0 0.0
    %558 = vmatpush1.msra.mxu0 0.0
    %559 = vmatprep.subr.mxu0 0.0
    %560 = vmatpush1.msra.mxu0 0.0
    %561 = vmatprep.subr.mxu0 0.0
    %562 = vmatpush1.msra.mxu0 0.0
    %563 = vmatprep.subr.mxu0 0.0
    %564 = vmatpush1.msra.mxu0 0.0
    %565 = vmatprep.subr.mxu0 0.0
    %566 = vmatpush1.msra.mxu0 0.0
    %567 = vmatprep.subr.mxu0 0.0
    %568 = vmatpush1.msra.mxu0 0.0
    %569 = vmatprep.subr.mxu0 0.0
    %570 = vmatpush1.msra.mxu0 0.0
    %571 = vmatprep.subr.mxu0 0.0
    %572 = vmatpush1.msra.mxu0 0.0
    %573 = vmatprep.subr.mxu0 0.0
    %574 = vmatpush1.msra.mxu0 0.0
    %575 = vmatprep.subr.mxu0 0.0
    %576 = vmatpush1.msra.mxu0 0.0
    %577 = vmatprep.subr.mxu0 0.0
    %v578 = vand.u32 %v146, 4294901760
    %v579 = vsub.f32 %v146, %v578
    %v580 = vand.u32 %v579, 4294901760
    %581 = vmatpush1.msra.mxu0 %v580
    %582 = vmatprep.subr.mxu0 0.0
    %v583 = vand.u32 %v145, 4294901760
    %v584 = vsub.f32 %v145, %v583
    %v585 = vand.u32 %v584, 4294901760
    %586 = vmatpush1.msra.mxu0 %v585
    %587 = vmatprep.subr.mxu0 0.0
    %v588 = vand.u32 %v144, 4294901760
    %v589 = vsub.f32 %v144, %v588
    %v590 = vand.u32 %v589, 4294901760
    %591 = vmatpush1.msra.mxu0 %v590
    %592 = vmatprep.subr.mxu0 0.0
    %v593 = vand.u32 %v143, 4294901760
    %v594 = vsub.f32 %v143, %v593
    %v595 = vand.u32 %v594, 4294901760
    %596 = vmatpush1.msra.mxu0 %v595
    %597 = vmatprep.subr.mxu0 0.0
    %598 = vmatpush2.msra.mxu0 0.0
    %599 = vmatprep.subr.mxu0 0.0
    %600 = vmatpush2.msra.mxu0 0.0
    %601 = vmatprep.subr.mxu0 0.0
    %602 = vmatpush2.msra.mxu0 0.0
    %603 = vmatprep.subr.mxu0 0.0
    %604 = vmatpush2.msra.mxu0 0.0
    %605 = vmatprep.subr.mxu0 0.0
    %606 = vmatpush2.msra.mxu0 0.0
    %607 = vmatprep.subr.mxu0 0.0
    %608 = vmatpush2.msra.mxu0 0.0
    %609 = vmatprep.subr.mxu0 0.0
    %610 = vmatpush2.msra.mxu0 0.0
    %611 = vmatprep.subr.mxu0 0.0
    %612 = vmatpush2.msra.mxu0 0.0
    %613 = vmatprep.subr.mxu0 0.0
    %614 = vmatpush2.msra.mxu0 0.0
    %615 = vmatprep.subr.mxu0 0.0
    %616 = vmatpush2.msra.mxu0 0.0
    %617 = vmatprep.subr.mxu0 0.0
    %618 = vmatpush2.msra.mxu0 0.0
    %619 = vmatprep.subr.mxu0 0.0
    %620 = vmatpush2.msra.mxu0 0.0
    %621 = vmatprep.subr.mxu0 0.0
    %622 = vmatpush2.msra.mxu0 0.0
    %623 = vmatprep.subr.mxu0 0.0
    %624 = vmatpush2.msra.mxu0 0.0
    %625 = vmatprep.subr.mxu0 0.0
    %626 = vmatpush2.msra.mxu0 0.0
    %627 = vmatprep.subr.mxu0 0.0
    %628 = vmatpush2.msra.mxu0 0.0
    %629 = vmatprep.mubr.f32.mxu0 0.0
    %v630 = vand.u32 %v156, 4294901760
    %631 = vmatmul.mubr.f32.gmra.mxu0 %v630
    %v632 = vpop.f32.mrf.mxu0
    %v633 = vadd.f32 %v534, %v632
    %v634 = vpop.f32.mrf.mxu0
    %635 = vmatprep.mubr.f32.mxu0 0.0
    %v636 = vand.u32 %v159, 4294901760
    %637 = vmatmul.mubr.f32.gmra.mxu0 %v636
    %v638 = vpop.f32.mrf.mxu0
    %v639 = vadd.f32 %v542, %v638
    %v640 = vpop.f32.mrf.mxu0
    %641 = vmatprep.mubr.f32.mxu0 0.0
    %v642 = vand.u32 %v162, 4294901760
    %643 = vmatmul.mubr.f32.gmra.mxu0 %v642
    %v644 = vpop.f32.mrf.mxu0
    %v645 = vadd.f32 %v550, %v644
    %v646 = vpop.f32.mrf.mxu0
    %647 = vdwg.mxu0
    %648 = vmatprep.subr.mxu0 0.0
    %649 = vmatpush1.msra.mxu0 0.0
    %650 = vmatprep.subr.mxu0 0.0
    %651 = vmatpush1.msra.mxu0 0.0
    %652 = vmatprep.subr.mxu0 0.0
    %653 = vmatpush1.msra.mxu0 0.0
    %654 = vmatprep.subr.mxu0 0.0
    %655 = vmatpush1.msra.mxu0 0.0
    %656 = vmatprep.subr.mxu0 0.0
    %657 = vmatpush1.msra.mxu0 0.0
    %658 = vmatprep.subr.mxu0 0.0
    %659 = vmatpush1.msra.mxu0 0.0
    %660 = vmatprep.subr.mxu0 0.0
    %661 = vmatpush1.msra.mxu0 0.0
    %662 = vmatprep.subr.mxu0 0.0
    %663 = vmatpush1.msra.mxu0 0.0
    %664 = vmatprep.subr.mxu0 0.0
    %665 = vmatpush1.msra.mxu0 0.0
    %666 = vmatprep.subr.mxu0 0.0
    %667 = vmatpush1.msra.mxu0 0.0
    %668 = vmatprep.subr.mxu0 0.0
    %669 = vmatpush1.msra.mxu0 0.0
    %670 = vmatprep.subr.mxu0 0.0
    %671 = vmatpush1.msra.mxu0 0.0
    %672 = vmatprep.subr.mxu0 0.0
    %v673 = vand.u32 %v146, 4294901760
    %674 = vmatpush1.msra.mxu0 %v673
    %675 = vmatprep.subr.mxu0 0.0
    %v676 = vand.u32 %v145, 4294901760
    %677 = vmatpush1.msra.mxu0 %v676
    %678 = vmatprep.subr.mxu0 0.0
    %v679 = vand.u32 %v144, 4294901760
    %680 = vmatpush1.msra.mxu0 %v679
    %681 = vmatprep.subr.mxu0 0.0
    %v682 = vand.u32 %v143, 4294901760
    %683 = vmatpush1.msra.mxu0 %v682
    %684 = vmatprep.subr.mxu0 0.0
    %685 = vmatpush2.msra.mxu0 0.0
    %686 = vmatprep.subr.mxu0 0.0
    %687 = vmatpush2.msra.mxu0 0.0
    %688 = vmatprep.subr.mxu0 0.0
    %689 = vmatpush2.msra.mxu0 0.0
    %690 = vmatprep.subr.mxu0 0.0
    %691 = vmatpush2.msra.mxu0 0.0
    %692 = vmatprep.subr.mxu0 0.0
    %693 = vmatpush2.msra.mxu0 0.0
    %694 = vmatprep.subr.mxu0 0.0
    %695 = vmatpush2.msra.mxu0 0.0
    %696 = vmatprep.subr.mxu0 0.0
    %697 = vmatpush2.msra.mxu0 0.0
    %698 = vmatprep.subr.mxu0 0.0
    %699 = vmatpush2.msra.mxu0 0.0
    %700 = vmatprep.subr.mxu0 0.0
    %701 = vmatpush2.msra.mxu0 0.0
    %702 = vmatprep.subr.mxu0 0.0
    %703 = vmatpush2.msra.mxu0 0.0
    %704 = vmatprep.subr.mxu0 0.0
    %705 = vmatpush2.msra.mxu0 0.0
    %706 = vmatprep.subr.mxu0 0.0
    %707 = vmatpush2.msra.mxu0 0.0
    %708 = vmatprep.subr.mxu0 0.0
    %709 = vmatpush2.msra.mxu0 0.0
    %710 = vmatprep.subr.mxu0 0.0
    %711 = vmatpush2.msra.mxu0 0.0
    %712 = vmatprep.subr.mxu0 0.0
    %713 = vmatpush2.msra.mxu0 0.0
    %714 = vmatprep.subr.mxu0 0.0
    %715 = vmatpush2.msra.mxu0 0.0
    %716 = vmatprep.mubr.f32.mxu0 0.0
    %v717 = vand.u32 %v156, 4294901760
    %718 = vmatmul.mubr.f32.gmra.mxu0 %v717
    %v719 = vpop.f32.mrf.mxu0
    %v720 = vadd.f32 %v633, %v719
    %v721 = vpop.f32.mrf.mxu0
    %722 = vmatprep.mubr.f32.mxu0 0.0
    %v723 = vand.u32 %v159, 4294901760
    %724 = vmatmul.mubr.f32.gmra.mxu0 %v723
    %v725 = vpop.f32.mrf.mxu0
    %v726 = vadd.f32 %v639, %v725
    %v727 = vpop.f32.mrf.mxu0
    %728 = vmatprep.mubr.f32.mxu0 0.0
    %v729 = vand.u32 %v162, 4294901760
    %730 = vmatmul.mubr.f32.gmra.mxu0 %v729
    %v731 = vpop.f32.mrf.mxu0
    %v732 = vadd.f32 %v645, %v731
    %v733 = vpop.f32.mrf.mxu0
    %734 = vdwg.mxu0
    %v735 = vld [vmem:[%s0] sm:$0xff]
    %v736 = vld [vmem:[%s0 + $0x8] sm:$0xff]
    %v737 = vld [vmem:[%s0 + $0x10] sm:$0x1]
    %739 = vset.pattern.permute.xlu0 0
    %740 = vperm.xlu0 %739, %v735
    %v741 = vpop.permute.xlu0 %740
    %744 = vset.pattern.permute.xlu0 0
    %745 = vperm.xlu0 %744, %v736
    %v746 = vpop.permute.xlu0 %745
    %749 = vset.pattern.permute.xlu0 0
    %750 = vperm.xlu0 %749, %v737
    %v751 = vpop.permute.xlu0 %750
    %v753 = vlaneseq
    %v754 = vshrl.u32 %v753, 7
    %v755 = vsub.s32 0, %v754
    %v756 = vrot.slane %v125, %v755
    %v757 = vmul.f32 %v741, %v756
    %v758 = vmul.f32 %v746, %v756
    %v759 = vmul.f32 %v751, %v756
    %760 = vset.pattern.permute.xlu0 1
    %761 = vperm.xlu0 %760, %v735
    %v762 = vpop.permute.xlu0 %761
    %764 = vset.pattern.permute.xlu0 1
    %765 = vperm.xlu0 %764, %v736
    %v766 = vpop.permute.xlu0 %765
    %768 = vset.pattern.permute.xlu0 1
    %769 = vperm.xlu0 %768, %v737
    %v770 = vpop.permute.xlu0 %769
    %v772 = vlaneseq
    %v773 = vshrl.u32 %v772, 7
    %v774 = vsub.s32 1, %v773
    %v775 = vrot.slane %v125, %v774
    %v776 = vmul.f32 %v762, %v775
    %v777 = vmul.f32 %v766, %v775
    %v778 = vmul.f32 %v770, %v775
    %v779 = vadd.f32 %v757, %v776
    %v780 = vadd.f32 %v758, %v777
    %v781 = vadd.f32 %v759, %v778
    %v782 = vadd.f32 %v779, %v720
    %v783 = vadd.f32 %v780, %v726
    %v784 = vadd.f32 %v781, %v732
    %vm785 = vcmp.ge.f32.partialorder %v782, 0.0
    %vm786 = vcmp.ge.f32.partialorder %v783, 0.0
    %vm787 = vcmp.ge.f32.partialorder %v784, 0.0
    %v788 = vmul.f32 %v782, 0.01
    %v789 = vmul.f32 %v783, 0.01
    %v790 = vmul.f32 %v784, 0.01
    %v791 = vsel %vm785, %v782, %v788
    %v792 = vsel %vm786, %v783, %v789
    %v793 = vsel %vm787, %v784, %v790
    %v795 = vlaneseq
    %v796 = vshrl.u32 %v795, 7
    %v797 = vsub.s32 0, %v796
    %v798 = vrot.slane %v130, %v797
    %v801 = vsel %vm154, %v791, 0
    %v804 = vsel %vm154, %v792, 0
    %v807 = vsel %vm154, %v793, 0
    %809 = vmatprep.subr.mxu0 0.0
    %810 = vmatpush1.msra.mxu0 0.0
    %811 = vmatprep.subr.mxu0 0.0
    %812 = vmatpush1.msra.mxu0 0.0
    %813 = vmatprep.subr.mxu0 0.0
    %814 = vmatpush1.msra.mxu0 0.0
    %815 = vmatprep.subr.mxu0 0.0
    %816 = vmatpush1.msra.mxu0 0.0
    %817 = vmatprep.subr.mxu0 0.0
    %818 = vmatpush1.msra.mxu0 0.0
    %819 = vmatprep.subr.mxu0 0.0
    %820 = vmatpush1.msra.mxu0 0.0
    %821 = vmatprep.subr.mxu0 0.0
    %822 = vmatpush1.msra.mxu0 0.0
    %823 = vmatprep.subr.mxu0 0.0
    %824 = vmatpush1.msra.mxu0 0.0
    %825 = vmatprep.subr.mxu0 0.0
    %826 = vmatpush1.msra.mxu0 0.0
    %827 = vmatprep.subr.mxu0 0.0
    %828 = vmatpush1.msra.mxu0 0.0
    %829 = vmatprep.subr.mxu0 0.0
    %830 = vmatpush1.msra.mxu0 0.0
    %831 = vmatprep.subr.mxu0 0.0
    %832 = vmatpush1.msra.mxu0 0.0
    %833 = vmatprep.subr.mxu0 0.0
    %v834 = vand.u32 %v129, 4294901760
    %835 = vmatpush1.msra.mxu0 %v834
    %836 = vmatprep.subr.mxu0 0.0
    %v837 = vand.u32 %v128, 4294901760
    %838 = vmatpush1.msra.mxu0 %v837
    %839 = vmatprep.subr.mxu0 0.0
    %v840 = vand.u32 %v127, 4294901760
    %841 = vmatpush1.msra.mxu0 %v840
    %842 = vmatprep.subr.mxu0 0.0
    %v843 = vand.u32 %v126, 4294901760
    %844 = vmatpush1.msra.mxu0 %v843
    %845 = vmatprep.subr.mxu0 0.0
    %846 = vmatpush2.msra.mxu0 0.0
    %847 = vmatprep.subr.mxu0 0.0
    %848 = vmatpush2.msra.mxu0 0.0
    %849 = vmatprep.subr.mxu0 0.0
    %850 = vmatpush2.msra.mxu0 0.0
    %851 = vmatprep.subr.mxu0 0.0
    %852 = vmatpush2.msra.mxu0 0.0
    %853 = vmatprep.subr.mxu0 0.0
    %854 = vmatpush2.msra.mxu0 0.0
    %855 = vmatprep.subr.mxu0 0.0
    %856 = vmatpush2.msra.mxu0 0.0
    %857 = vmatprep.subr.mxu0 0.0
    %858 = vmatpush2.msra.mxu0 0.0
    %859 = vmatprep.subr.mxu0 0.0
    %860 = vmatpush2.msra.mxu0 0.0
    %861 = vmatprep.subr.mxu0 0.0
    %862 = vmatpush2.msra.mxu0 0.0
    %863 = vmatprep.subr.mxu0 0.0
    %864 = vmatpush2.msra.mxu0 0.0
    %865 = vmatprep.subr.mxu0 0.0
    %866 = vmatpush2.msra.mxu0 0.0
    %867 = vmatprep.subr.mxu0 0.0
    %868 = vmatpush2.msra.mxu0 0.0
    %869 = vmatprep.subr.mxu0 0.0
    %870 = vmatpush2.msra.mxu0 0.0
    %871 = vmatprep.subr.mxu0 0.0
    %872 = vmatpush2.msra.mxu0 0.0
    %873 = vmatprep.subr.mxu0 0.0
    %874 = vmatpush2.msra.mxu0 0.0
    %875 = vmatprep.subr.mxu0 0.0
    %876 = vmatpush2.msra.mxu0 0.0
    %877 = vmatprep.mubr.f32.mxu0 0.0
    %v878 = vand.u32 %v801, 4294901760
    %v879 = vsub.f32 %v801, %v878
    %v880 = vand.u32 %v879, 4294901760
    %v881 = vsub.f32 %v879, %v880
    %v882 = vand.u32 %v881, 4294901760
    %883 = vmatmul.mubr.f32.gmra.mxu0 %v882
    %v884 = vpop.f32.mrf.mxu0
    %v885 = vadd.f32 %v798, %v884
    %v886 = vpop.f32.mrf.mxu0
    %887 = vmatprep.mubr.f32.mxu0 0.0
    %v888 = vand.u32 %v804, 4294901760
    %v889 = vsub.f32 %v804, %v888
    %v890 = vand.u32 %v889, 4294901760
    %v891 = vsub.f32 %v889, %v890
    %v892 = vand.u32 %v891, 4294901760
    %893 = vmatmul.mubr.f32.gmra.mxu0 %v892
    %v894 = vpop.f32.mrf.mxu0
    %v895 = vadd.f32 %v798, %v894
    %v896 = vpop.f32.mrf.mxu0
    %897 = vmatprep.mubr.f32.mxu0 0.0
    %v898 = vand.u32 %v807, 4294901760
    %v899 = vsub.f32 %v807, %v898
    %v900 = vand.u32 %v899, 4294901760
    %v901 = vsub.f32 %v899, %v900
    %v902 = vand.u32 %v901, 4294901760
    %903 = vmatmul.mubr.f32.gmra.mxu0 %v902
    %v904 = vpop.f32.mrf.mxu0
    %v905 = vadd.f32 %v798, %v904
    %v906 = vpop.f32.mrf.mxu0
    %907 = vdwg.mxu0
    %908 = vmatprep.subr.mxu0 0.0
    %909 = vmatpush1.msra.mxu0 0.0
    %910 = vmatprep.subr.mxu0 0.0
    %911 = vmatpush1.msra.mxu0 0.0
    %912 = vmatprep.subr.mxu0 0.0
    %913 = vmatpush1.msra.mxu0 0.0
    %914 = vmatprep.subr.mxu0 0.0
    %915 = vmatpush1.msra.mxu0 0.0
    %916 = vmatprep.subr.mxu0 0.0
    %917 = vmatpush1.msra.mxu0 0.0
    %918 = vmatprep.subr.mxu0 0.0
    %919 = vmatpush1.msra.mxu0 0.0
    %920 = vmatprep.subr.mxu0 0.0
    %921 = vmatpush1.msra.mxu0 0.0
    %922 = vmatprep.subr.mxu0 0.0
    %923 = vmatpush1.msra.mxu0 0.0
    %924 = vmatprep.subr.mxu0 0.0
    %925 = vmatpush1.msra.mxu0 0.0
    %926 = vmatprep.subr.mxu0 0.0
    %927 = vmatpush1.msra.mxu0 0.0
    %928 = vmatprep.subr.mxu0 0.0
    %929 = vmatpush1.msra.mxu0 0.0
    %930 = vmatprep.subr.mxu0 0.0
    %931 = vmatpush1.msra.mxu0 0.0
    %932 = vmatprep.subr.mxu0 0.0
    %v933 = vand.u32 %v129, 4294901760
    %v934 = vsub.f32 %v129, %v933
    %v935 = vand.u32 %v934, 4294901760
    %v936 = vsub.f32 %v934, %v935
    %v937 = vand.u32 %v936, 4294901760
    %938 = vmatpush1.msra.mxu0 %v937
    %939 = vmatprep.subr.mxu0 0.0
    %v940 = vand.u32 %v128, 4294901760
    %v941 = vsub.f32 %v128, %v940
    %v942 = vand.u32 %v941, 4294901760
    %v943 = vsub.f32 %v941, %v942
    %v944 = vand.u32 %v943, 4294901760
    %945 = vmatpush1.msra.mxu0 %v944
    %946 = vmatprep.subr.mxu0 0.0
    %v947 = vand.u32 %v127, 4294901760
    %v948 = vsub.f32 %v127, %v947
    %v949 = vand.u32 %v948, 4294901760
    %v950 = vsub.f32 %v948, %v949
    %v951 = vand.u32 %v950, 4294901760
    %952 = vmatpush1.msra.mxu0 %v951
    %953 = vmatprep.subr.mxu0 0.0
    %v954 = vand.u32 %v126, 4294901760
    %v955 = vsub.f32 %v126, %v954
    %v956 = vand.u32 %v955, 4294901760
    %v957 = vsub.f32 %v955, %v956
    %v958 = vand.u32 %v957, 4294901760
    %959 = vmatpush1.msra.mxu0 %v958
    %960 = vmatprep.subr.mxu0 0.0
    %961 = vmatpush2.msra.mxu0 0.0
    %962 = vmatprep.subr.mxu0 0.0
    %963 = vmatpush2.msra.mxu0 0.0
    %964 = vmatprep.subr.mxu0 0.0
    %965 = vmatpush2.msra.mxu0 0.0
    %966 = vmatprep.subr.mxu0 0.0
    %967 = vmatpush2.msra.mxu0 0.0
    %968 = vmatprep.subr.mxu0 0.0
    %969 = vmatpush2.msra.mxu0 0.0
    %970 = vmatprep.subr.mxu0 0.0
    %971 = vmatpush2.msra.mxu0 0.0
    %972 = vmatprep.subr.mxu0 0.0
    %973 = vmatpush2.msra.mxu0 0.0
    %974 = vmatprep.subr.mxu0 0.0
    %975 = vmatpush2.msra.mxu0 0.0
    %976 = vmatprep.subr.mxu0 0.0
    %977 = vmatpush2.msra.mxu0 0.0
    %978 = vmatprep.subr.mxu0 0.0
    %979 = vmatpush2.msra.mxu0 0.0
    %980 = vmatprep.subr.mxu0 0.0
    %981 = vmatpush2.msra.mxu0 0.0
    %982 = vmatprep.subr.mxu0 0.0
    %983 = vmatpush2.msra.mxu0 0.0
    %984 = vmatprep.subr.mxu0 0.0
    %985 = vmatpush2.msra.mxu0 0.0
    %986 = vmatprep.subr.mxu0 0.0
    %987 = vmatpush2.msra.mxu0 0.0
    %988 = vmatprep.subr.mxu0 0.0
    %989 = vmatpush2.msra.mxu0 0.0
    %990 = vmatprep.subr.mxu0 0.0
    %991 = vmatpush2.msra.mxu0 0.0
    %992 = vmatprep.mubr.f32.mxu0 0.0
    %v993 = vand.u32 %v801, 4294901760
    %994 = vmatmul.mubr.f32.gmra.mxu0 %v993
    %v995 = vpop.f32.mrf.mxu0
    %v996 = vadd.f32 %v885, %v995
    %v997 = vpop.f32.mrf.mxu0
    %998 = vmatprep.mubr.f32.mxu0 0.0
    %v999 = vand.u32 %v804, 4294901760
    %1000 = vmatmul.mubr.f32.gmra.mxu0 %v999
    %v1001 = vpop.f32.mrf.mxu0
    %v1002 = vadd.f32 %v895, %v1001
    %v1003 = vpop.f32.mrf.mxu0
    %1004 = vmatprep.mubr.f32.mxu0 0.0
    %v1005 = vand.u32 %v807, 4294901760
    %1006 = vmatmul.mubr.f32.gmra.mxu0 %v1005
    %v1007 = vpop.f32.mrf.mxu0
    %v1008 = vadd.f32 %v905, %v1007
    %v1009 = vpop.f32.mrf.mxu0
    %1010 = vdwg.mxu0
    %1011 = vmatprep.subr.mxu0 0.0
    %1012 = vmatpush1.msra.mxu0 0.0
    %1013 = vmatprep.subr.mxu0 0.0
    %1014 = vmatpush1.msra.mxu0 0.0
    %1015 = vmatprep.subr.mxu0 0.0
    %1016 = vmatpush1.msra.mxu0 0.0
    %1017 = vmatprep.subr.mxu0 0.0
    %1018 = vmatpush1.msra.mxu0 0.0
    %1019 = vmatprep.subr.mxu0 0.0
    %1020 = vmatpush1.msra.mxu0 0.0
    %1021 = vmatprep.subr.mxu0 0.0
    %1022 = vmatpush1.msra.mxu0 0.0
    %1023 = vmatprep.subr.mxu0 0.0
    %1024 = vmatpush1.msra.mxu0 0.0
    %1025 = vmatprep.subr.mxu0 0.0
    %1026 = vmatpush1.msra.mxu0 0.0
    %1027 = vmatprep.subr.mxu0 0.0
    %1028 = vmatpush1.msra.mxu0 0.0
    %1029 = vmatprep.subr.mxu0 0.0
    %1030 = vmatpush1.msra.mxu0 0.0
    %1031 = vmatprep.subr.mxu0 0.0
    %1032 = vmatpush1.msra.mxu0 0.0
    %1033 = vmatprep.subr.mxu0 0.0
    %1034 = vmatpush1.msra.mxu0 0.0
    %1035 = vmatprep.subr.mxu0 0.0
    %v1036 = vand.u32 %v129, 4294901760
    %v1037 = vsub.f32 %v129, %v1036
    %1038 = vmatpush1.msra.mxu0 %v1037
    %1039 = vmatprep.subr.mxu0 0.0
    %v1040 = vand.u32 %v128, 4294901760
    %v1041 = vsub.f32 %v128, %v1040
    %1042 = vmatpush1.msra.mxu0 %v1041
    %1043 = vmatprep.subr.mxu0 0.0
    %v1044 = vand.u32 %v127, 4294901760
    %v1045 = vsub.f32 %v127, %v1044
    %1046 = vmatpush1.msra.mxu0 %v1045
    %1047 = vmatprep.subr.mxu0 0.0
    %v1048 = vand.u32 %v126, 4294901760
    %v1049 = vsub.f32 %v126, %v1048
    %1050 = vmatpush1.msra.mxu0 %v1049
    %1051 = vmatprep.subr.mxu0 0.0
    %1052 = vmatpush2.msra.mxu0 0.0
    %1053 = vmatprep.subr.mxu0 0.0
    %1054 = vmatpush2.msra.mxu0 0.0
    %1055 = vmatprep.subr.mxu0 0.0
    %1056 = vmatpush2.msra.mxu0 0.0
    %1057 = vmatprep.subr.mxu0 0.0
    %1058 = vmatpush2.msra.mxu0 0.0
    %1059 = vmatprep.subr.mxu0 0.0
    %1060 = vmatpush2.msra.mxu0 0.0
    %1061 = vmatprep.subr.mxu0 0.0
    %1062 = vmatpush2.msra.mxu0 0.0
    %1063 = vmatprep.subr.mxu0 0.0
    %1064 = vmatpush2.msra.mxu0 0.0
    %1065 = vmatprep.subr.mxu0 0.0
    %1066 = vmatpush2.msra.mxu0 0.0
    %1067 = vmatprep.subr.mxu0 0.0
    %1068 = vmatpush2.msra.mxu0 0.0
    %1069 = vmatprep.subr.mxu0 0.0
    %1070 = vmatpush2.msra.mxu0 0.0
    %1071 = vmatprep.subr.mxu0 0.0
    %1072 = vmatpush2.msra.mxu0 0.0
    %1073 = vmatprep.subr.mxu0 0.0
    %1074 = vmatpush2.msra.mxu0 0.0
    %1075 = vmatprep.subr.mxu0 0.0
    %1076 = vmatpush2.msra.mxu0 0.0
    %1077 = vmatprep.subr.mxu0 0.0
    %1078 = vmatpush2.msra.mxu0 0.0
    %1079 = vmatprep.subr.mxu0 0.0
    %1080 = vmatpush2.msra.mxu0 0.0
    %1081 = vmatprep.subr.mxu0 0.0
    %1082 = vmatpush2.msra.mxu0 0.0
    %1083 = vmatprep.mubr.f32.mxu0 0.0
    %v1084 = vand.u32 %v801, 4294901760
    %v1085 = vsub.f32 %v801, %v1084
    %1086 = vmatmul.mubr.f32.gmra.mxu0 %v1085
    %v1087 = vpop.f32.mrf.mxu0
    %v1088 = vadd.f32 %v996, %v1087
    %v1089 = vpop.f32.mrf.mxu0
    %1090 = vmatprep.mubr.f32.mxu0 0.0
    %v1091 = vand.u32 %v804, 4294901760
    %v1092 = vsub.f32 %v804, %v1091
    %1093 = vmatmul.mubr.f32.gmra.mxu0 %v1092
    %v1094 = vpop.f32.mrf.mxu0
    %v1095 = vadd.f32 %v1002, %v1094
    %v1096 = vpop.f32.mrf.mxu0
    %1097 = vmatprep.mubr.f32.mxu0 0.0
    %v1098 = vand.u32 %v807, 4294901760
    %v1099 = vsub.f32 %v807, %v1098
    %1100 = vmatmul.mubr.f32.gmra.mxu0 %v1099
    %v1101 = vpop.f32.mrf.mxu0
    %v1102 = vadd.f32 %v1008, %v1101
    %v1103 = vpop.f32.mrf.mxu0
    %1104 = vdwg.mxu0
    %1105 = vmatprep.subr.mxu0 0.0
    %1106 = vmatpush1.msra.mxu0 0.0
    %1107 = vmatprep.subr.mxu0 0.0
    %1108 = vmatpush1.msra.mxu0 0.0
    %1109 = vmatprep.subr.mxu0 0.0
    %1110 = vmatpush1.msra.mxu0 0.0
    %1111 = vmatprep.subr.mxu0 0.0
    %1112 = vmatpush1.msra.mxu0 0.0
    %1113 = vmatprep.subr.mxu0 0.0
    %1114 = vmatpush1.msra.mxu0 0.0
    %1115 = vmatprep.subr.mxu0 0.0
    %1116 = vmatpush1.msra.mxu0 0.0
    %1117 = vmatprep.subr.mxu0 0.0
    %1118 = vmatpush1.msra.mxu0 0.0
    %1119 = vmatprep.subr.mxu0 0.0
    %1120 = vmatpush1.msra.mxu0 0.0
    %1121 = vmatprep.subr.mxu0 0.0
    %1122 = vmatpush1.msra.mxu0 0.0
    %1123 = vmatprep.subr.mxu0 0.0
    %1124 = vmatpush1.msra.mxu0 0.0
    %1125 = vmatprep.subr.mxu0 0.0
    %1126 = vmatpush1.msra.mxu0 0.0
    %1127 = vmatprep.subr.mxu0 0.0
    %1128 = vmatpush1.msra.mxu0 0.0
    %1129 = vmatprep.subr.mxu0 0.0
    %v1130 = vand.u32 %v129, 4294901760
    %1131 = vmatpush1.msra.mxu0 %v1130
    %1132 = vmatprep.subr.mxu0 0.0
    %v1133 = vand.u32 %v128, 4294901760
    %1134 = vmatpush1.msra.mxu0 %v1133
    %1135 = vmatprep.subr.mxu0 0.0
    %v1136 = vand.u32 %v127, 4294901760
    %1137 = vmatpush1.msra.mxu0 %v1136
    %1138 = vmatprep.subr.mxu0 0.0
    %v1139 = vand.u32 %v126, 4294901760
    %1140 = vmatpush1.msra.mxu0 %v1139
    %1141 = vmatprep.subr.mxu0 0.0
    %1142 = vmatpush2.msra.mxu0 0.0
    %1143 = vmatprep.subr.mxu0 0.0
    %1144 = vmatpush2.msra.mxu0 0.0
    %1145 = vmatprep.subr.mxu0 0.0
    %1146 = vmatpush2.msra.mxu0 0.0
    %1147 = vmatprep.subr.mxu0 0.0
    %1148 = vmatpush2.msra.mxu0 0.0
    %1149 = vmatprep.subr.mxu0 0.0
    %1150 = vmatpush2.msra.mxu0 0.0
    %1151 = vmatprep.subr.mxu0 0.0
    %1152 = vmatpush2.msra.mxu0 0.0
    %1153 = vmatprep.subr.mxu0 0.0
    %1154 = vmatpush2.msra.mxu0 0.0
    %1155 = vmatprep.subr.mxu0 0.0
    %1156 = vmatpush2.msra.mxu0 0.0
    %1157 = vmatprep.subr.mxu0 0.0
    %1158 = vmatpush2.msra.mxu0 0.0
    %1159 = vmatprep.subr.mxu0 0.0
    %1160 = vmatpush2.msra.mxu0 0.0
    %1161 = vmatprep.subr.mxu0 0.0
    %1162 = vmatpush2.msra.mxu0 0.0
    %1163 = vmatprep.subr.mxu0 0.0
    %1164 = vmatpush2.msra.mxu0 0.0
    %1165 = vmatprep.subr.mxu0 0.0
    %1166 = vmatpush2.msra.mxu0 0.0
    %1167 = vmatprep.subr.mxu0 0.0
    %1168 = vmatpush2.msra.mxu0 0.0
    %1169 = vmatprep.subr.mxu0 0.0
    %1170 = vmatpush2.msra.mxu0 0.0
    %1171 = vmatprep.subr.mxu0 0.0
    %1172 = vmatpush2.msra.mxu0 0.0
    %1173 = vmatprep.mubr.f32.mxu0 0.0
    %v1174 = vand.u32 %v801, 4294901760
    %v1175 = vsub.f32 %v801, %v1174
    %v1176 = vand.u32 %v1175, 4294901760
    %1177 = vmatmul.mubr.f32.gmra.mxu0 %v1176
    %v1178 = vpop.f32.mrf.mxu0
    %v1179 = vadd.f32 %v1088, %v1178
    %v1180 = vpop.f32.mrf.mxu0
    %1181 = vmatprep.mubr.f32.mxu0 0.0
    %v1182 = vand.u32 %v804, 4294901760
    %v1183 = vsub.f32 %v804, %v1182
    %v1184 = vand.u32 %v1183, 4294901760
    %1185 = vmatmul.mubr.f32.gmra.mxu0 %v1184
    %v1186 = vpop.f32.mrf.mxu0
    %v1187 = vadd.f32 %v1095, %v1186
    %v1188 = vpop.f32.mrf.mxu0
    %1189 = vmatprep.mubr.f32.mxu0 0.0
    %v1190 = vand.u32 %v807, 4294901760
    %v1191 = vsub.f32 %v807, %v1190
    %v1192 = vand.u32 %v1191, 4294901760
    %1193 = vmatmul.mubr.f32.gmra.mxu0 %v1192
    %v1194 = vpop.f32.mrf.mxu0
    %v1195 = vadd.f32 %v1102, %v1194
    %v1196 = vpop.f32.mrf.mxu0
    %1197 = vdwg.mxu0
    %1198 = vmatprep.subr.mxu0 0.0
    %1199 = vmatpush1.msra.mxu0 0.0
    %1200 = vmatprep.subr.mxu0 0.0
    %1201 = vmatpush1.msra.mxu0 0.0
    %1202 = vmatprep.subr.mxu0 0.0
    %1203 = vmatpush1.msra.mxu0 0.0
    %1204 = vmatprep.subr.mxu0 0.0
    %1205 = vmatpush1.msra.mxu0 0.0
    %1206 = vmatprep.subr.mxu0 0.0
    %1207 = vmatpush1.msra.mxu0 0.0
    %1208 = vmatprep.subr.mxu0 0.0
    %1209 = vmatpush1.msra.mxu0 0.0
    %1210 = vmatprep.subr.mxu0 0.0
    %1211 = vmatpush1.msra.mxu0 0.0
    %1212 = vmatprep.subr.mxu0 0.0
    %1213 = vmatpush1.msra.mxu0 0.0
    %1214 = vmatprep.subr.mxu0 0.0
    %1215 = vmatpush1.msra.mxu0 0.0
    %1216 = vmatprep.subr.mxu0 0.0
    %1217 = vmatpush1.msra.mxu0 0.0
    %1218 = vmatprep.subr.mxu0 0.0
    %1219 = vmatpush1.msra.mxu0 0.0
    %1220 = vmatprep.subr.mxu0 0.0
    %1221 = vmatpush1.msra.mxu0 0.0
    %1222 = vmatprep.subr.mxu0 0.0
    %v1223 = vand.u32 %v129, 4294901760
    %v1224 = vsub.f32 %v129, %v1223
    %v1225 = vand.u32 %v1224, 4294901760
    %1226 = vmatpush1.msra.mxu0 %v1225
    %1227 = vmatprep.subr.mxu0 0.0
    %v1228 = vand.u32 %v128, 4294901760
    %v1229 = vsub.f32 %v128, %v1228
    %v1230 = vand.u32 %v1229, 4294901760
    %1231 = vmatpush1.msra.mxu0 %v1230
    %1232 = vmatprep.subr.mxu0 0.0
    %v1233 = vand.u32 %v127, 4294901760
    %v1234 = vsub.f32 %v127, %v1233
    %v1235 = vand.u32 %v1234, 4294901760
    %1236 = vmatpush1.msra.mxu0 %v1235
    %1237 = vmatprep.subr.mxu0 0.0
    %v1238 = vand.u32 %v126, 4294901760
    %v1239 = vsub.f32 %v126, %v1238
    %v1240 = vand.u32 %v1239, 4294901760
    %1241 = vmatpush1.msra.mxu0 %v1240
    %1242 = vmatprep.subr.mxu0 0.0
    %1243 = vmatpush2.msra.mxu0 0.0
    %1244 = vmatprep.subr.mxu0 0.0
    %1245 = vmatpush2.msra.mxu0 0.0
    %1246 = vmatprep.subr.mxu0 0.0
    %1247 = vmatpush2.msra.mxu0 0.0
    %1248 = vmatprep.subr.mxu0 0.0
    %1249 = vmatpush2.msra.mxu0 0.0
    %1250 = vmatprep.subr.mxu0 0.0
    %1251 = vmatpush2.msra.mxu0 0.0
    %1252 = vmatprep.subr.mxu0 0.0
    %1253 = vmatpush2.msra.mxu0 0.0
    %1254 = vmatprep.subr.mxu0 0.0
    %1255 = vmatpush2.msra.mxu0 0.0
    %1256 = vmatprep.subr.mxu0 0.0
    %1257 = vmatpush2.msra.mxu0 0.0
    %1258 = vmatprep.subr.mxu0 0.0
    %1259 = vmatpush2.msra.mxu0 0.0
    %1260 = vmatprep.subr.mxu0 0.0
    %1261 = vmatpush2.msra.mxu0 0.0
    %1262 = vmatprep.subr.mxu0 0.0
    %1263 = vmatpush2.msra.mxu0 0.0
    %1264 = vmatprep.subr.mxu0 0.0
    %1265 = vmatpush2.msra.mxu0 0.0
    %1266 = vmatprep.subr.mxu0 0.0
    %1267 = vmatpush2.msra.mxu0 0.0
    %1268 = vmatprep.subr.mxu0 0.0
    %1269 = vmatpush2.msra.mxu0 0.0
    %1270 = vmatprep.subr.mxu0 0.0
    %1271 = vmatpush2.msra.mxu0 0.0
    %1272 = vmatprep.subr.mxu0 0.0
    %1273 = vmatpush2.msra.mxu0 0.0
    %1274 = vmatprep.mubr.f32.mxu0 0.0
    %v1275 = vand.u32 %v801, 4294901760
    %1276 = vmatmul.mubr.f32.gmra.mxu0 %v1275
    %v1277 = vpop.f32.mrf.mxu0
    %v1278 = vadd.f32 %v1179, %v1277
    %v1279 = vpop.f32.mrf.mxu0
    %1280 = vmatprep.mubr.f32.mxu0 0.0
    %v1281 = vand.u32 %v804, 4294901760
    %1282 = vmatmul.mubr.f32.gmra.mxu0 %v1281
    %v1283 = vpop.f32.mrf.mxu0
    %v1284 = vadd.f32 %v1187, %v1283
    %v1285 = vpop.f32.mrf.mxu0
    %1286 = vmatprep.mubr.f32.mxu0 0.0
    %v1287 = vand.u32 %v807, 4294901760
    %1288 = vmatmul.mubr.f32.gmra.mxu0 %v1287
    %v1289 = vpop.f32.mrf.mxu0
    %v1290 = vadd.f32 %v1195, %v1289
    %v1291 = vpop.f32.mrf.mxu0
    %1292 = vdwg.mxu0
    %1293 = vmatprep.subr.mxu0 0.0
    %1294 = vmatpush1.msra.mxu0 0.0
    %1295 = vmatprep.subr.mxu0 0.0
    %1296 = vmatpush1.msra.mxu0 0.0
    %1297 = vmatprep.subr.mxu0 0.0
    %1298 = vmatpush1.msra.mxu0 0.0
    %1299 = vmatprep.subr.mxu0 0.0
    %1300 = vmatpush1.msra.mxu0 0.0
    %1301 = vmatprep.subr.mxu0 0.0
    %1302 = vmatpush1.msra.mxu0 0.0
    %1303 = vmatprep.subr.mxu0 0.0
    %1304 = vmatpush1.msra.mxu0 0.0
    %1305 = vmatprep.subr.mxu0 0.0
    %1306 = vmatpush1.msra.mxu0 0.0
    %1307 = vmatprep.subr.mxu0 0.0
    %1308 = vmatpush1.msra.mxu0 0.0
    %1309 = vmatprep.subr.mxu0 0.0
    %1310 = vmatpush1.msra.mxu0 0.0
    %1311 = vmatprep.subr.mxu0 0.0
    %1312 = vmatpush1.msra.mxu0 0.0
    %1313 = vmatprep.subr.mxu0 0.0
    %1314 = vmatpush1.msra.mxu0 0.0
    %1315 = vmatprep.subr.mxu0 0.0
    %1316 = vmatpush1.msra.mxu0 0.0
    %1317 = vmatprep.subr.mxu0 0.0
    %v1318 = vand.u32 %v129, 4294901760
    %1319 = vmatpush1.msra.mxu0 %v1318
    %1320 = vmatprep.subr.mxu0 0.0
    %v1321 = vand.u32 %v128, 4294901760
    %1322 = vmatpush1.msra.mxu0 %v1321
    %1323 = vmatprep.subr.mxu0 0.0
    %v1324 = vand.u32 %v127, 4294901760
    %1325 = vmatpush1.msra.mxu0 %v1324
    %1326 = vmatprep.subr.mxu0 0.0
    %v1327 = vand.u32 %v126, 4294901760
    %1328 = vmatpush1.msra.mxu0 %v1327
    %1329 = vmatprep.subr.mxu0 0.0
    %1330 = vmatpush2.msra.mxu0 0.0
    %1331 = vmatprep.subr.mxu0 0.0
    %1332 = vmatpush2.msra.mxu0 0.0
    %1333 = vmatprep.subr.mxu0 0.0
    %1334 = vmatpush2.msra.mxu0 0.0
    %1335 = vmatprep.subr.mxu0 0.0
    %1336 = vmatpush2.msra.mxu0 0.0
    %1337 = vmatprep.subr.mxu0 0.0
    %1338 = vmatpush2.msra.mxu0 0.0
    %1339 = vmatprep.subr.mxu0 0.0
    %1340 = vmatpush2.msra.mxu0 0.0
    %1341 = vmatprep.subr.mxu0 0.0
    %1342 = vmatpush2.msra.mxu0 0.0
    %1343 = vmatprep.subr.mxu0 0.0
    %1344 = vmatpush2.msra.mxu0 0.0
    %1345 = vmatprep.subr.mxu0 0.0
    %1346 = vmatpush2.msra.mxu0 0.0
    %1347 = vmatprep.subr.mxu0 0.0
    %1348 = vmatpush2.msra.mxu0 0.0
    %1349 = vmatprep.subr.mxu0 0.0
    %1350 = vmatpush2.msra.mxu0 0.0
    %1351 = vmatprep.subr.mxu0 0.0
    %1352 = vmatpush2.msra.mxu0 0.0
    %1353 = vmatprep.subr.mxu0 0.0
    %1354 = vmatpush2.msra.mxu0 0.0
    %1355 = vmatprep.subr.mxu0 0.0
    %1356 = vmatpush2.msra.mxu0 0.0
    %1357 = vmatprep.subr.mxu0 0.0
    %1358 = vmatpush2.msra.mxu0 0.0
    %1359 = vmatprep.subr.mxu0 0.0
    %1360 = vmatpush2.msra.mxu0 0.0
    %1361 = vmatprep.mubr.f32.mxu0 0.0
    %v1362 = vand.u32 %v801, 4294901760
    %1363 = vmatmul.mubr.f32.gmra.mxu0 %v1362
    %v1364 = vpop.f32.mrf.mxu0
    %v1365 = vadd.f32 %v1278, %v1364
    %v1366 = vpop.f32.mrf.mxu0
    %1367 = vmatprep.mubr.f32.mxu0 0.0
    %v1368 = vand.u32 %v804, 4294901760
    %1369 = vmatmul.mubr.f32.gmra.mxu0 %v1368
    %v1370 = vpop.f32.mrf.mxu0
    %v1371 = vadd.f32 %v1284, %v1370
    %v1372 = vpop.f32.mrf.mxu0
    %1373 = vmatprep.mubr.f32.mxu0 0.0
    %v1374 = vand.u32 %v807, 4294901760
    %1375 = vmatmul.mubr.f32.gmra.mxu0 %v1374
    %v1376 = vpop.f32.mrf.mxu0
    %v1377 = vadd.f32 %v1290, %v1376
    %v1378 = vpop.f32.mrf.mxu0
    %1379 = vdwg.mxu0
    %v1381 = vlaneseq
    %v1382 = vshrl.u32 %v1381, 7
    %v1383 = vsub.s32 0, %v1382
    %v1384 = vrot.slane %v135, %v1383
    %1386 = vmatprep.subr.mxu0 0.0
    %1387 = vmatpush1.msra.mxu0 0.0
    %1388 = vmatprep.subr.mxu0 0.0
    %1389 = vmatpush1.msra.mxu0 0.0
    %1390 = vmatprep.subr.mxu0 0.0
    %1391 = vmatpush1.msra.mxu0 0.0
    %1392 = vmatprep.subr.mxu0 0.0
    %1393 = vmatpush1.msra.mxu0 0.0
    %1394 = vmatprep.subr.mxu0 0.0
    %1395 = vmatpush1.msra.mxu0 0.0
    %1396 = vmatprep.subr.mxu0 0.0
    %1397 = vmatpush1.msra.mxu0 0.0
    %1398 = vmatprep.subr.mxu0 0.0
    %1399 = vmatpush1.msra.mxu0 0.0
    %1400 = vmatprep.subr.mxu0 0.0
    %1401 = vmatpush1.msra.mxu0 0.0
    %1402 = vmatprep.subr.mxu0 0.0
    %1403 = vmatpush1.msra.mxu0 0.0
    %1404 = vmatprep.subr.mxu0 0.0
    %1405 = vmatpush1.msra.mxu0 0.0
    %1406 = vmatprep.subr.mxu0 0.0
    %1407 = vmatpush1.msra.mxu0 0.0
    %1408 = vmatprep.subr.mxu0 0.0
    %1409 = vmatpush1.msra.mxu0 0.0
    %1410 = vmatprep.subr.mxu0 0.0
    %v1411 = vand.u32 %v134, 4294901760
    %1412 = vmatpush1.msra.mxu0 %v1411
    %1413 = vmatprep.subr.mxu0 0.0
    %v1414 = vand.u32 %v133, 4294901760
    %1415 = vmatpush1.msra.mxu0 %v1414
    %1416 = vmatprep.subr.mxu0 0.0
    %v1417 = vand.u32 %v132, 4294901760
    %1418 = vmatpush1.msra.mxu0 %v1417
    %1419 = vmatprep.subr.mxu0 0.0
    %v1420 = vand.u32 %v131, 4294901760
    %1421 = vmatpush1.msra.mxu0 %v1420
    %1422 = vmatprep.subr.mxu0 0.0
    %1423 = vmatpush2.msra.mxu0 0.0
    %1424 = vmatprep.subr.mxu0 0.0
    %1425 = vmatpush2.msra.mxu0 0.0
    %1426 = vmatprep.subr.mxu0 0.0
    %1427 = vmatpush2.msra.mxu0 0.0
    %1428 = vmatprep.subr.mxu0 0.0
    %1429 = vmatpush2.msra.mxu0 0.0
    %1430 = vmatprep.subr.mxu0 0.0
    %1431 = vmatpush2.msra.mxu0 0.0
    %1432 = vmatprep.subr.mxu0 0.0
    %1433 = vmatpush2.msra.mxu0 0.0
    %1434 = vmatprep.subr.mxu0 0.0
    %1435 = vmatpush2.msra.mxu0 0.0
    %1436 = vmatprep.subr.mxu0 0.0
    %1437 = vmatpush2.msra.mxu0 0.0
    %1438 = vmatprep.subr.mxu0 0.0
    %1439 = vmatpush2.msra.mxu0 0.0
    %1440 = vmatprep.subr.mxu0 0.0
    %1441 = vmatpush2.msra.mxu0 0.0
    %1442 = vmatprep.subr.mxu0 0.0
    %1443 = vmatpush2.msra.mxu0 0.0
    %1444 = vmatprep.subr.mxu0 0.0
    %1445 = vmatpush2.msra.mxu0 0.0
    %1446 = vmatprep.subr.mxu0 0.0
    %1447 = vmatpush2.msra.mxu0 0.0
    %1448 = vmatprep.subr.mxu0 0.0
    %1449 = vmatpush2.msra.mxu0 0.0
    %1450 = vmatprep.subr.mxu0 0.0
    %1451 = vmatpush2.msra.mxu0 0.0
    %1452 = vmatprep.subr.mxu0 0.0
    %1453 = vmatpush2.msra.mxu0 0.0
    %1454 = vmatprep.mubr.f32.mxu0 0.0
    %v1455 = vand.u32 %v801, 4294901760
    %v1456 = vsub.f32 %v801, %v1455
    %v1457 = vand.u32 %v1456, 4294901760
    %v1458 = vsub.f32 %v1456, %v1457
    %v1459 = vand.u32 %v1458, 4294901760
    %1460 = vmatmul.mubr.f32.gmra.mxu0 %v1459
    %v1461 = vpop.f32.mrf.mxu0
    %v1462 = vadd.f32 %v1384, %v1461
    %v1463 = vpop.f32.mrf.mxu0
    %1464 = vmatprep.mubr.f32.mxu0 0.0
    %v1465 = vand.u32 %v804, 4294901760
    %v1466 = vsub.f32 %v804, %v1465
    %v1467 = vand.u32 %v1466, 4294901760
    %v1468 = vsub.f32 %v1466, %v1467
    %v1469 = vand.u32 %v1468, 4294901760
    %1470 = vmatmul.mubr.f32.gmra.mxu0 %v1469
    %v1471 = vpop.f32.mrf.mxu0
    %v1472 = vadd.f32 %v1384, %v1471
    %v1473 = vpop.f32.mrf.mxu0
    %1474 = vmatprep.mubr.f32.mxu0 0.0
    %v1475 = vand.u32 %v807, 4294901760
    %v1476 = vsub.f32 %v807, %v1475
    %v1477 = vand.u32 %v1476, 4294901760
    %v1478 = vsub.f32 %v1476, %v1477
    %v1479 = vand.u32 %v1478, 4294901760
    %1480 = vmatmul.mubr.f32.gmra.mxu0 %v1479
    %v1481 = vpop.f32.mrf.mxu0
    %v1482 = vadd.f32 %v1384, %v1481
    %v1483 = vpop.f32.mrf.mxu0
    %1484 = vdwg.mxu0
    %1485 = vmatprep.subr.mxu0 0.0
    %1486 = vmatpush1.msra.mxu0 0.0
    %1487 = vmatprep.subr.mxu0 0.0
    %1488 = vmatpush1.msra.mxu0 0.0
    %1489 = vmatprep.subr.mxu0 0.0
    %1490 = vmatpush1.msra.mxu0 0.0
    %1491 = vmatprep.subr.mxu0 0.0
    %1492 = vmatpush1.msra.mxu0 0.0
    %1493 = vmatprep.subr.mxu0 0.0
    %1494 = vmatpush1.msra.mxu0 0.0
    %1495 = vmatprep.subr.mxu0 0.0
    %1496 = vmatpush1.msra.mxu0 0.0
    %1497 = vmatprep.subr.mxu0 0.0
    %1498 = vmatpush1.msra.mxu0 0.0
    %1499 = vmatprep.subr.mxu0 0.0
    %1500 = vmatpush1.msra.mxu0 0.0
    %1501 = vmatprep.subr.mxu0 0.0
    %1502 = vmatpush1.msra.mxu0 0.0
    %1503 = vmatprep.subr.mxu0 0.0
    %1504 = vmatpush1.msra.mxu0 0.0
    %1505 = vmatprep.subr.mxu0 0.0
    %1506 = vmatpush1.msra.mxu0 0.0
    %1507 = vmatprep.subr.mxu0 0.0
    %1508 = vmatpush1.msra.mxu0 0.0
    %1509 = vmatprep.subr.mxu0 0.0
    %v1510 = vand.u32 %v134, 4294901760
    %v1511 = vsub.f32 %v134, %v1510
    %v1512 = vand.u32 %v1511, 4294901760
    %v1513 = vsub.f32 %v1511, %v1512
    %v1514 = vand.u32 %v1513, 4294901760
    %1515 = vmatpush1.msra.mxu0 %v1514
    %1516 = vmatprep.subr.mxu0 0.0
    %v1517 = vand.u32 %v133, 4294901760
    %v1518 = vsub.f32 %v133, %v1517
    %v1519 = vand.u32 %v1518, 4294901760
    %v1520 = vsub.f32 %v1518, %v1519
    %v1521 = vand.u32 %v1520, 4294901760
    %1522 = vmatpush1.msra.mxu0 %v1521
    %1523 = vmatprep.subr.mxu0 0.0
    %v1524 = vand.u32 %v132, 4294901760
    %v1525 = vsub.f32 %v132, %v1524
    %v1526 = vand.u32 %v1525, 4294901760
    %v1527 = vsub.f32 %v1525, %v1526
    %v1528 = vand.u32 %v1527, 4294901760
    %1529 = vmatpush1.msra.mxu0 %v1528
    %1530 = vmatprep.subr.mxu0 0.0
    %v1531 = vand.u32 %v131, 4294901760
    %v1532 = vsub.f32 %v131, %v1531
    %v1533 = vand.u32 %v1532, 4294901760
    %v1534 = vsub.f32 %v1532, %v1533
    %v1535 = vand.u32 %v1534, 4294901760
    %1536 = vmatpush1.msra.mxu0 %v1535
    %1537 = vmatprep.subr.mxu0 0.0
    %1538 = vmatpush2.msra.mxu0 0.0
    %1539 = vmatprep.subr.mxu0 0.0
    %1540 = vmatpush2.msra.mxu0 0.0
    %1541 = vmatprep.subr.mxu0 0.0
    %1542 = vmatpush2.msra.mxu0 0.0
    %1543 = vmatprep.subr.mxu0 0.0
    %1544 = vmatpush2.msra.mxu0 0.0
    %1545 = vmatprep.subr.mxu0 0.0
    %1546 = vmatpush2.msra.mxu0 0.0
    %1547 = vmatprep.subr.mxu0 0.0
    %1548 = vmatpush2.msra.mxu0 0.0
    %1549 = vmatprep.subr.mxu0 0.0
    %1550 = vmatpush2.msra.mxu0 0.0
    %1551 = vmatprep.subr.mxu0 0.0
    %1552 = vmatpush2.msra.mxu0 0.0
    %1553 = vmatprep.subr.mxu0 0.0
    %1554 = vmatpush2.msra.mxu0 0.0
    %1555 = vmatprep.subr.mxu0 0.0
    %1556 = vmatpush2.msra.mxu0 0.0
    %1557 = vmatprep.subr.mxu0 0.0
    %1558 = vmatpush2.msra.mxu0 0.0
    %1559 = vmatprep.subr.mxu0 0.0
    %1560 = vmatpush2.msra.mxu0 0.0
    %1561 = vmatprep.subr.mxu0 0.0
    %1562 = vmatpush2.msra.mxu0 0.0
    %1563 = vmatprep.subr.mxu0 0.0
    %1564 = vmatpush2.msra.mxu0 0.0
    %1565 = vmatprep.subr.mxu0 0.0
    %1566 = vmatpush2.msra.mxu0 0.0
    %1567 = vmatprep.subr.mxu0 0.0
    %1568 = vmatpush2.msra.mxu0 0.0
    %1569 = vmatprep.mubr.f32.mxu0 0.0
    %v1570 = vand.u32 %v801, 4294901760
    %1571 = vmatmul.mubr.f32.gmra.mxu0 %v1570
    %v1572 = vpop.f32.mrf.mxu0
    %v1573 = vadd.f32 %v1462, %v1572
    %v1574 = vpop.f32.mrf.mxu0
    %1575 = vmatprep.mubr.f32.mxu0 0.0
    %v1576 = vand.u32 %v804, 4294901760
    %1577 = vmatmul.mubr.f32.gmra.mxu0 %v1576
    %v1578 = vpop.f32.mrf.mxu0
    %v1579 = vadd.f32 %v1472, %v1578
    %v1580 = vpop.f32.mrf.mxu0
    %1581 = vmatprep.mubr.f32.mxu0 0.0
    %v1582 = vand.u32 %v807, 4294901760
    %1583 = vmatmul.mubr.f32.gmra.mxu0 %v1582
    %v1584 = vpop.f32.mrf.mxu0
    %v1585 = vadd.f32 %v1482, %v1584
    %v1586 = vpop.f32.mrf.mxu0
    %1587 = vdwg.mxu0
    %1588 = vmatprep.subr.mxu0 0.0
    %1589 = vmatpush1.msra.mxu0 0.0
    %1590 = vmatprep.subr.mxu0 0.0
    %1591 = vmatpush1.msra.mxu0 0.0
    %1592 = vmatprep.subr.mxu0 0.0
    %1593 = vmatpush1.msra.mxu0 0.0
    %1594 = vmatprep.subr.mxu0 0.0
    %1595 = vmatpush1.msra.mxu0 0.0
    %1596 = vmatprep.subr.mxu0 0.0
    %1597 = vmatpush1.msra.mxu0 0.0
    %1598 = vmatprep.subr.mxu0 0.0
    %1599 = vmatpush1.msra.mxu0 0.0
    %1600 = vmatprep.subr.mxu0 0.0
    %1601 = vmatpush1.msra.mxu0 0.0
    %1602 = vmatprep.subr.mxu0 0.0
    %1603 = vmatpush1.msra.mxu0 0.0
    %1604 = vmatprep.subr.mxu0 0.0
    %1605 = vmatpush1.msra.mxu0 0.0
    %1606 = vmatprep.subr.mxu0 0.0
    %1607 = vmatpush1.msra.mxu0 0.0
    %1608 = vmatprep.subr.mxu0 0.0
    %1609 = vmatpush1.msra.mxu0 0.0
    %1610 = vmatprep.subr.mxu0 0.0
    %1611 = vmatpush1.msra.mxu0 0.0
    %1612 = vmatprep.subr.mxu0 0.0
    %v1613 = vand.u32 %v134, 4294901760
    %v1614 = vsub.f32 %v134, %v1613
    %1615 = vmatpush1.msra.mxu0 %v1614
    %1616 = vmatprep.subr.mxu0 0.0
    %v1617 = vand.u32 %v133, 4294901760
    %v1618 = vsub.f32 %v133, %v1617
    %1619 = vmatpush1.msra.mxu0 %v1618
    %1620 = vmatprep.subr.mxu0 0.0
    %v1621 = vand.u32 %v132, 4294901760
    %v1622 = vsub.f32 %v132, %v1621
    %1623 = vmatpush1.msra.mxu0 %v1622
    %1624 = vmatprep.subr.mxu0 0.0
    %v1625 = vand.u32 %v131, 4294901760
    %v1626 = vsub.f32 %v131, %v1625
    %1627 = vmatpush1.msra.mxu0 %v1626
    %1628 = vmatprep.subr.mxu0 0.0
    %1629 = vmatpush2.msra.mxu0 0.0
    %1630 = vmatprep.subr.mxu0 0.0
    %1631 = vmatpush2.msra.mxu0 0.0
    %1632 = vmatprep.subr.mxu0 0.0
    %1633 = vmatpush2.msra.mxu0 0.0
    %1634 = vmatprep.subr.mxu0 0.0
    %1635 = vmatpush2.msra.mxu0 0.0
    %1636 = vmatprep.subr.mxu0 0.0
    %1637 = vmatpush2.msra.mxu0 0.0
    %1638 = vmatprep.subr.mxu0 0.0
    %1639 = vmatpush2.msra.mxu0 0.0
    %1640 = vmatprep.subr.mxu0 0.0
    %1641 = vmatpush2.msra.mxu0 0.0
    %1642 = vmatprep.subr.mxu0 0.0
    %1643 = vmatpush2.msra.mxu0 0.0
    %1644 = vmatprep.subr.mxu0 0.0
    %1645 = vmatpush2.msra.mxu0 0.0
    %1646 = vmatprep.subr.mxu0 0.0
    %1647 = vmatpush2.msra.mxu0 0.0
    %1648 = vmatprep.subr.mxu0 0.0
    %1649 = vmatpush2.msra.mxu0 0.0
    %1650 = vmatprep.subr.mxu0 0.0
    %1651 = vmatpush2.msra.mxu0 0.0
    %1652 = vmatprep.subr.mxu0 0.0
    %1653 = vmatpush2.msra.mxu0 0.0
    %1654 = vmatprep.subr.mxu0 0.0
    %1655 = vmatpush2.msra.mxu0 0.0
    %1656 = vmatprep.subr.mxu0 0.0
    %1657 = vmatpush2.msra.mxu0 0.0
    %1658 = vmatprep.subr.mxu0 0.0
    %1659 = vmatpush2.msra.mxu0 0.0
    %1660 = vmatprep.mubr.f32.mxu0 0.0
    %v1661 = vand.u32 %v801, 4294901760
    %v1662 = vsub.f32 %v801, %v1661
    %1663 = vmatmul.mubr.f32.gmra.mxu0 %v1662
    %v1664 = vpop.f32.mrf.mxu0
    %v1665 = vadd.f32 %v1573, %v1664
    %v1666 = vpop.f32.mrf.mxu0
    %1667 = vmatprep.mubr.f32.mxu0 0.0
    %v1668 = vand.u32 %v804, 4294901760
    %v1669 = vsub.f32 %v804, %v1668
    %1670 = vmatmul.mubr.f32.gmra.mxu0 %v1669
    %v1671 = vpop.f32.mrf.mxu0
    %v1672 = vadd.f32 %v1579, %v1671
    %v1673 = vpop.f32.mrf.mxu0
    %1674 = vmatprep.mubr.f32.mxu0 0.0
    %v1675 = vand.u32 %v807, 4294901760
    %v1676 = vsub.f32 %v807, %v1675
    %1677 = vmatmul.mubr.f32.gmra.mxu0 %v1676
    %v1678 = vpop.f32.mrf.mxu0
    %v1679 = vadd.f32 %v1585, %v1678
    %v1680 = vpop.f32.mrf.mxu0
    %1681 = vdwg.mxu0
    %1682 = vmatprep.subr.mxu0 0.0
    %1683 = vmatpush1.msra.mxu0 0.0
    %1684 = vmatprep.subr.mxu0 0.0
    %1685 = vmatpush1.msra.mxu0 0.0
    %1686 = vmatprep.subr.mxu0 0.0
    %1687 = vmatpush1.msra.mxu0 0.0
    %1688 = vmatprep.subr.mxu0 0.0
    %1689 = vmatpush1.msra.mxu0 0.0
    %1690 = vmatprep.subr.mxu0 0.0
    %1691 = vmatpush1.msra.mxu0 0.0
    %1692 = vmatprep.subr.mxu0 0.0
    %1693 = vmatpush1.msra.mxu0 0.0
    %1694 = vmatprep.subr.mxu0 0.0
    %1695 = vmatpush1.msra.mxu0 0.0
    %1696 = vmatprep.subr.mxu0 0.0
    %1697 = vmatpush1.msra.mxu0 0.0
    %1698 = vmatprep.subr.mxu0 0.0
    %1699 = vmatpush1.msra.mxu0 0.0
    %1700 = vmatprep.subr.mxu0 0.0
    %1701 = vmatpush1.msra.mxu0 0.0
    %1702 = vmatprep.subr.mxu0 0.0
    %1703 = vmatpush1.msra.mxu0 0.0
    %1704 = vmatprep.subr.mxu0 0.0
    %1705 = vmatpush1.msra.mxu0 0.0
    %1706 = vmatprep.subr.mxu0 0.0
    %v1707 = vand.u32 %v134, 4294901760
    %1708 = vmatpush1.msra.mxu0 %v1707
    %1709 = vmatprep.subr.mxu0 0.0
    %v1710 = vand.u32 %v133, 4294901760
    %1711 = vmatpush1.msra.mxu0 %v1710
    %1712 = vmatprep.subr.mxu0 0.0
    %v1713 = vand.u32 %v132, 4294901760
    %1714 = vmatpush1.msra.mxu0 %v1713
    %1715 = vmatprep.subr.mxu0 0.0
    %v1716 = vand.u32 %v131, 4294901760
    %1717 = vmatpush1.msra.mxu0 %v1716
    %1718 = vmatprep.subr.mxu0 0.0
    %1719 = vmatpush2.msra.mxu0 0.0
    %1720 = vmatprep.subr.mxu0 0.0
    %1721 = vmatpush2.msra.mxu0 0.0
    %1722 = vmatprep.subr.mxu0 0.0
    %1723 = vmatpush2.msra.mxu0 0.0
    %1724 = vmatprep.subr.mxu0 0.0
    %1725 = vmatpush2.msra.mxu0 0.0
    %1726 = vmatprep.subr.mxu0 0.0
    %1727 = vmatpush2.msra.mxu0 0.0
    %1728 = vmatprep.subr.mxu0 0.0
    %1729 = vmatpush2.msra.mxu0 0.0
    %1730 = vmatprep.subr.mxu0 0.0
    %1731 = vmatpush2.msra.mxu0 0.0
    %1732 = vmatprep.subr.mxu0 0.0
    %1733 = vmatpush2.msra.mxu0 0.0
    %1734 = vmatprep.subr.mxu0 0.0
    %1735 = vmatpush2.msra.mxu0 0.0
    %1736 = vmatprep.subr.mxu0 0.0
    %1737 = vmatpush2.msra.mxu0 0.0
    %1738 = vmatprep.subr.mxu0 0.0
    %1739 = vmatpush2.msra.mxu0 0.0
    %1740 = vmatprep.subr.mxu0 0.0
    %1741 = vmatpush2.msra.mxu0 0.0
    %1742 = vmatprep.subr.mxu0 0.0
    %1743 = vmatpush2.msra.mxu0 0.0
    %1744 = vmatprep.subr.mxu0 0.0
    %1745 = vmatpush2.msra.mxu0 0.0
    %1746 = vmatprep.subr.mxu0 0.0
    %1747 = vmatpush2.msra.mxu0 0.0
    %1748 = vmatprep.subr.mxu0 0.0
    %1749 = vmatpush2.msra.mxu0 0.0
    %1750 = vmatprep.mubr.f32.mxu0 0.0
    %v1751 = vand.u32 %v801, 4294901760
    %v1752 = vsub.f32 %v801, %v1751
    %v1753 = vand.u32 %v1752, 4294901760
    %1754 = vmatmul.mubr.f32.gmra.mxu0 %v1753
    %v1755 = vpop.f32.mrf.mxu0
    %v1756 = vadd.f32 %v1665, %v1755
    %v1757 = vpop.f32.mrf.mxu0
    %1758 = vmatprep.mubr.f32.mxu0 0.0
    %v1759 = vand.u32 %v804, 4294901760
    %v1760 = vsub.f32 %v804, %v1759
    %v1761 = vand.u32 %v1760, 4294901760
    %1762 = vmatmul.mubr.f32.gmra.mxu0 %v1761
    %v1763 = vpop.f32.mrf.mxu0
    %v1764 = vadd.f32 %v1672, %v1763
    %v1765 = vpop.f32.mrf.mxu0
    %1766 = vmatprep.mubr.f32.mxu0 0.0
    %v1767 = vand.u32 %v807, 4294901760
    %v1768 = vsub.f32 %v807, %v1767
    %v1769 = vand.u32 %v1768, 4294901760
    %1770 = vmatmul.mubr.f32.gmra.mxu0 %v1769
    %v1771 = vpop.f32.mrf.mxu0
    %v1772 = vadd.f32 %v1679, %v1771
    %v1773 = vpop.f32.mrf.mxu0
    %1774 = vdwg.mxu0
    %1775 = vmatprep.subr.mxu0 0.0
    %1776 = vmatpush1.msra.mxu0 0.0
    %1777 = vmatprep.subr.mxu0 0.0
    %1778 = vmatpush1.msra.mxu0 0.0
    %1779 = vmatprep.subr.mxu0 0.0
    %1780 = vmatpush1.msra.mxu0 0.0
    %1781 = vmatprep.subr.mxu0 0.0
    %1782 = vmatpush1.msra.mxu0 0.0
    %1783 = vmatprep.subr.mxu0 0.0
    %1784 = vmatpush1.msra.mxu0 0.0
    %1785 = vmatprep.subr.mxu0 0.0
    %1786 = vmatpush1.msra.mxu0 0.0
    %1787 = vmatprep.subr.mxu0 0.0
    %1788 = vmatpush1.msra.mxu0 0.0
    %1789 = vmatprep.subr.mxu0 0.0
    %1790 = vmatpush1.msra.mxu0 0.0
    %1791 = vmatprep.subr.mxu0 0.0
    %1792 = vmatpush1.msra.mxu0 0.0
    %1793 = vmatprep.subr.mxu0 0.0
    %1794 = vmatpush1.msra.mxu0 0.0
    %1795 = vmatprep.subr.mxu0 0.0
    %1796 = vmatpush1.msra.mxu0 0.0
    %1797 = vmatprep.subr.mxu0 0.0
    %1798 = vmatpush1.msra.mxu0 0.0
    %1799 = vmatprep.subr.mxu0 0.0
    %v1800 = vand.u32 %v134, 4294901760
    %v1801 = vsub.f32 %v134, %v1800
    %v1802 = vand.u32 %v1801, 4294901760
    %1803 = vmatpush1.msra.mxu0 %v1802
    %1804 = vmatprep.subr.mxu0 0.0
    %v1805 = vand.u32 %v133, 4294901760
    %v1806 = vsub.f32 %v133, %v1805
    %v1807 = vand.u32 %v1806, 4294901760
    %1808 = vmatpush1.msra.mxu0 %v1807
    %1809 = vmatprep.subr.mxu0 0.0
    %v1810 = vand.u32 %v132, 4294901760
    %v1811 = vsub.f32 %v132, %v1810
    %v1812 = vand.u32 %v1811, 4294901760
    %1813 = vmatpush1.msra.mxu0 %v1812
    %1814 = vmatprep.subr.mxu0 0.0
    %v1815 = vand.u32 %v131, 4294901760
    %v1816 = vsub.f32 %v131, %v1815
    %v1817 = vand.u32 %v1816, 4294901760
    %1818 = vmatpush1.msra.mxu0 %v1817
    %1819 = vmatprep.subr.mxu0 0.0
    %1820 = vmatpush2.msra.mxu0 0.0
    %1821 = vmatprep.subr.mxu0 0.0
    %1822 = vmatpush2.msra.mxu0 0.0
    %1823 = vmatprep.subr.mxu0 0.0
    %1824 = vmatpush2.msra.mxu0 0.0
    %1825 = vmatprep.subr.mxu0 0.0
    %1826 = vmatpush2.msra.mxu0 0.0
    %1827 = vmatprep.subr.mxu0 0.0
    %1828 = vmatpush2.msra.mxu0 0.0
    %1829 = vmatprep.subr.mxu0 0.0
    %1830 = vmatpush2.msra.mxu0 0.0
    %1831 = vmatprep.subr.mxu0 0.0
    %1832 = vmatpush2.msra.mxu0 0.0
    %1833 = vmatprep.subr.mxu0 0.0
    %1834 = vmatpush2.msra.mxu0 0.0
    %1835 = vmatprep.subr.mxu0 0.0
    %1836 = vmatpush2.msra.mxu0 0.0
    %1837 = vmatprep.subr.mxu0 0.0
    %1838 = vmatpush2.msra.mxu0 0.0
    %1839 = vmatprep.subr.mxu0 0.0
    %1840 = vmatpush2.msra.mxu0 0.0
    %1841 = vmatprep.subr.mxu0 0.0
    %1842 = vmatpush2.msra.mxu0 0.0
    %1843 = vmatprep.subr.mxu0 0.0
    %1844 = vmatpush2.msra.mxu0 0.0
    %1845 = vmatprep.subr.mxu0 0.0
    %1846 = vmatpush2.msra.mxu0 0.0
    %1847 = vmatprep.subr.mxu0 0.0
    %1848 = vmatpush2.msra.mxu0 0.0
    %1849 = vmatprep.subr.mxu0 0.0
    %1850 = vmatpush2.msra.mxu0 0.0
    %1851 = vmatprep.mubr.f32.mxu0 0.0
    %v1852 = vand.u32 %v801, 4294901760
    %1853 = vmatmul.mubr.f32.gmra.mxu0 %v1852
    %v1854 = vpop.f32.mrf.mxu0
    %v1855 = vadd.f32 %v1756, %v1854
    %v1856 = vpop.f32.mrf.mxu0
    %1857 = vmatprep.mubr.f32.mxu0 0.0
    %v1858 = vand.u32 %v804, 4294901760
    %1859 = vmatmul.mubr.f32.gmra.mxu0 %v1858
    %v1860 = vpop.f32.mrf.mxu0
    %v1861 = vadd.f32 %v1764, %v1860
    %v1862 = vpop.f32.mrf.mxu0
    %1863 = vmatprep.mubr.f32.mxu0 0.0
    %v1864 = vand.u32 %v807, 4294901760
    %1865 = vmatmul.mubr.f32.gmra.mxu0 %v1864
    %v1866 = vpop.f32.mrf.mxu0
    %v1867 = vadd.f32 %v1772, %v1866
    %v1868 = vpop.f32.mrf.mxu0
    %1869 = vdwg.mxu0
    %1870 = vmatprep.subr.mxu0 0.0
    %1871 = vmatpush1.msra.mxu0 0.0
    %1872 = vmatprep.subr.mxu0 0.0
    %1873 = vmatpush1.msra.mxu0 0.0
    %1874 = vmatprep.subr.mxu0 0.0
    %1875 = vmatpush1.msra.mxu0 0.0
    %1876 = vmatprep.subr.mxu0 0.0
    %1877 = vmatpush1.msra.mxu0 0.0
    %1878 = vmatprep.subr.mxu0 0.0
    %1879 = vmatpush1.msra.mxu0 0.0
    %1880 = vmatprep.subr.mxu0 0.0
    %1881 = vmatpush1.msra.mxu0 0.0
    %1882 = vmatprep.subr.mxu0 0.0
    %1883 = vmatpush1.msra.mxu0 0.0
    %1884 = vmatprep.subr.mxu0 0.0
    %1885 = vmatpush1.msra.mxu0 0.0
    %1886 = vmatprep.subr.mxu0 0.0
    %1887 = vmatpush1.msra.mxu0 0.0
    %1888 = vmatprep.subr.mxu0 0.0
    %1889 = vmatpush1.msra.mxu0 0.0
    %1890 = vmatprep.subr.mxu0 0.0
    %1891 = vmatpush1.msra.mxu0 0.0
    %1892 = vmatprep.subr.mxu0 0.0
    %1893 = vmatpush1.msra.mxu0 0.0
    %1894 = vmatprep.subr.mxu0 0.0
    %v1895 = vand.u32 %v134, 4294901760
    %1896 = vmatpush1.msra.mxu0 %v1895
    %1897 = vmatprep.subr.mxu0 0.0
    %v1898 = vand.u32 %v133, 4294901760
    %1899 = vmatpush1.msra.mxu0 %v1898
    %1900 = vmatprep.subr.mxu0 0.0
    %v1901 = vand.u32 %v132, 4294901760
    %1902 = vmatpush1.msra.mxu0 %v1901
    %1903 = vmatprep.subr.mxu0 0.0
    %v1904 = vand.u32 %v131, 4294901760
    %1905 = vmatpush1.msra.mxu0 %v1904
    %1906 = vmatprep.subr.mxu0 0.0
    %1907 = vmatpush2.msra.mxu0 0.0
    %1908 = vmatprep.subr.mxu0 0.0
    %1909 = vmatpush2.msra.mxu0 0.0
    %1910 = vmatprep.subr.mxu0 0.0
    %1911 = vmatpush2.msra.mxu0 0.0
    %1912 = vmatprep.subr.mxu0 0.0
    %1913 = vmatpush2.msra.mxu0 0.0
    %1914 = vmatprep.subr.mxu0 0.0
    %1915 = vmatpush2.msra.mxu0 0.0
    %1916 = vmatprep.subr.mxu0 0.0
    %1917 = vmatpush2.msra.mxu0 0.0
    %1918 = vmatprep.subr.mxu0 0.0
    %1919 = vmatpush2.msra.mxu0 0.0
    %1920 = vmatprep.subr.mxu0 0.0
    %1921 = vmatpush2.msra.mxu0 0.0
    %1922 = vmatprep.subr.mxu0 0.0
    %1923 = vmatpush2.msra.mxu0 0.0
    %1924 = vmatprep.subr.mxu0 0.0
    %1925 = vmatpush2.msra.mxu0 0.0
    %1926 = vmatprep.subr.mxu0 0.0
    %1927 = vmatpush2.msra.mxu0 0.0
    %1928 = vmatprep.subr.mxu0 0.0
    %1929 = vmatpush2.msra.mxu0 0.0
    %1930 = vmatprep.subr.mxu0 0.0
    %1931 = vmatpush2.msra.mxu0 0.0
    %1932 = vmatprep.subr.mxu0 0.0
    %1933 = vmatpush2.msra.mxu0 0.0
    %1934 = vmatprep.subr.mxu0 0.0
    %1935 = vmatpush2.msra.mxu0 0.0
    %1936 = vmatprep.subr.mxu0 0.0
    %1937 = vmatpush2.msra.mxu0 0.0
    %1938 = vmatprep.mubr.f32.mxu0 0.0
    %v1939 = vand.u32 %v801, 4294901760
    %1940 = vmatmul.mubr.f32.gmra.mxu0 %v1939
    %v1941 = vpop.f32.mrf.mxu0
    %v1942 = vadd.f32 %v1855, %v1941
    %v1943 = vpop.f32.mrf.mxu0
    %1944 = vmatprep.mubr.f32.mxu0 0.0
    %v1945 = vand.u32 %v804, 4294901760
    %1946 = vmatmul.mubr.f32.gmra.mxu0 %v1945
    %v1947 = vpop.f32.mrf.mxu0
    %v1948 = vadd.f32 %v1861, %v1947
    %v1949 = vpop.f32.mrf.mxu0
    %1950 = vmatprep.mubr.f32.mxu0 0.0
    %v1951 = vand.u32 %v807, 4294901760
    %1952 = vmatmul.mubr.f32.gmra.mxu0 %v1951
    %v1953 = vpop.f32.mrf.mxu0
    %v1954 = vadd.f32 %v1867, %v1953
    %v1955 = vpop.f32.mrf.mxu0
    %1956 = vdwg.mxu0
    %v1958 = vlaneseq
    %v1959 = vshrl.u32 %v1958, 7
    %v1960 = vsub.s32 0, %v1959
    %v1961 = vrot.slane %v140, %v1960
    %1963 = vmatprep.subr.mxu0 0.0
    %1964 = vmatpush1.msra.mxu0 0.0
    %1965 = vmatprep.subr.mxu0 0.0
    %1966 = vmatpush1.msra.mxu0 0.0
    %1967 = vmatprep.subr.mxu0 0.0
    %1968 = vmatpush1.msra.mxu0 0.0
    %1969 = vmatprep.subr.mxu0 0.0
    %1970 = vmatpush1.msra.mxu0 0.0
    %1971 = vmatprep.subr.mxu0 0.0
    %1972 = vmatpush1.msra.mxu0 0.0
    %1973 = vmatprep.subr.mxu0 0.0
    %1974 = vmatpush1.msra.mxu0 0.0
    %1975 = vmatprep.subr.mxu0 0.0
    %1976 = vmatpush1.msra.mxu0 0.0
    %1977 = vmatprep.subr.mxu0 0.0
    %1978 = vmatpush1.msra.mxu0 0.0
    %1979 = vmatprep.subr.mxu0 0.0
    %1980 = vmatpush1.msra.mxu0 0.0
    %1981 = vmatprep.subr.mxu0 0.0
    %1982 = vmatpush1.msra.mxu0 0.0
    %1983 = vmatprep.subr.mxu0 0.0
    %1984 = vmatpush1.msra.mxu0 0.0
    %1985 = vmatprep.subr.mxu0 0.0
    %1986 = vmatpush1.msra.mxu0 0.0
    %1987 = vmatprep.subr.mxu0 0.0
    %v1988 = vand.u32 %v139, 4294901760
    %1989 = vmatpush1.msra.mxu0 %v1988
    %1990 = vmatprep.subr.mxu0 0.0
    %v1991 = vand.u32 %v138, 4294901760
    %1992 = vmatpush1.msra.mxu0 %v1991
    %1993 = vmatprep.subr.mxu0 0.0
    %v1994 = vand.u32 %v137, 4294901760
    %1995 = vmatpush1.msra.mxu0 %v1994
    %1996 = vmatprep.subr.mxu0 0.0
    %v1997 = vand.u32 %v136, 4294901760
    %1998 = vmatpush1.msra.mxu0 %v1997
    %1999 = vmatprep.subr.mxu0 0.0
    %2000 = vmatpush2.msra.mxu0 0.0
    %2001 = vmatprep.subr.mxu0 0.0
    %2002 = vmatpush2.msra.mxu0 0.0
    %2003 = vmatprep.subr.mxu0 0.0
    %2004 = vmatpush2.msra.mxu0 0.0
    %2005 = vmatprep.subr.mxu0 0.0
    %2006 = vmatpush2.msra.mxu0 0.0
    %2007 = vmatprep.subr.mxu0 0.0
    %2008 = vmatpush2.msra.mxu0 0.0
    %2009 = vmatprep.subr.mxu0 0.0
    %2010 = vmatpush2.msra.mxu0 0.0
    %2011 = vmatprep.subr.mxu0 0.0
    %2012 = vmatpush2.msra.mxu0 0.0
    %2013 = vmatprep.subr.mxu0 0.0
    %2014 = vmatpush2.msra.mxu0 0.0
    %2015 = vmatprep.subr.mxu0 0.0
    %2016 = vmatpush2.msra.mxu0 0.0
    %2017 = vmatprep.subr.mxu0 0.0
    %2018 = vmatpush2.msra.mxu0 0.0
    %2019 = vmatprep.subr.mxu0 0.0
    %2020 = vmatpush2.msra.mxu0 0.0
    %2021 = vmatprep.subr.mxu0 0.0
    %2022 = vmatpush2.msra.mxu0 0.0
    %2023 = vmatprep.subr.mxu0 0.0
    %2024 = vmatpush2.msra.mxu0 0.0
    %2025 = vmatprep.subr.mxu0 0.0
    %2026 = vmatpush2.msra.mxu0 0.0
    %2027 = vmatprep.subr.mxu0 0.0
    %2028 = vmatpush2.msra.mxu0 0.0
    %2029 = vmatprep.subr.mxu0 0.0
    %2030 = vmatpush2.msra.mxu0 0.0
    %2031 = vmatprep.mubr.f32.mxu0 0.0
    %v2032 = vand.u32 %v801, 4294901760
    %v2033 = vsub.f32 %v801, %v2032
    %v2034 = vand.u32 %v2033, 4294901760
    %v2035 = vsub.f32 %v2033, %v2034
    %v2036 = vand.u32 %v2035, 4294901760
    %2037 = vmatmul.mubr.f32.gmra.mxu0 %v2036
    %v2038 = vpop.f32.mrf.mxu0
    %v2039 = vadd.f32 %v1961, %v2038
    %v2040 = vpop.f32.mrf.mxu0
    %2041 = vmatprep.mubr.f32.mxu0 0.0
    %v2042 = vand.u32 %v804, 4294901760
    %v2043 = vsub.f32 %v804, %v2042
    %v2044 = vand.u32 %v2043, 4294901760
    %v2045 = vsub.f32 %v2043, %v2044
    %v2046 = vand.u32 %v2045, 4294901760
    %2047 = vmatmul.mubr.f32.gmra.mxu0 %v2046
    %v2048 = vpop.f32.mrf.mxu0
    %v2049 = vadd.f32 %v1961, %v2048
    %v2050 = vpop.f32.mrf.mxu0
    %2051 = vmatprep.mubr.f32.mxu0 0.0
    %v2052 = vand.u32 %v807, 4294901760
    %v2053 = vsub.f32 %v807, %v2052
    %v2054 = vand.u32 %v2053, 4294901760
    %v2055 = vsub.f32 %v2053, %v2054
    %v2056 = vand.u32 %v2055, 4294901760
    %2057 = vmatmul.mubr.f32.gmra.mxu0 %v2056
    %v2058 = vpop.f32.mrf.mxu0
    %v2059 = vadd.f32 %v1961, %v2058
    %v2060 = vpop.f32.mrf.mxu0
    %2061 = vdwg.mxu0
    %2062 = vmatprep.subr.mxu0 0.0
    %2063 = vmatpush1.msra.mxu0 0.0
    %2064 = vmatprep.subr.mxu0 0.0
    %2065 = vmatpush1.msra.mxu0 0.0
    %2066 = vmatprep.subr.mxu0 0.0
    %2067 = vmatpush1.msra.mxu0 0.0
    %2068 = vmatprep.subr.mxu0 0.0
    %2069 = vmatpush1.msra.mxu0 0.0
    %2070 = vmatprep.subr.mxu0 0.0
    %2071 = vmatpush1.msra.mxu0 0.0
    %2072 = vmatprep.subr.mxu0 0.0
    %2073 = vmatpush1.msra.mxu0 0.0
    %2074 = vmatprep.subr.mxu0 0.0
    %2075 = vmatpush1.msra.mxu0 0.0
    %2076 = vmatprep.subr.mxu0 0.0
    %2077 = vmatpush1.msra.mxu0 0.0
    %2078 = vmatprep.subr.mxu0 0.0
    %2079 = vmatpush1.msra.mxu0 0.0
    %2080 = vmatprep.subr.mxu0 0.0
    %2081 = vmatpush1.msra.mxu0 0.0
    %2082 = vmatprep.subr.mxu0 0.0
    %2083 = vmatpush1.msra.mxu0 0.0
    %2084 = vmatprep.subr.mxu0 0.0
    %2085 = vmatpush1.msra.mxu0 0.0
    %2086 = vmatprep.subr.mxu0 0.0
    %v2087 = vand.u32 %v139, 4294901760
    %v2088 = vsub.f32 %v139, %v2087
    %v2089 = vand.u32 %v2088, 4294901760
    %v2090 = vsub.f32 %v2088, %v2089
    %v2091 = vand.u32 %v2090, 4294901760
    %2092 = vmatpush1.msra.mxu0 %v2091
    %2093 = vmatprep.subr.mxu0 0.0
    %v2094 = vand.u32 %v138, 4294901760
    %v2095 = vsub.f32 %v138, %v2094
    %v2096 = vand.u32 %v2095, 4294901760
    %v2097 = vsub.f32 %v2095, %v2096
    %v2098 = vand.u32 %v2097, 4294901760
    %2099 = vmatpush1.msra.mxu0 %v2098
    %2100 = vmatprep.subr.mxu0 0.0
    %v2101 = vand.u32 %v137, 4294901760
    %v2102 = vsub.f32 %v137, %v2101
    %v2103 = vand.u32 %v2102, 4294901760
    %v2104 = vsub.f32 %v2102, %v2103
    %v2105 = vand.u32 %v2104, 4294901760
    %2106 = vmatpush1.msra.mxu0 %v2105
    %2107 = vmatprep.subr.mxu0 0.0
    %v2108 = vand.u32 %v136, 4294901760
    %v2109 = vsub.f32 %v136, %v2108
    %v2110 = vand.u32 %v2109, 4294901760
    %v2111 = vsub.f32 %v2109, %v2110
    %v2112 = vand.u32 %v2111, 4294901760
    %2113 = vmatpush1.msra.mxu0 %v2112
    %2114 = vmatprep.subr.mxu0 0.0
    %2115 = vmatpush2.msra.mxu0 0.0
    %2116 = vmatprep.subr.mxu0 0.0
    %2117 = vmatpush2.msra.mxu0 0.0
    %2118 = vmatprep.subr.mxu0 0.0
    %2119 = vmatpush2.msra.mxu0 0.0
    %2120 = vmatprep.subr.mxu0 0.0
    %2121 = vmatpush2.msra.mxu0 0.0
    %2122 = vmatprep.subr.mxu0 0.0
    %2123 = vmatpush2.msra.mxu0 0.0
    %2124 = vmatprep.subr.mxu0 0.0
    %2125 = vmatpush2.msra.mxu0 0.0
    %2126 = vmatprep.subr.mxu0 0.0
    %2127 = vmatpush2.msra.mxu0 0.0
    %2128 = vmatprep.subr.mxu0 0.0
    %2129 = vmatpush2.msra.mxu0 0.0
    %2130 = vmatprep.subr.mxu0 0.0
    %2131 = vmatpush2.msra.mxu0 0.0
    %2132 = vmatprep.subr.mxu0 0.0
    %2133 = vmatpush2.msra.mxu0 0.0
    %2134 = vmatprep.subr.mxu0 0.0
    %2135 = vmatpush2.msra.mxu0 0.0
    %2136 = vmatprep.subr.mxu0 0.0
    %2137 = vmatpush2.msra.mxu0 0.0
    %2138 = vmatprep.subr.mxu0 0.0
    %2139 = vmatpush2.msra.mxu0 0.0
    %2140 = vmatprep.subr.mxu0 0.0
    %2141 = vmatpush2.msra.mxu0 0.0
    %2142 = vmatprep.subr.mxu0 0.0
    %2143 = vmatpush2.msra.mxu0 0.0
    %2144 = vmatprep.subr.mxu0 0.0
    %2145 = vmatpush2.msra.mxu0 0.0
    %2146 = vmatprep.mubr.f32.mxu0 0.0
    %v2147 = vand.u32 %v801, 4294901760
    %2148 = vmatmul.mubr.f32.gmra.mxu0 %v2147
    %v2149 = vpop.f32.mrf.mxu0
    %v2150 = vadd.f32 %v2039, %v2149
    %v2151 = vpop.f32.mrf.mxu0
    %2152 = vmatprep.mubr.f32.mxu0 0.0
    %v2153 = vand.u32 %v804, 4294901760
    %2154 = vmatmul.mubr.f32.gmra.mxu0 %v2153
    %v2155 = vpop.f32.mrf.mxu0
    %v2156 = vadd.f32 %v2049, %v2155
    %v2157 = vpop.f32.mrf.mxu0
    %2158 = vmatprep.mubr.f32.mxu0 0.0
    %v2159 = vand.u32 %v807, 4294901760
    %2160 = vmatmul.mubr.f32.gmra.mxu0 %v2159
    %v2161 = vpop.f32.mrf.mxu0
    %v2162 = vadd.f32 %v2059, %v2161
    %v2163 = vpop.f32.mrf.mxu0
    %2164 = vdwg.mxu0
    %2165 = vmatprep.subr.mxu0 0.0
    %2166 = vmatpush1.msra.mxu0 0.0
    %2167 = vmatprep.subr.mxu0 0.0
    %2168 = vmatpush1.msra.mxu0 0.0
    %2169 = vmatprep.subr.mxu0 0.0
    %2170 = vmatpush1.msra.mxu0 0.0
    %2171 = vmatprep.subr.mxu0 0.0
    %2172 = vmatpush1.msra.mxu0 0.0
    %2173 = vmatprep.subr.mxu0 0.0
    %2174 = vmatpush1.msra.mxu0 0.0
    %2175 = vmatprep.subr.mxu0 0.0
    %2176 = vmatpush1.msra.mxu0 0.0
    %2177 = vmatprep.subr.mxu0 0.0
    %2178 = vmatpush1.msra.mxu0 0.0
    %2179 = vmatprep.subr.mxu0 0.0
    %2180 = vmatpush1.msra.mxu0 0.0
    %2181 = vmatprep.subr.mxu0 0.0
    %2182 = vmatpush1.msra.mxu0 0.0
    %2183 = vmatprep.subr.mxu0 0.0
    %2184 = vmatpush1.msra.mxu0 0.0
    %2185 = vmatprep.subr.mxu0 0.0
    %2186 = vmatpush1.msra.mxu0 0.0
    %2187 = vmatprep.subr.mxu0 0.0
    %2188 = vmatpush1.msra.mxu0 0.0
    %2189 = vmatprep.subr.mxu0 0.0
    %v2190 = vand.u32 %v139, 4294901760
    %v2191 = vsub.f32 %v139, %v2190
    %2192 = vmatpush1.msra.mxu0 %v2191
    %2193 = vmatprep.subr.mxu0 0.0
    %v2194 = vand.u32 %v138, 4294901760
    %v2195 = vsub.f32 %v138, %v2194
    %2196 = vmatpush1.msra.mxu0 %v2195
    %2197 = vmatprep.subr.mxu0 0.0
    %v2198 = vand.u32 %v137, 4294901760
    %v2199 = vsub.f32 %v137, %v2198
    %2200 = vmatpush1.msra.mxu0 %v2199
    %2201 = vmatprep.subr.mxu0 0.0
    %v2202 = vand.u32 %v136, 4294901760
    %v2203 = vsub.f32 %v136, %v2202
    %2204 = vmatpush1.msra.mxu0 %v2203
    %2205 = vmatprep.subr.mxu0 0.0
    %2206 = vmatpush2.msra.mxu0 0.0
    %2207 = vmatprep.subr.mxu0 0.0
    %2208 = vmatpush2.msra.mxu0 0.0
    %2209 = vmatprep.subr.mxu0 0.0
    %2210 = vmatpush2.msra.mxu0 0.0
    %2211 = vmatprep.subr.mxu0 0.0
    %2212 = vmatpush2.msra.mxu0 0.0
    %2213 = vmatprep.subr.mxu0 0.0
    %2214 = vmatpush2.msra.mxu0 0.0
    %2215 = vmatprep.subr.mxu0 0.0
    %2216 = vmatpush2.msra.mxu0 0.0
    %2217 = vmatprep.subr.mxu0 0.0
    %2218 = vmatpush2.msra.mxu0 0.0
    %2219 = vmatprep.subr.mxu0 0.0
    %2220 = vmatpush2.msra.mxu0 0.0
    %2221 = vmatprep.subr.mxu0 0.0
    %2222 = vmatpush2.msra.mxu0 0.0
    %2223 = vmatprep.subr.mxu0 0.0
    %2224 = vmatpush2.msra.mxu0 0.0
    %2225 = vmatprep.subr.mxu0 0.0
    %2226 = vmatpush2.msra.mxu0 0.0
    %2227 = vmatprep.subr.mxu0 0.0
    %2228 = vmatpush2.msra.mxu0 0.0
    %2229 = vmatprep.subr.mxu0 0.0
    %2230 = vmatpush2.msra.mxu0 0.0
    %2231 = vmatprep.subr.mxu0 0.0
    %2232 = vmatpush2.msra.mxu0 0.0
    %2233 = vmatprep.subr.mxu0 0.0
    %2234 = vmatpush2.msra.mxu0 0.0
    %2235 = vmatprep.subr.mxu0 0.0
    %2236 = vmatpush2.msra.mxu0 0.0
    %2237 = vmatprep.mubr.f32.mxu0 0.0
    %v2238 = vand.u32 %v801, 4294901760
    %v2239 = vsub.f32 %v801, %v2238
    %2240 = vmatmul.mubr.f32.gmra.mxu0 %v2239
    %v2241 = vpop.f32.mrf.mxu0
    %v2242 = vadd.f32 %v2150, %v2241
    %v2243 = vpop.f32.mrf.mxu0
    %2244 = vmatprep.mubr.f32.mxu0 0.0
    %v2245 = vand.u32 %v804, 4294901760
    %v2246 = vsub.f32 %v804, %v2245
    %2247 = vmatmul.mubr.f32.gmra.mxu0 %v2246
    %v2248 = vpop.f32.mrf.mxu0
    %v2249 = vadd.f32 %v2156, %v2248
    %v2250 = vpop.f32.mrf.mxu0
    %2251 = vmatprep.mubr.f32.mxu0 0.0
    %v2252 = vand.u32 %v807, 4294901760
    %v2253 = vsub.f32 %v807, %v2252
    %2254 = vmatmul.mubr.f32.gmra.mxu0 %v2253
    %v2255 = vpop.f32.mrf.mxu0
    %v2256 = vadd.f32 %v2162, %v2255
    %v2257 = vpop.f32.mrf.mxu0
    %2258 = vdwg.mxu0
    %2259 = vmatprep.subr.mxu0 0.0
    %2260 = vmatpush1.msra.mxu0 0.0
    %2261 = vmatprep.subr.mxu0 0.0
    %2262 = vmatpush1.msra.mxu0 0.0
    %2263 = vmatprep.subr.mxu0 0.0
    %2264 = vmatpush1.msra.mxu0 0.0
    %2265 = vmatprep.subr.mxu0 0.0
    %2266 = vmatpush1.msra.mxu0 0.0
    %2267 = vmatprep.subr.mxu0 0.0
    %2268 = vmatpush1.msra.mxu0 0.0
    %2269 = vmatprep.subr.mxu0 0.0
    %2270 = vmatpush1.msra.mxu0 0.0
    %2271 = vmatprep.subr.mxu0 0.0
    %2272 = vmatpush1.msra.mxu0 0.0
    %2273 = vmatprep.subr.mxu0 0.0
    %2274 = vmatpush1.msra.mxu0 0.0
    %2275 = vmatprep.subr.mxu0 0.0
    %2276 = vmatpush1.msra.mxu0 0.0
    %2277 = vmatprep.subr.mxu0 0.0
    %2278 = vmatpush1.msra.mxu0 0.0
    %2279 = vmatprep.subr.mxu0 0.0
    %2280 = vmatpush1.msra.mxu0 0.0
    %2281 = vmatprep.subr.mxu0 0.0
    %2282 = vmatpush1.msra.mxu0 0.0
    %2283 = vmatprep.subr.mxu0 0.0
    %v2284 = vand.u32 %v139, 4294901760
    %2285 = vmatpush1.msra.mxu0 %v2284
    %2286 = vmatprep.subr.mxu0 0.0
    %v2287 = vand.u32 %v138, 4294901760
    %2288 = vmatpush1.msra.mxu0 %v2287
    %2289 = vmatprep.subr.mxu0 0.0
    %v2290 = vand.u32 %v137, 4294901760
    %2291 = vmatpush1.msra.mxu0 %v2290
    %2292 = vmatprep.subr.mxu0 0.0
    %v2293 = vand.u32 %v136, 4294901760
    %2294 = vmatpush1.msra.mxu0 %v2293
    %2295 = vmatprep.subr.mxu0 0.0
    %2296 = vmatpush2.msra.mxu0 0.0
    %2297 = vmatprep.subr.mxu0 0.0
    %2298 = vmatpush2.msra.mxu0 0.0
    %2299 = vmatprep.subr.mxu0 0.0
    %2300 = vmatpush2.msra.mxu0 0.0
    %2301 = vmatprep.subr.mxu0 0.0
    %2302 = vmatpush2.msra.mxu0 0.0
    %2303 = vmatprep.subr.mxu0 0.0
    %2304 = vmatpush2.msra.mxu0 0.0
    %2305 = vmatprep.subr.mxu0 0.0
    %2306 = vmatpush2.msra.mxu0 0.0
    %2307 = vmatprep.subr.mxu0 0.0
    %2308 = vmatpush2.msra.mxu0 0.0
    %2309 = vmatprep.subr.mxu0 0.0
    %2310 = vmatpush2.msra.mxu0 0.0
    %2311 = vmatprep.subr.mxu0 0.0
    %2312 = vmatpush2.msra.mxu0 0.0
    %2313 = vmatprep.subr.mxu0 0.0
    %2314 = vmatpush2.msra.mxu0 0.0
    %2315 = vmatprep.subr.mxu0 0.0
    %2316 = vmatpush2.msra.mxu0 0.0
    %2317 = vmatprep.subr.mxu0 0.0
    %2318 = vmatpush2.msra.mxu0 0.0
    %2319 = vmatprep.subr.mxu0 0.0
    %2320 = vmatpush2.msra.mxu0 0.0
    %2321 = vmatprep.subr.mxu0 0.0
    %2322 = vmatpush2.msra.mxu0 0.0
    %2323 = vmatprep.subr.mxu0 0.0
    %2324 = vmatpush2.msra.mxu0 0.0
    %2325 = vmatprep.subr.mxu0 0.0
    %2326 = vmatpush2.msra.mxu0 0.0
    %2327 = vmatprep.mubr.f32.mxu0 0.0
    %v2328 = vand.u32 %v801, 4294901760
    %v2329 = vsub.f32 %v801, %v2328
    %v2330 = vand.u32 %v2329, 4294901760
    %2331 = vmatmul.mubr.f32.gmra.mxu0 %v2330
    %v2332 = vpop.f32.mrf.mxu0
    %v2333 = vadd.f32 %v2242, %v2332
    %v2334 = vpop.f32.mrf.mxu0
    %2335 = vmatprep.mubr.f32.mxu0 0.0
    %v2336 = vand.u32 %v804, 4294901760
    %v2337 = vsub.f32 %v804, %v2336
    %v2338 = vand.u32 %v2337, 4294901760
    %2339 = vmatmul.mubr.f32.gmra.mxu0 %v2338
    %v2340 = vpop.f32.mrf.mxu0
    %v2341 = vadd.f32 %v2249, %v2340
    %v2342 = vpop.f32.mrf.mxu0
    %2343 = vmatprep.mubr.f32.mxu0 0.0
    %v2344 = vand.u32 %v807, 4294901760
    %v2345 = vsub.f32 %v807, %v2344
    %v2346 = vand.u32 %v2345, 4294901760
    %2347 = vmatmul.mubr.f32.gmra.mxu0 %v2346
    %v2348 = vpop.f32.mrf.mxu0
    %v2349 = vadd.f32 %v2256, %v2348
    %v2350 = vpop.f32.mrf.mxu0
    %2351 = vdwg.mxu0
    %2352 = vmatprep.subr.mxu0 0.0
    %2353 = vmatpush1.msra.mxu0 0.0
    %2354 = vmatprep.subr.mxu0 0.0
    %2355 = vmatpush1.msra.mxu0 0.0
    %2356 = vmatprep.subr.mxu0 0.0
    %2357 = vmatpush1.msra.mxu0 0.0
    %2358 = vmatprep.subr.mxu0 0.0
    %2359 = vmatpush1.msra.mxu0 0.0
    %2360 = vmatprep.subr.mxu0 0.0
    %2361 = vmatpush1.msra.mxu0 0.0
    %2362 = vmatprep.subr.mxu0 0.0
    %2363 = vmatpush1.msra.mxu0 0.0
    %2364 = vmatprep.subr.mxu0 0.0
    %2365 = vmatpush1.msra.mxu0 0.0
    %2366 = vmatprep.subr.mxu0 0.0
    %2367 = vmatpush1.msra.mxu0 0.0
    %2368 = vmatprep.subr.mxu0 0.0
    %2369 = vmatpush1.msra.mxu0 0.0
    %2370 = vmatprep.subr.mxu0 0.0
    %2371 = vmatpush1.msra.mxu0 0.0
    %2372 = vmatprep.subr.mxu0 0.0
    %2373 = vmatpush1.msra.mxu0 0.0
    %2374 = vmatprep.subr.mxu0 0.0
    %2375 = vmatpush1.msra.mxu0 0.0
    %2376 = vmatprep.subr.mxu0 0.0
    %v2377 = vand.u32 %v139, 4294901760
    %v2378 = vsub.f32 %v139, %v2377
    %v2379 = vand.u32 %v2378, 4294901760
    %2380 = vmatpush1.msra.mxu0 %v2379
    %2381 = vmatprep.subr.mxu0 0.0
    %v2382 = vand.u32 %v138, 4294901760
    %v2383 = vsub.f32 %v138, %v2382
    %v2384 = vand.u32 %v2383, 4294901760
    %2385 = vmatpush1.msra.mxu0 %v2384
    %2386 = vmatprep.subr.mxu0 0.0
    %v2387 = vand.u32 %v137, 4294901760
    %v2388 = vsub.f32 %v137, %v2387
    %v2389 = vand.u32 %v2388, 4294901760
    %2390 = vmatpush1.msra.mxu0 %v2389
    %2391 = vmatprep.subr.mxu0 0.0
    %v2392 = vand.u32 %v136, 4294901760
    %v2393 = vsub.f32 %v136, %v2392
    %v2394 = vand.u32 %v2393, 4294901760
    %2395 = vmatpush1.msra.mxu0 %v2394
    %2396 = vmatprep.subr.mxu0 0.0
    %2397 = vmatpush2.msra.mxu0 0.0
    %2398 = vmatprep.subr.mxu0 0.0
    %2399 = vmatpush2.msra.mxu0 0.0
    %2400 = vmatprep.subr.mxu0 0.0
    %2401 = vmatpush2.msra.mxu0 0.0
    %2402 = vmatprep.subr.mxu0 0.0
    %2403 = vmatpush2.msra.mxu0 0.0
    %2404 = vmatprep.subr.mxu0 0.0
    %2405 = vmatpush2.msra.mxu0 0.0
    %2406 = vmatprep.subr.mxu0 0.0
    %2407 = vmatpush2.msra.mxu0 0.0
    %2408 = vmatprep.subr.mxu0 0.0
    %2409 = vmatpush2.msra.mxu0 0.0
    %2410 = vmatprep.subr.mxu0 0.0
    %2411 = vmatpush2.msra.mxu0 0.0
    %2412 = vmatprep.subr.mxu0 0.0
    %2413 = vmatpush2.msra.mxu0 0.0
    %2414 = vmatprep.subr.mxu0 0.0
    %2415 = vmatpush2.msra.mxu0 0.0
    %2416 = vmatprep.subr.mxu0 0.0
    %2417 = vmatpush2.msra.mxu0 0.0
    %2418 = vmatprep.subr.mxu0 0.0
    %2419 = vmatpush2.msra.mxu0 0.0
    %2420 = vmatprep.subr.mxu0 0.0
    %2421 = vmatpush2.msra.mxu0 0.0
    %2422 = vmatprep.subr.mxu0 0.0
    %2423 = vmatpush2.msra.mxu0 0.0
    %2424 = vmatprep.subr.mxu0 0.0
    %2425 = vmatpush2.msra.mxu0 0.0
    %2426 = vmatprep.subr.mxu0 0.0
    %2427 = vmatpush2.msra.mxu0 0.0
    %2428 = vmatprep.mubr.f32.mxu0 0.0
    %v2429 = vand.u32 %v801, 4294901760
    %2430 = vmatmul.mubr.f32.gmra.mxu0 %v2429
    %v2431 = vpop.f32.mrf.mxu0
    %v2432 = vadd.f32 %v2333, %v2431
    %v2433 = vpop.f32.mrf.mxu0
    %2434 = vmatprep.mubr.f32.mxu0 0.0
    %v2435 = vand.u32 %v804, 4294901760
    %2436 = vmatmul.mubr.f32.gmra.mxu0 %v2435
    %v2437 = vpop.f32.mrf.mxu0
    %v2438 = vadd.f32 %v2341, %v2437
    %v2439 = vpop.f32.mrf.mxu0
    %2440 = vmatprep.mubr.f32.mxu0 0.0
    %v2441 = vand.u32 %v807, 4294901760
    %2442 = vmatmul.mubr.f32.gmra.mxu0 %v2441
    %v2443 = vpop.f32.mrf.mxu0
    %v2444 = vadd.f32 %v2349, %v2443
    %v2445 = vpop.f32.mrf.mxu0
    %2446 = vdwg.mxu0
    %2447 = vmatprep.subr.mxu0 0.0
    %2448 = vmatpush1.msra.mxu0 0.0
    %2449 = vmatprep.subr.mxu0 0.0
    %2450 = vmatpush1.msra.mxu0 0.0
    %2451 = vmatprep.subr.mxu0 0.0
    %2452 = vmatpush1.msra.mxu0 0.0
    %2453 = vmatprep.subr.mxu0 0.0
    %2454 = vmatpush1.msra.mxu0 0.0
    %2455 = vmatprep.subr.mxu0 0.0
    %2456 = vmatpush1.msra.mxu0 0.0
    %2457 = vmatprep.subr.mxu0 0.0
    %2458 = vmatpush1.msra.mxu0 0.0
    %2459 = vmatprep.subr.mxu0 0.0
    %2460 = vmatpush1.msra.mxu0 0.0
    %2461 = vmatprep.subr.mxu0 0.0
    %2462 = vmatpush1.msra.mxu0 0.0
    %2463 = vmatprep.subr.mxu0 0.0
    %2464 = vmatpush1.msra.mxu0 0.0
    %2465 = vmatprep.subr.mxu0 0.0
    %2466 = vmatpush1.msra.mxu0 0.0
    %2467 = vmatprep.subr.mxu0 0.0
    %2468 = vmatpush1.msra.mxu0 0.0
    %2469 = vmatprep.subr.mxu0 0.0
    %2470 = vmatpush1.msra.mxu0 0.0
    %2471 = vmatprep.subr.mxu0 0.0
    %v2472 = vand.u32 %v139, 4294901760
    %2473 = vmatpush1.msra.mxu0 %v2472
    %2474 = vmatprep.subr.mxu0 0.0
    %v2475 = vand.u32 %v138, 4294901760
    %2476 = vmatpush1.msra.mxu0 %v2475
    %2477 = vmatprep.subr.mxu0 0.0
    %v2478 = vand.u32 %v137, 4294901760
    %2479 = vmatpush1.msra.mxu0 %v2478
    %2480 = vmatprep.subr.mxu0 0.0
    %v2481 = vand.u32 %v136, 4294901760
    %2482 = vmatpush1.msra.mxu0 %v2481
    %2483 = vmatprep.subr.mxu0 0.0
    %2484 = vmatpush2.msra.mxu0 0.0
    %2485 = vmatprep.subr.mxu0 0.0
    %2486 = vmatpush2.msra.mxu0 0.0
    %2487 = vmatprep.subr.mxu0 0.0
    %2488 = vmatpush2.msra.mxu0 0.0
    %2489 = vmatprep.subr.mxu0 0.0
    %2490 = vmatpush2.msra.mxu0 0.0
    %2491 = vmatprep.subr.mxu0 0.0
    %2492 = vmatpush2.msra.mxu0 0.0
    %2493 = vmatprep.subr.mxu0 0.0
    %2494 = vmatpush2.msra.mxu0 0.0
    %2495 = vmatprep.subr.mxu0 0.0
    %2496 = vmatpush2.msra.mxu0 0.0
    %2497 = vmatprep.subr.mxu0 0.0
    %2498 = vmatpush2.msra.mxu0 0.0
    %2499 = vmatprep.subr.mxu0 0.0
    %2500 = vmatpush2.msra.mxu0 0.0
    %2501 = vmatprep.subr.mxu0 0.0
    %2502 = vmatpush2.msra.mxu0 0.0
    %2503 = vmatprep.subr.mxu0 0.0
    %2504 = vmatpush2.msra.mxu0 0.0
    %2505 = vmatprep.subr.mxu0 0.0
    %2506 = vmatpush2.msra.mxu0 0.0
    %2507 = vmatprep.subr.mxu0 0.0
    %2508 = vmatpush2.msra.mxu0 0.0
    %2509 = vmatprep.subr.mxu0 0.0
    %2510 = vmatpush2.msra.mxu0 0.0
    %2511 = vmatprep.subr.mxu0 0.0
    %2512 = vmatpush2.msra.mxu0 0.0
    %2513 = vmatprep.subr.mxu0 0.0
    %2514 = vmatpush2.msra.mxu0 0.0
    %2515 = vmatprep.mubr.f32.mxu0 0.0
    %v2516 = vand.u32 %v801, 4294901760
    %2517 = vmatmul.mubr.f32.gmra.mxu0 %v2516
    %v2518 = vpop.f32.mrf.mxu0
    %v2519 = vadd.f32 %v2432, %v2518
    %v2520 = vpop.f32.mrf.mxu0
    %2521 = vmatprep.mubr.f32.mxu0 0.0
    %v2522 = vand.u32 %v804, 4294901760
    %2523 = vmatmul.mubr.f32.gmra.mxu0 %v2522
    %v2524 = vpop.f32.mrf.mxu0
    %v2525 = vadd.f32 %v2438, %v2524
    %v2526 = vpop.f32.mrf.mxu0
    %2527 = vmatprep.mubr.f32.mxu0 0.0
    %v2528 = vand.u32 %v807, 4294901760
    %2529 = vmatmul.mubr.f32.gmra.mxu0 %v2528
    %v2530 = vpop.f32.mrf.mxu0
    %v2531 = vadd.f32 %v2444, %v2530
    %v2532 = vpop.f32.mrf.mxu0
    %2533 = vdwg.mxu0
    %v2535 = vsel %vm154, %v1365, 0
    %v2538 = vsel %vm154, %v1371, 0
    %v2541 = vsel %vm154, %v1377, 0
    %v2544 = vsel %vm154, %v1942, 0
    %v2547 = vsel %vm154, %v1948, 0
    %v2550 = vsel %vm154, %v1954, 0
    %2552 = vmatprep.subr.mxu0 0.0
    %2553 = vmatpush1.xpose.msra.mxu0 0.0
    %2554 = vmatprep.subr.mxu0 0.0
    %2555 = vmatpush1.xpose.msra.mxu0 0.0
    %2556 = vmatprep.subr.mxu0 0.0
    %2557 = vmatpush1.xpose.msra.mxu0 0.0
    %2558 = vmatprep.subr.mxu0 0.0
    %2559 = vmatpush1.xpose.msra.mxu0 0.0
    %2560 = vmatprep.subr.mxu0 0.0
    %2561 = vmatpush1.xpose.msra.mxu0 0.0
    %2562 = vmatprep.subr.mxu0 0.0
    %2563 = vmatpush1.xpose.msra.mxu0 0.0
    %2564 = vmatprep.subr.mxu0 0.0
    %2565 = vmatpush1.xpose.msra.mxu0 0.0
    %2566 = vmatprep.subr.mxu0 0.0
    %2567 = vmatpush1.xpose.msra.mxu0 0.0
    %2568 = vmatprep.subr.mxu0 0.0
    %2569 = vmatpush1.xpose.msra.mxu0 0.0
    %2570 = vmatprep.subr.mxu0 0.0
    %2571 = vmatpush1.xpose.msra.mxu0 0.0
    %2572 = vmatprep.subr.mxu0 0.0
    %2573 = vmatpush1.xpose.msra.mxu0 0.0
    %2574 = vmatprep.subr.mxu0 0.0
    %2575 = vmatpush1.xpose.msra.mxu0 0.0
    %2576 = vmatprep.subr.mxu0 0.0
    %2577 = vmatpush1.xpose.msra.mxu0 0.0
    %2578 = vmatprep.subr.mxu0 0.0
    %v2579 = vand.u32 %v2550, 4294901760
    %2580 = vmatpush1.xpose.msra.mxu0 %v2579
    %2581 = vmatprep.subr.mxu0 0.0
    %v2582 = vand.u32 %v2547, 4294901760
    %2583 = vmatpush1.xpose.msra.mxu0 %v2582
    %2584 = vmatprep.subr.mxu0 0.0
    %v2585 = vand.u32 %v2544, 4294901760
    %2586 = vmatpush1.xpose.msra.mxu0 %v2585
    %2587 = vmatprep.subr.mxu0 0.0
    %2588 = vmatpush2.xpose.msra.mxu0 0.0
    %2589 = vmatprep.subr.mxu0 0.0
    %2590 = vmatpush2.xpose.msra.mxu0 0.0
    %2591 = vmatprep.subr.mxu0 0.0
    %2592 = vmatpush2.xpose.msra.mxu0 0.0
    %2593 = vmatprep.subr.mxu0 0.0
    %2594 = vmatpush2.xpose.msra.mxu0 0.0
    %2595 = vmatprep.subr.mxu0 0.0
    %2596 = vmatpush2.xpose.msra.mxu0 0.0
    %2597 = vmatprep.subr.mxu0 0.0
    %2598 = vmatpush2.xpose.msra.mxu0 0.0
    %2599 = vmatprep.subr.mxu0 0.0
    %2600 = vmatpush2.xpose.msra.mxu0 0.0
    %2601 = vmatprep.subr.mxu0 0.0
    %2602 = vmatpush2.xpose.msra.mxu0 0.0
    %2603 = vmatprep.subr.mxu0 0.0
    %2604 = vmatpush2.xpose.msra.mxu0 0.0
    %2605 = vmatprep.subr.mxu0 0.0
    %2606 = vmatpush2.xpose.msra.mxu0 0.0
    %2607 = vmatprep.subr.mxu0 0.0
    %2608 = vmatpush2.xpose.msra.mxu0 0.0
    %2609 = vmatprep.subr.mxu0 0.0
    %2610 = vmatpush2.xpose.msra.mxu0 0.0
    %2611 = vmatprep.subr.mxu0 0.0
    %2612 = vmatpush2.xpose.msra.mxu0 0.0
    %2613 = vmatprep.subr.mxu0 0.0
    %2614 = vmatpush2.xpose.msra.mxu0 0.0
    %2615 = vmatprep.subr.mxu0 0.0
    %2616 = vmatpush2.xpose.msra.mxu0 0.0
    %2617 = vmatprep.subr.mxu0 0.0
    %2618 = vmatpush2.xpose.msra.mxu0 0.0
    %2619 = vmatprep.mubr.f32.mxu0 0.0
    %v2620 = vand.u32 %v2535, 4294901760
    %v2621 = vsub.f32 %v2535, %v2620
    %v2622 = vand.u32 %v2621, 4294901760
    %v2623 = vsub.f32 %v2621, %v2622
    %v2624 = vand.u32 %v2623, 4294901760
    %2625 = vmatmul.mubr.f32.gmra.mxu0 %v2624
    %v2626 = vpop.f32.mrf.mxu0
    %v2627 = vadd.f32 0.0, %v2626
    %v2628 = vpop.f32.mrf.mxu0
    %2629 = vmatprep.mubr.f32.mxu0 0.0
    %v2630 = vand.u32 %v2538, 4294901760
    %v2631 = vsub.f32 %v2538, %v2630
    %v2632 = vand.u32 %v2631, 4294901760
    %v2633 = vsub.f32 %v2631, %v2632
    %v2634 = vand.u32 %v2633, 4294901760
    %2635 = vmatmul.mubr.f32.gmra.mxu0 %v2634
    %v2636 = vpop.f32.mrf.mxu0
    %v2637 = vadd.f32 0.0, %v2636
    %v2638 = vpop.f32.mrf.mxu0
    %2639 = vmatprep.mubr.f32.mxu0 0.0
    %v2640 = vand.u32 %v2541, 4294901760
    %v2641 = vsub.f32 %v2541, %v2640
    %v2642 = vand.u32 %v2641, 4294901760
    %v2643 = vsub.f32 %v2641, %v2642
    %v2644 = vand.u32 %v2643, 4294901760
    %2645 = vmatmul.mubr.f32.gmra.mxu0 %v2644
    %v2646 = vpop.f32.mrf.mxu0
    %v2647 = vadd.f32 0.0, %v2646
    %v2648 = vpop.f32.mrf.mxu0
    %2649 = vdwg.mxu0
    %2650 = vmatprep.subr.mxu0 0.0
    %2651 = vmatpush1.xpose.msra.mxu0 0.0
    %2652 = vmatprep.subr.mxu0 0.0
    %2653 = vmatpush1.xpose.msra.mxu0 0.0
    %2654 = vmatprep.subr.mxu0 0.0
    %2655 = vmatpush1.xpose.msra.mxu0 0.0
    %2656 = vmatprep.subr.mxu0 0.0
    %2657 = vmatpush1.xpose.msra.mxu0 0.0
    %2658 = vmatprep.subr.mxu0 0.0
    %2659 = vmatpush1.xpose.msra.mxu0 0.0
    %2660 = vmatprep.subr.mxu0 0.0
    %2661 = vmatpush1.xpose.msra.mxu0 0.0
    %2662 = vmatprep.subr.mxu0 0.0
    %2663 = vmatpush1.xpose.msra.mxu0 0.0
    %2664 = vmatprep.subr.mxu0 0.0
    %2665 = vmatpush1.xpose.msra.mxu0 0.0
    %2666 = vmatprep.subr.mxu0 0.0
    %2667 = vmatpush1.xpose.msra.mxu0 0.0
    %2668 = vmatprep.subr.mxu0 0.0
    %2669 = vmatpush1.xpose.msra.mxu0 0.0
    %2670 = vmatprep.subr.mxu0 0.0
    %2671 = vmatpush1.xpose.msra.mxu0 0.0
    %2672 = vmatprep.subr.mxu0 0.0
    %2673 = vmatpush1.xpose.msra.mxu0 0.0
    %2674 = vmatprep.subr.mxu0 0.0
    %2675 = vmatpush1.xpose.msra.mxu0 0.0
    %2676 = vmatprep.subr.mxu0 0.0
    %v2677 = vand.u32 %v2550, 4294901760
    %v2678 = vsub.f32 %v2550, %v2677
    %v2679 = vand.u32 %v2678, 4294901760
    %v2680 = vsub.f32 %v2678, %v2679
    %v2681 = vand.u32 %v2680, 4294901760
    %2682 = vmatpush1.xpose.msra.mxu0 %v2681
    %2683 = vmatprep.subr.mxu0 0.0
    %v2684 = vand.u32 %v2547, 4294901760
    %v2685 = vsub.f32 %v2547, %v2684
    %v2686 = vand.u32 %v2685, 4294901760
    %v2687 = vsub.f32 %v2685, %v2686
    %v2688 = vand.u32 %v2687, 4294901760
    %2689 = vmatpush1.xpose.msra.mxu0 %v2688
    %2690 = vmatprep.subr.mxu0 0.0
    %v2691 = vand.u32 %v2544, 4294901760
    %v2692 = vsub.f32 %v2544, %v2691
    %v2693 = vand.u32 %v2692, 4294901760
    %v2694 = vsub.f32 %v2692, %v2693
    %v2695 = vand.u32 %v2694, 4294901760
    %2696 = vmatpush1.xpose.msra.mxu0 %v2695
    %2697 = vmatprep.subr.mxu0 0.0
    %2698 = vmatpush2.xpose.msra.mxu0 0.0
    %2699 = vmatprep.subr.mxu0 0.0
    %2700 = vmatpush2.xpose.msra.mxu0 0.0
    %2701 = vmatprep.subr.mxu0 0.0
    %2702 = vmatpush2.xpose.msra.mxu0 0.0
    %2703 = vmatprep.subr.mxu0 0.0
    %2704 = vmatpush2.xpose.msra.mxu0 0.0
    %2705 = vmatprep.subr.mxu0 0.0
    %2706 = vmatpush2.xpose.msra.mxu0 0.0
    %2707 = vmatprep.subr.mxu0 0.0
    %2708 = vmatpush2.xpose.msra.mxu0 0.0
    %2709 = vmatprep.subr.mxu0 0.0
    %2710 = vmatpush2.xpose.msra.mxu0 0.0
    %2711 = vmatprep.subr.mxu0 0.0
    %2712 = vmatpush2.xpose.msra.mxu0 0.0
    %2713 = vmatprep.subr.mxu0 0.0
    %2714 = vmatpush2.xpose.msra.mxu0 0.0
    %2715 = vmatprep.subr.mxu0 0.0
    %2716 = vmatpush2.xpose.msra.mxu0 0.0
    %2717 = vmatprep.subr.mxu0 0.0
    %2718 = vmatpush2.xpose.msra.mxu0 0.0
    %2719 = vmatprep.subr.mxu0 0.0
    %2720 = vmatpush2.xpose.msra.mxu0 0.0
    %2721 = vmatprep.subr.mxu0 0.0
    %2722 = vmatpush2.xpose.msra.mxu0 0.0
    %2723 = vmatprep.subr.mxu0 0.0
    %2724 = vmatpush2.xpose.msra.mxu0 0.0
    %2725 = vmatprep.subr.mxu0 0.0
    %2726 = vmatpush2.xpose.msra.mxu0 0.0
    %2727 = vmatprep.subr.mxu0 0.0
    %2728 = vmatpush2.xpose.msra.mxu0 0.0
    %2729 = vmatprep.mubr.f32.mxu0 0.0
    %v2730 = vand.u32 %v2535, 4294901760
    %2731 = vmatmul.mubr.f32.gmra.mxu0 %v2730
    %v2732 = vpop.f32.mrf.mxu0
    %v2733 = vadd.f32 %v2627, %v2732
    %v2734 = vpop.f32.mrf.mxu0
    %2735 = vmatprep.mubr.f32.mxu0 0.0
    %v2736 = vand.u32 %v2538, 4294901760
    %2737 = vmatmul.mubr.f32.gmra.mxu0 %v2736
    %v2738 = vpop.f32.mrf.mxu0
    %v2739 = vadd.f32 %v2637, %v2738
    %v2740 = vpop.f32.mrf.mxu0
    %2741 = vmatprep.mubr.f32.mxu0 0.0
    %v2742 = vand.u32 %v2541, 4294901760
    %2743 = vmatmul.mubr.f32.gmra.mxu0 %v2742
    %v2744 = vpop.f32.mrf.mxu0
    %v2745 = vadd.f32 %v2647, %v2744
    %v2746 = vpop.f32.mrf.mxu0
    %2747 = vdwg.mxu0
    %2748 = vmatprep.subr.mxu0 0.0
    %2749 = vmatpush1.xpose.msra.mxu0 0.0
    %2750 = vmatprep.subr.mxu0 0.0
    %2751 = vmatpush1.xpose.msra.mxu0 0.0
    %2752 = vmatprep.subr.mxu0 0.0
    %2753 = vmatpush1.xpose.msra.mxu0 0.0
    %2754 = vmatprep.subr.mxu0 0.0
    %2755 = vmatpush1.xpose.msra.mxu0 0.0
    %2756 = vmatprep.subr.mxu0 0.0
    %2757 = vmatpush1.xpose.msra.mxu0 0.0
    %2758 = vmatprep.subr.mxu0 0.0
    %2759 = vmatpush1.xpose.msra.mxu0 0.0
    %2760 = vmatprep.subr.mxu0 0.0
    %2761 = vmatpush1.xpose.msra.mxu0 0.0
    %2762 = vmatprep.subr.mxu0 0.0
    %2763 = vmatpush1.xpose.msra.mxu0 0.0
    %2764 = vmatprep.subr.mxu0 0.0
    %2765 = vmatpush1.xpose.msra.mxu0 0.0
    %2766 = vmatprep.subr.mxu0 0.0
    %2767 = vmatpush1.xpose.msra.mxu0 0.0
    %2768 = vmatprep.subr.mxu0 0.0
    %2769 = vmatpush1.xpose.msra.mxu0 0.0
    %2770 = vmatprep.subr.mxu0 0.0
    %2771 = vmatpush1.xpose.msra.mxu0 0.0
    %2772 = vmatprep.subr.mxu0 0.0
    %2773 = vmatpush1.xpose.msra.mxu0 0.0
    %2774 = vmatprep.subr.mxu0 0.0
    %v2775 = vand.u32 %v2550, 4294901760
    %v2776 = vsub.f32 %v2550, %v2775
    %2777 = vmatpush1.xpose.msra.mxu0 %v2776
    %2778 = vmatprep.subr.mxu0 0.0
    %v2779 = vand.u32 %v2547, 4294901760
    %v2780 = vsub.f32 %v2547, %v2779
    %2781 = vmatpush1.xpose.msra.mxu0 %v2780
    %2782 = vmatprep.subr.mxu0 0.0
    %v2783 = vand.u32 %v2544, 4294901760
    %v2784 = vsub.f32 %v2544, %v2783
    %2785 = vmatpush1.xpose.msra.mxu0 %v2784
    %2786 = vmatprep.subr.mxu0 0.0
    %2787 = vmatpush2.xpose.msra.mxu0 0.0
    %2788 = vmatprep.subr.mxu0 0.0
    %2789 = vmatpush2.xpose.msra.mxu0 0.0
    %2790 = vmatprep.subr.mxu0 0.0
    %2791 = vmatpush2.xpose.msra.mxu0 0.0
    %2792 = vmatprep.subr.mxu0 0.0
    %2793 = vmatpush2.xpose.msra.mxu0 0.0
    %2794 = vmatprep.subr.mxu0 0.0
    %2795 = vmatpush2.xpose.msra.mxu0 0.0
    %2796 = vmatprep.subr.mxu0 0.0
    %2797 = vmatpush2.xpose.msra.mxu0 0.0
    %2798 = vmatprep.subr.mxu0 0.0
    %2799 = vmatpush2.xpose.msra.mxu0 0.0
    %2800 = vmatprep.subr.mxu0 0.0
    %2801 = vmatpush2.xpose.msra.mxu0 0.0
    %2802 = vmatprep.subr.mxu0 0.0
    %2803 = vmatpush2.xpose.msra.mxu0 0.0
    %2804 = vmatprep.subr.mxu0 0.0
    %2805 = vmatpush2.xpose.msra.mxu0 0.0
    %2806 = vmatprep.subr.mxu0 0.0
    %2807 = vmatpush2.xpose.msra.mxu0 0.0
    %2808 = vmatprep.subr.mxu0 0.0
    %2809 = vmatpush2.xpose.msra.mxu0 0.0
    %2810 = vmatprep.subr.mxu0 0.0
    %2811 = vmatpush2.xpose.msra.mxu0 0.0
    %2812 = vmatprep.subr.mxu0 0.0
    %2813 = vmatpush2.xpose.msra.mxu0 0.0
    %2814 = vmatprep.subr.mxu0 0.0
    %2815 = vmatpush2.xpose.msra.mxu0 0.0
    %2816 = vmatprep.subr.mxu0 0.0
    %2817 = vmatpush2.xpose.msra.mxu0 0.0
    %2818 = vmatprep.mubr.f32.mxu0 0.0
    %v2819 = vand.u32 %v2535, 4294901760
    %v2820 = vsub.f32 %v2535, %v2819
    %2821 = vmatmul.mubr.f32.gmra.mxu0 %v2820
    %v2822 = vpop.f32.mrf.mxu0
    %v2823 = vadd.f32 %v2733, %v2822
    %v2824 = vpop.f32.mrf.mxu0
    %2825 = vmatprep.mubr.f32.mxu0 0.0
    %v2826 = vand.u32 %v2538, 4294901760
    %v2827 = vsub.f32 %v2538, %v2826
    %2828 = vmatmul.mubr.f32.gmra.mxu0 %v2827
    %v2829 = vpop.f32.mrf.mxu0
    %v2830 = vadd.f32 %v2739, %v2829
    %v2831 = vpop.f32.mrf.mxu0
    %2832 = vmatprep.mubr.f32.mxu0 0.0
    %v2833 = vand.u32 %v2541, 4294901760
    %v2834 = vsub.f32 %v2541, %v2833
    %2835 = vmatmul.mubr.f32.gmra.mxu0 %v2834
    %v2836 = vpop.f32.mrf.mxu0
    %v2837 = vadd.f32 %v2745, %v2836
    %v2838 = vpop.f32.mrf.mxu0
    %2839 = vdwg.mxu0
    %2840 = vmatprep.subr.mxu0 0.0
    %2841 = vmatpush1.xpose.msra.mxu0 0.0
    %2842 = vmatprep.subr.mxu0 0.0
    %2843 = vmatpush1.xpose.msra.mxu0 0.0
    %2844 = vmatprep.subr.mxu0 0.0
    %2845 = vmatpush1.xpose.msra.mxu0 0.0
    %2846 = vmatprep.subr.mxu0 0.0
    %2847 = vmatpush1.xpose.msra.mxu0 0.0
    %2848 = vmatprep.subr.mxu0 0.0
    %2849 = vmatpush1.xpose.msra.mxu0 0.0
    %2850 = vmatprep.subr.mxu0 0.0
    %2851 = vmatpush1.xpose.msra.mxu0 0.0
    %2852 = vmatprep.subr.mxu0 0.0
    %2853 = vmatpush1.xpose.msra.mxu0 0.0
    %2854 = vmatprep.subr.mxu0 0.0
    %2855 = vmatpush1.xpose.msra.mxu0 0.0
    %2856 = vmatprep.subr.mxu0 0.0
    %2857 = vmatpush1.xpose.msra.mxu0 0.0
    %2858 = vmatprep.subr.mxu0 0.0
    %2859 = vmatpush1.xpose.msra.mxu0 0.0
    %2860 = vmatprep.subr.mxu0 0.0
    %2861 = vmatpush1.xpose.msra.mxu0 0.0
    %2862 = vmatprep.subr.mxu0 0.0
    %2863 = vmatpush1.xpose.msra.mxu0 0.0
    %2864 = vmatprep.subr.mxu0 0.0
    %2865 = vmatpush1.xpose.msra.mxu0 0.0
    %2866 = vmatprep.subr.mxu0 0.0
    %v2867 = vand.u32 %v2550, 4294901760
    %2868 = vmatpush1.xpose.msra.mxu0 %v2867
    %2869 = vmatprep.subr.mxu0 0.0
    %v2870 = vand.u32 %v2547, 4294901760
    %2871 = vmatpush1.xpose.msra.mxu0 %v2870
    %2872 = vmatprep.subr.mxu0 0.0
    %v2873 = vand.u32 %v2544, 4294901760
    %2874 = vmatpush1.xpose.msra.mxu0 %v2873
    %2875 = vmatprep.subr.mxu0 0.0
    %2876 = vmatpush2.xpose.msra.mxu0 0.0
    %2877 = vmatprep.subr.mxu0 0.0
    %2878 = vmatpush2.xpose.msra.mxu0 0.0
    %2879 = vmatprep.subr.mxu0 0.0
    %2880 = vmatpush2.xpose.msra.mxu0 0.0
    %2881 = vmatprep.subr.mxu0 0.0
    %2882 = vmatpush2.xpose.msra.mxu0 0.0
    %2883 = vmatprep.subr.mxu0 0.0
    %2884 = vmatpush2.xpose.msra.mxu0 0.0
    %2885 = vmatprep.subr.mxu0 0.0
    %2886 = vmatpush2.xpose.msra.mxu0 0.0
    %2887 = vmatprep.subr.mxu0 0.0
    %2888 = vmatpush2.xpose.msra.mxu0 0.0
    %2889 = vmatprep.subr.mxu0 0.0
    %2890 = vmatpush2.xpose.msra.mxu0 0.0
    %2891 = vmatprep.subr.mxu0 0.0
    %2892 = vmatpush2.xpose.msra.mxu0 0.0
    %2893 = vmatprep.subr.mxu0 0.0
    %2894 = vmatpush2.xpose.msra.mxu0 0.0
    %2895 = vmatprep.subr.mxu0 0.0
    %2896 = vmatpush2.xpose.msra.mxu0 0.0
    %2897 = vmatprep.subr.mxu0 0.0
    %2898 = vmatpush2.xpose.msra.mxu0 0.0
    %2899 = vmatprep.subr.mxu0 0.0
    %2900 = vmatpush2.xpose.msra.mxu0 0.0
    %2901 = vmatprep.subr.mxu0 0.0
    %2902 = vmatpush2.xpose.msra.mxu0 0.0
    %2903 = vmatprep.subr.mxu0 0.0
    %2904 = vmatpush2.xpose.msra.mxu0 0.0
    %2905 = vmatprep.subr.mxu0 0.0
    %2906 = vmatpush2.xpose.msra.mxu0 0.0
    %2907 = vmatprep.mubr.f32.mxu0 0.0
    %v2908 = vand.u32 %v2535, 4294901760
    %v2909 = vsub.f32 %v2535, %v2908
    %v2910 = vand.u32 %v2909, 4294901760
    %2911 = vmatmul.mubr.f32.gmra.mxu0 %v2910
    %v2912 = vpop.f32.mrf.mxu0
    %v2913 = vadd.f32 %v2823, %v2912
    %v2914 = vpop.f32.mrf.mxu0
    %2915 = vmatprep.mubr.f32.mxu0 0.0
    %v2916 = vand.u32 %v2538, 4294901760
    %v2917 = vsub.f32 %v2538, %v2916
    %v2918 = vand.u32 %v2917, 4294901760
    %2919 = vmatmul.mubr.f32.gmra.mxu0 %v2918
    %v2920 = vpop.f32.mrf.mxu0
    %v2921 = vadd.f32 %v2830, %v2920
    %v2922 = vpop.f32.mrf.mxu0
    %2923 = vmatprep.mubr.f32.mxu0 0.0
    %v2924 = vand.u32 %v2541, 4294901760
    %v2925 = vsub.f32 %v2541, %v2924
    %v2926 = vand.u32 %v2925, 4294901760
    %2927 = vmatmul.mubr.f32.gmra.mxu0 %v2926
    %v2928 = vpop.f32.mrf.mxu0
    %v2929 = vadd.f32 %v2837, %v2928
    %v2930 = vpop.f32.mrf.mxu0
    %2931 = vdwg.mxu0
    %2932 = vmatprep.subr.mxu0 0.0
    %2933 = vmatpush1.xpose.msra.mxu0 0.0
    %2934 = vmatprep.subr.mxu0 0.0
    %2935 = vmatpush1.xpose.msra.mxu0 0.0
    %2936 = vmatprep.subr.mxu0 0.0
    %2937 = vmatpush1.xpose.msra.mxu0 0.0
    %2938 = vmatprep.subr.mxu0 0.0
    %2939 = vmatpush1.xpose.msra.mxu0 0.0
    %2940 = vmatprep.subr.mxu0 0.0
    %2941 = vmatpush1.xpose.msra.mxu0 0.0
    %2942 = vmatprep.subr.mxu0 0.0
    %2943 = vmatpush1.xpose.msra.mxu0 0.0
    %2944 = vmatprep.subr.mxu0 0.0
    %2945 = vmatpush1.xpose.msra.mxu0 0.0
    %2946 = vmatprep.subr.mxu0 0.0
    %2947 = vmatpush1.xpose.msra.mxu0 0.0
    %2948 = vmatprep.subr.mxu0 0.0
    %2949 = vmatpush1.xpose.msra.mxu0 0.0
    %2950 = vmatprep.subr.mxu0 0.0
    %2951 = vmatpush1.xpose.msra.mxu0 0.0
    %2952 = vmatprep.subr.mxu0 0.0
    %2953 = vmatpush1.xpose.msra.mxu0 0.0
    %2954 = vmatprep.subr.mxu0 0.0
    %2955 = vmatpush1.xpose.msra.mxu0 0.0
    %2956 = vmatprep.subr.mxu0 0.0
    %2957 = vmatpush1.xpose.msra.mxu0 0.0
    %2958 = vmatprep.subr.mxu0 0.0
    %v2959 = vand.u32 %v2550, 4294901760
    %v2960 = vsub.f32 %v2550, %v2959
    %v2961 = vand.u32 %v2960, 4294901760
    %2962 = vmatpush1.xpose.msra.mxu0 %v2961
    %2963 = vmatprep.subr.mxu0 0.0
    %v2964 = vand.u32 %v2547, 4294901760
    %v2965 = vsub.f32 %v2547, %v2964
    %v2966 = vand.u32 %v2965, 4294901760
    %2967 = vmatpush1.xpose.msra.mxu0 %v2966
    %2968 = vmatprep.subr.mxu0 0.0
    %v2969 = vand.u32 %v2544, 4294901760
    %v2970 = vsub.f32 %v2544, %v2969
    %v2971 = vand.u32 %v2970, 4294901760
    %2972 = vmatpush1.xpose.msra.mxu0 %v2971
    %2973 = vmatprep.subr.mxu0 0.0
    %2974 = vmatpush2.xpose.msra.mxu0 0.0
    %2975 = vmatprep.subr.mxu0 0.0
    %2976 = vmatpush2.xpose.msra.mxu0 0.0
    %2977 = vmatprep.subr.mxu0 0.0
    %2978 = vmatpush2.xpose.msra.mxu0 0.0
    %2979 = vmatprep.subr.mxu0 0.0
    %2980 = vmatpush2.xpose.msra.mxu0 0.0
    %2981 = vmatprep.subr.mxu0 0.0
    %2982 = vmatpush2.xpose.msra.mxu0 0.0
    %2983 = vmatprep.subr.mxu0 0.0
    %2984 = vmatpush2.xpose.msra.mxu0 0.0
    %2985 = vmatprep.subr.mxu0 0.0
    %2986 = vmatpush2.xpose.msra.mxu0 0.0
    %2987 = vmatprep.subr.mxu0 0.0
    %2988 = vmatpush2.xpose.msra.mxu0 0.0
    %2989 = vmatprep.subr.mxu0 0.0
    %2990 = vmatpush2.xpose.msra.mxu0 0.0
    %2991 = vmatprep.subr.mxu0 0.0
    %2992 = vmatpush2.xpose.msra.mxu0 0.0
    %2993 = vmatprep.subr.mxu0 0.0
    %2994 = vmatpush2.xpose.msra.mxu0 0.0
    %2995 = vmatprep.subr.mxu0 0.0
    %2996 = vmatpush2.xpose.msra.mxu0 0.0
    %2997 = vmatprep.subr.mxu0 0.0
    %2998 = vmatpush2.xpose.msra.mxu0 0.0
    %2999 = vmatprep.subr.mxu0 0.0
    %3000 = vmatpush2.xpose.msra.mxu0 0.0
    %3001 = vmatprep.subr.mxu0 0.0
    %3002 = vmatpush2.xpose.msra.mxu0 0.0
    %3003 = vmatprep.subr.mxu0 0.0
    %3004 = vmatpush2.xpose.msra.mxu0 0.0
    %3005 = vmatprep.mubr.f32.mxu0 0.0
    %v3006 = vand.u32 %v2535, 4294901760
    %3007 = vmatmul.mubr.f32.gmra.mxu0 %v3006
    %v3008 = vpop.f32.mrf.mxu0
    %v3009 = vadd.f32 %v2913, %v3008
    %v3010 = vpop.f32.mrf.mxu0
    %3011 = vmatprep.mubr.f32.mxu0 0.0
    %v3012 = vand.u32 %v2538, 4294901760
    %3013 = vmatmul.mubr.f32.gmra.mxu0 %v3012
    %v3014 = vpop.f32.mrf.mxu0
    %v3015 = vadd.f32 %v2921, %v3014
    %v3016 = vpop.f32.mrf.mxu0
    %3017 = vmatprep.mubr.f32.mxu0 0.0
    %v3018 = vand.u32 %v2541, 4294901760
    %3019 = vmatmul.mubr.f32.gmra.mxu0 %v3018
    %v3020 = vpop.f32.mrf.mxu0
    %v3021 = vadd.f32 %v2929, %v3020
    %v3022 = vpop.f32.mrf.mxu0
    %3023 = vdwg.mxu0
    %3024 = vmatprep.subr.mxu0 0.0
    %3025 = vmatpush1.xpose.msra.mxu0 0.0
    %3026 = vmatprep.subr.mxu0 0.0
    %3027 = vmatpush1.xpose.msra.mxu0 0.0
    %3028 = vmatprep.subr.mxu0 0.0
    %3029 = vmatpush1.xpose.msra.mxu0 0.0
    %3030 = vmatprep.subr.mxu0 0.0
    %3031 = vmatpush1.xpose.msra.mxu0 0.0
    %3032 = vmatprep.subr.mxu0 0.0
    %3033 = vmatpush1.xpose.msra.mxu0 0.0
    %3034 = vmatprep.subr.mxu0 0.0
    %3035 = vmatpush1.xpose.msra.mxu0 0.0
    %3036 = vmatprep.subr.mxu0 0.0
    %3037 = vmatpush1.xpose.msra.mxu0 0.0
    %3038 = vmatprep.subr.mxu0 0.0
    %3039 = vmatpush1.xpose.msra.mxu0 0.0
    %3040 = vmatprep.subr.mxu0 0.0
    %3041 = vmatpush1.xpose.msra.mxu0 0.0
    %3042 = vmatprep.subr.mxu0 0.0
    %3043 = vmatpush1.xpose.msra.mxu0 0.0
    %3044 = vmatprep.subr.mxu0 0.0
    %3045 = vmatpush1.xpose.msra.mxu0 0.0
    %3046 = vmatprep.subr.mxu0 0.0
    %3047 = vmatpush1.xpose.msra.mxu0 0.0
    %3048 = vmatprep.subr.mxu0 0.0
    %3049 = vmatpush1.xpose.msra.mxu0 0.0
    %3050 = vmatprep.subr.mxu0 0.0
    %v3051 = vand.u32 %v2550, 4294901760
    %3052 = vmatpush1.xpose.msra.mxu0 %v3051
    %3053 = vmatprep.subr.mxu0 0.0
    %v3054 = vand.u32 %v2547, 4294901760
    %3055 = vmatpush1.xpose.msra.mxu0 %v3054
    %3056 = vmatprep.subr.mxu0 0.0
    %v3057 = vand.u32 %v2544, 4294901760
    %3058 = vmatpush1.xpose.msra.mxu0 %v3057
    %3059 = vmatprep.subr.mxu0 0.0
    %3060 = vmatpush2.xpose.msra.mxu0 0.0
    %3061 = vmatprep.subr.mxu0 0.0
    %3062 = vmatpush2.xpose.msra.mxu0 0.0
    %3063 = vmatprep.subr.mxu0 0.0
    %3064 = vmatpush2.xpose.msra.mxu0 0.0
    %3065 = vmatprep.subr.mxu0 0.0
    %3066 = vmatpush2.xpose.msra.mxu0 0.0
    %3067 = vmatprep.subr.mxu0 0.0
    %3068 = vmatpush2.xpose.msra.mxu0 0.0
    %3069 = vmatprep.subr.mxu0 0.0
    %3070 = vmatpush2.xpose.msra.mxu0 0.0
    %3071 = vmatprep.subr.mxu0 0.0
    %3072 = vmatpush2.xpose.msra.mxu0 0.0
    %3073 = vmatprep.subr.mxu0 0.0
    %3074 = vmatpush2.xpose.msra.mxu0 0.0
    %3075 = vmatprep.subr.mxu0 0.0
    %3076 = vmatpush2.xpose.msra.mxu0 0.0
    %3077 = vmatprep.subr.mxu0 0.0
    %3078 = vmatpush2.xpose.msra.mxu0 0.0
    %3079 = vmatprep.subr.mxu0 0.0
    %3080 = vmatpush2.xpose.msra.mxu0 0.0
    %3081 = vmatprep.subr.mxu0 0.0
    %3082 = vmatpush2.xpose.msra.mxu0 0.0
    %3083 = vmatprep.subr.mxu0 0.0
    %3084 = vmatpush2.xpose.msra.mxu0 0.0
    %3085 = vmatprep.subr.mxu0 0.0
    %3086 = vmatpush2.xpose.msra.mxu0 0.0
    %3087 = vmatprep.subr.mxu0 0.0
    %3088 = vmatpush2.xpose.msra.mxu0 0.0
    %3089 = vmatprep.subr.mxu0 0.0
    %3090 = vmatpush2.xpose.msra.mxu0 0.0
    %3091 = vmatprep.mubr.f32.mxu0 0.0
    %v3092 = vand.u32 %v2535, 4294901760
    %3093 = vmatmul.mubr.f32.gmra.mxu0 %v3092
    %v3094 = vpop.f32.mrf.mxu0
    %v3095 = vadd.f32 %v3009, %v3094
    %v3096 = vpop.f32.mrf.mxu0
    %3097 = vmatprep.mubr.f32.mxu0 0.0
    %v3098 = vand.u32 %v2538, 4294901760
    %3099 = vmatmul.mubr.f32.gmra.mxu0 %v3098
    %v3100 = vpop.f32.mrf.mxu0
    %v3101 = vadd.f32 %v3015, %v3100
    %v3102 = vpop.f32.mrf.mxu0
    %3103 = vmatprep.mubr.f32.mxu0 0.0
    %v3104 = vand.u32 %v2541, 4294901760
    %3105 = vmatmul.mubr.f32.gmra.mxu0 %v3104
    %v3106 = vpop.f32.mrf.mxu0
    %v3107 = vadd.f32 %v3021, %v3106
    %v3108 = vpop.f32.mrf.mxu0
    %3109 = vdwg.mxu0
    %v3110 = vmul.f32 %v3095, 0.17677669
    %v3111 = vmul.f32 %v3101, 0.17677669
    %v3112 = vmul.f32 %v3107, 0.17677669
    %vm3113 = vcmask 138240
    %v3114 = vsel %vm3113, %v3110, -inf
    %3115 = vmax.xlane.f32.xlu0 %v3114
    %v3116 = vpop.xlane.xlu0 %3115
    %v3117 = vsel %vm3113, %v3111, -inf
    %3118 = vmax.xlane.f32.xlu0 %v3117
    %v3119 = vpop.xlane.xlu0 %3118
    %vm3120 = vcmask 131072
    %v3121 = vsel %vm3120, %v3112, -inf
    %3122 = vmax.xlane.f32.xlu0 %v3121
    %v3123 = vpop.xlane.xlu0 %3122
    %v3124 = vsub.f32 %v3110, %v3116
    %v3125 = vsub.f32 %v3111, %v3119
    %v3126 = vsub.f32 %v3112, %v3123
    %v3127 = vmul.f32 %v3124, 1.442695
    %v3128 = vpow.pop %v3127
    %v3129 = vmul.f32 %v3125, 1.442695
    %v3130 = vpow.pop %v3129
    %v3131 = vmul.f32 %v3126, 1.442695
    %v3132 = vpow.pop %v3131
    %v3133 = vsel %vm3113, %v3128, 0.0
    %3134 = vadd.xlane.f32.xlu0 %v3133
    %v3135 = vpop.xlane.xlu0 %3134
    %v3136 = vsel %vm3113, %v3130, 0.0
    %3137 = vadd.xlane.f32.xlu0 %v3136
    %v3138 = vpop.xlane.xlu0 %3137
    %v3139 = vsel %vm3120, %v3132, 0.0
    %3140 = vadd.xlane.f32.xlu0 %v3139
    %v3141 = vpop.xlane.xlu0 %3140
    %v3142 = vrcp.pop %v3135
    %v3143 = vmul.f32 %v3128, %v3142
    %v3144 = vrcp.pop %v3138
    %v3145 = vmul.f32 %v3130, %v3144
    %v3146 = vrcp.pop %v3141
    %v3147 = vmul.f32 %v3132, %v3146
    %v3149 = vsel %vm3113, %v3143, 0
    %v3152 = vsel %vm3113, %v3145, 0
    %v3155 = vsel %vm3113, %v3147, 0
    %vm3157 = vcmask 1040384
    %v3159 = vsel %vm3157, %v2531, 0
    %3161 = vmatprep.subr.mxu0 0.0
    %3162 = vmatpush1.msra.mxu0 0.0
    %3163 = vmatprep.subr.mxu0 0.0
    %3164 = vmatpush1.msra.mxu0 0.0
    %3165 = vmatprep.subr.mxu0 0.0
    %3166 = vmatpush1.msra.mxu0 0.0
    %3167 = vmatprep.subr.mxu0 0.0
    %3168 = vmatpush1.msra.mxu0 0.0
    %3169 = vmatprep.subr.mxu0 0.0
    %3170 = vmatpush1.msra.mxu0 0.0
    %3171 = vmatprep.subr.mxu0 0.0
    %3172 = vmatpush1.msra.mxu0 0.0
    %3173 = vmatprep.subr.mxu0 0.0
    %3174 = vmatpush1.msra.mxu0 0.0
    %3175 = vmatprep.subr.mxu0 0.0
    %3176 = vmatpush1.msra.mxu0 0.0
    %3177 = vmatprep.subr.mxu0 0.0
    %3178 = vmatpush1.msra.mxu0 0.0
    %3179 = vmatprep.subr.mxu0 0.0
    %3180 = vmatpush1.msra.mxu0 0.0
    %3181 = vmatprep.subr.mxu0 0.0
    %3182 = vmatpush1.msra.mxu0 0.0
    %3183 = vmatprep.subr.mxu0 0.0
    %3184 = vmatpush1.msra.mxu0 0.0
    %3185 = vmatprep.subr.mxu0 0.0
    %3186 = vmatpush1.msra.mxu0 0.0
    %3187 = vmatprep.subr.mxu0 0.0
    %v3188 = vand.u32 %v3159, 4294901760
    %3189 = vmatpush1.msra.mxu0 %v3188
    %3190 = vmatprep.subr.mxu0 0.0
    %v3191 = vand.u32 %v2525, 4294901760
    %3192 = vmatpush1.msra.mxu0 %v3191
    %3193 = vmatprep.subr.mxu0 0.0
    %v3194 = vand.u32 %v2519, 4294901760
    %3195 = vmatpush1.msra.mxu0 %v3194
    %3196 = vmatprep.subr.mxu0 0.0
    %3197 = vmatpush2.msra.mxu0 0.0
    %3198 = vmatprep.subr.mxu0 0.0
    %3199 = vmatpush2.msra.mxu0 0.0
    %3200 = vmatprep.subr.mxu0 0.0
    %3201 = vmatpush2.msra.mxu0 0.0
    %3202 = vmatprep.subr.mxu0 0.0
    %3203 = vmatpush2.msra.mxu0 0.0
    %3204 = vmatprep.subr.mxu0 0.0
    %3205 = vmatpush2.msra.mxu0 0.0
    %3206 = vmatprep.subr.mxu0 0.0
    %3207 = vmatpush2.msra.mxu0 0.0
    %3208 = vmatprep.subr.mxu0 0.0
    %3209 = vmatpush2.msra.mxu0 0.0
    %3210 = vmatprep.subr.mxu0 0.0
    %3211 = vmatpush2.msra.mxu0 0.0
    %3212 = vmatprep.subr.mxu0 0.0
    %3213 = vmatpush2.msra.mxu0 0.0
    %3214 = vmatprep.subr.mxu0 0.0
    %3215 = vmatpush2.msra.mxu0 0.0
    %3216 = vmatprep.subr.mxu0 0.0
    %3217 = vmatpush2.msra.mxu0 0.0
    %3218 = vmatprep.subr.mxu0 0.0
    %3219 = vmatpush2.msra.mxu0 0.0
    %3220 = vmatprep.subr.mxu0 0.0
    %3221 = vmatpush2.msra.mxu0 0.0
    %3222 = vmatprep.subr.mxu0 0.0
    %3223 = vmatpush2.msra.mxu0 0.0
    %3224 = vmatprep.subr.mxu0 0.0
    %3225 = vmatpush2.msra.mxu0 0.0
    %3226 = vmatprep.subr.mxu0 0.0
    %3227 = vmatpush2.msra.mxu0 0.0
    %3228 = vmatprep.mubr.f32.mxu0 0.0
    %v3229 = vand.u32 %v3149, 4294901760
    %v3230 = vsub.f32 %v3149, %v3229
    %v3231 = vand.u32 %v3230, 4294901760
    %v3232 = vsub.f32 %v3230, %v3231
    %v3233 = vand.u32 %v3232, 4294901760
    %3234 = vmatmul.mubr.f32.gmra.mxu0 %v3233
    %v3235 = vpop.f32.mrf.mxu0
    %v3236 = vadd.f32 0.0, %v3235
    %v3237 = vpop.f32.mrf.mxu0
    %3238 = vmatprep.mubr.f32.mxu0 0.0
    %v3239 = vand.u32 %v3152, 4294901760
    %v3240 = vsub.f32 %v3152, %v3239
    %v3241 = vand.u32 %v3240, 4294901760
    %v3242 = vsub.f32 %v3240, %v3241
    %v3243 = vand.u32 %v3242, 4294901760
    %3244 = vmatmul.mubr.f32.gmra.mxu0 %v3243
    %v3245 = vpop.f32.mrf.mxu0
    %v3246 = vadd.f32 0.0, %v3245
    %v3247 = vpop.f32.mrf.mxu0
    %3248 = vmatprep.mubr.f32.mxu0 0.0
    %v3249 = vand.u32 %v3155, 4294901760
    %v3250 = vsub.f32 %v3155, %v3249
    %v3251 = vand.u32 %v3250, 4294901760
    %v3252 = vsub.f32 %v3250, %v3251
    %v3253 = vand.u32 %v3252, 4294901760
    %3254 = vmatmul.mubr.f32.gmra.mxu0 %v3253
    %v3255 = vpop.f32.mrf.mxu0
    %v3256 = vadd.f32 0.0, %v3255
    %v3257 = vpop.f32.mrf.mxu0
    %3258 = vdwg.mxu0
    %3259 = vmatprep.subr.mxu0 0.0
    %3260 = vmatpush1.msra.mxu0 0.0
    %3261 = vmatprep.subr.mxu0 0.0
    %3262 = vmatpush1.msra.mxu0 0.0
    %3263 = vmatprep.subr.mxu0 0.0
    %3264 = vmatpush1.msra.mxu0 0.0
    %3265 = vmatprep.subr.mxu0 0.0
    %3266 = vmatpush1.msra.mxu0 0.0
    %3267 = vmatprep.subr.mxu0 0.0
    %3268 = vmatpush1.msra.mxu0 0.0
    %3269 = vmatprep.subr.mxu0 0.0
    %3270 = vmatpush1.msra.mxu0 0.0
    %3271 = vmatprep.subr.mxu0 0.0
    %3272 = vmatpush1.msra.mxu0 0.0
    %3273 = vmatprep.subr.mxu0 0.0
    %3274 = vmatpush1.msra.mxu0 0.0
    %3275 = vmatprep.subr.mxu0 0.0
    %3276 = vmatpush1.msra.mxu0 0.0
    %3277 = vmatprep.subr.mxu0 0.0
    %3278 = vmatpush1.msra.mxu0 0.0
    %3279 = vmatprep.subr.mxu0 0.0
    %3280 = vmatpush1.msra.mxu0 0.0
    %3281 = vmatprep.subr.mxu0 0.0
    %3282 = vmatpush1.msra.mxu0 0.0
    %3283 = vmatprep.subr.mxu0 0.0
    %3284 = vmatpush1.msra.mxu0 0.0
    %3285 = vmatprep.subr.mxu0 0.0
    %v3286 = vand.u32 %v3159, 4294901760
    %v3287 = vsub.f32 %v3159, %v3286
    %v3288 = vand.u32 %v3287, 4294901760
    %v3289 = vsub.f32 %v3287, %v3288
    %v3290 = vand.u32 %v3289, 4294901760
    %3291 = vmatpush1.msra.mxu0 %v3290
    %3292 = vmatprep.subr.mxu0 0.0
    %v3293 = vand.u32 %v2525, 4294901760
    %v3294 = vsub.f32 %v2525, %v3293
    %v3295 = vand.u32 %v3294, 4294901760
    %v3296 = vsub.f32 %v3294, %v3295
    %v3297 = vand.u32 %v3296, 4294901760
    %3298 = vmatpush1.msra.mxu0 %v3297
    %3299 = vmatprep.subr.mxu0 0.0
    %v3300 = vand.u32 %v2519, 4294901760
    %v3301 = vsub.f32 %v2519, %v3300
    %v3302 = vand.u32 %v3301, 4294901760
    %v3303 = vsub.f32 %v3301, %v3302
    %v3304 = vand.u32 %v3303, 4294901760
    %3305 = vmatpush1.msra.mxu0 %v3304
    %3306 = vmatprep.subr.mxu0 0.0
    %3307 = vmatpush2.msra.mxu0 0.0
    %3308 = vmatprep.subr.mxu0 0.0
    %3309 = vmatpush2.msra.mxu0 0.0
    %3310 = vmatprep.subr.mxu0 0.0
    %3311 = vmatpush2.msra.mxu0 0.0
    %3312 = vmatprep.subr.mxu0 0.0
    %3313 = vmatpush2.msra.mxu0 0.0
    %3314 = vmatprep.subr.mxu0 0.0
    %3315 = vmatpush2.msra.mxu0 0.0
    %3316 = vmatprep.subr.mxu0 0.0
    %3317 = vmatpush2.msra.mxu0 0.0
    %3318 = vmatprep.subr.mxu0 0.0
    %3319 = vmatpush2.msra.mxu0 0.0
    %3320 = vmatprep.subr.mxu0 0.0
    %3321 = vmatpush2.msra.mxu0 0.0
    %3322 = vmatprep.subr.mxu0 0.0
    %3323 = vmatpush2.msra.mxu0 0.0
    %3324 = vmatprep.subr.mxu0 0.0
    %3325 = vmatpush2.msra.mxu0 0.0
    %3326 = vmatprep.subr.mxu0 0.0
    %3327 = vmatpush2.msra.mxu0 0.0
    %3328 = vmatprep.subr.mxu0 0.0
    %3329 = vmatpush2.msra.mxu0 0.0
    %3330 = vmatprep.subr.mxu0 0.0
    %3331 = vmatpush2.msra.mxu0 0.0
    %3332 = vmatprep.subr.mxu0 0.0
    %3333 = vmatpush2.msra.mxu0 0.0
    %3334 = vmatprep.subr.mxu0 0.0
    %3335 = vmatpush2.msra.mxu0 0.0
    %3336 = vmatprep.subr.mxu0 0.0
    %3337 = vmatpush2.msra.mxu0 0.0
    %3338 = vmatprep.mubr.f32.mxu0 0.0
    %v3339 = vand.u32 %v3149, 4294901760
    %3340 = vmatmul.mubr.f32.gmra.mxu0 %v3339
    %v3341 = vpop.f32.mrf.mxu0
    %v3342 = vadd.f32 %v3236, %v3341
    %v3343 = vpop.f32.mrf.mxu0
    %3344 = vmatprep.mubr.f32.mxu0 0.0
    %v3345 = vand.u32 %v3152, 4294901760
    %3346 = vmatmul.mubr.f32.gmra.mxu0 %v3345
    %v3347 = vpop.f32.mrf.mxu0
    %v3348 = vadd.f32 %v3246, %v3347
    %v3349 = vpop.f32.mrf.mxu0
    %3350 = vmatprep.mubr.f32.mxu0 0.0
    %v3351 = vand.u32 %v3155, 4294901760
    %3352 = vmatmul.mubr.f32.gmra.mxu0 %v3351
    %v3353 = vpop.f32.mrf.mxu0
    %v3354 = vadd.f32 %v3256, %v3353
    %v3355 = vpop.f32.mrf.mxu0
    %3356 = vdwg.mxu0
    %3357 = vmatprep.subr.mxu0 0.0
    %3358 = vmatpush1.msra.mxu0 0.0
    %3359 = vmatprep.subr.mxu0 0.0
    %3360 = vmatpush1.msra.mxu0 0.0
    %3361 = vmatprep.subr.mxu0 0.0
    %3362 = vmatpush1.msra.mxu0 0.0
    %3363 = vmatprep.subr.mxu0 0.0
    %3364 = vmatpush1.msra.mxu0 0.0
    %3365 = vmatprep.subr.mxu0 0.0
    %3366 = vmatpush1.msra.mxu0 0.0
    %3367 = vmatprep.subr.mxu0 0.0
    %3368 = vmatpush1.msra.mxu0 0.0
    %3369 = vmatprep.subr.mxu0 0.0
    %3370 = vmatpush1.msra.mxu0 0.0
    %3371 = vmatprep.subr.mxu0 0.0
    %3372 = vmatpush1.msra.mxu0 0.0
    %3373 = vmatprep.subr.mxu0 0.0
    %3374 = vmatpush1.msra.mxu0 0.0
    %3375 = vmatprep.subr.mxu0 0.0
    %3376 = vmatpush1.msra.mxu0 0.0
    %3377 = vmatprep.subr.mxu0 0.0
    %3378 = vmatpush1.msra.mxu0 0.0
    %3379 = vmatprep.subr.mxu0 0.0
    %3380 = vmatpush1.msra.mxu0 0.0
    %3381 = vmatprep.subr.mxu0 0.0
    %3382 = vmatpush1.msra.mxu0 0.0
    %3383 = vmatprep.subr.mxu0 0.0
    %v3384 = vand.u32 %v3159, 4294901760
    %v3385 = vsub.f32 %v3159, %v3384
    %3386 = vmatpush1.msra.mxu0 %v3385
    %3387 = vmatprep.subr.mxu0 0.0
    %v3388 = vand.u32 %v2525, 4294901760
    %v3389 = vsub.f32 %v2525, %v3388
    %3390 = vmatpush1.msra.mxu0 %v3389
    %3391 = vmatprep.subr.mxu0 0.0
    %v3392 = vand.u32 %v2519, 4294901760
    %v3393 = vsub.f32 %v2519, %v3392
    %3394 = vmatpush1.msra.mxu0 %v3393
    %3395 = vmatprep.subr.mxu0 0.0
    %3396 = vmatpush2.msra.mxu0 0.0
    %3397 = vmatprep.subr.mxu0 0.0
    %3398 = vmatpush2.msra.mxu0 0.0
    %3399 = vmatprep.subr.mxu0 0.0
    %3400 = vmatpush2.msra.mxu0 0.0
    %3401 = vmatprep.subr.mxu0 0.0
    %3402 = vmatpush2.msra.mxu0 0.0
    %3403 = vmatprep.subr.mxu0 0.0
    %3404 = vmatpush2.msra.mxu0 0.0
    %3405 = vmatprep.subr.mxu0 0.0
    %3406 = vmatpush2.msra.mxu0 0.0
    %3407 = vmatprep.subr.mxu0 0.0
    %3408 = vmatpush2.msra.mxu0 0.0
    %3409 = vmatprep.subr.mxu0 0.0
    %3410 = vmatpush2.msra.mxu0 0.0
    %3411 = vmatprep.subr.mxu0 0.0
    %3412 = vmatpush2.msra.mxu0 0.0
    %3413 = vmatprep.subr.mxu0 0.0
    %3414 = vmatpush2.msra.mxu0 0.0
    %3415 = vmatprep.subr.mxu0 0.0
    %3416 = vmatpush2.msra.mxu0 0.0
    %3417 = vmatprep.subr.mxu0 0.0
    %3418 = vmatpush2.msra.mxu0 0.0
    %3419 = vmatprep.subr.mxu0 0.0
    %3420 = vmatpush2.msra.mxu0 0.0
    %3421 = vmatprep.subr.mxu0 0.0
    %3422 = vmatpush2.msra.mxu0 0.0
    %3423 = vmatprep.subr.mxu0 0.0
    %3424 = vmatpush2.msra.mxu0 0.0
    %3425 = vmatprep.subr.mxu0 0.0
    %3426 = vmatpush2.msra.mxu0 0.0
    %3427 = vmatprep.mubr.f32.mxu0 0.0
    %v3428 = vand.u32 %v3149, 4294901760
    %v3429 = vsub.f32 %v3149, %v3428
    %3430 = vmatmul.mubr.f32.gmra.mxu0 %v3429
    %v3431 = vpop.f32.mrf.mxu0
    %v3432 = vadd.f32 %v3342, %v3431
    %v3433 = vpop.f32.mrf.mxu0
    %3434 = vmatprep.mubr.f32.mxu0 0.0
    %v3435 = vand.u32 %v3152, 4294901760
    %v3436 = vsub.f32 %v3152, %v3435
    %3437 = vmatmul.mubr.f32.gmra.mxu0 %v3436
    %v3438 = vpop.f32.mrf.mxu0
    %v3439 = vadd.f32 %v3348, %v3438
    %v3440 = vpop.f32.mrf.mxu0
    %3441 = vmatprep.mubr.f32.mxu0 0.0
    %v3442 = vand.u32 %v3155, 4294901760
    %v3443 = vsub.f32 %v3155, %v3442
    %3444 = vmatmul.mubr.f32.gmra.mxu0 %v3443
    %v3445 = vpop.f32.mrf.mxu0
    %v3446 = vadd.f32 %v3354, %v3445
    %v3447 = vpop.f32.mrf.mxu0
    %3448 = vdwg.mxu0
    %3449 = vmatprep.subr.mxu0 0.0
    %3450 = vmatpush1.msra.mxu0 0.0
    %3451 = vmatprep.subr.mxu0 0.0
    %3452 = vmatpush1.msra.mxu0 0.0
    %3453 = vmatprep.subr.mxu0 0.0
    %3454 = vmatpush1.msra.mxu0 0.0
    %3455 = vmatprep.subr.mxu0 0.0
    %3456 = vmatpush1.msra.mxu0 0.0
    %3457 = vmatprep.subr.mxu0 0.0
    %3458 = vmatpush1.msra.mxu0 0.0
    %3459 = vmatprep.subr.mxu0 0.0
    %3460 = vmatpush1.msra.mxu0 0.0
    %3461 = vmatprep.subr.mxu0 0.0
    %3462 = vmatpush1.msra.mxu0 0.0
    %3463 = vmatprep.subr.mxu0 0.0
    %3464 = vmatpush1.msra.mxu0 0.0
    %3465 = vmatprep.subr.mxu0 0.0
    %3466 = vmatpush1.msra.mxu0 0.0
    %3467 = vmatprep.subr.mxu0 0.0
    %3468 = vmatpush1.msra.mxu0 0.0
    %3469 = vmatprep.subr.mxu0 0.0
    %3470 = vmatpush1.msra.mxu0 0.0
    %3471 = vmatprep.subr.mxu0 0.0
    %3472 = vmatpush1.msra.mxu0 0.0
    %3473 = vmatprep.subr.mxu0 0.0
    %3474 = vmatpush1.msra.mxu0 0.0
    %3475 = vmatprep.subr.mxu0 0.0
    %v3476 = vand.u32 %v3159, 4294901760
    %3477 = vmatpush1.msra.mxu0 %v3476
    %3478 = vmatprep.subr.mxu0 0.0
    %v3479 = vand.u32 %v2525, 4294901760
    %3480 = vmatpush1.msra.mxu0 %v3479
    %3481 = vmatprep.subr.mxu0 0.0
    %v3482 = vand.u32 %v2519, 4294901760
    %3483 = vmatpush1.msra.mxu0 %v3482
    %3484 = vmatprep.subr.mxu0 0.0
    %3485 = vmatpush2.msra.mxu0 0.0
    %3486 = vmatprep.subr.mxu0 0.0
    %3487 = vmatpush2.msra.mxu0 0.0
    %3488 = vmatprep.subr.mxu0 0.0
    %3489 = vmatpush2.msra.mxu0 0.0
    %3490 = vmatprep.subr.mxu0 0.0
    %3491 = vmatpush2.msra.mxu0 0.0
    %3492 = vmatprep.subr.mxu0 0.0
    %3493 = vmatpush2.msra.mxu0 0.0
    %3494 = vmatprep.subr.mxu0 0.0
    %3495 = vmatpush2.msra.mxu0 0.0
    %3496 = vmatprep.subr.mxu0 0.0
    %3497 = vmatpush2.msra.mxu0 0.0
    %3498 = vmatprep.subr.mxu0 0.0
    %3499 = vmatpush2.msra.mxu0 0.0
    %3500 = vmatprep.subr.mxu0 0.0
    %3501 = vmatpush2.msra.mxu0 0.0
    %3502 = vmatprep.subr.mxu0 0.0
    %3503 = vmatpush2.msra.mxu0 0.0
    %3504 = vmatprep.subr.mxu0 0.0
    %3505 = vmatpush2.msra.mxu0 0.0
    %3506 = vmatprep.subr.mxu0 0.0
    %3507 = vmatpush2.msra.mxu0 0.0
    %3508 = vmatprep.subr.mxu0 0.0
    %3509 = vmatpush2.msra.mxu0 0.0
    %3510 = vmatprep.subr.mxu0 0.0
    %3511 = vmatpush2.msra.mxu0 0.0
    %3512 = vmatprep.subr.mxu0 0.0
    %3513 = vmatpush2.msra.mxu0 0.0
    %3514 = vmatprep.subr.mxu0 0.0
    %3515 = vmatpush2.msra.mxu0 0.0
    %3516 = vmatprep.mubr.f32.mxu0 0.0
    %v3517 = vand.u32 %v3149, 4294901760
    %v3518 = vsub.f32 %v3149, %v3517
    %v3519 = vand.u32 %v3518, 4294901760
    %3520 = vmatmul.mubr.f32.gmra.mxu0 %v3519
    %v3521 = vpop.f32.mrf.mxu0
    %v3522 = vadd.f32 %v3432, %v3521
    %v3523 = vpop.f32.mrf.mxu0
    %3524 = vmatprep.mubr.f32.mxu0 0.0
    %v3525 = vand.u32 %v3152, 4294901760
    %v3526 = vsub.f32 %v3152, %v3525
    %v3527 = vand.u32 %v3526, 4294901760
    %3528 = vmatmul.mubr.f32.gmra.mxu0 %v3527
    %v3529 = vpop.f32.mrf.mxu0
    %v3530 = vadd.f32 %v3439, %v3529
    %v3531 = vpop.f32.mrf.mxu0
    %3532 = vmatprep.mubr.f32.mxu0 0.0
    %v3533 = vand.u32 %v3155, 4294901760
    %v3534 = vsub.f32 %v3155, %v3533
    %v3535 = vand.u32 %v3534, 4294901760
    %3536 = vmatmul.mubr.f32.gmra.mxu0 %v3535
    %v3537 = vpop.f32.mrf.mxu0
    %v3538 = vadd.f32 %v3446, %v3537
    %v3539 = vpop.f32.mrf.mxu0
    %3540 = vdwg.mxu0
    %3541 = vmatprep.subr.mxu0 0.0
    %3542 = vmatpush1.msra.mxu0 0.0
    %3543 = vmatprep.subr.mxu0 0.0
    %3544 = vmatpush1.msra.mxu0 0.0
    %3545 = vmatprep.subr.mxu0 0.0
    %3546 = vmatpush1.msra.mxu0 0.0
    %3547 = vmatprep.subr.mxu0 0.0
    %3548 = vmatpush1.msra.mxu0 0.0
    %3549 = vmatprep.subr.mxu0 0.0
    %3550 = vmatpush1.msra.mxu0 0.0
    %3551 = vmatprep.subr.mxu0 0.0
    %3552 = vmatpush1.msra.mxu0 0.0
    %3553 = vmatprep.subr.mxu0 0.0
    %3554 = vmatpush1.msra.mxu0 0.0
    %3555 = vmatprep.subr.mxu0 0.0
    %3556 = vmatpush1.msra.mxu0 0.0
    %3557 = vmatprep.subr.mxu0 0.0
    %3558 = vmatpush1.msra.mxu0 0.0
    %3559 = vmatprep.subr.mxu0 0.0
    %3560 = vmatpush1.msra.mxu0 0.0
    %3561 = vmatprep.subr.mxu0 0.0
    %3562 = vmatpush1.msra.mxu0 0.0
    %3563 = vmatprep.subr.mxu0 0.0
    %3564 = vmatpush1.msra.mxu0 0.0
    %3565 = vmatprep.subr.mxu0 0.0
    %3566 = vmatpush1.msra.mxu0 0.0
    %3567 = vmatprep.subr.mxu0 0.0
    %v3568 = vand.u32 %v3159, 4294901760
    %v3569 = vsub.f32 %v3159, %v3568
    %v3570 = vand.u32 %v3569, 4294901760
    %3571 = vmatpush1.msra.mxu0 %v3570
    %3572 = vmatprep.subr.mxu0 0.0
    %v3573 = vand.u32 %v2525, 4294901760
    %v3574 = vsub.f32 %v2525, %v3573
    %v3575 = vand.u32 %v3574, 4294901760
    %3576 = vmatpush1.msra.mxu0 %v3575
    %3577 = vmatprep.subr.mxu0 0.0
    %v3578 = vand.u32 %v2519, 4294901760
    %v3579 = vsub.f32 %v2519, %v3578
    %v3580 = vand.u32 %v3579, 4294901760
    %3581 = vmatpush1.msra.mxu0 %v3580
    %3582 = vmatprep.subr.mxu0 0.0
    %3583 = vmatpush2.msra.mxu0 0.0
    %3584 = vmatprep.subr.mxu0 0.0
    %3585 = vmatpush2.msra.mxu0 0.0
    %3586 = vmatprep.subr.mxu0 0.0
    %3587 = vmatpush2.msra.mxu0 0.0
    %3588 = vmatprep.subr.mxu0 0.0
    %3589 = vmatpush2.msra.mxu0 0.0
    %3590 = vmatprep.subr.mxu0 0.0
    %3591 = vmatpush2.msra.mxu0 0.0
    %3592 = vmatprep.subr.mxu0 0.0
    %3593 = vmatpush2.msra.mxu0 0.0
    %3594 = vmatprep.subr.mxu0 0.0
    %3595 = vmatpush2.msra.mxu0 0.0
    %3596 = vmatprep.subr.mxu0 0.0
    %3597 = vmatpush2.msra.mxu0 0.0
    %3598 = vmatprep.subr.mxu0 0.0
    %3599 = vmatpush2.msra.mxu0 0.0
    %3600 = vmatprep.subr.mxu0 0.0
    %3601 = vmatpush2.msra.mxu0 0.0
    %3602 = vmatprep.subr.mxu0 0.0
    %3603 = vmatpush2.msra.mxu0 0.0
    %3604 = vmatprep.subr.mxu0 0.0
    %3605 = vmatpush2.msra.mxu0 0.0
    %3606 = vmatprep.subr.mxu0 0.0
    %3607 = vmatpush2.msra.mxu0 0.0
    %3608 = vmatprep.subr.mxu0 0.0
    %3609 = vmatpush2.msra.mxu0 0.0
    %3610 = vmatprep.subr.mxu0 0.0
    %3611 = vmatpush2.msra.mxu0 0.0
    %3612 = vmatprep.subr.mxu0 0.0
    %3613 = vmatpush2.msra.mxu0 0.0
    %3614 = vmatprep.mubr.f32.mxu0 0.0
    %v3615 = vand.u32 %v3149, 4294901760
    %3616 = vmatmul.mubr.f32.gmra.mxu0 %v3615
    %v3617 = vpop.f32.mrf.mxu0
    %v3618 = vadd.f32 %v3522, %v3617
    %v3619 = vpop.f32.mrf.mxu0
    %3620 = vmatprep.mubr.f32.mxu0 0.0
    %v3621 = vand.u32 %v3152, 4294901760
    %3622 = vmatmul.mubr.f32.gmra.mxu0 %v3621
    %v3623 = vpop.f32.mrf.mxu0
    %v3624 = vadd.f32 %v3530, %v3623
    %v3625 = vpop.f32.mrf.mxu0
    %3626 = vmatprep.mubr.f32.mxu0 0.0
    %v3627 = vand.u32 %v3155, 4294901760
    %3628 = vmatmul.mubr.f32.gmra.mxu0 %v3627
    %v3629 = vpop.f32.mrf.mxu0
    %v3630 = vadd.f32 %v3538, %v3629
    %v3631 = vpop.f32.mrf.mxu0
    %3632 = vdwg.mxu0
    %3633 = vmatprep.subr.mxu0 0.0
    %3634 = vmatpush1.msra.mxu0 0.0
    %3635 = vmatprep.subr.mxu0 0.0
    %3636 = vmatpush1.msra.mxu0 0.0
    %3637 = vmatprep.subr.mxu0 0.0
    %3638 = vmatpush1.msra.mxu0 0.0
    %3639 = vmatprep.subr.mxu0 0.0
    %3640 = vmatpush1.msra.mxu0 0.0
    %3641 = vmatprep.subr.mxu0 0.0
    %3642 = vmatpush1.msra.mxu0 0.0
    %3643 = vmatprep.subr.mxu0 0.0
    %3644 = vmatpush1.msra.mxu0 0.0
    %3645 = vmatprep.subr.mxu0 0.0
    %3646 = vmatpush1.msra.mxu0 0.0
    %3647 = vmatprep.subr.mxu0 0.0
    %3648 = vmatpush1.msra.mxu0 0.0
    %3649 = vmatprep.subr.mxu0 0.0
    %3650 = vmatpush1.msra.mxu0 0.0
    %3651 = vmatprep.subr.mxu0 0.0
    %3652 = vmatpush1.msra.mxu0 0.0
    %3653 = vmatprep.subr.mxu0 0.0
    %3654 = vmatpush1.msra.mxu0 0.0
    %3655 = vmatprep.subr.mxu0 0.0
    %3656 = vmatpush1.msra.mxu0 0.0
    %3657 = vmatprep.subr.mxu0 0.0
    %3658 = vmatpush1.msra.mxu0 0.0
    %3659 = vmatprep.subr.mxu0 0.0
    %v3660 = vand.u32 %v3159, 4294901760
    %3661 = vmatpush1.msra.mxu0 %v3660
    %3662 = vmatprep.subr.mxu0 0.0
    %v3663 = vand.u32 %v2525, 4294901760
    %3664 = vmatpush1.msra.mxu0 %v3663
    %3665 = vmatprep.subr.mxu0 0.0
    %v3666 = vand.u32 %v2519, 4294901760
    %3667 = vmatpush1.msra.mxu0 %v3666
    %3668 = vmatprep.subr.mxu0 0.0
    %3669 = vmatpush2.msra.mxu0 0.0
    %3670 = vmatprep.subr.mxu0 0.0
    %3671 = vmatpush2.msra.mxu0 0.0
    %3672 = vmatprep.subr.mxu0 0.0
    %3673 = vmatpush2.msra.mxu0 0.0
    %3674 = vmatprep.subr.mxu0 0.0
    %3675 = vmatpush2.msra.mxu0 0.0
    %3676 = vmatprep.subr.mxu0 0.0
    %3677 = vmatpush2.msra.mxu0 0.0
    %3678 = vmatprep.subr.mxu0 0.0
    %3679 = vmatpush2.msra.mxu0 0.0
    %3680 = vmatprep.subr.mxu0 0.0
    %3681 = vmatpush2.msra.mxu0 0.0
    %3682 = vmatprep.subr.mxu0 0.0
    %3683 = vmatpush2.msra.mxu0 0.0
    %3684 = vmatprep.subr.mxu0 0.0
    %3685 = vmatpush2.msra.mxu0 0.0
    %3686 = vmatprep.subr.mxu0 0.0
    %3687 = vmatpush2.msra.mxu0 0.0
    %3688 = vmatprep.subr.mxu0 0.0
    %3689 = vmatpush2.msra.mxu0 0.0
    %3690 = vmatprep.subr.mxu0 0.0
    %3691 = vmatpush2.msra.mxu0 0.0
    %3692 = vmatprep.subr.mxu0 0.0
    %3693 = vmatpush2.msra.mxu0 0.0
    %3694 = vmatprep.subr.mxu0 0.0
    %3695 = vmatpush2.msra.mxu0 0.0
    %3696 = vmatprep.subr.mxu0 0.0
    %3697 = vmatpush2.msra.mxu0 0.0
    %3698 = vmatprep.subr.mxu0 0.0
    %3699 = vmatpush2.msra.mxu0 0.0
    %3700 = vmatprep.mubr.f32.mxu0 0.0
    %v3701 = vand.u32 %v3149, 4294901760
    %3702 = vmatmul.mubr.f32.gmra.mxu0 %v3701
    %v3703 = vpop.f32.mrf.mxu0
    %v3704 = vadd.f32 %v3618, %v3703
    %v3705 = vpop.f32.mrf.mxu0
    %3706 = vmatprep.mubr.f32.mxu0 0.0
    %v3707 = vand.u32 %v3152, 4294901760
    %3708 = vmatmul.mubr.f32.gmra.mxu0 %v3707
    %v3709 = vpop.f32.mrf.mxu0
    %v3710 = vadd.f32 %v3624, %v3709
    %v3711 = vpop.f32.mrf.mxu0
    %3712 = vmatprep.mubr.f32.mxu0 0.0
    %v3713 = vand.u32 %v3155, 4294901760
    %3714 = vmatmul.mubr.f32.gmra.mxu0 %v3713
    %v3715 = vpop.f32.mrf.mxu0
    %v3716 = vadd.f32 %v3630, %v3715
    %v3717 = vpop.f32.mrf.mxu0
    %3718 = vdwg.mxu0
    %vm3719 = vcmp.ge.f32.partialorder %v3704, 0.0
    %vm3720 = vcmp.ge.f32.partialorder %v3710, 0.0
    %vm3721 = vcmp.ge.f32.partialorder %v3716, 0.0
    %v3722 = vmul.f32 %v3704, 0.01
    %v3723 = vmul.f32 %v3710, 0.01
    %v3724 = vmul.f32 %v3716, 0.01
    %v3725 = vsel %vm3719, %v3704, %v3722
    %v3726 = vsel %vm3720, %v3710, %v3723
    %v3727 = vsel %vm3721, %v3716, %v3724
    %v3729 = vlaneseq
    %v3730 = vshrl.u32 %v3729, 7
    %v3731 = vsub.s32 0, %v3730
    %v3732 = vrot.slane %v141, %v3731
    %v3734 = vmul.f32 %v3725, %v3732
    %v3735 = vmul.f32 %v3726, %v3732
    %v3736 = vmul.f32 %v3727, %v3732
    %v3737 = vsel %vm154, %v3734, 0.0
    %3738 = vadd.xlane.f32.xlu0 %v3737
    %v3739 = vpop.xlane.xlu0 %3738
    %v3740 = vsel %vm154, %v3735, 0.0
    %3741 = vadd.xlane.f32.xlu0 %v3740
    %v3742 = vpop.xlane.xlu0 %3741
    %vm3743 = vcmask 253952
    %v3744 = vsel %vm3743, %v3736, 0.0
    %3745 = vadd.xlane.f32.xlu0 %v3744
    %v3746 = vpop.xlane.xlu0 %3745
    %v3748 = vlaneseq
    %v3749 = vshrl.u32 %v3748, 7
    %v3750 = vsub.s32 0, %v3749
    %v3751 = vrot.slane %v142, %v3750
    %v3753 = vadd.f32 %v3739, %v3751
    %v3754 = vadd.f32 %v3742, %v3751
    %v3755 = vadd.f32 %v3746, %v3751
    %v3756 = vsub.f32 0.0, %v3753
    %v3757 = vsub.f32 0.0, %v3754
    %v3758 = vsub.f32 0.0, %v3755
    %v3759 = vmul.f32 %v3756, 1.442695
    %v3760 = vpow.pop %v3759
    %v3761 = vmul.f32 %v3757, 1.442695
    %v3762 = vpow.pop %v3761
    %v3763 = vmul.f32 %v3758, 1.442695
    %v3764 = vpow.pop %v3763
    %v3765 = vadd.f32 %v3760, 1.0
    %v3766 = vadd.f32 %v3762, 1.0
    %v3767 = vadd.f32 %v3764, 1.0
    %v3768 = vrcp.pop %v3765
    %v3769 = vmul.f32 1.0, %v3768
    %v3770 = vrcp.pop %v3766
    %v3771 = vmul.f32 1.0, %v3770
    %v3772 = vrcp.pop %v3767
    %v3773 = vmul.f32 1.0, %v3772
    %vm3774 = vcmask 7168
    %3775 = vst.msk [vmem:[%s13] sm:$0xff] %vm3774, %v3769
    %3776 = vst.msk [vmem:[%s13 + $0x8] sm:$0xff] %vm3774, %v3771
    %vm3777 = vcmask 0
    %3778 = vst.msk [vmem:[%s13 + $0x10] sm:$0x1] %vm3777, %v3773
    %s3779 = scalar_lea.vmem %s0, 24
    %v3780 = vld [vmem:[%s3779] sm:$0xff]
    %v3781 = vld [vmem:[%s3779 + $0x8] sm:$0xff]
    %v3782 = vld [vmem:[%s3779 + $0x10] sm:$0x1]
    %3784 = vset.pattern.permute.xlu0 0
    %3785 = vperm.xlu0 %3784, %v3780
    %v3786 = vpop.permute.xlu0 %3785
    %3789 = vset.pattern.permute.xlu0 0
    %3790 = vperm.xlu0 %3789, %v3781
    %v3791 = vpop.permute.xlu0 %3790
    %3794 = vset.pattern.permute.xlu0 0
    %3795 = vperm.xlu0 %3794, %v3782
    %v3796 = vpop.permute.xlu0 %3795
    %v3798 = vmul.f32 %v3786, %v756
    %v3799 = vmul.f32 %v3791, %v756
    %v3800 = vmul.f32 %v3796, %v756
    %3801 = vset.pattern.permute.xlu0 1
    %3802 = vperm.xlu0 %3801, %v3780
    %v3803 = vpop.permute.xlu0 %3802
    %3805 = vset.pattern.permute.xlu0 1
    %3806 = vperm.xlu0 %3805, %v3781
    %v3807 = vpop.permute.xlu0 %3806
    %3809 = vset.pattern.permute.xlu0 1
    %3810 = vperm.xlu0 %3809, %v3782
    %v3811 = vpop.permute.xlu0 %3810
    %v3813 = vmul.f32 %v3803, %v775
    %v3814 = vmul.f32 %v3807, %v775
    %v3815 = vmul.f32 %v3811, %v775
    %v3816 = vadd.f32 %v3798, %v3813
    %v3817 = vadd.f32 %v3799, %v3814
    %v3818 = vadd.f32 %v3800, %v3815
    %v3819 = vadd.f32 %v3816, %v720
    %v3820 = vadd.f32 %v3817, %v726
    %v3821 = vadd.f32 %v3818, %v732
    %vm3822 = vcmp.ge.f32.partialorder %v3819, 0.0
    %vm3823 = vcmp.ge.f32.partialorder %v3820, 0.0
    %vm3824 = vcmp.ge.f32.partialorder %v3821, 0.0
    %v3825 = vmul.f32 %v3819, 0.01
    %v3826 = vmul.f32 %v3820, 0.01
    %v3827 = vmul.f32 %v3821, 0.01
    %v3828 = vsel %vm3822, %v3819, %v3825
    %v3829 = vsel %vm3823, %v3820, %v3826
    %v3830 = vsel %vm3824, %v3821, %v3827
    %v3832 = vsel %vm154, %v3828, 0
    %v3835 = vsel %vm154, %v3829, 0
    %v3838 = vsel %vm154, %v3830, 0
    %3840 = vmatprep.subr.mxu0 0.0
    %3841 = vmatpush1.msra.mxu0 0.0
    %3842 = vmatprep.subr.mxu0 0.0
    %3843 = vmatpush1.msra.mxu0 0.0
    %3844 = vmatprep.subr.mxu0 0.0
    %3845 = vmatpush1.msra.mxu0 0.0
    %3846 = vmatprep.subr.mxu0 0.0
    %3847 = vmatpush1.msra.mxu0 0.0
    %3848 = vmatprep.subr.mxu0 0.0
    %3849 = vmatpush1.msra.mxu0 0.0
    %3850 = vmatprep.subr.mxu0 0.0
    %3851 = vmatpush1.msra.mxu0 0.0
    %3852 = vmatprep.subr.mxu0 0.0
    %3853 = vmatpush1.msra.mxu0 0.0
    %3854 = vmatprep.subr.mxu0 0.0
    %3855 = vmatpush1.msra.mxu0 0.0
    %3856 = vmatprep.subr.mxu0 0.0
    %3857 = vmatpush1.msra.mxu0 0.0
    %3858 = vmatprep.subr.mxu0 0.0
    %3859 = vmatpush1.msra.mxu0 0.0
    %3860 = vmatprep.subr.mxu0 0.0
    %3861 = vmatpush1.msra.mxu0 0.0
    %3862 = vmatprep.subr.mxu0 0.0
    %3863 = vmatpush1.msra.mxu0 0.0
    %3864 = vmatprep.subr.mxu0 0.0
    %v3865 = vand.u32 %v129, 4294901760
    %3866 = vmatpush1.msra.mxu0 %v3865
    %3867 = vmatprep.subr.mxu0 0.0
    %v3868 = vand.u32 %v128, 4294901760
    %3869 = vmatpush1.msra.mxu0 %v3868
    %3870 = vmatprep.subr.mxu0 0.0
    %v3871 = vand.u32 %v127, 4294901760
    %3872 = vmatpush1.msra.mxu0 %v3871
    %3873 = vmatprep.subr.mxu0 0.0
    %v3874 = vand.u32 %v126, 4294901760
    %3875 = vmatpush1.msra.mxu0 %v3874
    %3876 = vmatprep.subr.mxu0 0.0
    %3877 = vmatpush2.msra.mxu0 0.0
    %3878 = vmatprep.subr.mxu0 0.0
    %3879 = vmatpush2.msra.mxu0 0.0
    %3880 = vmatprep.subr.mxu0 0.0
    %3881 = vmatpush2.msra.mxu0 0.0
    %3882 = vmatprep.subr.mxu0 0.0
    %3883 = vmatpush2.msra.mxu0 0.0
    %3884 = vmatprep.subr.mxu0 0.0
    %3885 = vmatpush2.msra.mxu0 0.0
    %3886 = vmatprep.subr.mxu0 0.0
    %3887 = vmatpush2.msra.mxu0 0.0
    %3888 = vmatprep.subr.mxu0 0.0
    %3889 = vmatpush2.msra.mxu0 0.0
    %3890 = vmatprep.subr.mxu0 0.0
    %3891 = vmatpush2.msra.mxu0 0.0
    %3892 = vmatprep.subr.mxu0 0.0
    %3893 = vmatpush2.msra.mxu0 0.0
    %3894 = vmatprep.subr.mxu0 0.0
    %3895 = vmatpush2.msra.mxu0 0.0
    %3896 = vmatprep.subr.mxu0 0.0
    %3897 = vmatpush2.msra.mxu0 0.0
    %3898 = vmatprep.subr.mxu0 0.0
    %3899 = vmatpush2.msra.mxu0 0.0
    %3900 = vmatprep.subr.mxu0 0.0
    %3901 = vmatpush2.msra.mxu0 0.0
    %3902 = vmatprep.subr.mxu0 0.0
    %3903 = vmatpush2.msra.mxu0 0.0
    %3904 = vmatprep.subr.mxu0 0.0
    %3905 = vmatpush2.msra.mxu0 0.0
    %3906 = vmatprep.subr.mxu0 0.0
    %3907 = vmatpush2.msra.mxu0 0.0
    %3908 = vmatprep.mubr.f32.mxu0 0.0
    %v3909 = vand.u32 %v3832, 4294901760
    %v3910 = vsub.f32 %v3832, %v3909
    %v3911 = vand.u32 %v3910, 4294901760
    %v3912 = vsub.f32 %v3910, %v3911
    %v3913 = vand.u32 %v3912, 4294901760
    %3914 = vmatmul.mubr.f32.gmra.mxu0 %v3913
    %v3915 = vpop.f32.mrf.mxu0
    %v3916 = vadd.f32 %v798, %v3915
    %v3917 = vpop.f32.mrf.mxu0
    %3918 = vmatprep.mubr.f32.mxu0 0.0
    %v3919 = vand.u32 %v3835, 4294901760
    %v3920 = vsub.f32 %v3835, %v3919
    %v3921 = vand.u32 %v3920, 4294901760
    %v3922 = vsub.f32 %v3920, %v3921
    %v3923 = vand.u32 %v3922, 4294901760
    %3924 = vmatmul.mubr.f32.gmra.mxu0 %v3923
    %v3925 = vpop.f32.mrf.mxu0
    %v3926 = vadd.f32 %v798, %v3925
    %v3927 = vpop.f32.mrf.mxu0
    %3928 = vmatprep.mubr.f32.mxu0 0.0
    %v3929 = vand.u32 %v3838, 4294901760
    %v3930 = vsub.f32 %v3838, %v3929
    %v3931 = vand.u32 %v3930, 4294901760
    %v3932 = vsub.f32 %v3930, %v3931
    %v3933 = vand.u32 %v3932, 4294901760
    %3934 = vmatmul.mubr.f32.gmra.mxu0 %v3933
    %v3935 = vpop.f32.mrf.mxu0
    %v3936 = vadd.f32 %v798, %v3935
    %v3937 = vpop.f32.mrf.mxu0
    %3938 = vdwg.mxu0
    %3939 = vmatprep.subr.mxu0 0.0
    %3940 = vmatpush1.msra.mxu0 0.0
    %3941 = vmatprep.subr.mxu0 0.0
    %3942 = vmatpush1.msra.mxu0 0.0
    %3943 = vmatprep.subr.mxu0 0.0
    %3944 = vmatpush1.msra.mxu0 0.0
    %3945 = vmatprep.subr.mxu0 0.0
    %3946 = vmatpush1.msra.mxu0 0.0
    %3947 = vmatprep.subr.mxu0 0.0
    %3948 = vmatpush1.msra.mxu0 0.0
    %3949 = vmatprep.subr.mxu0 0.0
    %3950 = vmatpush1.msra.mxu0 0.0
    %3951 = vmatprep.subr.mxu0 0.0
    %3952 = vmatpush1.msra.mxu0 0.0
    %3953 = vmatprep.subr.mxu0 0.0
    %3954 = vmatpush1.msra.mxu0 0.0
    %3955 = vmatprep.subr.mxu0 0.0
    %3956 = vmatpush1.msra.mxu0 0.0
    %3957 = vmatprep.subr.mxu0 0.0
    %3958 = vmatpush1.msra.mxu0 0.0
    %3959 = vmatprep.subr.mxu0 0.0
    %3960 = vmatpush1.msra.mxu0 0.0
    %3961 = vmatprep.subr.mxu0 0.0
    %3962 = vmatpush1.msra.mxu0 0.0
    %3963 = vmatprep.subr.mxu0 0.0
    %v3964 = vand.u32 %v129, 4294901760
    %v3965 = vsub.f32 %v129, %v3964
    %v3966 = vand.u32 %v3965, 4294901760
    %v3967 = vsub.f32 %v3965, %v3966
    %v3968 = vand.u32 %v3967, 4294901760
    %3969 = vmatpush1.msra.mxu0 %v3968
    %3970 = vmatprep.subr.mxu0 0.0
    %v3971 = vand.u32 %v128, 4294901760
    %v3972 = vsub.f32 %v128, %v3971
    %v3973 = vand.u32 %v3972, 4294901760
    %v3974 = vsub.f32 %v3972, %v3973
    %v3975 = vand.u32 %v3974, 4294901760
    %3976 = vmatpush1.msra.mxu0 %v3975
    %3977 = vmatprep.subr.mxu0 0.0
    %v3978 = vand.u32 %v127, 4294901760
    %v3979 = vsub.f32 %v127, %v3978
    %v3980 = vand.u32 %v3979, 4294901760
    %v3981 = vsub.f32 %v3979, %v3980
    %v3982 = vand.u32 %v3981, 4294901760
    %3983 = vmatpush1.msra.mxu0 %v3982
    %3984 = vmatprep.subr.mxu0 0.0
    %v3985 = vand.u32 %v126, 4294901760
    %v3986 = vsub.f32 %v126, %v3985
    %v3987 = vand.u32 %v3986, 4294901760
    %v3988 = vsub.f32 %v3986, %v3987
    %v3989 = vand.u32 %v3988, 4294901760
    %3990 = vmatpush1.msra.mxu0 %v3989
    %3991 = vmatprep.subr.mxu0 0.0
    %3992 = vmatpush2.msra.mxu0 0.0
    %3993 = vmatprep.subr.mxu0 0.0
    %3994 = vmatpush2.msra.mxu0 0.0
    %3995 = vmatprep.subr.mxu0 0.0
    %3996 = vmatpush2.msra.mxu0 0.0
    %3997 = vmatprep.subr.mxu0 0.0
    %3998 = vmatpush2.msra.mxu0 0.0
    %3999 = vmatprep.subr.mxu0 0.0
    %4000 = vmatpush2.msra.mxu0 0.0
    %4001 = vmatprep.subr.mxu0 0.0
    %4002 = vmatpush2.msra.mxu0 0.0
    %4003 = vmatprep.subr.mxu0 0.0
    %4004 = vmatpush2.msra.mxu0 0.0
    %4005 = vmatprep.subr.mxu0 0.0
    %4006 = vmatpush2.msra.mxu0 0.0
    %4007 = vmatprep.subr.mxu0 0.0
    %4008 = vmatpush2.msra.mxu0 0.0
    %4009 = vmatprep.subr.mxu0 0.0
    %4010 = vmatpush2.msra.mxu0 0.0
    %4011 = vmatprep.subr.mxu0 0.0
    %4012 = vmatpush2.msra.mxu0 0.0
    %4013 = vmatprep.subr.mxu0 0.0
    %4014 = vmatpush2.msra.mxu0 0.0
    %4015 = vmatprep.subr.mxu0 0.0
    %4016 = vmatpush2.msra.mxu0 0.0
    %4017 = vmatprep.subr.mxu0 0.0
    %4018 = vmatpush2.msra.mxu0 0.0
    %4019 = vmatprep.subr.mxu0 0.0
    %4020 = vmatpush2.msra.mxu0 0.0
    %4021 = vmatprep.subr.mxu0 0.0
    %4022 = vmatpush2.msra.mxu0 0.0
    %4023 = vmatprep.mubr.f32.mxu0 0.0
    %v4024 = vand.u32 %v3832, 4294901760
    %4025 = vmatmul.mubr.f32.gmra.mxu0 %v4024
    %v4026 = vpop.f32.mrf.mxu0
    %v4027 = vadd.f32 %v3916, %v4026
    %v4028 = vpop.f32.mrf.mxu0
    %4029 = vmatprep.mubr.f32.mxu0 0.0
    %v4030 = vand.u32 %v3835, 4294901760
    %4031 = vmatmul.mubr.f32.gmra.mxu0 %v4030
    %v4032 = vpop.f32.mrf.mxu0
    %v4033 = vadd.f32 %v3926, %v4032
    %v4034 = vpop.f32.mrf.mxu0
    %4035 = vmatprep.mubr.f32.mxu0 0.0
    %v4036 = vand.u32 %v3838, 4294901760
    %4037 = vmatmul.mubr.f32.gmra.mxu0 %v4036
    %v4038 = vpop.f32.mrf.mxu0
    %v4039 = vadd.f32 %v3936, %v4038
    %v4040 = vpop.f32.mrf.mxu0
    %4041 = vdwg.mxu0
    %4042 = vmatprep.subr.mxu0 0.0
    %4043 = vmatpush1.msra.mxu0 0.0
    %4044 = vmatprep.subr.mxu0 0.0
    %4045 = vmatpush1.msra.mxu0 0.0
    %4046 = vmatprep.subr.mxu0 0.0
    %4047 = vmatpush1.msra.mxu0 0.0
    %4048 = vmatprep.subr.mxu0 0.0
    %4049 = vmatpush1.msra.mxu0 0.0
    %4050 = vmatprep.subr.mxu0 0.0
    %4051 = vmatpush1.msra.mxu0 0.0
    %4052 = vmatprep.subr.mxu0 0.0
    %4053 = vmatpush1.msra.mxu0 0.0
    %4054 = vmatprep.subr.mxu0 0.0
    %4055 = vmatpush1.msra.mxu0 0.0
    %4056 = vmatprep.subr.mxu0 0.0
    %4057 = vmatpush1.msra.mxu0 0.0
    %4058 = vmatprep.subr.mxu0 0.0
    %4059 = vmatpush1.msra.mxu0 0.0
    %4060 = vmatprep.subr.mxu0 0.0
    %4061 = vmatpush1.msra.mxu0 0.0
    %4062 = vmatprep.subr.mxu0 0.0
    %4063 = vmatpush1.msra.mxu0 0.0
    %4064 = vmatprep.subr.mxu0 0.0
    %4065 = vmatpush1.msra.mxu0 0.0
    %4066 = vmatprep.subr.mxu0 0.0
    %v4067 = vand.u32 %v129, 4294901760
    %v4068 = vsub.f32 %v129, %v4067
    %4069 = vmatpush1.msra.mxu0 %v4068
    %4070 = vmatprep.subr.mxu0 0.0
    %v4071 = vand.u32 %v128, 4294901760
    %v4072 = vsub.f32 %v128, %v4071
    %4073 = vmatpush1.msra.mxu0 %v4072
    %4074 = vmatprep.subr.mxu0 0.0
    %v4075 = vand.u32 %v127, 4294901760
    %v4076 = vsub.f32 %v127, %v4075
    %4077 = vmatpush1.msra.mxu0 %v4076
    %4078 = vmatprep.subr.mxu0 0.0
    %v4079 = vand.u32 %v126, 4294901760
    %v4080 = vsub.f32 %v126, %v4079
    %4081 = vmatpush1.msra.mxu0 %v4080
    %4082 = vmatprep.subr.mxu0 0.0
    %4083 = vmatpush2.msra.mxu0 0.0
    %4084 = vmatprep.subr.mxu0 0.0
    %4085 = vmatpush2.msra.mxu0 0.0
    %4086 = vmatprep.subr.mxu0 0.0
    %4087 = vmatpush2.msra.mxu0 0.0
    %4088 = vmatprep.subr.mxu0 0.0
    %4089 = vmatpush2.msra.mxu0 0.0
    %4090 = vmatprep.subr.mxu0 0.0
    %4091 = vmatpush2.msra.mxu0 0.0
    %4092 = vmatprep.subr.mxu0 0.0
    %4093 = vmatpush2.msra.mxu0 0.0
    %4094 = vmatprep.subr.mxu0 0.0
    %4095 = vmatpush2.msra.mxu0 0.0
    %4096 = vmatprep.subr.mxu0 0.0
    %4097 = vmatpush2.msra.mxu0 0.0
    %4098 = vmatprep.subr.mxu0 0.0
    %4099 = vmatpush2.msra.mxu0 0.0
    %4100 = vmatprep.subr.mxu0 0.0
    %4101 = vmatpush2.msra.mxu0 0.0
    %4102 = vmatprep.subr.mxu0 0.0
    %4103 = vmatpush2.msra.mxu0 0.0
    %4104 = vmatprep.subr.mxu0 0.0
    %4105 = vmatpush2.msra.mxu0 0.0
    %4106 = vmatprep.subr.mxu0 0.0
    %4107 = vmatpush2.msra.mxu0 0.0
    %4108 = vmatprep.subr.mxu0 0.0
    %4109 = vmatpush2.msra.mxu0 0.0
    %4110 = vmatprep.subr.mxu0 0.0
    %4111 = vmatpush2.msra.mxu0 0.0
    %4112 = vmatprep.subr.mxu0 0.0
    %4113 = vmatpush2.msra.mxu0 0.0
    %4114 = vmatprep.mubr.f32.mxu0 0.0
    %v4115 = vand.u32 %v3832, 4294901760
    %v4116 = vsub.f32 %v3832, %v4115
    %4117 = vmatmul.mubr.f32.gmra.mxu0 %v4116
    %v4118 = vpop.f32.mrf.mxu0
    %v4119 = vadd.f32 %v4027, %v4118
    %v4120 = vpop.f32.mrf.mxu0
    %4121 = vmatprep.mubr.f32.mxu0 0.0
    %v4122 = vand.u32 %v3835, 4294901760
    %v4123 = vsub.f32 %v3835, %v4122
    %4124 = vmatmul.mubr.f32.gmra.mxu0 %v4123
    %v4125 = vpop.f32.mrf.mxu0
    %v4126 = vadd.f32 %v4033, %v4125
    %v4127 = vpop.f32.mrf.mxu0
    %4128 = vmatprep.mubr.f32.mxu0 0.0
    %v4129 = vand.u32 %v3838, 4294901760
    %v4130 = vsub.f32 %v3838, %v4129
    %4131 = vmatmul.mubr.f32.gmra.mxu0 %v4130
    %v4132 = vpop.f32.mrf.mxu0
    %v4133 = vadd.f32 %v4039, %v4132
    %v4134 = vpop.f32.mrf.mxu0
    %4135 = vdwg.mxu0
    %4136 = vmatprep.subr.mxu0 0.0
    %4137 = vmatpush1.msra.mxu0 0.0
    %4138 = vmatprep.subr.mxu0 0.0
    %4139 = vmatpush1.msra.mxu0 0.0
    %4140 = vmatprep.subr.mxu0 0.0
    %4141 = vmatpush1.msra.mxu0 0.0
    %4142 = vmatprep.subr.mxu0 0.0
    %4143 = vmatpush1.msra.mxu0 0.0
    %4144 = vmatprep.subr.mxu0 0.0
    %4145 = vmatpush1.msra.mxu0 0.0
    %4146 = vmatprep.subr.mxu0 0.0
    %4147 = vmatpush1.msra.mxu0 0.0
    %4148 = vmatprep.subr.mxu0 0.0
    %4149 = vmatpush1.msra.mxu0 0.0
    %4150 = vmatprep.subr.mxu0 0.0
    %4151 = vmatpush1.msra.mxu0 0.0
    %4152 = vmatprep.subr.mxu0 0.0
    %4153 = vmatpush1.msra.mxu0 0.0
    %4154 = vmatprep.subr.mxu0 0.0
    %4155 = vmatpush1.msra.mxu0 0.0
    %4156 = vmatprep.subr.mxu0 0.0
    %4157 = vmatpush1.msra.mxu0 0.0
    %4158 = vmatprep.subr.mxu0 0.0
    %4159 = vmatpush1.msra.mxu0 0.0
    %4160 = vmatprep.subr.mxu0 0.0
    %v4161 = vand.u32 %v129, 4294901760
    %4162 = vmatpush1.msra.mxu0 %v4161
    %4163 = vmatprep.subr.mxu0 0.0
    %v4164 = vand.u32 %v128, 4294901760
    %4165 = vmatpush1.msra.mxu0 %v4164
    %4166 = vmatprep.subr.mxu0 0.0
    %v4167 = vand.u32 %v127, 4294901760
    %4168 = vmatpush1.msra.mxu0 %v4167
    %4169 = vmatprep.subr.mxu0 0.0
    %v4170 = vand.u32 %v126, 4294901760
    %4171 = vmatpush1.msra.mxu0 %v4170
    %4172 = vmatprep.subr.mxu0 0.0
    %4173 = vmatpush2.msra.mxu0 0.0
    %4174 = vmatprep.subr.mxu0 0.0
    %4175 = vmatpush2.msra.mxu0 0.0
    %4176 = vmatprep.subr.mxu0 0.0
    %4177 = vmatpush2.msra.mxu0 0.0
    %4178 = vmatprep.subr.mxu0 0.0
    %4179 = vmatpush2.msra.mxu0 0.0
    %4180 = vmatprep.subr.mxu0 0.0
    %4181 = vmatpush2.msra.mxu0 0.0
    %4182 = vmatprep.subr.mxu0 0.0
    %4183 = vmatpush2.msra.mxu0 0.0
    %4184 = vmatprep.subr.mxu0 0.0
    %4185 = vmatpush2.msra.mxu0 0.0
    %4186 = vmatprep.subr.mxu0 0.0
    %4187 = vmatpush2.msra.mxu0 0.0
    %4188 = vmatprep.subr.mxu0 0.0
    %4189 = vmatpush2.msra.mxu0 0.0
    %4190 = vmatprep.subr.mxu0 0.0
    %4191 = vmatpush2.msra.mxu0 0.0
    %4192 = vmatprep.subr.mxu0 0.0
    %4193 = vmatpush2.msra.mxu0 0.0
    %4194 = vmatprep.subr.mxu0 0.0
    %4195 = vmatpush2.msra.mxu0 0.0
    %4196 = vmatprep.subr.mxu0 0.0
    %4197 = vmatpush2.msra.mxu0 0.0
    %4198 = vmatprep.subr.mxu0 0.0
    %4199 = vmatpush2.msra.mxu0 0.0
    %4200 = vmatprep.subr.mxu0 0.0
    %4201 = vmatpush2.msra.mxu0 0.0
    %4202 = vmatprep.subr.mxu0 0.0
    %4203 = vmatpush2.msra.mxu0 0.0
    %4204 = vmatprep.mubr.f32.mxu0 0.0
    %v4205 = vand.u32 %v3832, 4294901760
    %v4206 = vsub.f32 %v3832, %v4205
    %v4207 = vand.u32 %v4206, 4294901760
    %4208 = vmatmul.mubr.f32.gmra.mxu0 %v4207
    %v4209 = vpop.f32.mrf.mxu0
    %v4210 = vadd.f32 %v4119, %v4209
    %v4211 = vpop.f32.mrf.mxu0
    %4212 = vmatprep.mubr.f32.mxu0 0.0
    %v4213 = vand.u32 %v3835, 4294901760
    %v4214 = vsub.f32 %v3835, %v4213
    %v4215 = vand.u32 %v4214, 4294901760
    %4216 = vmatmul.mubr.f32.gmra.mxu0 %v4215
    %v4217 = vpop.f32.mrf.mxu0
    %v4218 = vadd.f32 %v4126, %v4217
    %v4219 = vpop.f32.mrf.mxu0
    %4220 = vmatprep.mubr.f32.mxu0 0.0
    %v4221 = vand.u32 %v3838, 4294901760
    %v4222 = vsub.f32 %v3838, %v4221
    %v4223 = vand.u32 %v4222, 4294901760
    %4224 = vmatmul.mubr.f32.gmra.mxu0 %v4223
    %v4225 = vpop.f32.mrf.mxu0
    %v4226 = vadd.f32 %v4133, %v4225
    %v4227 = vpop.f32.mrf.mxu0
    %4228 = vdwg.mxu0
    %4229 = vmatprep.subr.mxu0 0.0
    %4230 = vmatpush1.msra.mxu0 0.0
    %4231 = vmatprep.subr.mxu0 0.0
    %4232 = vmatpush1.msra.mxu0 0.0
    %4233 = vmatprep.subr.mxu0 0.0
    %4234 = vmatpush1.msra.mxu0 0.0
    %4235 = vmatprep.subr.mxu0 0.0
    %4236 = vmatpush1.msra.mxu0 0.0
    %4237 = vmatprep.subr.mxu0 0.0
    %4238 = vmatpush1.msra.mxu0 0.0
    %4239 = vmatprep.subr.mxu0 0.0
    %4240 = vmatpush1.msra.mxu0 0.0
    %4241 = vmatprep.subr.mxu0 0.0
    %4242 = vmatpush1.msra.mxu0 0.0
    %4243 = vmatprep.subr.mxu0 0.0
    %4244 = vmatpush1.msra.mxu0 0.0
    %4245 = vmatprep.subr.mxu0 0.0
    %4246 = vmatpush1.msra.mxu0 0.0
    %4247 = vmatprep.subr.mxu0 0.0
    %4248 = vmatpush1.msra.mxu0 0.0
    %4249 = vmatprep.subr.mxu0 0.0
    %4250 = vmatpush1.msra.mxu0 0.0
    %4251 = vmatprep.subr.mxu0 0.0
    %4252 = vmatpush1.msra.mxu0 0.0
    %4253 = vmatprep.subr.mxu0 0.0
    %v4254 = vand.u32 %v129, 4294901760
    %v4255 = vsub.f32 %v129, %v4254
    %v4256 = vand.u32 %v4255, 4294901760
    %4257 = vmatpush1.msra.mxu0 %v4256
    %4258 = vmatprep.subr.mxu0 0.0
    %v4259 = vand.u32 %v128, 4294901760
    %v4260 = vsub.f32 %v128, %v4259
    %v4261 = vand.u32 %v4260, 4294901760
    %4262 = vmatpush1.msra.mxu0 %v4261
    %4263 = vmatprep.subr.mxu0 0.0
    %v4264 = vand.u32 %v127, 4294901760
    %v4265 = vsub.f32 %v127, %v4264
    %v4266 = vand.u32 %v4265, 4294901760
    %4267 = vmatpush1.msra.mxu0 %v4266
    %4268 = vmatprep.subr.mxu0 0.0
    %v4269 = vand.u32 %v126, 4294901760
    %v4270 = vsub.f32 %v126, %v4269
    %v4271 = vand.u32 %v4270, 4294901760
    %4272 = vmatpush1.msra.mxu0 %v4271
    %4273 = vmatprep.subr.mxu0 0.0
    %4274 = vmatpush2.msra.mxu0 0.0
    %4275 = vmatprep.subr.mxu0 0.0
    %4276 = vmatpush2.msra.mxu0 0.0
    %4277 = vmatprep.subr.mxu0 0.0
    %4278 = vmatpush2.msra.mxu0 0.0
    %4279 = vmatprep.subr.mxu0 0.0
    %4280 = vmatpush2.msra.mxu0 0.0
    %4281 = vmatprep.subr.mxu0 0.0
    %4282 = vmatpush2.msra.mxu0 0.0
    %4283 = vmatprep.subr.mxu0 0.0
    %4284 = vmatpush2.msra.mxu0 0.0
    %4285 = vmatprep.subr.mxu0 0.0
    %4286 = vmatpush2.msra.mxu0 0.0
    %4287 = vmatprep.subr.mxu0 0.0
    %4288 = vmatpush2.msra.mxu0 0.0
    %4289 = vmatprep.subr.mxu0 0.0
    %4290 = vmatpush2.msra.mxu0 0.0
    %4291 = vmatprep.subr.mxu0 0.0
    %4292 = vmatpush2.msra.mxu0 0.0
    %4293 = vmatprep.subr.mxu0 0.0
    %4294 = vmatpush2.msra.mxu0 0.0
    %4295 = vmatprep.subr.mxu0 0.0
    %4296 = vmatpush2.msra.mxu0 0.0
    %4297 = vmatprep.subr.mxu0 0.0
    %4298 = vmatpush2.msra.mxu0 0.0
    %4299 = vmatprep.subr.mxu0 0.0
    %4300 = vmatpush2.msra.mxu0 0.0
    %4301 = vmatprep.subr.mxu0 0.0
    %4302 = vmatpush2.msra.mxu0 0.0
    %4303 = vmatprep.subr.mxu0 0.0
    %4304 = vmatpush2.msra.mxu0 0.0
    %4305 = vmatprep.mubr.f32.mxu0 0.0
    %v4306 = vand.u32 %v3832, 4294901760
    %4307 = vmatmul.mubr.f32.gmra.mxu0 %v4306
    %v4308 = vpop.f32.mrf.mxu0
    %v4309 = vadd.f32 %v4210, %v4308
    %v4310 = vpop.f32.mrf.mxu0
    %4311 = vmatprep.mubr.f32.mxu0 0.0
    %v4312 = vand.u32 %v3835, 4294901760
    %4313 = vmatmul.mubr.f32.gmra.mxu0 %v4312
    %v4314 = vpop.f32.mrf.mxu0
    %v4315 = vadd.f32 %v4218, %v4314
    %v4316 = vpop.f32.mrf.mxu0
    %4317 = vmatprep.mubr.f32.mxu0 0.0
    %v4318 = vand.u32 %v3838, 4294901760
    %4319 = vmatmul.mubr.f32.gmra.mxu0 %v4318
    %v4320 = vpop.f32.mrf.mxu0
    %v4321 = vadd.f32 %v4226, %v4320
    %v4322 = vpop.f32.mrf.mxu0
    %4323 = vdwg.mxu0
    %4324 = vmatprep.subr.mxu0 0.0
    %4325 = vmatpush1.msra.mxu0 0.0
    %4326 = vmatprep.subr.mxu0 0.0
    %4327 = vmatpush1.msra.mxu0 0.0
    %4328 = vmatprep.subr.mxu0 0.0
    %4329 = vmatpush1.msra.mxu0 0.0
    %4330 = vmatprep.subr.mxu0 0.0
    %4331 = vmatpush1.msra.mxu0 0.0
    %4332 = vmatprep.subr.mxu0 0.0
    %4333 = vmatpush1.msra.mxu0 0.0
    %4334 = vmatprep.subr.mxu0 0.0
    %4335 = vmatpush1.msra.mxu0 0.0
    %4336 = vmatprep.subr.mxu0 0.0
    %4337 = vmatpush1.msra.mxu0 0.0
    %4338 = vmatprep.subr.mxu0 0.0
    %4339 = vmatpush1.msra.mxu0 0.0
    %4340 = vmatprep.subr.mxu0 0.0
    %4341 = vmatpush1.msra.mxu0 0.0
    %4342 = vmatprep.subr.mxu0 0.0
    %4343 = vmatpush1.msra.mxu0 0.0
    %4344 = vmatprep.subr.mxu0 0.0
    %4345 = vmatpush1.msra.mxu0 0.0
    %4346 = vmatprep.subr.mxu0 0.0
    %4347 = vmatpush1.msra.mxu0 0.0
    %4348 = vmatprep.subr.mxu0 0.0
    %v4349 = vand.u32 %v129, 4294901760
    %4350 = vmatpush1.msra.mxu0 %v4349
    %4351 = vmatprep.subr.mxu0 0.0
    %v4352 = vand.u32 %v128, 4294901760
    %4353 = vmatpush1.msra.mxu0 %v4352
    %4354 = vmatprep.subr.mxu0 0.0
    %v4355 = vand.u32 %v127, 4294901760
    %4356 = vmatpush1.msra.mxu0 %v4355
    %4357 = vmatprep.subr.mxu0 0.0
    %v4358 = vand.u32 %v126, 4294901760
    %4359 = vmatpush1.msra.mxu0 %v4358
    %4360 = vmatprep.subr.mxu0 0.0
    %4361 = vmatpush2.msra.mxu0 0.0
    %4362 = vmatprep.subr.mxu0 0.0
    %4363 = vmatpush2.msra.mxu0 0.0
    %4364 = vmatprep.subr.mxu0 0.0
    %4365 = vmatpush2.msra.mxu0 0.0
    %4366 = vmatprep.subr.mxu0 0.0
    %4367 = vmatpush2.msra.mxu0 0.0
    %4368 = vmatprep.subr.mxu0 0.0
    %4369 = vmatpush2.msra.mxu0 0.0
    %4370 = vmatprep.subr.mxu0 0.0
    %4371 = vmatpush2.msra.mxu0 0.0
    %4372 = vmatprep.subr.mxu0 0.0
    %4373 = vmatpush2.msra.mxu0 0.0
    %4374 = vmatprep.subr.mxu0 0.0
    %4375 = vmatpush2.msra.mxu0 0.0
    %4376 = vmatprep.subr.mxu0 0.0
    %4377 = vmatpush2.msra.mxu0 0.0
    %4378 = vmatprep.subr.mxu0 0.0
    %4379 = vmatpush2.msra.mxu0 0.0
    %4380 = vmatprep.subr.mxu0 0.0
    %4381 = vmatpush2.msra.mxu0 0.0
    %4382 = vmatprep.subr.mxu0 0.0
    %4383 = vmatpush2.msra.mxu0 0.0
    %4384 = vmatprep.subr.mxu0 0.0
    %4385 = vmatpush2.msra.mxu0 0.0
    %4386 = vmatprep.subr.mxu0 0.0
    %4387 = vmatpush2.msra.mxu0 0.0
    %4388 = vmatprep.subr.mxu0 0.0
    %4389 = vmatpush2.msra.mxu0 0.0
    %4390 = vmatprep.subr.mxu0 0.0
    %4391 = vmatpush2.msra.mxu0 0.0
    %4392 = vmatprep.mubr.f32.mxu0 0.0
    %v4393 = vand.u32 %v3832, 4294901760
    %4394 = vmatmul.mubr.f32.gmra.mxu0 %v4393
    %v4395 = vpop.f32.mrf.mxu0
    %v4396 = vadd.f32 %v4309, %v4395
    %v4397 = vpop.f32.mrf.mxu0
    %4398 = vmatprep.mubr.f32.mxu0 0.0
    %v4399 = vand.u32 %v3835, 4294901760
    %4400 = vmatmul.mubr.f32.gmra.mxu0 %v4399
    %v4401 = vpop.f32.mrf.mxu0
    %v4402 = vadd.f32 %v4315, %v4401
    %v4403 = vpop.f32.mrf.mxu0
    %4404 = vmatprep.mubr.f32.mxu0 0.0
    %v4405 = vand.u32 %v3838, 4294901760
    %4406 = vmatmul.mubr.f32.gmra.mxu0 %v4405
    %v4407 = vpop.f32.mrf.mxu0
    %v4408 = vadd.f32 %v4321, %v4407
    %v4409 = vpop.f32.mrf.mxu0
    %4410 = vdwg.mxu0
    %4411 = vmatprep.subr.mxu0 0.0
    %4412 = vmatpush1.msra.mxu0 0.0
    %4413 = vmatprep.subr.mxu0 0.0
    %4414 = vmatpush1.msra.mxu0 0.0
    %4415 = vmatprep.subr.mxu0 0.0
    %4416 = vmatpush1.msra.mxu0 0.0
    %4417 = vmatprep.subr.mxu0 0.0
    %4418 = vmatpush1.msra.mxu0 0.0
    %4419 = vmatprep.subr.mxu0 0.0
    %4420 = vmatpush1.msra.mxu0 0.0
    %4421 = vmatprep.subr.mxu0 0.0
    %4422 = vmatpush1.msra.mxu0 0.0
    %4423 = vmatprep.subr.mxu0 0.0
    %4424 = vmatpush1.msra.mxu0 0.0
    %4425 = vmatprep.subr.mxu0 0.0
    %4426 = vmatpush1.msra.mxu0 0.0
    %4427 = vmatprep.subr.mxu0 0.0
    %4428 = vmatpush1.msra.mxu0 0.0
    %4429 = vmatprep.subr.mxu0 0.0
    %4430 = vmatpush1.msra.mxu0 0.0
    %4431 = vmatprep.subr.mxu0 0.0
    %4432 = vmatpush1.msra.mxu0 0.0
    %4433 = vmatprep.subr.mxu0 0.0
    %4434 = vmatpush1.msra.mxu0 0.0
    %4435 = vmatprep.subr.mxu0 0.0
    %v4436 = vand.u32 %v134, 4294901760
    %4437 = vmatpush1.msra.mxu0 %v4436
    %4438 = vmatprep.subr.mxu0 0.0
    %v4439 = vand.u32 %v133, 4294901760
    %4440 = vmatpush1.msra.mxu0 %v4439
    %4441 = vmatprep.subr.mxu0 0.0
    %v4442 = vand.u32 %v132, 4294901760
    %4443 = vmatpush1.msra.mxu0 %v4442
    %4444 = vmatprep.subr.mxu0 0.0
    %v4445 = vand.u32 %v131, 4294901760
    %4446 = vmatpush1.msra.mxu0 %v4445
    %4447 = vmatprep.subr.mxu0 0.0
    %4448 = vmatpush2.msra.mxu0 0.0
    %4449 = vmatprep.subr.mxu0 0.0
    %4450 = vmatpush2.msra.mxu0 0.0
    %4451 = vmatprep.subr.mxu0 0.0
    %4452 = vmatpush2.msra.mxu0 0.0
    %4453 = vmatprep.subr.mxu0 0.0
    %4454 = vmatpush2.msra.mxu0 0.0
    %4455 = vmatprep.subr.mxu0 0.0
    %4456 = vmatpush2.msra.mxu0 0.0
    %4457 = vmatprep.subr.mxu0 0.0
    %4458 = vmatpush2.msra.mxu0 0.0
    %4459 = vmatprep.subr.mxu0 0.0
    %4460 = vmatpush2.msra.mxu0 0.0
    %4461 = vmatprep.subr.mxu0 0.0
    %4462 = vmatpush2.msra.mxu0 0.0
    %4463 = vmatprep.subr.mxu0 0.0
    %4464 = vmatpush2.msra.mxu0 0.0
    %4465 = vmatprep.subr.mxu0 0.0
    %4466 = vmatpush2.msra.mxu0 0.0
    %4467 = vmatprep.subr.mxu0 0.0
    %4468 = vmatpush2.msra.mxu0 0.0
    %4469 = vmatprep.subr.mxu0 0.0
    %4470 = vmatpush2.msra.mxu0 0.0
    %4471 = vmatprep.subr.mxu0 0.0
    %4472 = vmatpush2.msra.mxu0 0.0
    %4473 = vmatprep.subr.mxu0 0.0
    %4474 = vmatpush2.msra.mxu0 0.0
    %4475 = vmatprep.subr.mxu0 0.0
    %4476 = vmatpush2.msra.mxu0 0.0
    %4477 = vmatprep.subr.mxu0 0.0
    %4478 = vmatpush2.msra.mxu0 0.0
    %4479 = vmatprep.mubr.f32.mxu0 0.0
    %v4480 = vand.u32 %v3832, 4294901760
    %v4481 = vsub.f32 %v3832, %v4480
    %v4482 = vand.u32 %v4481, 4294901760
    %v4483 = vsub.f32 %v4481, %v4482
    %v4484 = vand.u32 %v4483, 4294901760
    %4485 = vmatmul.mubr.f32.gmra.mxu0 %v4484
    %v4486 = vpop.f32.mrf.mxu0
    %v4487 = vadd.f32 %v1384, %v4486
    %v4488 = vpop.f32.mrf.mxu0
    %4489 = vmatprep.mubr.f32.mxu0 0.0
    %v4490 = vand.u32 %v3835, 4294901760
    %v4491 = vsub.f32 %v3835, %v4490
    %v4492 = vand.u32 %v4491, 4294901760
    %v4493 = vsub.f32 %v4491, %v4492
    %v4494 = vand.u32 %v4493, 4294901760
    %4495 = vmatmul.mubr.f32.gmra.mxu0 %v4494
    %v4496 = vpop.f32.mrf.mxu0
    %v4497 = vadd.f32 %v1384, %v4496
    %v4498 = vpop.f32.mrf.mxu0
    %4499 = vmatprep.mubr.f32.mxu0 0.0
    %v4500 = vand.u32 %v3838, 4294901760
    %v4501 = vsub.f32 %v3838, %v4500
    %v4502 = vand.u32 %v4501, 4294901760
    %v4503 = vsub.f32 %v4501, %v4502
    %v4504 = vand.u32 %v4503, 4294901760
    %4505 = vmatmul.mubr.f32.gmra.mxu0 %v4504
    %v4506 = vpop.f32.mrf.mxu0
    %v4507 = vadd.f32 %v1384, %v4506
    %v4508 = vpop.f32.mrf.mxu0
    %4509 = vdwg.mxu0
    %4510 = vmatprep.subr.mxu0 0.0
    %4511 = vmatpush1.msra.mxu0 0.0
    %4512 = vmatprep.subr.mxu0 0.0
    %4513 = vmatpush1.msra.mxu0 0.0
    %4514 = vmatprep.subr.mxu0 0.0
    %4515 = vmatpush1.msra.mxu0 0.0
    %4516 = vmatprep.subr.mxu0 0.0
    %4517 = vmatpush1.msra.mxu0 0.0
    %4518 = vmatprep.subr.mxu0 0.0
    %4519 = vmatpush1.msra.mxu0 0.0
    %4520 = vmatprep.subr.mxu0 0.0
    %4521 = vmatpush1.msra.mxu0 0.0
    %4522 = vmatprep.subr.mxu0 0.0
    %4523 = vmatpush1.msra.mxu0 0.0
    %4524 = vmatprep.subr.mxu0 0.0
    %4525 = vmatpush1.msra.mxu0 0.0
    %4526 = vmatprep.subr.mxu0 0.0
    %4527 = vmatpush1.msra.mxu0 0.0
    %4528 = vmatprep.subr.mxu0 0.0
    %4529 = vmatpush1.msra.mxu0 0.0
    %4530 = vmatprep.subr.mxu0 0.0
    %4531 = vmatpush1.msra.mxu0 0.0
    %4532 = vmatprep.subr.mxu0 0.0
    %4533 = vmatpush1.msra.mxu0 0.0
    %4534 = vmatprep.subr.mxu0 0.0
    %v4535 = vand.u32 %v134, 4294901760
    %v4536 = vsub.f32 %v134, %v4535
    %v4537 = vand.u32 %v4536, 4294901760
    %v4538 = vsub.f32 %v4536, %v4537
    %v4539 = vand.u32 %v4538, 4294901760
    %4540 = vmatpush1.msra.mxu0 %v4539
    %4541 = vmatprep.subr.mxu0 0.0
    %v4542 = vand.u32 %v133, 4294901760
    %v4543 = vsub.f32 %v133, %v4542
    %v4544 = vand.u32 %v4543, 4294901760
    %v4545 = vsub.f32 %v4543, %v4544
    %v4546 = vand.u32 %v4545, 4294901760
    %4547 = vmatpush1.msra.mxu0 %v4546
    %4548 = vmatprep.subr.mxu0 0.0
    %v4549 = vand.u32 %v132, 4294901760
    %v4550 = vsub.f32 %v132, %v4549
    %v4551 = vand.u32 %v4550, 4294901760
    %v4552 = vsub.f32 %v4550, %v4551
    %v4553 = vand.u32 %v4552, 4294901760
    %4554 = vmatpush1.msra.mxu0 %v4553
    %4555 = vmatprep.subr.mxu0 0.0
    %v4556 = vand.u32 %v131, 4294901760
    %v4557 = vsub.f32 %v131, %v4556
    %v4558 = vand.u32 %v4557, 4294901760
    %v4559 = vsub.f32 %v4557, %v4558
    %v4560 = vand.u32 %v4559, 4294901760
    %4561 = vmatpush1.msra.mxu0 %v4560
    %4562 = vmatprep.subr.mxu0 0.0
    %4563 = vmatpush2.msra.mxu0 0.0
    %4564 = vmatprep.subr.mxu0 0.0
    %4565 = vmatpush2.msra.mxu0 0.0
    %4566 = vmatprep.subr.mxu0 0.0
    %4567 = vmatpush2.msra.mxu0 0.0
    %4568 = vmatprep.subr.mxu0 0.0
    %4569 = vmatpush2.msra.mxu0 0.0
    %4570 = vmatprep.subr.mxu0 0.0
    %4571 = vmatpush2.msra.mxu0 0.0
    %4572 = vmatprep.subr.mxu0 0.0
    %4573 = vmatpush2.msra.mxu0 0.0
    %4574 = vmatprep.subr.mxu0 0.0
    %4575 = vmatpush2.msra.mxu0 0.0
    %4576 = vmatprep.subr.mxu0 0.0
    %4577 = vmatpush2.msra.mxu0 0.0
    %4578 = vmatprep.subr.mxu0 0.0
    %4579 = vmatpush2.msra.mxu0 0.0
    %4580 = vmatprep.subr.mxu0 0.0
    %4581 = vmatpush2.msra.mxu0 0.0
    %4582 = vmatprep.subr.mxu0 0.0
    %4583 = vmatpush2.msra.mxu0 0.0
    %4584 = vmatprep.subr.mxu0 0.0
    %4585 = vmatpush2.msra.mxu0 0.0
    %4586 = vmatprep.subr.mxu0 0.0
    %4587 = vmatpush2.msra.mxu0 0.0
    %4588 = vmatprep.subr.mxu0 0.0
    %4589 = vmatpush2.msra.mxu0 0.0
    %4590 = vmatprep.subr.mxu0 0.0
    %4591 = vmatpush2.msra.mxu0 0.0
    %4592 = vmatprep.subr.mxu0 0.0
    %4593 = vmatpush2.msra.mxu0 0.0
    %4594 = vmatprep.mubr.f32.mxu0 0.0
    %v4595 = vand.u32 %v3832, 4294901760
    %4596 = vmatmul.mubr.f32.gmra.mxu0 %v4595
    %v4597 = vpop.f32.mrf.mxu0
    %v4598 = vadd.f32 %v4487, %v4597
    %v4599 = vpop.f32.mrf.mxu0
    %4600 = vmatprep.mubr.f32.mxu0 0.0
    %v4601 = vand.u32 %v3835, 4294901760
    %4602 = vmatmul.mubr.f32.gmra.mxu0 %v4601
    %v4603 = vpop.f32.mrf.mxu0
    %v4604 = vadd.f32 %v4497, %v4603
    %v4605 = vpop.f32.mrf.mxu0
    %4606 = vmatprep.mubr.f32.mxu0 0.0
    %v4607 = vand.u32 %v3838, 4294901760
    %4608 = vmatmul.mubr.f32.gmra.mxu0 %v4607
    %v4609 = vpop.f32.mrf.mxu0
    %v4610 = vadd.f32 %v4507, %v4609
    %v4611 = vpop.f32.mrf.mxu0
    %4612 = vdwg.mxu0
    %4613 = vmatprep.subr.mxu0 0.0
    %4614 = vmatpush1.msra.mxu0 0.0
    %4615 = vmatprep.subr.mxu0 0.0
    %4616 = vmatpush1.msra.mxu0 0.0
    %4617 = vmatprep.subr.mxu0 0.0
    %4618 = vmatpush1.msra.mxu0 0.0
    %4619 = vmatprep.subr.mxu0 0.0
    %4620 = vmatpush1.msra.mxu0 0.0
    %4621 = vmatprep.subr.mxu0 0.0
    %4622 = vmatpush1.msra.mxu0 0.0
    %4623 = vmatprep.subr.mxu0 0.0
    %4624 = vmatpush1.msra.mxu0 0.0
    %4625 = vmatprep.subr.mxu0 0.0
    %4626 = vmatpush1.msra.mxu0 0.0
    %4627 = vmatprep.subr.mxu0 0.0
    %4628 = vmatpush1.msra.mxu0 0.0
    %4629 = vmatprep.subr.mxu0 0.0
    %4630 = vmatpush1.msra.mxu0 0.0
    %4631 = vmatprep.subr.mxu0 0.0
    %4632 = vmatpush1.msra.mxu0 0.0
    %4633 = vmatprep.subr.mxu0 0.0
    %4634 = vmatpush1.msra.mxu0 0.0
    %4635 = vmatprep.subr.mxu0 0.0
    %4636 = vmatpush1.msra.mxu0 0.0
    %4637 = vmatprep.subr.mxu0 0.0
    %v4638 = vand.u32 %v134, 4294901760
    %v4639 = vsub.f32 %v134, %v4638
    %4640 = vmatpush1.msra.mxu0 %v4639
    %4641 = vmatprep.subr.mxu0 0.0
    %v4642 = vand.u32 %v133, 4294901760
    %v4643 = vsub.f32 %v133, %v4642
    %4644 = vmatpush1.msra.mxu0 %v4643
    %4645 = vmatprep.subr.mxu0 0.0
    %v4646 = vand.u32 %v132, 4294901760
    %v4647 = vsub.f32 %v132, %v4646
    %4648 = vmatpush1.msra.mxu0 %v4647
    %4649 = vmatprep.subr.mxu0 0.0
    %v4650 = vand.u32 %v131, 4294901760
    %v4651 = vsub.f32 %v131, %v4650
    %4652 = vmatpush1.msra.mxu0 %v4651
    %4653 = vmatprep.subr.mxu0 0.0
    %4654 = vmatpush2.msra.mxu0 0.0
    %4655 = vmatprep.subr.mxu0 0.0
    %4656 = vmatpush2.msra.mxu0 0.0
    %4657 = vmatprep.subr.mxu0 0.0
    %4658 = vmatpush2.msra.mxu0 0.0
    %4659 = vmatprep.subr.mxu0 0.0
    %4660 = vmatpush2.msra.mxu0 0.0
    %4661 = vmatprep.subr.mxu0 0.0
    %4662 = vmatpush2.msra.mxu0 0.0
    %4663 = vmatprep.subr.mxu0 0.0
    %4664 = vmatpush2.msra.mxu0 0.0
    %4665 = vmatprep.subr.mxu0 0.0
    %4666 = vmatpush2.msra.mxu0 0.0
    %4667 = vmatprep.subr.mxu0 0.0
    %4668 = vmatpush2.msra.mxu0 0.0
    %4669 = vmatprep.subr.mxu0 0.0
    %4670 = vmatpush2.msra.mxu0 0.0
    %4671 = vmatprep.subr.mxu0 0.0
    %4672 = vmatpush2.msra.mxu0 0.0
    %4673 = vmatprep.subr.mxu0 0.0
    %4674 = vmatpush2.msra.mxu0 0.0
    %4675 = vmatprep.subr.mxu0 0.0
    %4676 = vmatpush2.msra.mxu0 0.0
    %4677 = vmatprep.subr.mxu0 0.0
    %4678 = vmatpush2.msra.mxu0 0.0
    %4679 = vmatprep.subr.mxu0 0.0
    %4680 = vmatpush2.msra.mxu0 0.0
    %4681 = vmatprep.subr.mxu0 0.0
    %4682 = vmatpush2.msra.mxu0 0.0
    %4683 = vmatprep.subr.mxu0 0.0
    %4684 = vmatpush2.msra.mxu0 0.0
    %4685 = vmatprep.mubr.f32.mxu0 0.0
    %v4686 = vand.u32 %v3832, 4294901760
    %v4687 = vsub.f32 %v3832, %v4686
    %4688 = vmatmul.mubr.f32.gmra.mxu0 %v4687
    %v4689 = vpop.f32.mrf.mxu0
    %v4690 = vadd.f32 %v4598, %v4689
    %v4691 = vpop.f32.mrf.mxu0
    %4692 = vmatprep.mubr.f32.mxu0 0.0
    %v4693 = vand.u32 %v3835, 4294901760
    %v4694 = vsub.f32 %v3835, %v4693
    %4695 = vmatmul.mubr.f32.gmra.mxu0 %v4694
    %v4696 = vpop.f32.mrf.mxu0
    %v4697 = vadd.f32 %v4604, %v4696
    %v4698 = vpop.f32.mrf.mxu0
    %4699 = vmatprep.mubr.f32.mxu0 0.0
    %v4700 = vand.u32 %v3838, 4294901760
    %v4701 = vsub.f32 %v3838, %v4700
    %4702 = vmatmul.mubr.f32.gmra.mxu0 %v4701
    %v4703 = vpop.f32.mrf.mxu0
    %v4704 = vadd.f32 %v4610, %v4703
    %v4705 = vpop.f32.mrf.mxu0
    %4706 = vdwg.mxu0
    %4707 = vmatprep.subr.mxu0 0.0
    %4708 = vmatpush1.msra.mxu0 0.0
    %4709 = vmatprep.subr.mxu0 0.0
    %4710 = vmatpush1.msra.mxu0 0.0
    %4711 = vmatprep.subr.mxu0 0.0
    %4712 = vmatpush1.msra.mxu0 0.0
    %4713 = vmatprep.subr.mxu0 0.0
    %4714 = vmatpush1.msra.mxu0 0.0
    %4715 = vmatprep.subr.mxu0 0.0
    %4716 = vmatpush1.msra.mxu0 0.0
    %4717 = vmatprep.subr.mxu0 0.0
    %4718 = vmatpush1.msra.mxu0 0.0
    %4719 = vmatprep.subr.mxu0 0.0
    %4720 = vmatpush1.msra.mxu0 0.0
    %4721 = vmatprep.subr.mxu0 0.0
    %4722 = vmatpush1.msra.mxu0 0.0
    %4723 = vmatprep.subr.mxu0 0.0
    %4724 = vmatpush1.msra.mxu0 0.0
    %4725 = vmatprep.subr.mxu0 0.0
    %4726 = vmatpush1.msra.mxu0 0.0
    %4727 = vmatprep.subr.mxu0 0.0
    %4728 = vmatpush1.msra.mxu0 0.0
    %4729 = vmatprep.subr.mxu0 0.0
    %4730 = vmatpush1.msra.mxu0 0.0
    %4731 = vmatprep.subr.mxu0 0.0
    %v4732 = vand.u32 %v134, 4294901760
    %4733 = vmatpush1.msra.mxu0 %v4732
    %4734 = vmatprep.subr.mxu0 0.0
    %v4735 = vand.u32 %v133, 4294901760
    %4736 = vmatpush1.msra.mxu0 %v4735
    %4737 = vmatprep.subr.mxu0 0.0
    %v4738 = vand.u32 %v132, 4294901760
    %4739 = vmatpush1.msra.mxu0 %v4738
    %4740 = vmatprep.subr.mxu0 0.0
    %v4741 = vand.u32 %v131, 4294901760
    %4742 = vmatpush1.msra.mxu0 %v4741
    %4743 = vmatprep.subr.mxu0 0.0
    %4744 = vmatpush2.msra.mxu0 0.0
    %4745 = vmatprep.subr.mxu0 0.0
    %4746 = vmatpush2.msra.mxu0 0.0
    %4747 = vmatprep.subr.mxu0 0.0
    %4748 = vmatpush2.msra.mxu0 0.0
    %4749 = vmatprep.subr.mxu0 0.0
    %4750 = vmatpush2.msra.mxu0 0.0
    %4751 = vmatprep.subr.mxu0 0.0
    %4752 = vmatpush2.msra.mxu0 0.0
    %4753 = vmatprep.subr.mxu0 0.0
    %4754 = vmatpush2.msra.mxu0 0.0
    %4755 = vmatprep.subr.mxu0 0.0
    %4756 = vmatpush2.msra.mxu0 0.0
    %4757 = vmatprep.subr.mxu0 0.0
    %4758 = vmatpush2.msra.mxu0 0.0
    %4759 = vmatprep.subr.mxu0 0.0
    %4760 = vmatpush2.msra.mxu0 0.0
    %4761 = vmatprep.subr.mxu0 0.0
    %4762 = vmatpush2.msra.mxu0 0.0
    %4763 = vmatprep.subr.mxu0 0.0
    %4764 = vmatpush2.msra.mxu0 0.0
    %4765 = vmatprep.subr.mxu0 0.0
    %4766 = vmatpush2.msra.mxu0 0.0
    %4767 = vmatprep.subr.mxu0 0.0
    %4768 = vmatpush2.msra.mxu0 0.0
    %4769 = vmatprep.subr.mxu0 0.0
    %4770 = vmatpush2.msra.mxu0 0.0
    %4771 = vmatprep.subr.mxu0 0.0
    %4772 = vmatpush2.msra.mxu0 0.0
    %4773 = vmatprep.subr.mxu0 0.0
    %4774 = vmatpush2.msra.mxu0 0.0
    %4775 = vmatprep.mubr.f32.mxu0 0.0
    %v4776 = vand.u32 %v3832, 4294901760
    %v4777 = vsub.f32 %v3832, %v4776
    %v4778 = vand.u32 %v4777, 4294901760
    %4779 = vmatmul.mubr.f32.gmra.mxu0 %v4778
    %v4780 = vpop.f32.mrf.mxu0
    %v4781 = vadd.f32 %v4690, %v4780
    %v4782 = vpop.f32.mrf.mxu0
    %4783 = vmatprep.mubr.f32.mxu0 0.0
    %v4784 = vand.u32 %v3835, 4294901760
    %v4785 = vsub.f32 %v3835, %v4784
    %v4786 = vand.u32 %v4785, 4294901760
    %4787 = vmatmul.mubr.f32.gmra.mxu0 %v4786
    %v4788 = vpop.f32.mrf.mxu0
    %v4789 = vadd.f32 %v4697, %v4788
    %v4790 = vpop.f32.mrf.mxu0
    %4791 = vmatprep.mubr.f32.mxu0 0.0
    %v4792 = vand.u32 %v3838, 4294901760
    %v4793 = vsub.f32 %v3838, %v4792
    %v4794 = vand.u32 %v4793, 4294901760
    %4795 = vmatmul.mubr.f32.gmra.mxu0 %v4794
    %v4796 = vpop.f32.mrf.mxu0
    %v4797 = vadd.f32 %v4704, %v4796
    %v4798 = vpop.f32.mrf.mxu0
    %4799 = vdwg.mxu0
    %4800 = vmatprep.subr.mxu0 0.0
    %4801 = vmatpush1.msra.mxu0 0.0
    %4802 = vmatprep.subr.mxu0 0.0
    %4803 = vmatpush1.msra.mxu0 0.0
    %4804 = vmatprep.subr.mxu0 0.0
    %4805 = vmatpush1.msra.mxu0 0.0
    %4806 = vmatprep.subr.mxu0 0.0
    %4807 = vmatpush1.msra.mxu0 0.0
    %4808 = vmatprep.subr.mxu0 0.0
    %4809 = vmatpush1.msra.mxu0 0.0
    %4810 = vmatprep.subr.mxu0 0.0
    %4811 = vmatpush1.msra.mxu0 0.0
    %4812 = vmatprep.subr.mxu0 0.0
    %4813 = vmatpush1.msra.mxu0 0.0
    %4814 = vmatprep.subr.mxu0 0.0
    %4815 = vmatpush1.msra.mxu0 0.0
    %4816 = vmatprep.subr.mxu0 0.0
    %4817 = vmatpush1.msra.mxu0 0.0
    %4818 = vmatprep.subr.mxu0 0.0
    %4819 = vmatpush1.msra.mxu0 0.0
    %4820 = vmatprep.subr.mxu0 0.0
    %4821 = vmatpush1.msra.mxu0 0.0
    %4822 = vmatprep.subr.mxu0 0.0
    %4823 = vmatpush1.msra.mxu0 0.0
    %4824 = vmatprep.subr.mxu0 0.0
    %v4825 = vand.u32 %v134, 4294901760
    %v4826 = vsub.f32 %v134, %v4825
    %v4827 = vand.u32 %v4826, 4294901760
    %4828 = vmatpush1.msra.mxu0 %v4827
    %4829 = vmatprep.subr.mxu0 0.0
    %v4830 = vand.u32 %v133, 4294901760
    %v4831 = vsub.f32 %v133, %v4830
    %v4832 = vand.u32 %v4831, 4294901760
    %4833 = vmatpush1.msra.mxu0 %v4832
    %4834 = vmatprep.subr.mxu0 0.0
    %v4835 = vand.u32 %v132, 4294901760
    %v4836 = vsub.f32 %v132, %v4835
    %v4837 = vand.u32 %v4836, 4294901760
    %4838 = vmatpush1.msra.mxu0 %v4837
    %4839 = vmatprep.subr.mxu0 0.0
    %v4840 = vand.u32 %v131, 4294901760
    %v4841 = vsub.f32 %v131, %v4840
    %v4842 = vand.u32 %v4841, 4294901760
    %4843 = vmatpush1.msra.mxu0 %v4842
    %4844 = vmatprep.subr.mxu0 0.0
    %4845 = vmatpush2.msra.mxu0 0.0
    %4846 = vmatprep.subr.mxu0 0.0
    %4847 = vmatpush2.msra.mxu0 0.0
    %4848 = vmatprep.subr.mxu0 0.0
    %4849 = vmatpush2.msra.mxu0 0.0
    %4850 = vmatprep.subr.mxu0 0.0
    %4851 = vmatpush2.msra.mxu0 0.0
    %4852 = vmatprep.subr.mxu0 0.0
    %4853 = vmatpush2.msra.mxu0 0.0
    %4854 = vmatprep.subr.mxu0 0.0
    %4855 = vmatpush2.msra.mxu0 0.0
    %4856 = vmatprep.subr.mxu0 0.0
    %4857 = vmatpush2.msra.mxu0 0.0
    %4858 = vmatprep.subr.mxu0 0.0
    %4859 = vmatpush2.msra.mxu0 0.0
    %4860 = vmatprep.subr.mxu0 0.0
    %4861 = vmatpush2.msra.mxu0 0.0
    %4862 = vmatprep.subr.mxu0 0.0
    %4863 = vmatpush2.msra.mxu0 0.0
    %4864 = vmatprep.subr.mxu0 0.0
    %4865 = vmatpush2.msra.mxu0 0.0
    %4866 = vmatprep.subr.mxu0 0.0
    %4867 = vmatpush2.msra.mxu0 0.0
    %4868 = vmatprep.subr.mxu0 0.0
    %4869 = vmatpush2.msra.mxu0 0.0
    %4870 = vmatprep.subr.mxu0 0.0
    %4871 = vmatpush2.msra.mxu0 0.0
    %4872 = vmatprep.subr.mxu0 0.0
    %4873 = vmatpush2.msra.mxu0 0.0
    %4874 = vmatprep.subr.mxu0 0.0
    %4875 = vmatpush2.msra.mxu0 0.0
    %4876 = vmatprep.mubr.f32.mxu0 0.0
    %v4877 = vand.u32 %v3832, 4294901760
    %4878 = vmatmul.mubr.f32.gmra.mxu0 %v4877
    %v4879 = vpop.f32.mrf.mxu0
    %v4880 = vadd.f32 %v4781, %v4879
    %v4881 = vpop.f32.mrf.mxu0
    %4882 = vmatprep.mubr.f32.mxu0 0.0
    %v4883 = vand.u32 %v3835, 4294901760
    %4884 = vmatmul.mubr.f32.gmra.mxu0 %v4883
    %v4885 = vpop.f32.mrf.mxu0
    %v4886 = vadd.f32 %v4789, %v4885
    %v4887 = vpop.f32.mrf.mxu0
    %4888 = vmatprep.mubr.f32.mxu0 0.0
    %v4889 = vand.u32 %v3838, 4294901760
    %4890 = vmatmul.mubr.f32.gmra.mxu0 %v4889
    %v4891 = vpop.f32.mrf.mxu0
    %v4892 = vadd.f32 %v4797, %v4891
    %v4893 = vpop.f32.mrf.mxu0
    %4894 = vdwg.mxu0
    %4895 = vmatprep.subr.mxu0 0.0
    %4896 = vmatpush1.msra.mxu0 0.0
    %4897 = vmatprep.subr.mxu0 0.0
    %4898 = vmatpush1.msra.mxu0 0.0
    %4899 = vmatprep.subr.mxu0 0.0
    %4900 = vmatpush1.msra.mxu0 0.0
    %4901 = vmatprep.subr.mxu0 0.0
    %4902 = vmatpush1.msra.mxu0 0.0
    %4903 = vmatprep.subr.mxu0 0.0
    %4904 = vmatpush1.msra.mxu0 0.0
    %4905 = vmatprep.subr.mxu0 0.0
    %4906 = vmatpush1.msra.mxu0 0.0
    %4907 = vmatprep.subr.mxu0 0.0
    %4908 = vmatpush1.msra.mxu0 0.0
    %4909 = vmatprep.subr.mxu0 0.0
    %4910 = vmatpush1.msra.mxu0 0.0
    %4911 = vmatprep.subr.mxu0 0.0
    %4912 = vmatpush1.msra.mxu0 0.0
    %4913 = vmatprep.subr.mxu0 0.0
    %4914 = vmatpush1.msra.mxu0 0.0
    %4915 = vmatprep.subr.mxu0 0.0
    %4916 = vmatpush1.msra.mxu0 0.0
    %4917 = vmatprep.subr.mxu0 0.0
    %4918 = vmatpush1.msra.mxu0 0.0
    %4919 = vmatprep.subr.mxu0 0.0
    %v4920 = vand.u32 %v134, 4294901760
    %4921 = vmatpush1.msra.mxu0 %v4920
    %4922 = vmatprep.subr.mxu0 0.0
    %v4923 = vand.u32 %v133, 4294901760
    %4924 = vmatpush1.msra.mxu0 %v4923
    %4925 = vmatprep.subr.mxu0 0.0
    %v4926 = vand.u32 %v132, 4294901760
    %4927 = vmatpush1.msra.mxu0 %v4926
    %4928 = vmatprep.subr.mxu0 0.0
    %v4929 = vand.u32 %v131, 4294901760
    %4930 = vmatpush1.msra.mxu0 %v4929
    %4931 = vmatprep.subr.mxu0 0.0
    %4932 = vmatpush2.msra.mxu0 0.0
    %4933 = vmatprep.subr.mxu0 0.0
    %4934 = vmatpush2.msra.mxu0 0.0
    %4935 = vmatprep.subr.mxu0 0.0
    %4936 = vmatpush2.msra.mxu0 0.0
    %4937 = vmatprep.subr.mxu0 0.0
    %4938 = vmatpush2.msra.mxu0 0.0
    %4939 = vmatprep.subr.mxu0 0.0
    %4940 = vmatpush2.msra.mxu0 0.0
    %4941 = vmatprep.subr.mxu0 0.0
    %4942 = vmatpush2.msra.mxu0 0.0
    %4943 = vmatprep.subr.mxu0 0.0
    %4944 = vmatpush2.msra.mxu0 0.0
    %4945 = vmatprep.subr.mxu0 0.0
    %4946 = vmatpush2.msra.mxu0 0.0
    %4947 = vmatprep.subr.mxu0 0.0
    %4948 = vmatpush2.msra.mxu0 0.0
    %4949 = vmatprep.subr.mxu0 0.0
    %4950 = vmatpush2.msra.mxu0 0.0
    %4951 = vmatprep.subr.mxu0 0.0
    %4952 = vmatpush2.msra.mxu0 0.0
    %4953 = vmatprep.subr.mxu0 0.0
    %4954 = vmatpush2.msra.mxu0 0.0
    %4955 = vmatprep.subr.mxu0 0.0
    %4956 = vmatpush2.msra.mxu0 0.0
    %4957 = vmatprep.subr.mxu0 0.0
    %4958 = vmatpush2.msra.mxu0 0.0
    %4959 = vmatprep.subr.mxu0 0.0
    %4960 = vmatpush2.msra.mxu0 0.0
    %4961 = vmatprep.subr.mxu0 0.0
    %4962 = vmatpush2.msra.mxu0 0.0
    %4963 = vmatprep.mubr.f32.mxu0 0.0
    %v4964 = vand.u32 %v3832, 4294901760
    %4965 = vmatmul.mubr.f32.gmra.mxu0 %v4964
    %v4966 = vpop.f32.mrf.mxu0
    %v4967 = vadd.f32 %v4880, %v4966
    %v4968 = vpop.f32.mrf.mxu0
    %4969 = vmatprep.mubr.f32.mxu0 0.0
    %v4970 = vand.u32 %v3835, 4294901760
    %4971 = vmatmul.mubr.f32.gmra.mxu0 %v4970
    %v4972 = vpop.f32.mrf.mxu0
    %v4973 = vadd.f32 %v4886, %v4972
    %v4974 = vpop.f32.mrf.mxu0
    %4975 = vmatprep.mubr.f32.mxu0 0.0
    %v4976 = vand.u32 %v3838, 4294901760
    %4977 = vmatmul.mubr.f32.gmra.mxu0 %v4976
    %v4978 = vpop.f32.mrf.mxu0
    %v4979 = vadd.f32 %v4892, %v4978
    %v4980 = vpop.f32.mrf.mxu0
    %4981 = vdwg.mxu0
    %4982 = vmatprep.subr.mxu0 0.0
    %4983 = vmatpush1.msra.mxu0 0.0
    %4984 = vmatprep.subr.mxu0 0.0
    %4985 = vmatpush1.msra.mxu0 0.0
    %4986 = vmatprep.subr.mxu0 0.0
    %4987 = vmatpush1.msra.mxu0 0.0
    %4988 = vmatprep.subr.mxu0 0.0
    %4989 = vmatpush1.msra.mxu0 0.0
    %4990 = vmatprep.subr.mxu0 0.0
    %4991 = vmatpush1.msra.mxu0 0.0
    %4992 = vmatprep.subr.mxu0 0.0
    %4993 = vmatpush1.msra.mxu0 0.0
    %4994 = vmatprep.subr.mxu0 0.0
    %4995 = vmatpush1.msra.mxu0 0.0
    %4996 = vmatprep.subr.mxu0 0.0
    %4997 = vmatpush1.msra.mxu0 0.0
    %4998 = vmatprep.subr.mxu0 0.0
    %4999 = vmatpush1.msra.mxu0 0.0
    %5000 = vmatprep.subr.mxu0 0.0
    %5001 = vmatpush1.msra.mxu0 0.0
    %5002 = vmatprep.subr.mxu0 0.0
    %5003 = vmatpush1.msra.mxu0 0.0
    %5004 = vmatprep.subr.mxu0 0.0
    %5005 = vmatpush1.msra.mxu0 0.0
    %5006 = vmatprep.subr.mxu0 0.0
    %v5007 = vand.u32 %v139, 4294901760
    %5008 = vmatpush1.msra.mxu0 %v5007
    %5009 = vmatprep.subr.mxu0 0.0
    %v5010 = vand.u32 %v138, 4294901760
    %5011 = vmatpush1.msra.mxu0 %v5010
    %5012 = vmatprep.subr.mxu0 0.0
    %v5013 = vand.u32 %v137, 4294901760
    %5014 = vmatpush1.msra.mxu0 %v5013
    %5015 = vmatprep.subr.mxu0 0.0
    %v5016 = vand.u32 %v136, 4294901760
    %5017 = vmatpush1.msra.mxu0 %v5016
    %5018 = vmatprep.subr.mxu0 0.0
    %5019 = vmatpush2.msra.mxu0 0.0
    %5020 = vmatprep.subr.mxu0 0.0
    %5021 = vmatpush2.msra.mxu0 0.0
    %5022 = vmatprep.subr.mxu0 0.0
    %5023 = vmatpush2.msra.mxu0 0.0
    %5024 = vmatprep.subr.mxu0 0.0
    %5025 = vmatpush2.msra.mxu0 0.0
    %5026 = vmatprep.subr.mxu0 0.0
    %5027 = vmatpush2.msra.mxu0 0.0
    %5028 = vmatprep.subr.mxu0 0.0
    %5029 = vmatpush2.msra.mxu0 0.0
    %5030 = vmatprep.subr.mxu0 0.0
    %5031 = vmatpush2.msra.mxu0 0.0
    %5032 = vmatprep.subr.mxu0 0.0
    %5033 = vmatpush2.msra.mxu0 0.0
    %5034 = vmatprep.subr.mxu0 0.0
    %5035 = vmatpush2.msra.mxu0 0.0
    %5036 = vmatprep.subr.mxu0 0.0
    %5037 = vmatpush2.msra.mxu0 0.0
    %5038 = vmatprep.subr.mxu0 0.0
    %5039 = vmatpush2.msra.mxu0 0.0
    %5040 = vmatprep.subr.mxu0 0.0
    %5041 = vmatpush2.msra.mxu0 0.0
    %5042 = vmatprep.subr.mxu0 0.0
    %5043 = vmatpush2.msra.mxu0 0.0
    %5044 = vmatprep.subr.mxu0 0.0
    %5045 = vmatpush2.msra.mxu0 0.0
    %5046 = vmatprep.subr.mxu0 0.0
    %5047 = vmatpush2.msra.mxu0 0.0
    %5048 = vmatprep.subr.mxu0 0.0
    %5049 = vmatpush2.msra.mxu0 0.0
    %5050 = vmatprep.mubr.f32.mxu0 0.0
    %v5051 = vand.u32 %v3832, 4294901760
    %v5052 = vsub.f32 %v3832, %v5051
    %v5053 = vand.u32 %v5052, 4294901760
    %v5054 = vsub.f32 %v5052, %v5053
    %v5055 = vand.u32 %v5054, 4294901760
    %5056 = vmatmul.mubr.f32.gmra.mxu0 %v5055
    %v5057 = vpop.f32.mrf.mxu0
    %v5058 = vadd.f32 %v1961, %v5057
    %v5059 = vpop.f32.mrf.mxu0
    %5060 = vmatprep.mubr.f32.mxu0 0.0
    %v5061 = vand.u32 %v3835, 4294901760
    %v5062 = vsub.f32 %v3835, %v5061
    %v5063 = vand.u32 %v5062, 4294901760
    %v5064 = vsub.f32 %v5062, %v5063
    %v5065 = vand.u32 %v5064, 4294901760
    %5066 = vmatmul.mubr.f32.gmra.mxu0 %v5065
    %v5067 = vpop.f32.mrf.mxu0
    %v5068 = vadd.f32 %v1961, %v5067
    %v5069 = vpop.f32.mrf.mxu0
    %5070 = vmatprep.mubr.f32.mxu0 0.0
    %v5071 = vand.u32 %v3838, 4294901760
    %v5072 = vsub.f32 %v3838, %v5071
    %v5073 = vand.u32 %v5072, 4294901760
    %v5074 = vsub.f32 %v5072, %v5073
    %v5075 = vand.u32 %v5074, 4294901760
    %5076 = vmatmul.mubr.f32.gmra.mxu0 %v5075
    %v5077 = vpop.f32.mrf.mxu0
    %v5078 = vadd.f32 %v1961, %v5077
    %v5079 = vpop.f32.mrf.mxu0
    %5080 = vdwg.mxu0
    %5081 = vmatprep.subr.mxu0 0.0
    %5082 = vmatpush1.msra.mxu0 0.0
    %5083 = vmatprep.subr.mxu0 0.0
    %5084 = vmatpush1.msra.mxu0 0.0
    %5085 = vmatprep.subr.mxu0 0.0
    %5086 = vmatpush1.msra.mxu0 0.0
    %5087 = vmatprep.subr.mxu0 0.0
    %5088 = vmatpush1.msra.mxu0 0.0
    %5089 = vmatprep.subr.mxu0 0.0
    %5090 = vmatpush1.msra.mxu0 0.0
    %5091 = vmatprep.subr.mxu0 0.0
    %5092 = vmatpush1.msra.mxu0 0.0
    %5093 = vmatprep.subr.mxu0 0.0
    %5094 = vmatpush1.msra.mxu0 0.0
    %5095 = vmatprep.subr.mxu0 0.0
    %5096 = vmatpush1.msra.mxu0 0.0
    %5097 = vmatprep.subr.mxu0 0.0
    %5098 = vmatpush1.msra.mxu0 0.0
    %5099 = vmatprep.subr.mxu0 0.0
    %5100 = vmatpush1.msra.mxu0 0.0
    %5101 = vmatprep.subr.mxu0 0.0
    %5102 = vmatpush1.msra.mxu0 0.0
    %5103 = vmatprep.subr.mxu0 0.0
    %5104 = vmatpush1.msra.mxu0 0.0
    %5105 = vmatprep.subr.mxu0 0.0
    %v5106 = vand.u32 %v139, 4294901760
    %v5107 = vsub.f32 %v139, %v5106
    %v5108 = vand.u32 %v5107, 4294901760
    %v5109 = vsub.f32 %v5107, %v5108
    %v5110 = vand.u32 %v5109, 4294901760
    %5111 = vmatpush1.msra.mxu0 %v5110
    %5112 = vmatprep.subr.mxu0 0.0
    %v5113 = vand.u32 %v138, 4294901760
    %v5114 = vsub.f32 %v138, %v5113
    %v5115 = vand.u32 %v5114, 4294901760
    %v5116 = vsub.f32 %v5114, %v5115
    %v5117 = vand.u32 %v5116, 4294901760
    %5118 = vmatpush1.msra.mxu0 %v5117
    %5119 = vmatprep.subr.mxu0 0.0
    %v5120 = vand.u32 %v137, 4294901760
    %v5121 = vsub.f32 %v137, %v5120
    %v5122 = vand.u32 %v5121, 4294901760
    %v5123 = vsub.f32 %v5121, %v5122
    %v5124 = vand.u32 %v5123, 4294901760
    %5125 = vmatpush1.msra.mxu0 %v5124
    %5126 = vmatprep.subr.mxu0 0.0
    %v5127 = vand.u32 %v136, 4294901760
    %v5128 = vsub.f32 %v136, %v5127
    %v5129 = vand.u32 %v5128, 4294901760
    %v5130 = vsub.f32 %v5128, %v5129
    %v5131 = vand.u32 %v5130, 4294901760
    %5132 = vmatpush1.msra.mxu0 %v5131
    %5133 = vmatprep.subr.mxu0 0.0
    %5134 = vmatpush2.msra.mxu0 0.0
    %5135 = vmatprep.subr.mxu0 0.0
    %5136 = vmatpush2.msra.mxu0 0.0
    %5137 = vmatprep.subr.mxu0 0.0
    %5138 = vmatpush2.msra.mxu0 0.0
    %5139 = vmatprep.subr.mxu0 0.0
    %5140 = vmatpush2.msra.mxu0 0.0
    %5141 = vmatprep.subr.mxu0 0.0
    %5142 = vmatpush2.msra.mxu0 0.0
    %5143 = vmatprep.subr.mxu0 0.0
    %5144 = vmatpush2.msra.mxu0 0.0
    %5145 = vmatprep.subr.mxu0 0.0
    %5146 = vmatpush2.msra.mxu0 0.0
    %5147 = vmatprep.subr.mxu0 0.0
    %5148 = vmatpush2.msra.mxu0 0.0
    %5149 = vmatprep.subr.mxu0 0.0
    %5150 = vmatpush2.msra.mxu0 0.0
    %5151 = vmatprep.subr.mxu0 0.0
    %5152 = vmatpush2.msra.mxu0 0.0
    %5153 = vmatprep.subr.mxu0 0.0
    %5154 = vmatpush2.msra.mxu0 0.0
    %5155 = vmatprep.subr.mxu0 0.0
    %5156 = vmatpush2.msra.mxu0 0.0
    %5157 = vmatprep.subr.mxu0 0.0
    %5158 = vmatpush2.msra.mxu0 0.0
    %5159 = vmatprep.subr.mxu0 0.0
    %5160 = vmatpush2.msra.mxu0 0.0
    %5161 = vmatprep.subr.mxu0 0.0
    %5162 = vmatpush2.msra.mxu0 0.0
    %5163 = vmatprep.subr.mxu0 0.0
    %5164 = vmatpush2.msra.mxu0 0.0
    %5165 = vmatprep.mubr.f32.mxu0 0.0
    %v5166 = vand.u32 %v3832, 4294901760
    %5167 = vmatmul.mubr.f32.gmra.mxu0 %v5166
    %v5168 = vpop.f32.mrf.mxu0
    %v5169 = vadd.f32 %v5058, %v5168
    %v5170 = vpop.f32.mrf.mxu0
    %5171 = vmatprep.mubr.f32.mxu0 0.0
    %v5172 = vand.u32 %v3835, 4294901760
    %5173 = vmatmul.mubr.f32.gmra.mxu0 %v5172
    %v5174 = vpop.f32.mrf.mxu0
    %v5175 = vadd.f32 %v5068, %v5174
    %v5176 = vpop.f32.mrf.mxu0
    %5177 = vmatprep.mubr.f32.mxu0 0.0
    %v5178 = vand.u32 %v3838, 4294901760
    %5179 = vmatmul.mubr.f32.gmra.mxu0 %v5178
    %v5180 = vpop.f32.mrf.mxu0
    %v5181 = vadd.f32 %v5078, %v5180
    %v5182 = vpop.f32.mrf.mxu0
    %5183 = vdwg.mxu0
    %5184 = vmatprep.subr.mxu0 0.0
    %5185 = vmatpush1.msra.mxu0 0.0
    %5186 = vmatprep.subr.mxu0 0.0
    %5187 = vmatpush1.msra.mxu0 0.0
    %5188 = vmatprep.subr.mxu0 0.0
    %5189 = vmatpush1.msra.mxu0 0.0
    %5190 = vmatprep.subr.mxu0 0.0
    %5191 = vmatpush1.msra.mxu0 0.0
    %5192 = vmatprep.subr.mxu0 0.0
    %5193 = vmatpush1.msra.mxu0 0.0
    %5194 = vmatprep.subr.mxu0 0.0
    %5195 = vmatpush1.msra.mxu0 0.0
    %5196 = vmatprep.subr.mxu0 0.0
    %5197 = vmatpush1.msra.mxu0 0.0
    %5198 = vmatprep.subr.mxu0 0.0
    %5199 = vmatpush1.msra.mxu0 0.0
    %5200 = vmatprep.subr.mxu0 0.0
    %5201 = vmatpush1.msra.mxu0 0.0
    %5202 = vmatprep.subr.mxu0 0.0
    %5203 = vmatpush1.msra.mxu0 0.0
    %5204 = vmatprep.subr.mxu0 0.0
    %5205 = vmatpush1.msra.mxu0 0.0
    %5206 = vmatprep.subr.mxu0 0.0
    %5207 = vmatpush1.msra.mxu0 0.0
    %5208 = vmatprep.subr.mxu0 0.0
    %v5209 = vand.u32 %v139, 4294901760
    %v5210 = vsub.f32 %v139, %v5209
    %5211 = vmatpush1.msra.mxu0 %v5210
    %5212 = vmatprep.subr.mxu0 0.0
    %v5213 = vand.u32 %v138, 4294901760
    %v5214 = vsub.f32 %v138, %v5213
    %5215 = vmatpush1.msra.mxu0 %v5214
    %5216 = vmatprep.subr.mxu0 0.0
    %v5217 = vand.u32 %v137, 4294901760
    %v5218 = vsub.f32 %v137, %v5217
    %5219 = vmatpush1.msra.mxu0 %v5218
    %5220 = vmatprep.subr.mxu0 0.0
    %v5221 = vand.u32 %v136, 4294901760
    %v5222 = vsub.f32 %v136, %v5221
    %5223 = vmatpush1.msra.mxu0 %v5222
    %5224 = vmatprep.subr.mxu0 0.0
    %5225 = vmatpush2.msra.mxu0 0.0
    %5226 = vmatprep.subr.mxu0 0.0
    %5227 = vmatpush2.msra.mxu0 0.0
    %5228 = vmatprep.subr.mxu0 0.0
    %5229 = vmatpush2.msra.mxu0 0.0
    %5230 = vmatprep.subr.mxu0 0.0
    %5231 = vmatpush2.msra.mxu0 0.0
    %5232 = vmatprep.subr.mxu0 0.0
    %5233 = vmatpush2.msra.mxu0 0.0
    %5234 = vmatprep.subr.mxu0 0.0
    %5235 = vmatpush2.msra.mxu0 0.0
    %5236 = vmatprep.subr.mxu0 0.0
    %5237 = vmatpush2.msra.mxu0 0.0
    %5238 = vmatprep.subr.mxu0 0.0
    %5239 = vmatpush2.msra.mxu0 0.0
    %5240 = vmatprep.subr.mxu0 0.0
    %5241 = vmatpush2.msra.mxu0 0.0
    %5242 = vmatprep.subr.mxu0 0.0
    %5243 = vmatpush2.msra.mxu0 0.0
    %5244 = vmatprep.subr.mxu0 0.0
    %5245 = vmatpush2.msra.mxu0 0.0
    %5246 = vmatprep.subr.mxu0 0.0
    %5247 = vmatpush2.msra.mxu0 0.0
    %5248 = vmatprep.subr.mxu0 0.0
    %5249 = vmatpush2.msra.mxu0 0.0
    %5250 = vmatprep.subr.mxu0 0.0
    %5251 = vmatpush2.msra.mxu0 0.0
    %5252 = vmatprep.subr.mxu0 0.0
    %5253 = vmatpush2.msra.mxu0 0.0
    %5254 = vmatprep.subr.mxu0 0.0
    %5255 = vmatpush2.msra.mxu0 0.0
    %5256 = vmatprep.mubr.f32.mxu0 0.0
    %v5257 = vand.u32 %v3832, 4294901760
    %v5258 = vsub.f32 %v3832, %v5257
    %5259 = vmatmul.mubr.f32.gmra.mxu0 %v5258
    %v5260 = vpop.f32.mrf.mxu0
    %v5261 = vadd.f32 %v5169, %v5260
    %v5262 = vpop.f32.mrf.mxu0
    %5263 = vmatprep.mubr.f32.mxu0 0.0
    %v5264 = vand.u32 %v3835, 4294901760
    %v5265 = vsub.f32 %v3835, %v5264
    %5266 = vmatmul.mubr.f32.gmra.mxu0 %v5265
    %v5267 = vpop.f32.mrf.mxu0
    %v5268 = vadd.f32 %v5175, %v5267
    %v5269 = vpop.f32.mrf.mxu0
    %5270 = vmatprep.mubr.f32.mxu0 0.0
    %v5271 = vand.u32 %v3838, 4294901760
    %v5272 = vsub.f32 %v3838, %v5271
    %5273 = vmatmul.mubr.f32.gmra.mxu0 %v5272
    %v5274 = vpop.f32.mrf.mxu0
    %v5275 = vadd.f32 %v5181, %v5274
    %v5276 = vpop.f32.mrf.mxu0
    %5277 = vdwg.mxu0
    %5278 = vmatprep.subr.mxu0 0.0
    %5279 = vmatpush1.msra.mxu0 0.0
    %5280 = vmatprep.subr.mxu0 0.0
    %5281 = vmatpush1.msra.mxu0 0.0
    %5282 = vmatprep.subr.mxu0 0.0
    %5283 = vmatpush1.msra.mxu0 0.0
    %5284 = vmatprep.subr.mxu0 0.0
    %5285 = vmatpush1.msra.mxu0 0.0
    %5286 = vmatprep.subr.mxu0 0.0
    %5287 = vmatpush1.msra.mxu0 0.0
    %5288 = vmatprep.subr.mxu0 0.0
    %5289 = vmatpush1.msra.mxu0 0.0
    %5290 = vmatprep.subr.mxu0 0.0
    %5291 = vmatpush1.msra.mxu0 0.0
    %5292 = vmatprep.subr.mxu0 0.0
    %5293 = vmatpush1.msra.mxu0 0.0
    %5294 = vmatprep.subr.mxu0 0.0
    %5295 = vmatpush1.msra.mxu0 0.0
    %5296 = vmatprep.subr.mxu0 0.0
    %5297 = vmatpush1.msra.mxu0 0.0
    %5298 = vmatprep.subr.mxu0 0.0
    %5299 = vmatpush1.msra.mxu0 0.0
    %5300 = vmatprep.subr.mxu0 0.0
    %5301 = vmatpush1.msra.mxu0 0.0
    %5302 = vmatprep.subr.mxu0 0.0
    %v5303 = vand.u32 %v139, 4294901760
    %5304 = vmatpush1.msra.mxu0 %v5303
    %5305 = vmatprep.subr.mxu0 0.0
    %v5306 = vand.u32 %v138, 4294901760
    %5307 = vmatpush1.msra.mxu0 %v5306
    %5308 = vmatprep.subr.mxu0 0.0
    %v5309 = vand.u32 %v137, 4294901760
    %5310 = vmatpush1.msra.mxu0 %v5309
    %5311 = vmatprep.subr.mxu0 0.0
    %v5312 = vand.u32 %v136, 4294901760
    %5313 = vmatpush1.msra.mxu0 %v5312
    %5314 = vmatprep.subr.mxu0 0.0
    %5315 = vmatpush2.msra.mxu0 0.0
    %5316 = vmatprep.subr.mxu0 0.0
    %5317 = vmatpush2.msra.mxu0 0.0
    %5318 = vmatprep.subr.mxu0 0.0
    %5319 = vmatpush2.msra.mxu0 0.0
    %5320 = vmatprep.subr.mxu0 0.0
    %5321 = vmatpush2.msra.mxu0 0.0
    %5322 = vmatprep.subr.mxu0 0.0
    %5323 = vmatpush2.msra.mxu0 0.0
    %5324 = vmatprep.subr.mxu0 0.0
    %5325 = vmatpush2.msra.mxu0 0.0
    %5326 = vmatprep.subr.mxu0 0.0
    %5327 = vmatpush2.msra.mxu0 0.0
    %5328 = vmatprep.subr.mxu0 0.0
    %5329 = vmatpush2.msra.mxu0 0.0
    %5330 = vmatprep.subr.mxu0 0.0
    %5331 = vmatpush2.msra.mxu0 0.0
    %5332 = vmatprep.subr.mxu0 0.0
    %5333 = vmatpush2.msra.mxu0 0.0
    %5334 = vmatprep.subr.mxu0 0.0
    %5335 = vmatpush2.msra.mxu0 0.0
    %5336 = vmatprep.subr.mxu0 0.0
    %5337 = vmatpush2.msra.mxu0 0.0
    %5338 = vmatprep.subr.mxu0 0.0
    %5339 = vmatpush2.msra.mxu0 0.0
    %5340 = vmatprep.subr.mxu0 0.0
    %5341 = vmatpush2.msra.mxu0 0.0
    %5342 = vmatprep.subr.mxu0 0.0
    %5343 = vmatpush2.msra.mxu0 0.0
    %5344 = vmatprep.subr.mxu0 0.0
    %5345 = vmatpush2.msra.mxu0 0.0
    %5346 = vmatprep.mubr.f32.mxu0 0.0
    %v5347 = vand.u32 %v3832, 4294901760
    %v5348 = vsub.f32 %v3832, %v5347
    %v5349 = vand.u32 %v5348, 4294901760
    %5350 = vmatmul.mubr.f32.gmra.mxu0 %v5349
    %v5351 = vpop.f32.mrf.mxu0
    %v5352 = vadd.f32 %v5261, %v5351
    %v5353 = vpop.f32.mrf.mxu0
    %5354 = vmatprep.mubr.f32.mxu0 0.0
    %v5355 = vand.u32 %v3835, 4294901760
    %v5356 = vsub.f32 %v3835, %v5355
    %v5357 = vand.u32 %v5356, 4294901760
    %5358 = vmatmul.mubr.f32.gmra.mxu0 %v5357
    %v5359 = vpop.f32.mrf.mxu0
    %v5360 = vadd.f32 %v5268, %v5359
    %v5361 = vpop.f32.mrf.mxu0
    %5362 = vmatprep.mubr.f32.mxu0 0.0
    %v5363 = vand.u32 %v3838, 4294901760
    %v5364 = vsub.f32 %v3838, %v5363
    %v5365 = vand.u32 %v5364, 4294901760
    %5366 = vmatmul.mubr.f32.gmra.mxu0 %v5365
    %v5367 = vpop.f32.mrf.mxu0
    %v5368 = vadd.f32 %v5275, %v5367
    %v5369 = vpop.f32.mrf.mxu0
    %5370 = vdwg.mxu0
    %5371 = vmatprep.subr.mxu0 0.0
    %5372 = vmatpush1.msra.mxu0 0.0
    %5373 = vmatprep.subr.mxu0 0.0
    %5374 = vmatpush1.msra.mxu0 0.0
    %5375 = vmatprep.subr.mxu0 0.0
    %5376 = vmatpush1.msra.mxu0 0.0
    %5377 = vmatprep.subr.mxu0 0.0
    %5378 = vmatpush1.msra.mxu0 0.0
    %5379 = vmatprep.subr.mxu0 0.0
    %5380 = vmatpush1.msra.mxu0 0.0
    %5381 = vmatprep.subr.mxu0 0.0
    %5382 = vmatpush1.msra.mxu0 0.0
    %5383 = vmatprep.subr.mxu0 0.0
    %5384 = vmatpush1.msra.mxu0 0.0
    %5385 = vmatprep.subr.mxu0 0.0
    %5386 = vmatpush1.msra.mxu0 0.0
    %5387 = vmatprep.subr.mxu0 0.0
    %5388 = vmatpush1.msra.mxu0 0.0
    %5389 = vmatprep.subr.mxu0 0.0
    %5390 = vmatpush1.msra.mxu0 0.0
    %5391 = vmatprep.subr.mxu0 0.0
    %5392 = vmatpush1.msra.mxu0 0.0
    %5393 = vmatprep.subr.mxu0 0.0
    %5394 = vmatpush1.msra.mxu0 0.0
    %5395 = vmatprep.subr.mxu0 0.0
    %v5396 = vand.u32 %v139, 4294901760
    %v5397 = vsub.f32 %v139, %v5396
    %v5398 = vand.u32 %v5397, 4294901760
    %5399 = vmatpush1.msra.mxu0 %v5398
    %5400 = vmatprep.subr.mxu0 0.0
    %v5401 = vand.u32 %v138, 4294901760
    %v5402 = vsub.f32 %v138, %v5401
    %v5403 = vand.u32 %v5402, 4294901760
    %5404 = vmatpush1.msra.mxu0 %v5403
    %5405 = vmatprep.subr.mxu0 0.0
    %v5406 = vand.u32 %v137, 4294901760
    %v5407 = vsub.f32 %v137, %v5406
    %v5408 = vand.u32 %v5407, 4294901760
    %5409 = vmatpush1.msra.mxu0 %v5408
    %5410 = vmatprep.subr.mxu0 0.0
    %v5411 = vand.u32 %v136, 4294901760
    %v5412 = vsub.f32 %v136, %v5411
    %v5413 = vand.u32 %v5412, 4294901760
    %5414 = vmatpush1.msra.mxu0 %v5413
    %5415 = vmatprep.subr.mxu0 0.0
    %5416 = vmatpush2.msra.mxu0 0.0
    %5417 = vmatprep.subr.mxu0 0.0
    %5418 = vmatpush2.msra.mxu0 0.0
    %5419 = vmatprep.subr.mxu0 0.0
    %5420 = vmatpush2.msra.mxu0 0.0
    %5421 = vmatprep.subr.mxu0 0.0
    %5422 = vmatpush2.msra.mxu0 0.0
    %5423 = vmatprep.subr.mxu0 0.0
    %5424 = vmatpush2.msra.mxu0 0.0
    %5425 = vmatprep.subr.mxu0 0.0
    %5426 = vmatpush2.msra.mxu0 0.0
    %5427 = vmatprep.subr.mxu0 0.0
    %5428 = vmatpush2.msra.mxu0 0.0
    %5429 = vmatprep.subr.mxu0 0.0
    %5430 = vmatpush2.msra.mxu0 0.0
    %5431 = vmatprep.subr.mxu0 0.0
    %5432 = vmatpush2.msra.mxu0 0.0
    %5433 = vmatprep.subr.mxu0 0.0
    %5434 = vmatpush2.msra.mxu0 0.0
    %5435 = vmatprep.subr.mxu0 0.0
    %5436 = vmatpush2.msra.mxu0 0.0
    %5437 = vmatprep.subr.mxu0 0.0
    %5438 = vmatpush2.msra.mxu0 0.0
    %5439 = vmatprep.subr.mxu0 0.0
    %5440 = vmatpush2.msra.mxu0 0.0
    %5441 = vmatprep.subr.mxu0 0.0
    %5442 = vmatpush2.msra.mxu0 0.0
    %5443 = vmatprep.subr.mxu0 0.0
    %5444 = vmatpush2.msra.mxu0 0.0
    %5445 = vmatprep.subr.mxu0 0.0
    %5446 = vmatpush2.msra.mxu0 0.0
    %5447 = vmatprep.mubr.f32.mxu0 0.0
    %v5448 = vand.u32 %v3832, 4294901760
    %5449 = vmatmul.mubr.f32.gmra.mxu0 %v5448
    %v5450 = vpop.f32.mrf.mxu0
    %v5451 = vadd.f32 %v5352, %v5450
    %v5452 = vpop.f32.mrf.mxu0
    %5453 = vmatprep.mubr.f32.mxu0 0.0
    %v5454 = vand.u32 %v3835, 4294901760
    %5455 = vmatmul.mubr.f32.gmra.mxu0 %v5454
    %v5456 = vpop.f32.mrf.mxu0
    %v5457 = vadd.f32 %v5360, %v5456
    %v5458 = vpop.f32.mrf.mxu0
    %5459 = vmatprep.mubr.f32.mxu0 0.0
    %v5460 = vand.u32 %v3838, 4294901760
    %5461 = vmatmul.mubr.f32.gmra.mxu0 %v5460
    %v5462 = vpop.f32.mrf.mxu0
    %v5463 = vadd.f32 %v5368, %v5462
    %v5464 = vpop.f32.mrf.mxu0
    %5465 = vdwg.mxu0
    %5466 = vmatprep.subr.mxu0 0.0
    %5467 = vmatpush1.msra.mxu0 0.0
    %5468 = vmatprep.subr.mxu0 0.0
    %5469 = vmatpush1.msra.mxu0 0.0
    %5470 = vmatprep.subr.mxu0 0.0
    %5471 = vmatpush1.msra.mxu0 0.0
    %5472 = vmatprep.subr.mxu0 0.0
    %5473 = vmatpush1.msra.mxu0 0.0
    %5474 = vmatprep.subr.mxu0 0.0
    %5475 = vmatpush1.msra.mxu0 0.0
    %5476 = vmatprep.subr.mxu0 0.0
    %5477 = vmatpush1.msra.mxu0 0.0
    %5478 = vmatprep.subr.mxu0 0.0
    %5479 = vmatpush1.msra.mxu0 0.0
    %5480 = vmatprep.subr.mxu0 0.0
    %5481 = vmatpush1.msra.mxu0 0.0
    %5482 = vmatprep.subr.mxu0 0.0
    %5483 = vmatpush1.msra.mxu0 0.0
    %5484 = vmatprep.subr.mxu0 0.0
    %5485 = vmatpush1.msra.mxu0 0.0
    %5486 = vmatprep.subr.mxu0 0.0
    %5487 = vmatpush1.msra.mxu0 0.0
    %5488 = vmatprep.subr.mxu0 0.0
    %5489 = vmatpush1.msra.mxu0 0.0
    %5490 = vmatprep.subr.mxu0 0.0
    %v5491 = vand.u32 %v139, 4294901760
    %5492 = vmatpush1.msra.mxu0 %v5491
    %5493 = vmatprep.subr.mxu0 0.0
    %v5494 = vand.u32 %v138, 4294901760
    %5495 = vmatpush1.msra.mxu0 %v5494
    %5496 = vmatprep.subr.mxu0 0.0
    %v5497 = vand.u32 %v137, 4294901760
    %5498 = vmatpush1.msra.mxu0 %v5497
    %5499 = vmatprep.subr.mxu0 0.0
    %v5500 = vand.u32 %v136, 4294901760
    %5501 = vmatpush1.msra.mxu0 %v5500
    %5502 = vmatprep.subr.mxu0 0.0
    %5503 = vmatpush2.msra.mxu0 0.0
    %5504 = vmatprep.subr.mxu0 0.0
    %5505 = vmatpush2.msra.mxu0 0.0
    %5506 = vmatprep.subr.mxu0 0.0
    %5507 = vmatpush2.msra.mxu0 0.0
    %5508 = vmatprep.subr.mxu0 0.0
    %5509 = vmatpush2.msra.mxu0 0.0
    %5510 = vmatprep.subr.mxu0 0.0
    %5511 = vmatpush2.msra.mxu0 0.0
    %5512 = vmatprep.subr.mxu0 0.0
    %5513 = vmatpush2.msra.mxu0 0.0
    %5514 = vmatprep.subr.mxu0 0.0
    %5515 = vmatpush2.msra.mxu0 0.0
    %5516 = vmatprep.subr.mxu0 0.0
    %5517 = vmatpush2.msra.mxu0 0.0
    %5518 = vmatprep.subr.mxu0 0.0
    %5519 = vmatpush2.msra.mxu0 0.0
    %5520 = vmatprep.subr.mxu0 0.0
    %5521 = vmatpush2.msra.mxu0 0.0
    %5522 = vmatprep.subr.mxu0 0.0
    %5523 = vmatpush2.msra.mxu0 0.0
    %5524 = vmatprep.subr.mxu0 0.0
    %5525 = vmatpush2.msra.mxu0 0.0
    %5526 = vmatprep.subr.mxu0 0.0
    %5527 = vmatpush2.msra.mxu0 0.0
    %5528 = vmatprep.subr.mxu0 0.0
    %5529 = vmatpush2.msra.mxu0 0.0
    %5530 = vmatprep.subr.mxu0 0.0
    %5531 = vmatpush2.msra.mxu0 0.0
    %5532 = vmatprep.subr.mxu0 0.0
    %5533 = vmatpush2.msra.mxu0 0.0
    %5534 = vmatprep.mubr.f32.mxu0 0.0
    %v5535 = vand.u32 %v3832, 4294901760
    %5536 = vmatmul.mubr.f32.gmra.mxu0 %v5535
    %v5537 = vpop.f32.mrf.mxu0
    %v5538 = vadd.f32 %v5451, %v5537
    %v5539 = vpop.f32.mrf.mxu0
    %5540 = vmatprep.mubr.f32.mxu0 0.0
    %v5541 = vand.u32 %v3835, 4294901760
    %5542 = vmatmul.mubr.f32.gmra.mxu0 %v5541
    %v5543 = vpop.f32.mrf.mxu0
    %v5544 = vadd.f32 %v5457, %v5543
    %v5545 = vpop.f32.mrf.mxu0
    %5546 = vmatprep.mubr.f32.mxu0 0.0
    %v5547 = vand.u32 %v3838, 4294901760
    %5548 = vmatmul.mubr.f32.gmra.mxu0 %v5547
    %v5549 = vpop.f32.mrf.mxu0
    %v5550 = vadd.f32 %v5463, %v5549
    %v5551 = vpop.f32.mrf.mxu0
    %5552 = vdwg.mxu0
    %v5554 = vsel %vm154, %v4396, 0
    %v5557 = vsel %vm154, %v4402, 0
    %v5560 = vsel %vm154, %v4408, 0
    %v5563 = vsel %vm154, %v4967, 0
    %v5566 = vsel %vm154, %v4973, 0
    %v5569 = vsel %vm154, %v4979, 0
    %5571 = vmatprep.subr.mxu0 0.0
    %5572 = vmatpush1.xpose.msra.mxu0 0.0
    %5573 = vmatprep.subr.mxu0 0.0
    %5574 = vmatpush1.xpose.msra.mxu0 0.0
    %5575 = vmatprep.subr.mxu0 0.0
    %5576 = vmatpush1.xpose.msra.mxu0 0.0
    %5577 = vmatprep.subr.mxu0 0.0
    %5578 = vmatpush1.xpose.msra.mxu0 0.0
    %5579 = vmatprep.subr.mxu0 0.0
    %5580 = vmatpush1.xpose.msra.mxu0 0.0
    %5581 = vmatprep.subr.mxu0 0.0
    %5582 = vmatpush1.xpose.msra.mxu0 0.0
    %5583 = vmatprep.subr.mxu0 0.0
    %5584 = vmatpush1.xpose.msra.mxu0 0.0
    %5585 = vmatprep.subr.mxu0 0.0
    %5586 = vmatpush1.xpose.msra.mxu0 0.0
    %5587 = vmatprep.subr.mxu0 0.0
    %5588 = vmatpush1.xpose.msra.mxu0 0.0
    %5589 = vmatprep.subr.mxu0 0.0
    %5590 = vmatpush1.xpose.msra.mxu0 0.0
    %5591 = vmatprep.subr.mxu0 0.0
    %5592 = vmatpush1.xpose.msra.mxu0 0.0
    %5593 = vmatprep.subr.mxu0 0.0
    %5594 = vmatpush1.xpose.msra.mxu0 0.0
    %5595 = vmatprep.subr.mxu0 0.0
    %5596 = vmatpush1.xpose.msra.mxu0 0.0
    %5597 = vmatprep.subr.mxu0 0.0
    %v5598 = vand.u32 %v5569, 4294901760
    %5599 = vmatpush1.xpose.msra.mxu0 %v5598
    %5600 = vmatprep.subr.mxu0 0.0
    %v5601 = vand.u32 %v5566, 4294901760
    %5602 = vmatpush1.xpose.msra.mxu0 %v5601
    %5603 = vmatprep.subr.mxu0 0.0
    %v5604 = vand.u32 %v5563, 4294901760
    %5605 = vmatpush1.xpose.msra.mxu0 %v5604
    %5606 = vmatprep.subr.mxu0 0.0
    %5607 = vmatpush2.xpose.msra.mxu0 0.0
    %5608 = vmatprep.subr.mxu0 0.0
    %5609 = vmatpush2.xpose.msra.mxu0 0.0
    %5610 = vmatprep.subr.mxu0 0.0
    %5611 = vmatpush2.xpose.msra.mxu0 0.0
    %5612 = vmatprep.subr.mxu0 0.0
    %5613 = vmatpush2.xpose.msra.mxu0 0.0
    %5614 = vmatprep.subr.mxu0 0.0
    %5615 = vmatpush2.xpose.msra.mxu0 0.0
    %5616 = vmatprep.subr.mxu0 0.0
    %5617 = vmatpush2.xpose.msra.mxu0 0.0
    %5618 = vmatprep.subr.mxu0 0.0
    %5619 = vmatpush2.xpose.msra.mxu0 0.0
    %5620 = vmatprep.subr.mxu0 0.0
    %5621 = vmatpush2.xpose.msra.mxu0 0.0
    %5622 = vmatprep.subr.mxu0 0.0
    %5623 = vmatpush2.xpose.msra.mxu0 0.0
    %5624 = vmatprep.subr.mxu0 0.0
    %5625 = vmatpush2.xpose.msra.mxu0 0.0
    %5626 = vmatprep.subr.mxu0 0.0
    %5627 = vmatpush2.xpose.msra.mxu0 0.0
    %5628 = vmatprep.subr.mxu0 0.0
    %5629 = vmatpush2.xpose.msra.mxu0 0.0
    %5630 = vmatprep.subr.mxu0 0.0
    %5631 = vmatpush2.xpose.msra.mxu0 0.0
    %5632 = vmatprep.subr.mxu0 0.0
    %5633 = vmatpush2.xpose.msra.mxu0 0.0
    %5634 = vmatprep.subr.mxu0 0.0
    %5635 = vmatpush2.xpose.msra.mxu0 0.0
    %5636 = vmatprep.subr.mxu0 0.0
    %5637 = vmatpush2.xpose.msra.mxu0 0.0
    %5638 = vmatprep.mubr.f32.mxu0 0.0
    %v5639 = vand.u32 %v5554, 4294901760
    %v5640 = vsub.f32 %v5554, %v5639
    %v5641 = vand.u32 %v5640, 4294901760
    %v5642 = vsub.f32 %v5640, %v5641
    %v5643 = vand.u32 %v5642, 4294901760
    %5644 = vmatmul.mubr.f32.gmra.mxu0 %v5643
    %v5645 = vpop.f32.mrf.mxu0
    %v5646 = vadd.f32 0.0, %v5645
    %v5647 = vpop.f32.mrf.mxu0
    %5648 = vmatprep.mubr.f32.mxu0 0.0
    %v5649 = vand.u32 %v5557, 4294901760
    %v5650 = vsub.f32 %v5557, %v5649
    %v5651 = vand.u32 %v5650, 4294901760
    %v5652 = vsub.f32 %v5650, %v5651
    %v5653 = vand.u32 %v5652, 4294901760
    %5654 = vmatmul.mubr.f32.gmra.mxu0 %v5653
    %v5655 = vpop.f32.mrf.mxu0
    %v5656 = vadd.f32 0.0, %v5655
    %v5657 = vpop.f32.mrf.mxu0
    %5658 = vmatprep.mubr.f32.mxu0 0.0
    %v5659 = vand.u32 %v5560, 4294901760
    %v5660 = vsub.f32 %v5560, %v5659
    %v5661 = vand.u32 %v5660, 4294901760
    %v5662 = vsub.f32 %v5660, %v5661
    %v5663 = vand.u32 %v5662, 4294901760
    %5664 = vmatmul.mubr.f32.gmra.mxu0 %v5663
    %v5665 = vpop.f32.mrf.mxu0
    %v5666 = vadd.f32 0.0, %v5665
    %v5667 = vpop.f32.mrf.mxu0
    %5668 = vdwg.mxu0
    %5669 = vmatprep.subr.mxu0 0.0
    %5670 = vmatpush1.xpose.msra.mxu0 0.0
    %5671 = vmatprep.subr.mxu0 0.0
    %5672 = vmatpush1.xpose.msra.mxu0 0.0
    %5673 = vmatprep.subr.mxu0 0.0
    %5674 = vmatpush1.xpose.msra.mxu0 0.0
    %5675 = vmatprep.subr.mxu0 0.0
    %5676 = vmatpush1.xpose.msra.mxu0 0.0
    %5677 = vmatprep.subr.mxu0 0.0
    %5678 = vmatpush1.xpose.msra.mxu0 0.0
    %5679 = vmatprep.subr.mxu0 0.0
    %5680 = vmatpush1.xpose.msra.mxu0 0.0
    %5681 = vmatprep.subr.mxu0 0.0
    %5682 = vmatpush1.xpose.msra.mxu0 0.0
    %5683 = vmatprep.subr.mxu0 0.0
    %5684 = vmatpush1.xpose.msra.mxu0 0.0
    %5685 = vmatprep.subr.mxu0 0.0
    %5686 = vmatpush1.xpose.msra.mxu0 0.0
    %5687 = vmatprep.subr.mxu0 0.0
    %5688 = vmatpush1.xpose.msra.mxu0 0.0
    %5689 = vmatprep.subr.mxu0 0.0
    %5690 = vmatpush1.xpose.msra.mxu0 0.0
    %5691 = vmatprep.subr.mxu0 0.0
    %5692 = vmatpush1.xpose.msra.mxu0 0.0
    %5693 = vmatprep.subr.mxu0 0.0
    %5694 = vmatpush1.xpose.msra.mxu0 0.0
    %5695 = vmatprep.subr.mxu0 0.0
    %v5696 = vand.u32 %v5569, 4294901760
    %v5697 = vsub.f32 %v5569, %v5696
    %v5698 = vand.u32 %v5697, 4294901760
    %v5699 = vsub.f32 %v5697, %v5698
    %v5700 = vand.u32 %v5699, 4294901760
    %5701 = vmatpush1.xpose.msra.mxu0 %v5700
    %5702 = vmatprep.subr.mxu0 0.0
    %v5703 = vand.u32 %v5566, 4294901760
    %v5704 = vsub.f32 %v5566, %v5703
    %v5705 = vand.u32 %v5704, 4294901760
    %v5706 = vsub.f32 %v5704, %v5705
    %v5707 = vand.u32 %v5706, 4294901760
    %5708 = vmatpush1.xpose.msra.mxu0 %v5707
    %5709 = vmatprep.subr.mxu0 0.0
    %v5710 = vand.u32 %v5563, 4294901760
    %v5711 = vsub.f32 %v5563, %v5710
    %v5712 = vand.u32 %v5711, 4294901760
    %v5713 = vsub.f32 %v5711, %v5712
    %v5714 = vand.u32 %v5713, 4294901760
    %5715 = vmatpush1.xpose.msra.mxu0 %v5714
    %5716 = vmatprep.subr.mxu0 0.0
    %5717 = vmatpush2.xpose.msra.mxu0 0.0
    %5718 = vmatprep.subr.mxu0 0.0
    %5719 = vmatpush2.xpose.msra.mxu0 0.0
    %5720 = vmatprep.subr.mxu0 0.0
    %5721 = vmatpush2.xpose.msra.mxu0 0.0
    %5722 = vmatprep.subr.mxu0 0.0
    %5723 = vmatpush2.xpose.msra.mxu0 0.0
    %5724 = vmatprep.subr.mxu0 0.0
    %5725 = vmatpush2.xpose.msra.mxu0 0.0
    %5726 = vmatprep.subr.mxu0 0.0
    %5727 = vmatpush2.xpose.msra.mxu0 0.0
    %5728 = vmatprep.subr.mxu0 0.0
    %5729 = vmatpush2.xpose.msra.mxu0 0.0
    %5730 = vmatprep.subr.mxu0 0.0
    %5731 = vmatpush2.xpose.msra.mxu0 0.0
    %5732 = vmatprep.subr.mxu0 0.0
    %5733 = vmatpush2.xpose.msra.mxu0 0.0
    %5734 = vmatprep.subr.mxu0 0.0
    %5735 = vmatpush2.xpose.msra.mxu0 0.0
    %5736 = vmatprep.subr.mxu0 0.0
    %5737 = vmatpush2.xpose.msra.mxu0 0.0
    %5738 = vmatprep.subr.mxu0 0.0
    %5739 = vmatpush2.xpose.msra.mxu0 0.0
    %5740 = vmatprep.subr.mxu0 0.0
    %5741 = vmatpush2.xpose.msra.mxu0 0.0
    %5742 = vmatprep.subr.mxu0 0.0
    %5743 = vmatpush2.xpose.msra.mxu0 0.0
    %5744 = vmatprep.subr.mxu0 0.0
    %5745 = vmatpush2.xpose.msra.mxu0 0.0
    %5746 = vmatprep.subr.mxu0 0.0
    %5747 = vmatpush2.xpose.msra.mxu0 0.0
    %5748 = vmatprep.mubr.f32.mxu0 0.0
    %v5749 = vand.u32 %v5554, 4294901760
    %5750 = vmatmul.mubr.f32.gmra.mxu0 %v5749
    %v5751 = vpop.f32.mrf.mxu0
    %v5752 = vadd.f32 %v5646, %v5751
    %v5753 = vpop.f32.mrf.mxu0
    %5754 = vmatprep.mubr.f32.mxu0 0.0
    %v5755 = vand.u32 %v5557, 4294901760
    %5756 = vmatmul.mubr.f32.gmra.mxu0 %v5755
    %v5757 = vpop.f32.mrf.mxu0
    %v5758 = vadd.f32 %v5656, %v5757
    %v5759 = vpop.f32.mrf.mxu0
    %5760 = vmatprep.mubr.f32.mxu0 0.0
    %v5761 = vand.u32 %v5560, 4294901760
    %5762 = vmatmul.mubr.f32.gmra.mxu0 %v5761
    %v5763 = vpop.f32.mrf.mxu0
    %v5764 = vadd.f32 %v5666, %v5763
    %v5765 = vpop.f32.mrf.mxu0
    %5766 = vdwg.mxu0
    %5767 = vmatprep.subr.mxu0 0.0
    %5768 = vmatpush1.xpose.msra.mxu0 0.0
    %5769 = vmatprep.subr.mxu0 0.0
    %5770 = vmatpush1.xpose.msra.mxu0 0.0
    %5771 = vmatprep.subr.mxu0 0.0
    %5772 = vmatpush1.xpose.msra.mxu0 0.0
    %5773 = vmatprep.subr.mxu0 0.0
    %5774 = vmatpush1.xpose.msra.mxu0 0.0
    %5775 = vmatprep.subr.mxu0 0.0
    %5776 = vmatpush1.xpose.msra.mxu0 0.0
    %5777 = vmatprep.subr.mxu0 0.0
    %5778 = vmatpush1.xpose.msra.mxu0 0.0
    %5779 = vmatprep.subr.mxu0 0.0
    %5780 = vmatpush1.xpose.msra.mxu0 0.0
    %5781 = vmatprep.subr.mxu0 0.0
    %5782 = vmatpush1.xpose.msra.mxu0 0.0
    %5783 = vmatprep.subr.mxu0 0.0
    %5784 = vmatpush1.xpose.msra.mxu0 0.0
    %5785 = vmatprep.subr.mxu0 0.0
    %5786 = vmatpush1.xpose.msra.mxu0 0.0
    %5787 = vmatprep.subr.mxu0 0.0
    %5788 = vmatpush1.xpose.msra.mxu0 0.0
    %5789 = vmatprep.subr.mxu0 0.0
    %5790 = vmatpush1.xpose.msra.mxu0 0.0
    %5791 = vmatprep.subr.mxu0 0.0
    %5792 = vmatpush1.xpose.msra.mxu0 0.0
    %5793 = vmatprep.subr.mxu0 0.0
    %v5794 = vand.u32 %v5569, 4294901760
    %v5795 = vsub.f32 %v5569, %v5794
    %5796 = vmatpush1.xpose.msra.mxu0 %v5795
    %5797 = vmatprep.subr.mxu0 0.0
    %v5798 = vand.u32 %v5566, 4294901760
    %v5799 = vsub.f32 %v5566, %v5798
    %5800 = vmatpush1.xpose.msra.mxu0 %v5799
    %5801 = vmatprep.subr.mxu0 0.0
    %v5802 = vand.u32 %v5563, 4294901760
    %v5803 = vsub.f32 %v5563, %v5802
    %5804 = vmatpush1.xpose.msra.mxu0 %v5803
    %5805 = vmatprep.subr.mxu0 0.0
    %5806 = vmatpush2.xpose.msra.mxu0 0.0
    %5807 = vmatprep.subr.mxu0 0.0
    %5808 = vmatpush2.xpose.msra.mxu0 0.0
    %5809 = vmatprep.subr.mxu0 0.0
    %5810 = vmatpush2.xpose.msra.mxu0 0.0
    %5811 = vmatprep.subr.mxu0 0.0
    %5812 = vmatpush2.xpose.msra.mxu0 0.0
    %5813 = vmatprep.subr.mxu0 0.0
    %5814 = vmatpush2.xpose.msra.mxu0 0.0
    %5815 = vmatprep.subr.mxu0 0.0
    %5816 = vmatpush2.xpose.msra.mxu0 0.0
    %5817 = vmatprep.subr.mxu0 0.0
    %5818 = vmatpush2.xpose.msra.mxu0 0.0
    %5819 = vmatprep.subr.mxu0 0.0
    %5820 = vmatpush2.xpose.msra.mxu0 0.0
    %5821 = vmatprep.subr.mxu0 0.0
    %5822 = vmatpush2.xpose.msra.mxu0 0.0
    %5823 = vmatprep.subr.mxu0 0.0
    %5824 = vmatpush2.xpose.msra.mxu0 0.0
    %5825 = vmatprep.subr.mxu0 0.0
    %5826 = vmatpush2.xpose.msra.mxu0 0.0
    %5827 = vmatprep.subr.mxu0 0.0
    %5828 = vmatpush2.xpose.msra.mxu0 0.0
    %5829 = vmatprep.subr.mxu0 0.0
    %5830 = vmatpush2.xpose.msra.mxu0 0.0
    %5831 = vmatprep.subr.mxu0 0.0
    %5832 = vmatpush2.xpose.msra.mxu0 0.0
    %5833 = vmatprep.subr.mxu0 0.0
    %5834 = vmatpush2.xpose.msra.mxu0 0.0
    %5835 = vmatprep.subr.mxu0 0.0
    %5836 = vmatpush2.xpose.msra.mxu0 0.0
    %5837 = vmatprep.mubr.f32.mxu0 0.0
    %v5838 = vand.u32 %v5554, 4294901760
    %v5839 = vsub.f32 %v5554, %v5838
    %5840 = vmatmul.mubr.f32.gmra.mxu0 %v5839
    %v5841 = vpop.f32.mrf.mxu0
    %v5842 = vadd.f32 %v5752, %v5841
    %v5843 = vpop.f32.mrf.mxu0
    %5844 = vmatprep.mubr.f32.mxu0 0.0
    %v5845 = vand.u32 %v5557, 4294901760
    %v5846 = vsub.f32 %v5557, %v5845
    %5847 = vmatmul.mubr.f32.gmra.mxu0 %v5846
    %v5848 = vpop.f32.mrf.mxu0
    %v5849 = vadd.f32 %v5758, %v5848
    %v5850 = vpop.f32.mrf.mxu0
    %5851 = vmatprep.mubr.f32.mxu0 0.0
    %v5852 = vand.u32 %v5560, 4294901760
    %v5853 = vsub.f32 %v5560, %v5852
    %5854 = vmatmul.mubr.f32.gmra.mxu0 %v5853
    %v5855 = vpop.f32.mrf.mxu0
    %v5856 = vadd.f32 %v5764, %v5855
    %v5857 = vpop.f32.mrf.mxu0
    %5858 = vdwg.mxu0
    %5859 = vmatprep.subr.mxu0 0.0
    %5860 = vmatpush1.xpose.msra.mxu0 0.0
    %5861 = vmatprep.subr.mxu0 0.0
    %5862 = vmatpush1.xpose.msra.mxu0 0.0
    %5863 = vmatprep.subr.mxu0 0.0
    %5864 = vmatpush1.xpose.msra.mxu0 0.0
    %5865 = vmatprep.subr.mxu0 0.0
    %5866 = vmatpush1.xpose.msra.mxu0 0.0
    %5867 = vmatprep.subr.mxu0 0.0
    %5868 = vmatpush1.xpose.msra.mxu0 0.0
    %5869 = vmatprep.subr.mxu0 0.0
    %5870 = vmatpush1.xpose.msra.mxu0 0.0
    %5871 = vmatprep.subr.mxu0 0.0
    %5872 = vmatpush1.xpose.msra.mxu0 0.0
    %5873 = vmatprep.subr.mxu0 0.0
    %5874 = vmatpush1.xpose.msra.mxu0 0.0
    %5875 = vmatprep.subr.mxu0 0.0
    %5876 = vmatpush1.xpose.msra.mxu0 0.0
    %5877 = vmatprep.subr.mxu0 0.0
    %5878 = vmatpush1.xpose.msra.mxu0 0.0
    %5879 = vmatprep.subr.mxu0 0.0
    %5880 = vmatpush1.xpose.msra.mxu0 0.0
    %5881 = vmatprep.subr.mxu0 0.0
    %5882 = vmatpush1.xpose.msra.mxu0 0.0
    %5883 = vmatprep.subr.mxu0 0.0
    %5884 = vmatpush1.xpose.msra.mxu0 0.0
    %5885 = vmatprep.subr.mxu0 0.0
    %v5886 = vand.u32 %v5569, 4294901760
    %5887 = vmatpush1.xpose.msra.mxu0 %v5886
    %5888 = vmatprep.subr.mxu0 0.0
    %v5889 = vand.u32 %v5566, 4294901760
    %5890 = vmatpush1.xpose.msra.mxu0 %v5889
    %5891 = vmatprep.subr.mxu0 0.0
    %v5892 = vand.u32 %v5563, 4294901760
    %5893 = vmatpush1.xpose.msra.mxu0 %v5892
    %5894 = vmatprep.subr.mxu0 0.0
    %5895 = vmatpush2.xpose.msra.mxu0 0.0
    %5896 = vmatprep.subr.mxu0 0.0
    %5897 = vmatpush2.xpose.msra.mxu0 0.0
    %5898 = vmatprep.subr.mxu0 0.0
    %5899 = vmatpush2.xpose.msra.mxu0 0.0
    %5900 = vmatprep.subr.mxu0 0.0
    %5901 = vmatpush2.xpose.msra.mxu0 0.0
    %5902 = vmatprep.subr.mxu0 0.0
    %5903 = vmatpush2.xpose.msra.mxu0 0.0
    %5904 = vmatprep.subr.mxu0 0.0
    %5905 = vmatpush2.xpose.msra.mxu0 0.0
    %5906 = vmatprep.subr.mxu0 0.0
    %5907 = vmatpush2.xpose.msra.mxu0 0.0
    %5908 = vmatprep.subr.mxu0 0.0
    %5909 = vmatpush2.xpose.msra.mxu0 0.0
    %5910 = vmatprep.subr.mxu0 0.0
    %5911 = vmatpush2.xpose.msra.mxu0 0.0
    %5912 = vmatprep.subr.mxu0 0.0
    %5913 = vmatpush2.xpose.msra.mxu0 0.0
    %5914 = vmatprep.subr.mxu0 0.0
    %5915 = vmatpush2.xpose.msra.mxu0 0.0
    %5916 = vmatprep.subr.mxu0 0.0
    %5917 = vmatpush2.xpose.msra.mxu0 0.0
    %5918 = vmatprep.subr.mxu0 0.0
    %5919 = vmatpush2.xpose.msra.mxu0 0.0
    %5920 = vmatprep.subr.mxu0 0.0
    %5921 = vmatpush2.xpose.msra.mxu0 0.0
    %5922 = vmatprep.subr.mxu0 0.0
    %5923 = vmatpush2.xpose.msra.mxu0 0.0
    %5924 = vmatprep.subr.mxu0 0.0
    %5925 = vmatpush2.xpose.msra.mxu0 0.0
    %5926 = vmatprep.mubr.f32.mxu0 0.0
    %v5927 = vand.u32 %v5554, 4294901760
    %v5928 = vsub.f32 %v5554, %v5927
    %v5929 = vand.u32 %v5928, 4294901760
    %5930 = vmatmul.mubr.f32.gmra.mxu0 %v5929
    %v5931 = vpop.f32.mrf.mxu0
    %v5932 = vadd.f32 %v5842, %v5931
    %v5933 = vpop.f32.mrf.mxu0
    %5934 = vmatprep.mubr.f32.mxu0 0.0
    %v5935 = vand.u32 %v5557, 4294901760
    %v5936 = vsub.f32 %v5557, %v5935
    %v5937 = vand.u32 %v5936, 4294901760
    %5938 = vmatmul.mubr.f32.gmra.mxu0 %v5937
    %v5939 = vpop.f32.mrf.mxu0
    %v5940 = vadd.f32 %v5849, %v5939
    %v5941 = vpop.f32.mrf.mxu0
    %5942 = vmatprep.mubr.f32.mxu0 0.0
    %v5943 = vand.u32 %v5560, 4294901760
    %v5944 = vsub.f32 %v5560, %v5943
    %v5945 = vand.u32 %v5944, 4294901760
    %5946 = vmatmul.mubr.f32.gmra.mxu0 %v5945
    %v5947 = vpop.f32.mrf.mxu0
    %v5948 = vadd.f32 %v5856, %v5947
    %v5949 = vpop.f32.mrf.mxu0
    %5950 = vdwg.mxu0
    %5951 = vmatprep.subr.mxu0 0.0
    %5952 = vmatpush1.xpose.msra.mxu0 0.0
    %5953 = vmatprep.subr.mxu0 0.0
    %5954 = vmatpush1.xpose.msra.mxu0 0.0
    %5955 = vmatprep.subr.mxu0 0.0
    %5956 = vmatpush1.xpose.msra.mxu0 0.0
    %5957 = vmatprep.subr.mxu0 0.0
    %5958 = vmatpush1.xpose.msra.mxu0 0.0
    %5959 = vmatprep.subr.mxu0 0.0
    %5960 = vmatpush1.xpose.msra.mxu0 0.0
    %5961 = vmatprep.subr.mxu0 0.0
    %5962 = vmatpush1.xpose.msra.mxu0 0.0
    %5963 = vmatprep.subr.mxu0 0.0
    %5964 = vmatpush1.xpose.msra.mxu0 0.0
    %5965 = vmatprep.subr.mxu0 0.0
    %5966 = vmatpush1.xpose.msra.mxu0 0.0
    %5967 = vmatprep.subr.mxu0 0.0
    %5968 = vmatpush1.xpose.msra.mxu0 0.0
    %5969 = vmatprep.subr.mxu0 0.0
    %5970 = vmatpush1.xpose.msra.mxu0 0.0
    %5971 = vmatprep.subr.mxu0 0.0
    %5972 = vmatpush1.xpose.msra.mxu0 0.0
    %5973 = vmatprep.subr.mxu0 0.0
    %5974 = vmatpush1.xpose.msra.mxu0 0.0
    %5975 = vmatprep.subr.mxu0 0.0
    %5976 = vmatpush1.xpose.msra.mxu0 0.0
    %5977 = vmatprep.subr.mxu0 0.0
    %v5978 = vand.u32 %v5569, 4294901760
    %v5979 = vsub.f32 %v5569, %v5978
    %v5980 = vand.u32 %v5979, 4294901760
    %5981 = vmatpush1.xpose.msra.mxu0 %v5980
    %5982 = vmatprep.subr.mxu0 0.0
    %v5983 = vand.u32 %v5566, 4294901760
    %v5984 = vsub.f32 %v5566, %v5983
    %v5985 = vand.u32 %v5984, 4294901760
    %5986 = vmatpush1.xpose.msra.mxu0 %v5985
    %5987 = vmatprep.subr.mxu0 0.0
    %v5988 = vand.u32 %v5563, 4294901760
    %v5989 = vsub.f32 %v5563, %v5988
    %v5990 = vand.u32 %v5989, 4294901760
    %5991 = vmatpush1.xpose.msra.mxu0 %v5990
    %5992 = vmatprep.subr.mxu0 0.0
    %5993 = vmatpush2.xpose.msra.mxu0 0.0
    %5994 = vmatprep.subr.mxu0 0.0
    %5995 = vmatpush2.xpose.msra.mxu0 0.0
    %5996 = vmatprep.subr.mxu0 0.0
    %5997 = vmatpush2.xpose.msra.mxu0 0.0
    %5998 = vmatprep.subr.mxu0 0.0
    %5999 = vmatpush2.xpose.msra.mxu0 0.0
    %6000 = vmatprep.subr.mxu0 0.0
    %6001 = vmatpush2.xpose.msra.mxu0 0.0
    %6002 = vmatprep.subr.mxu0 0.0
    %6003 = vmatpush2.xpose.msra.mxu0 0.0
    %6004 = vmatprep.subr.mxu0 0.0
    %6005 = vmatpush2.xpose.msra.mxu0 0.0
    %6006 = vmatprep.subr.mxu0 0.0
    %6007 = vmatpush2.xpose.msra.mxu0 0.0
    %6008 = vmatprep.subr.mxu0 0.0
    %6009 = vmatpush2.xpose.msra.mxu0 0.0
    %6010 = vmatprep.subr.mxu0 0.0
    %6011 = vmatpush2.xpose.msra.mxu0 0.0
    %6012 = vmatprep.subr.mxu0 0.0
    %6013 = vmatpush2.xpose.msra.mxu0 0.0
    %6014 = vmatprep.subr.mxu0 0.0
    %6015 = vmatpush2.xpose.msra.mxu0 0.0
    %6016 = vmatprep.subr.mxu0 0.0
    %6017 = vmatpush2.xpose.msra.mxu0 0.0
    %6018 = vmatprep.subr.mxu0 0.0
    %6019 = vmatpush2.xpose.msra.mxu0 0.0
    %6020 = vmatprep.subr.mxu0 0.0
    %6021 = vmatpush2.xpose.msra.mxu0 0.0
    %6022 = vmatprep.subr.mxu0 0.0
    %6023 = vmatpush2.xpose.msra.mxu0 0.0
    %6024 = vmatprep.mubr.f32.mxu0 0.0
    %v6025 = vand.u32 %v5554, 4294901760
    %6026 = vmatmul.mubr.f32.gmra.mxu0 %v6025
    %v6027 = vpop.f32.mrf.mxu0
    %v6028 = vadd.f32 %v5932, %v6027
    %v6029 = vpop.f32.mrf.mxu0
    %6030 = vmatprep.mubr.f32.mxu0 0.0
    %v6031 = vand.u32 %v5557, 4294901760
    %6032 = vmatmul.mubr.f32.gmra.mxu0 %v6031
    %v6033 = vpop.f32.mrf.mxu0
    %v6034 = vadd.f32 %v5940, %v6033
    %v6035 = vpop.f32.mrf.mxu0
    %6036 = vmatprep.mubr.f32.mxu0 0.0
    %v6037 = vand.u32 %v5560, 4294901760
    %6038 = vmatmul.mubr.f32.gmra.mxu0 %v6037
    %v6039 = vpop.f32.mrf.mxu0
    %v6040 = vadd.f32 %v5948, %v6039
    %v6041 = vpop.f32.mrf.mxu0
    %6042 = vdwg.mxu0
    %6043 = vmatprep.subr.mxu0 0.0
    %6044 = vmatpush1.xpose.msra.mxu0 0.0
    %6045 = vmatprep.subr.mxu0 0.0
    %6046 = vmatpush1.xpose.msra.mxu0 0.0
    %6047 = vmatprep.subr.mxu0 0.0
    %6048 = vmatpush1.xpose.msra.mxu0 0.0
    %6049 = vmatprep.subr.mxu0 0.0
    %6050 = vmatpush1.xpose.msra.mxu0 0.0
    %6051 = vmatprep.subr.mxu0 0.0
    %6052 = vmatpush1.xpose.msra.mxu0 0.0
    %6053 = vmatprep.subr.mxu0 0.0
    %6054 = vmatpush1.xpose.msra.mxu0 0.0
    %6055 = vmatprep.subr.mxu0 0.0
    %6056 = vmatpush1.xpose.msra.mxu0 0.0
    %6057 = vmatprep.subr.mxu0 0.0
    %6058 = vmatpush1.xpose.msra.mxu0 0.0
    %6059 = vmatprep.subr.mxu0 0.0
    %6060 = vmatpush1.xpose.msra.mxu0 0.0
    %6061 = vmatprep.subr.mxu0 0.0
    %6062 = vmatpush1.xpose.msra.mxu0 0.0
    %6063 = vmatprep.subr.mxu0 0.0
    %6064 = vmatpush1.xpose.msra.mxu0 0.0
    %6065 = vmatprep.subr.mxu0 0.0
    %6066 = vmatpush1.xpose.msra.mxu0 0.0
    %6067 = vmatprep.subr.mxu0 0.0
    %6068 = vmatpush1.xpose.msra.mxu0 0.0
    %6069 = vmatprep.subr.mxu0 0.0
    %v6070 = vand.u32 %v5569, 4294901760
    %6071 = vmatpush1.xpose.msra.mxu0 %v6070
    %6072 = vmatprep.subr.mxu0 0.0
    %v6073 = vand.u32 %v5566, 4294901760
    %6074 = vmatpush1.xpose.msra.mxu0 %v6073
    %6075 = vmatprep.subr.mxu0 0.0
    %v6076 = vand.u32 %v5563, 4294901760
    %6077 = vmatpush1.xpose.msra.mxu0 %v6076
    %6078 = vmatprep.subr.mxu0 0.0
    %6079 = vmatpush2.xpose.msra.mxu0 0.0
    %6080 = vmatprep.subr.mxu0 0.0
    %6081 = vmatpush2.xpose.msra.mxu0 0.0
    %6082 = vmatprep.subr.mxu0 0.0
    %6083 = vmatpush2.xpose.msra.mxu0 0.0
    %6084 = vmatprep.subr.mxu0 0.0
    %6085 = vmatpush2.xpose.msra.mxu0 0.0
    %6086 = vmatprep.subr.mxu0 0.0
    %6087 = vmatpush2.xpose.msra.mxu0 0.0
    %6088 = vmatprep.subr.mxu0 0.0
    %6089 = vmatpush2.xpose.msra.mxu0 0.0
    %6090 = vmatprep.subr.mxu0 0.0
    %6091 = vmatpush2.xpose.msra.mxu0 0.0
    %6092 = vmatprep.subr.mxu0 0.0
    %6093 = vmatpush2.xpose.msra.mxu0 0.0
    %6094 = vmatprep.subr.mxu0 0.0
    %6095 = vmatpush2.xpose.msra.mxu0 0.0
    %6096 = vmatprep.subr.mxu0 0.0
    %6097 = vmatpush2.xpose.msra.mxu0 0.0
    %6098 = vmatprep.subr.mxu0 0.0
    %6099 = vmatpush2.xpose.msra.mxu0 0.0
    %6100 = vmatprep.subr.mxu0 0.0
    %6101 = vmatpush2.xpose.msra.mxu0 0.0
    %6102 = vmatprep.subr.mxu0 0.0
    %6103 = vmatpush2.xpose.msra.mxu0 0.0
    %6104 = vmatprep.subr.mxu0 0.0
    %6105 = vmatpush2.xpose.msra.mxu0 0.0
    %6106 = vmatprep.subr.mxu0 0.0
    %6107 = vmatpush2.xpose.msra.mxu0 0.0
    %6108 = vmatprep.subr.mxu0 0.0
    %6109 = vmatpush2.xpose.msra.mxu0 0.0
    %6110 = vmatprep.mubr.f32.mxu0 0.0
    %v6111 = vand.u32 %v5554, 4294901760
    %6112 = vmatmul.mubr.f32.gmra.mxu0 %v6111
    %v6113 = vpop.f32.mrf.mxu0
    %v6114 = vadd.f32 %v6028, %v6113
    %v6115 = vpop.f32.mrf.mxu0
    %6116 = vmatprep.mubr.f32.mxu0 0.0
    %v6117 = vand.u32 %v5557, 4294901760
    %6118 = vmatmul.mubr.f32.gmra.mxu0 %v6117
    %v6119 = vpop.f32.mrf.mxu0
    %v6120 = vadd.f32 %v6034, %v6119
    %v6121 = vpop.f32.mrf.mxu0
    %6122 = vmatprep.mubr.f32.mxu0 0.0
    %v6123 = vand.u32 %v5560, 4294901760
    %6124 = vmatmul.mubr.f32.gmra.mxu0 %v6123
    %v6125 = vpop.f32.mrf.mxu0
    %v6126 = vadd.f32 %v6040, %v6125
    %v6127 = vpop.f32.mrf.mxu0
    %6128 = vdwg.mxu0
    %v6129 = vmul.f32 %v6114, 0.17677669
    %v6130 = vmul.f32 %v6120, 0.17677669
    %v6131 = vmul.f32 %v6126, 0.17677669
    %v6132 = vsel %vm3113, %v6129, -inf
    %6133 = vmax.xlane.f32.xlu0 %v6132
    %v6134 = vpop.xlane.xlu0 %6133
    %v6135 = vsel %vm3113, %v6130, -inf
    %6136 = vmax.xlane.f32.xlu0 %v6135
    %v6137 = vpop.xlane.xlu0 %6136
    %v6138 = vsel %vm3120, %v6131, -inf
    %6139 = vmax.xlane.f32.xlu0 %v6138
    %v6140 = vpop.xlane.xlu0 %6139
    %v6141 = vsub.f32 %v6129, %v6134
    %v6142 = vsub.f32 %v6130, %v6137
    %v6143 = vsub.f32 %v6131, %v6140
    %v6144 = vmul.f32 %v6141, 1.442695
    %v6145 = vpow.pop %v6144
    %v6146 = vmul.f32 %v6142, 1.442695
    %v6147 = vpow.pop %v6146
    %v6148 = vmul.f32 %v6143, 1.442695
    %v6149 = vpow.pop %v6148
    %v6150 = vsel %vm3113, %v6145, 0.0
    %6151 = vadd.xlane.f32.xlu0 %v6150
    %v6152 = vpop.xlane.xlu0 %6151
    %v6153 = vsel %vm3113, %v6147, 0.0
    %6154 = vadd.xlane.f32.xlu0 %v6153
    %v6155 = vpop.xlane.xlu0 %6154
    %v6156 = vsel %vm3120, %v6149, 0.0
    %6157 = vadd.xlane.f32.xlu0 %v6156
    %v6158 = vpop.xlane.xlu0 %6157
    %v6159 = vrcp.pop %v6152
    %v6160 = vmul.f32 %v6145, %v6159
    %v6161 = vrcp.pop %v6155
    %v6162 = vmul.f32 %v6147, %v6161
    %v6163 = vrcp.pop %v6158
    %v6164 = vmul.f32 %v6149, %v6163
    %v6166 = vsel %vm3113, %v6160, 0
    %v6169 = vsel %vm3113, %v6162, 0
    %v6172 = vsel %vm3113, %v6164, 0
    %v6175 = vsel %vm3157, %v5550, 0
    %6177 = vmatprep.subr.mxu0 0.0
    %6178 = vmatpush1.msra.mxu0 0.0
    %6179 = vmatprep.subr.mxu0 0.0
    %6180 = vmatpush1.msra.mxu0 0.0
    %6181 = vmatprep.subr.mxu0 0.0
    %6182 = vmatpush1.msra.mxu0 0.0
    %6183 = vmatprep.subr.mxu0 0.0
    %6184 = vmatpush1.msra.mxu0 0.0
    %6185 = vmatprep.subr.mxu0 0.0
    %6186 = vmatpush1.msra.mxu0 0.0
    %6187 = vmatprep.subr.mxu0 0.0
    %6188 = vmatpush1.msra.mxu0 0.0
    %6189 = vmatprep.subr.mxu0 0.0
    %6190 = vmatpush1.msra.mxu0 0.0
    %6191 = vmatprep.subr.mxu0 0.0
    %6192 = vmatpush1.msra.mxu0 0.0
    %6193 = vmatprep.subr.mxu0 0.0
    %6194 = vmatpush1.msra.mxu0 0.0
    %6195 = vmatprep.subr.mxu0 0.0
    %6196 = vmatpush1.msra.mxu0 0.0
    %6197 = vmatprep.subr.mxu0 0.0
    %6198 = vmatpush1.msra.mxu0 0.0
    %6199 = vmatprep.subr.mxu0 0.0
    %6200 = vmatpush1.msra.mxu0 0.0
    %6201 = vmatprep.subr.mxu0 0.0
    %6202 = vmatpush1.msra.mxu0 0.0
    %6203 = vmatprep.subr.mxu0 0.0
    %v6204 = vand.u32 %v6175, 4294901760
    %6205 = vmatpush1.msra.mxu0 %v6204
    %6206 = vmatprep.subr.mxu0 0.0
    %v6207 = vand.u32 %v5544, 4294901760
    %6208 = vmatpush1.msra.mxu0 %v6207
    %6209 = vmatprep.subr.mxu0 0.0
    %v6210 = vand.u32 %v5538, 4294901760
    %6211 = vmatpush1.msra.mxu0 %v6210
    %6212 = vmatprep.subr.mxu0 0.0
    %6213 = vmatpush2.msra.mxu0 0.0
    %6214 = vmatprep.subr.mxu0 0.0
    %6215 = vmatpush2.msra.mxu0 0.0
    %6216 = vmatprep.subr.mxu0 0.0
    %6217 = vmatpush2.msra.mxu0 0.0
    %6218 = vmatprep.subr.mxu0 0.0
    %6219 = vmatpush2.msra.mxu0 0.0
    %6220 = vmatprep.subr.mxu0 0.0
    %6221 = vmatpush2.msra.mxu0 0.0
    %6222 = vmatprep.subr.mxu0 0.0
    %6223 = vmatpush2.msra.mxu0 0.0
    %6224 = vmatprep.subr.mxu0 0.0
    %6225 = vmatpush2.msra.mxu0 0.0
    %6226 = vmatprep.subr.mxu0 0.0
    %6227 = vmatpush2.msra.mxu0 0.0
    %6228 = vmatprep.subr.mxu0 0.0
    %6229 = vmatpush2.msra.mxu0 0.0
    %6230 = vmatprep.subr.mxu0 0.0
    %6231 = vmatpush2.msra.mxu0 0.0
    %6232 = vmatprep.subr.mxu0 0.0
    %6233 = vmatpush2.msra.mxu0 0.0
    %6234 = vmatprep.subr.mxu0 0.0
    %6235 = vmatpush2.msra.mxu0 0.0
    %6236 = vmatprep.subr.mxu0 0.0
    %6237 = vmatpush2.msra.mxu0 0.0
    %6238 = vmatprep.subr.mxu0 0.0
    %6239 = vmatpush2.msra.mxu0 0.0
    %6240 = vmatprep.subr.mxu0 0.0
    %6241 = vmatpush2.msra.mxu0 0.0
    %6242 = vmatprep.subr.mxu0 0.0
    %6243 = vmatpush2.msra.mxu0 0.0
    %6244 = vmatprep.mubr.f32.mxu0 0.0
    %v6245 = vand.u32 %v6166, 4294901760
    %v6246 = vsub.f32 %v6166, %v6245
    %v6247 = vand.u32 %v6246, 4294901760
    %v6248 = vsub.f32 %v6246, %v6247
    %v6249 = vand.u32 %v6248, 4294901760
    %6250 = vmatmul.mubr.f32.gmra.mxu0 %v6249
    %v6251 = vpop.f32.mrf.mxu0
    %v6252 = vadd.f32 0.0, %v6251
    %v6253 = vpop.f32.mrf.mxu0
    %6254 = vmatprep.mubr.f32.mxu0 0.0
    %v6255 = vand.u32 %v6169, 4294901760
    %v6256 = vsub.f32 %v6169, %v6255
    %v6257 = vand.u32 %v6256, 4294901760
    %v6258 = vsub.f32 %v6256, %v6257
    %v6259 = vand.u32 %v6258, 4294901760
    %6260 = vmatmul.mubr.f32.gmra.mxu0 %v6259
    %v6261 = vpop.f32.mrf.mxu0
    %v6262 = vadd.f32 0.0, %v6261
    %v6263 = vpop.f32.mrf.mxu0
    %6264 = vmatprep.mubr.f32.mxu0 0.0
    %v6265 = vand.u32 %v6172, 4294901760
    %v6266 = vsub.f32 %v6172, %v6265
    %v6267 = vand.u32 %v6266, 4294901760
    %v6268 = vsub.f32 %v6266, %v6267
    %v6269 = vand.u32 %v6268, 4294901760
    %6270 = vmatmul.mubr.f32.gmra.mxu0 %v6269
    %v6271 = vpop.f32.mrf.mxu0
    %v6272 = vadd.f32 0.0, %v6271
    %v6273 = vpop.f32.mrf.mxu0
    %6274 = vdwg.mxu0
    %6275 = vmatprep.subr.mxu0 0.0
    %6276 = vmatpush1.msra.mxu0 0.0
    %6277 = vmatprep.subr.mxu0 0.0
    %6278 = vmatpush1.msra.mxu0 0.0
    %6279 = vmatprep.subr.mxu0 0.0
    %6280 = vmatpush1.msra.mxu0 0.0
    %6281 = vmatprep.subr.mxu0 0.0
    %6282 = vmatpush1.msra.mxu0 0.0
    %6283 = vmatprep.subr.mxu0 0.0
    %6284 = vmatpush1.msra.mxu0 0.0
    %6285 = vmatprep.subr.mxu0 0.0
    %6286 = vmatpush1.msra.mxu0 0.0
    %6287 = vmatprep.subr.mxu0 0.0
    %6288 = vmatpush1.msra.mxu0 0.0
    %6289 = vmatprep.subr.mxu0 0.0
    %6290 = vmatpush1.msra.mxu0 0.0
    %6291 = vmatprep.subr.mxu0 0.0
    %6292 = vmatpush1.msra.mxu0 0.0
    %6293 = vmatprep.subr.mxu0 0.0
    %6294 = vmatpush1.msra.mxu0 0.0
    %6295 = vmatprep.subr.mxu0 0.0
    %6296 = vmatpush1.msra.mxu0 0.0
    %6297 = vmatprep.subr.mxu0 0.0
    %6298 = vmatpush1.msra.mxu0 0.0
    %6299 = vmatprep.subr.mxu0 0.0
    %6300 = vmatpush1.msra.mxu0 0.0
    %6301 = vmatprep.subr.mxu0 0.0
    %v6302 = vand.u32 %v6175, 4294901760
    %v6303 = vsub.f32 %v6175, %v6302
    %v6304 = vand.u32 %v6303, 4294901760
    %v6305 = vsub.f32 %v6303, %v6304
    %v6306 = vand.u32 %v6305, 4294901760
    %6307 = vmatpush1.msra.mxu0 %v6306
    %6308 = vmatprep.subr.mxu0 0.0
    %v6309 = vand.u32 %v5544, 4294901760
    %v6310 = vsub.f32 %v5544, %v6309
    %v6311 = vand.u32 %v6310, 4294901760
    %v6312 = vsub.f32 %v6310, %v6311
    %v6313 = vand.u32 %v6312, 4294901760
    %6314 = vmatpush1.msra.mxu0 %v6313
    %6315 = vmatprep.subr.mxu0 0.0
    %v6316 = vand.u32 %v5538, 4294901760
    %v6317 = vsub.f32 %v5538, %v6316
    %v6318 = vand.u32 %v6317, 4294901760
    %v6319 = vsub.f32 %v6317, %v6318
    %v6320 = vand.u32 %v6319, 4294901760
    %6321 = vmatpush1.msra.mxu0 %v6320
    %6322 = vmatprep.subr.mxu0 0.0
    %6323 = vmatpush2.msra.mxu0 0.0
    %6324 = vmatprep.subr.mxu0 0.0
    %6325 = vmatpush2.msra.mxu0 0.0
    %6326 = vmatprep.subr.mxu0 0.0
    %6327 = vmatpush2.msra.mxu0 0.0
    %6328 = vmatprep.subr.mxu0 0.0
    %6329 = vmatpush2.msra.mxu0 0.0
    %6330 = vmatprep.subr.mxu0 0.0
    %6331 = vmatpush2.msra.mxu0 0.0
    %6332 = vmatprep.subr.mxu0 0.0
    %6333 = vmatpush2.msra.mxu0 0.0
    %6334 = vmatprep.subr.mxu0 0.0
    %6335 = vmatpush2.msra.mxu0 0.0
    %6336 = vmatprep.subr.mxu0 0.0
    %6337 = vmatpush2.msra.mxu0 0.0
    %6338 = vmatprep.subr.mxu0 0.0
    %6339 = vmatpush2.msra.mxu0 0.0
    %6340 = vmatprep.subr.mxu0 0.0
    %6341 = vmatpush2.msra.mxu0 0.0
    %6342 = vmatprep.subr.mxu0 0.0
    %6343 = vmatpush2.msra.mxu0 0.0
    %6344 = vmatprep.subr.mxu0 0.0
    %6345 = vmatpush2.msra.mxu0 0.0
    %6346 = vmatprep.subr.mxu0 0.0
    %6347 = vmatpush2.msra.mxu0 0.0
    %6348 = vmatprep.subr.mxu0 0.0
    %6349 = vmatpush2.msra.mxu0 0.0
    %6350 = vmatprep.subr.mxu0 0.0
    %6351 = vmatpush2.msra.mxu0 0.0
    %6352 = vmatprep.subr.mxu0 0.0
    %6353 = vmatpush2.msra.mxu0 0.0
    %6354 = vmatprep.mubr.f32.mxu0 0.0
    %v6355 = vand.u32 %v6166, 4294901760
    %6356 = vmatmul.mubr.f32.gmra.mxu0 %v6355
    %v6357 = vpop.f32.mrf.mxu0
    %v6358 = vadd.f32 %v6252, %v6357
    %v6359 = vpop.f32.mrf.mxu0
    %6360 = vmatprep.mubr.f32.mxu0 0.0
    %v6361 = vand.u32 %v6169, 4294901760
    %6362 = vmatmul.mubr.f32.gmra.mxu0 %v6361
    %v6363 = vpop.f32.mrf.mxu0
    %v6364 = vadd.f32 %v6262, %v6363
    %v6365 = vpop.f32.mrf.mxu0
    %6366 = vmatprep.mubr.f32.mxu0 0.0
    %v6367 = vand.u32 %v6172, 4294901760
    %6368 = vmatmul.mubr.f32.gmra.mxu0 %v6367
    %v6369 = vpop.f32.mrf.mxu0
    %v6370 = vadd.f32 %v6272, %v6369
    %v6371 = vpop.f32.mrf.mxu0
    %6372 = vdwg.mxu0
    %6373 = vmatprep.subr.mxu0 0.0
    %6374 = vmatpush1.msra.mxu0 0.0
    %6375 = vmatprep.subr.mxu0 0.0
    %6376 = vmatpush1.msra.mxu0 0.0
    %6377 = vmatprep.subr.mxu0 0.0
    %6378 = vmatpush1.msra.mxu0 0.0
    %6379 = vmatprep.subr.mxu0 0.0
    %6380 = vmatpush1.msra.mxu0 0.0
    %6381 = vmatprep.subr.mxu0 0.0
    %6382 = vmatpush1.msra.mxu0 0.0
    %6383 = vmatprep.subr.mxu0 0.0
    %6384 = vmatpush1.msra.mxu0 0.0
    %6385 = vmatprep.subr.mxu0 0.0
    %6386 = vmatpush1.msra.mxu0 0.0
    %6387 = vmatprep.subr.mxu0 0.0
    %6388 = vmatpush1.msra.mxu0 0.0
    %6389 = vmatprep.subr.mxu0 0.0
    %6390 = vmatpush1.msra.mxu0 0.0
    %6391 = vmatprep.subr.mxu0 0.0
    %6392 = vmatpush1.msra.mxu0 0.0
    %6393 = vmatprep.subr.mxu0 0.0
    %6394 = vmatpush1.msra.mxu0 0.0
    %6395 = vmatprep.subr.mxu0 0.0
    %6396 = vmatpush1.msra.mxu0 0.0
    %6397 = vmatprep.subr.mxu0 0.0
    %6398 = vmatpush1.msra.mxu0 0.0
    %6399 = vmatprep.subr.mxu0 0.0
    %v6400 = vand.u32 %v6175, 4294901760
    %v6401 = vsub.f32 %v6175, %v6400
    %6402 = vmatpush1.msra.mxu0 %v6401
    %6403 = vmatprep.subr.mxu0 0.0
    %v6404 = vand.u32 %v5544, 4294901760
    %v6405 = vsub.f32 %v5544, %v6404
    %6406 = vmatpush1.msra.mxu0 %v6405
    %6407 = vmatprep.subr.mxu0 0.0
    %v6408 = vand.u32 %v5538, 4294901760
    %v6409 = vsub.f32 %v5538, %v6408
    %6410 = vmatpush1.msra.mxu0 %v6409
    %6411 = vmatprep.subr.mxu0 0.0
    %6412 = vmatpush2.msra.mxu0 0.0
    %6413 = vmatprep.subr.mxu0 0.0
    %6414 = vmatpush2.msra.mxu0 0.0
    %6415 = vmatprep.subr.mxu0 0.0
    %6416 = vmatpush2.msra.mxu0 0.0
    %6417 = vmatprep.subr.mxu0 0.0
    %6418 = vmatpush2.msra.mxu0 0.0
    %6419 = vmatprep.subr.mxu0 0.0
    %6420 = vmatpush2.msra.mxu0 0.0
    %6421 = vmatprep.subr.mxu0 0.0
    %6422 = vmatpush2.msra.mxu0 0.0
    %6423 = vmatprep.subr.mxu0 0.0
    %6424 = vmatpush2.msra.mxu0 0.0
    %6425 = vmatprep.subr.mxu0 0.0
    %6426 = vmatpush2.msra.mxu0 0.0
    %6427 = vmatprep.subr.mxu0 0.0
    %6428 = vmatpush2.msra.mxu0 0.0
    %6429 = vmatprep.subr.mxu0 0.0
    %6430 = vmatpush2.msra.mxu0 0.0
    %6431 = vmatprep.subr.mxu0 0.0
    %6432 = vmatpush2.msra.mxu0 0.0
    %6433 = vmatprep.subr.mxu0 0.0
    %6434 = vmatpush2.msra.mxu0 0.0
    %6435 = vmatprep.subr.mxu0 0.0
    %6436 = vmatpush2.msra.mxu0 0.0
    %6437 = vmatprep.subr.mxu0 0.0
    %6438 = vmatpush2.msra.mxu0 0.0
    %6439 = vmatprep.subr.mxu0 0.0
    %6440 = vmatpush2.msra.mxu0 0.0
    %6441 = vmatprep.subr.mxu0 0.0
    %6442 = vmatpush2.msra.mxu0 0.0
    %6443 = vmatprep.mubr.f32.mxu0 0.0
    %v6444 = vand.u32 %v6166, 4294901760
    %v6445 = vsub.f32 %v6166, %v6444
    %6446 = vmatmul.mubr.f32.gmra.mxu0 %v6445
    %v6447 = vpop.f32.mrf.mxu0
    %v6448 = vadd.f32 %v6358, %v6447
    %v6449 = vpop.f32.mrf.mxu0
    %6450 = vmatprep.mubr.f32.mxu0 0.0
    %v6451 = vand.u32 %v6169, 4294901760
    %v6452 = vsub.f32 %v6169, %v6451
    %6453 = vmatmul.mubr.f32.gmra.mxu0 %v6452
    %v6454 = vpop.f32.mrf.mxu0
    %v6455 = vadd.f32 %v6364, %v6454
    %v6456 = vpop.f32.mrf.mxu0
    %6457 = vmatprep.mubr.f32.mxu0 0.0
    %v6458 = vand.u32 %v6172, 4294901760
    %v6459 = vsub.f32 %v6172, %v6458
    %6460 = vmatmul.mubr.f32.gmra.mxu0 %v6459
    %v6461 = vpop.f32.mrf.mxu0
    %v6462 = vadd.f32 %v6370, %v6461
    %v6463 = vpop.f32.mrf.mxu0
    %6464 = vdwg.mxu0
    %6465 = vmatprep.subr.mxu0 0.0
    %6466 = vmatpush1.msra.mxu0 0.0
    %6467 = vmatprep.subr.mxu0 0.0
    %6468 = vmatpush1.msra.mxu0 0.0
    %6469 = vmatprep.subr.mxu0 0.0
    %6470 = vmatpush1.msra.mxu0 0.0
    %6471 = vmatprep.subr.mxu0 0.0
    %6472 = vmatpush1.msra.mxu0 0.0
    %6473 = vmatprep.subr.mxu0 0.0
    %6474 = vmatpush1.msra.mxu0 0.0
    %6475 = vmatprep.subr.mxu0 0.0
    %6476 = vmatpush1.msra.mxu0 0.0
    %6477 = vmatprep.subr.mxu0 0.0
    %6478 = vmatpush1.msra.mxu0 0.0
    %6479 = vmatprep.subr.mxu0 0.0
    %6480 = vmatpush1.msra.mxu0 0.0
    %6481 = vmatprep.subr.mxu0 0.0
    %6482 = vmatpush1.msra.mxu0 0.0
    %6483 = vmatprep.subr.mxu0 0.0
    %6484 = vmatpush1.msra.mxu0 0.0
    %6485 = vmatprep.subr.mxu0 0.0
    %6486 = vmatpush1.msra.mxu0 0.0
    %6487 = vmatprep.subr.mxu0 0.0
    %6488 = vmatpush1.msra.mxu0 0.0
    %6489 = vmatprep.subr.mxu0 0.0
    %6490 = vmatpush1.msra.mxu0 0.0
    %6491 = vmatprep.subr.mxu0 0.0
    %v6492 = vand.u32 %v6175, 4294901760
    %6493 = vmatpush1.msra.mxu0 %v6492
    %6494 = vmatprep.subr.mxu0 0.0
    %v6495 = vand.u32 %v5544, 4294901760
    %6496 = vmatpush1.msra.mxu0 %v6495
    %6497 = vmatprep.subr.mxu0 0.0
    %v6498 = vand.u32 %v5538, 4294901760
    %6499 = vmatpush1.msra.mxu0 %v6498
    %6500 = vmatprep.subr.mxu0 0.0
    %6501 = vmatpush2.msra.mxu0 0.0
    %6502 = vmatprep.subr.mxu0 0.0
    %6503 = vmatpush2.msra.mxu0 0.0
    %6504 = vmatprep.subr.mxu0 0.0
    %6505 = vmatpush2.msra.mxu0 0.0
    %6506 = vmatprep.subr.mxu0 0.0
    %6507 = vmatpush2.msra.mxu0 0.0
    %6508 = vmatprep.subr.mxu0 0.0
    %6509 = vmatpush2.msra.mxu0 0.0
    %6510 = vmatprep.subr.mxu0 0.0
    %6511 = vmatpush2.msra.mxu0 0.0
    %6512 = vmatprep.subr.mxu0 0.0
    %6513 = vmatpush2.msra.mxu0 0.0
    %6514 = vmatprep.subr.mxu0 0.0
    %6515 = vmatpush2.msra.mxu0 0.0
    %6516 = vmatprep.subr.mxu0 0.0
    %6517 = vmatpush2.msra.mxu0 0.0
    %6518 = vmatprep.subr.mxu0 0.0
    %6519 = vmatpush2.msra.mxu0 0.0
    %6520 = vmatprep.subr.mxu0 0.0
    %6521 = vmatpush2.msra.mxu0 0.0
    %6522 = vmatprep.subr.mxu0 0.0
    %6523 = vmatpush2.msra.mxu0 0.0
    %6524 = vmatprep.subr.mxu0 0.0
    %6525 = vmatpush2.msra.mxu0 0.0
    %6526 = vmatprep.subr.mxu0 0.0
    %6527 = vmatpush2.msra.mxu0 0.0
    %6528 = vmatprep.subr.mxu0 0.0
    %6529 = vmatpush2.msra.mxu0 0.0
    %6530 = vmatprep.subr.mxu0 0.0
    %6531 = vmatpush2.msra.mxu0 0.0
    %6532 = vmatprep.mubr.f32.mxu0 0.0
    %v6533 = vand.u32 %v6166, 4294901760
    %v6534 = vsub.f32 %v6166, %v6533
    %v6535 = vand.u32 %v6534, 4294901760
    %6536 = vmatmul.mubr.f32.gmra.mxu0 %v6535
    %v6537 = vpop.f32.mrf.mxu0
    %v6538 = vadd.f32 %v6448, %v6537
    %v6539 = vpop.f32.mrf.mxu0
    %6540 = vmatprep.mubr.f32.mxu0 0.0
    %v6541 = vand.u32 %v6169, 4294901760
    %v6542 = vsub.f32 %v6169, %v6541
    %v6543 = vand.u32 %v6542, 4294901760
    %6544 = vmatmul.mubr.f32.gmra.mxu0 %v6543
    %v6545 = vpop.f32.mrf.mxu0
    %v6546 = vadd.f32 %v6455, %v6545
    %v6547 = vpop.f32.mrf.mxu0
    %6548 = vmatprep.mubr.f32.mxu0 0.0
    %v6549 = vand.u32 %v6172, 4294901760
    %v6550 = vsub.f32 %v6172, %v6549
    %v6551 = vand.u32 %v6550, 4294901760
    %6552 = vmatmul.mubr.f32.gmra.mxu0 %v6551
    %v6553 = vpop.f32.mrf.mxu0
    %v6554 = vadd.f32 %v6462, %v6553
    %v6555 = vpop.f32.mrf.mxu0
    %6556 = vdwg.mxu0
    %6557 = vmatprep.subr.mxu0 0.0
    %6558 = vmatpush1.msra.mxu0 0.0
    %6559 = vmatprep.subr.mxu0 0.0
    %6560 = vmatpush1.msra.mxu0 0.0
    %6561 = vmatprep.subr.mxu0 0.0
    %6562 = vmatpush1.msra.mxu0 0.0
    %6563 = vmatprep.subr.mxu0 0.0
    %6564 = vmatpush1.msra.mxu0 0.0
    %6565 = vmatprep.subr.mxu0 0.0
    %6566 = vmatpush1.msra.mxu0 0.0
    %6567 = vmatprep.subr.mxu0 0.0
    %6568 = vmatpush1.msra.mxu0 0.0
    %6569 = vmatprep.subr.mxu0 0.0
    %6570 = vmatpush1.msra.mxu0 0.0
    %6571 = vmatprep.subr.mxu0 0.0
    %6572 = vmatpush1.msra.mxu0 0.0
    %6573 = vmatprep.subr.mxu0 0.0
    %6574 = vmatpush1.msra.mxu0 0.0
    %6575 = vmatprep.subr.mxu0 0.0
    %6576 = vmatpush1.msra.mxu0 0.0
    %6577 = vmatprep.subr.mxu0 0.0
    %6578 = vmatpush1.msra.mxu0 0.0
    %6579 = vmatprep.subr.mxu0 0.0
    %6580 = vmatpush1.msra.mxu0 0.0
    %6581 = vmatprep.subr.mxu0 0.0
    %6582 = vmatpush1.msra.mxu0 0.0
    %6583 = vmatprep.subr.mxu0 0.0
    %v6584 = vand.u32 %v6175, 4294901760
    %v6585 = vsub.f32 %v6175, %v6584
    %v6586 = vand.u32 %v6585, 4294901760
    %6587 = vmatpush1.msra.mxu0 %v6586
    %6588 = vmatprep.subr.mxu0 0.0
    %v6589 = vand.u32 %v5544, 4294901760
    %v6590 = vsub.f32 %v5544, %v6589
    %v6591 = vand.u32 %v6590, 4294901760
    %6592 = vmatpush1.msra.mxu0 %v6591
    %6593 = vmatprep.subr.mxu0 0.0
    %v6594 = vand.u32 %v5538, 4294901760
    %v6595 = vsub.f32 %v5538, %v6594
    %v6596 = vand.u32 %v6595, 4294901760
    %6597 = vmatpush1.msra.mxu0 %v6596
    %6598 = vmatprep.subr.mxu0 0.0
    %6599 = vmatpush2.msra.mxu0 0.0
    %6600 = vmatprep.subr.mxu0 0.0
    %6601 = vmatpush2.msra.mxu0 0.0
    %6602 = vmatprep.subr.mxu0 0.0
    %6603 = vmatpush2.msra.mxu0 0.0
    %6604 = vmatprep.subr.mxu0 0.0
    %6605 = vmatpush2.msra.mxu0 0.0
    %6606 = vmatprep.subr.mxu0 0.0
    %6607 = vmatpush2.msra.mxu0 0.0
    %6608 = vmatprep.subr.mxu0 0.0
    %6609 = vmatpush2.msra.mxu0 0.0
    %6610 = vmatprep.subr.mxu0 0.0
    %6611 = vmatpush2.msra.mxu0 0.0
    %6612 = vmatprep.subr.mxu0 0.0
    %6613 = vmatpush2.msra.mxu0 0.0
    %6614 = vmatprep.subr.mxu0 0.0
    %6615 = vmatpush2.msra.mxu0 0.0
    %6616 = vmatprep.subr.mxu0 0.0
    %6617 = vmatpush2.msra.mxu0 0.0
    %6618 = vmatprep.subr.mxu0 0.0
    %6619 = vmatpush2.msra.mxu0 0.0
    %6620 = vmatprep.subr.mxu0 0.0
    %6621 = vmatpush2.msra.mxu0 0.0
    %6622 = vmatprep.subr.mxu0 0.0
    %6623 = vmatpush2.msra.mxu0 0.0
    %6624 = vmatprep.subr.mxu0 0.0
    %6625 = vmatpush2.msra.mxu0 0.0
    %6626 = vmatprep.subr.mxu0 0.0
    %6627 = vmatpush2.msra.mxu0 0.0
    %6628 = vmatprep.subr.mxu0 0.0
    %6629 = vmatpush2.msra.mxu0 0.0
    %6630 = vmatprep.mubr.f32.mxu0 0.0
    %v6631 = vand.u32 %v6166, 4294901760
    %6632 = vmatmul.mubr.f32.gmra.mxu0 %v6631
    %v6633 = vpop.f32.mrf.mxu0
    %v6634 = vadd.f32 %v6538, %v6633
    %v6635 = vpop.f32.mrf.mxu0
    %6636 = vmatprep.mubr.f32.mxu0 0.0
    %v6637 = vand.u32 %v6169, 4294901760
    %6638 = vmatmul.mubr.f32.gmra.mxu0 %v6637
    %v6639 = vpop.f32.mrf.mxu0
    %v6640 = vadd.f32 %v6546, %v6639
    %v6641 = vpop.f32.mrf.mxu0
    %6642 = vmatprep.mubr.f32.mxu0 0.0
    %v6643 = vand.u32 %v6172, 4294901760
    %6644 = vmatmul.mubr.f32.gmra.mxu0 %v6643
    %v6645 = vpop.f32.mrf.mxu0
    %v6646 = vadd.f32 %v6554, %v6645
    %v6647 = vpop.f32.mrf.mxu0
    %6648 = vdwg.mxu0
    %6649 = vmatprep.subr.mxu0 0.0
    %6650 = vmatpush1.msra.mxu0 0.0
    %6651 = vmatprep.subr.mxu0 0.0
    %6652 = vmatpush1.msra.mxu0 0.0
    %6653 = vmatprep.subr.mxu0 0.0
    %6654 = vmatpush1.msra.mxu0 0.0
    %6655 = vmatprep.subr.mxu0 0.0
    %6656 = vmatpush1.msra.mxu0 0.0
    %6657 = vmatprep.subr.mxu0 0.0
    %6658 = vmatpush1.msra.mxu0 0.0
    %6659 = vmatprep.subr.mxu0 0.0
    %6660 = vmatpush1.msra.mxu0 0.0
    %6661 = vmatprep.subr.mxu0 0.0
    %6662 = vmatpush1.msra.mxu0 0.0
    %6663 = vmatprep.subr.mxu0 0.0
    %6664 = vmatpush1.msra.mxu0 0.0
    %6665 = vmatprep.subr.mxu0 0.0
    %6666 = vmatpush1.msra.mxu0 0.0
    %6667 = vmatprep.subr.mxu0 0.0
    %6668 = vmatpush1.msra.mxu0 0.0
    %6669 = vmatprep.subr.mxu0 0.0
    %6670 = vmatpush1.msra.mxu0 0.0
    %6671 = vmatprep.subr.mxu0 0.0
    %6672 = vmatpush1.msra.mxu0 0.0
    %6673 = vmatprep.subr.mxu0 0.0
    %6674 = vmatpush1.msra.mxu0 0.0
    %6675 = vmatprep.subr.mxu0 0.0
    %v6676 = vand.u32 %v6175, 4294901760
    %6677 = vmatpush1.msra.mxu0 %v6676
    %6678 = vmatprep.subr.mxu0 0.0
    %v6679 = vand.u32 %v5544, 4294901760
    %6680 = vmatpush1.msra.mxu0 %v6679
    %6681 = vmatprep.subr.mxu0 0.0
    %v6682 = vand.u32 %v5538, 4294901760
    %6683 = vmatpush1.msra.mxu0 %v6682
    %6684 = vmatprep.subr.mxu0 0.0
    %6685 = vmatpush2.msra.mxu0 0.0
    %6686 = vmatprep.subr.mxu0 0.0
    %6687 = vmatpush2.msra.mxu0 0.0
    %6688 = vmatprep.subr.mxu0 0.0
    %6689 = vmatpush2.msra.mxu0 0.0
    %6690 = vmatprep.subr.mxu0 0.0
    %6691 = vmatpush2.msra.mxu0 0.0
    %6692 = vmatprep.subr.mxu0 0.0
    %6693 = vmatpush2.msra.mxu0 0.0
    %6694 = vmatprep.subr.mxu0 0.0
    %6695 = vmatpush2.msra.mxu0 0.0
    %6696 = vmatprep.subr.mxu0 0.0
    %6697 = vmatpush2.msra.mxu0 0.0
    %6698 = vmatprep.subr.mxu0 0.0
    %6699 = vmatpush2.msra.mxu0 0.0
    %6700 = vmatprep.subr.mxu0 0.0
    %6701 = vmatpush2.msra.mxu0 0.0
    %6702 = vmatprep.subr.mxu0 0.0
    %6703 = vmatpush2.msra.mxu0 0.0
    %6704 = vmatprep.subr.mxu0 0.0
    %6705 = vmatpush2.msra.mxu0 0.0
    %6706 = vmatprep.subr.mxu0 0.0
    %6707 = vmatpush2.msra.mxu0 0.0
    %6708 = vmatprep.subr.mxu0 0.0
    %6709 = vmatpush2.msra.mxu0 0.0
    %6710 = vmatprep.subr.mxu0 0.0
    %6711 = vmatpush2.msra.mxu0 0.0
    %6712 = vmatprep.subr.mxu0 0.0
    %6713 = vmatpush2.msra.mxu0 0.0
    %6714 = vmatprep.subr.mxu0 0.0
    %6715 = vmatpush2.msra.mxu0 0.0
    %6716 = vmatprep.mubr.f32.mxu0 0.0
    %v6717 = vand.u32 %v6166, 4294901760
    %6718 = vmatmul.mubr.f32.gmra.mxu0 %v6717
    %v6719 = vpop.f32.mrf.mxu0
    %v6720 = vadd.f32 %v6634, %v6719
    %v6721 = vpop.f32.mrf.mxu0
    %6722 = vmatprep.mubr.f32.mxu0 0.0
    %v6723 = vand.u32 %v6169, 4294901760
    %6724 = vmatmul.mubr.f32.gmra.mxu0 %v6723
    %v6725 = vpop.f32.mrf.mxu0
    %v6726 = vadd.f32 %v6640, %v6725
    %v6727 = vpop.f32.mrf.mxu0
    %6728 = vmatprep.mubr.f32.mxu0 0.0
    %v6729 = vand.u32 %v6172, 4294901760
    %6730 = vmatmul.mubr.f32.gmra.mxu0 %v6729
    %v6731 = vpop.f32.mrf.mxu0
    %v6732 = vadd.f32 %v6646, %v6731
    %v6733 = vpop.f32.mrf.mxu0
    %6734 = vdwg.mxu0
    %vm6735 = vcmp.ge.f32.partialorder %v6720, 0.0
    %vm6736 = vcmp.ge.f32.partialorder %v6726, 0.0
    %vm6737 = vcmp.ge.f32.partialorder %v6732, 0.0
    %v6738 = vmul.f32 %v6720, 0.01
    %v6739 = vmul.f32 %v6726, 0.01
    %v6740 = vmul.f32 %v6732, 0.01
    %v6741 = vsel %vm6735, %v6720, %v6738
    %v6742 = vsel %vm6736, %v6726, %v6739
    %v6743 = vsel %vm6737, %v6732, %v6740
    %v6744 = vmul.f32 %v6741, %v3732
    %v6745 = vmul.f32 %v6742, %v3732
    %v6746 = vmul.f32 %v6743, %v3732
    %v6747 = vsel %vm154, %v6744, 0.0
    %6748 = vadd.xlane.f32.xlu0 %v6747
    %v6749 = vpop.xlane.xlu0 %6748
    %v6750 = vsel %vm154, %v6745, 0.0
    %6751 = vadd.xlane.f32.xlu0 %v6750
    %v6752 = vpop.xlane.xlu0 %6751
    %v6753 = vsel %vm3743, %v6746, 0.0
    %6754 = vadd.xlane.f32.xlu0 %v6753
    %v6755 = vpop.xlane.xlu0 %6754
    %v6756 = vadd.f32 %v6749, %v3751
    %v6757 = vadd.f32 %v6752, %v3751
    %v6758 = vadd.f32 %v6755, %v3751
    %v6759 = vsub.f32 0.0, %v6756
    %v6760 = vsub.f32 0.0, %v6757
    %v6761 = vsub.f32 0.0, %v6758
    %v6762 = vmul.f32 %v6759, 1.442695
    %v6763 = vpow.pop %v6762
    %v6764 = vmul.f32 %v6760, 1.442695
    %v6765 = vpow.pop %v6764
    %v6766 = vmul.f32 %v6761, 1.442695
    %v6767 = vpow.pop %v6766
    %v6768 = vadd.f32 %v6763, 1.0
    %v6769 = vadd.f32 %v6765, 1.0
    %v6770 = vadd.f32 %v6767, 1.0
    %v6771 = vrcp.pop %v6768
    %v6772 = vmul.f32 1.0, %v6771
    %v6773 = vrcp.pop %v6769
    %v6774 = vmul.f32 1.0, %v6773
    %v6775 = vrcp.pop %v6770
    %v6776 = vmul.f32 1.0, %v6775
    %6780 = vrot.lane.b32.xlu0 %v6772, 1
    %v6781 = vpop.permute.xlu0 %6780
    %6782 = vrot.lane.b32.xlu0 %v6774, 1
    %v6783 = vpop.permute.xlu0 %6782
    %6784 = vrot.lane.b32.xlu0 %v6776, 1
    %v6785 = vpop.permute.xlu0 %6784
    %vm6789 = vcmask 15368
    %6790 = vst.msk [vmem:[%s13] sm:$0xff] %vm6789, %v6781
    %6791 = vst.msk [vmem:[%s13 + $0x8] sm:$0xff] %vm6789, %v6783
    %vm6792 = vcmask 8200
    %6793 = vst.msk [vmem:[%s13 + $0x10] sm:$0x1] %vm6792, %v6785
    // Predicated region
    $region78: #{tpu_custom_call.1} parent=1 // pred_check
      _
    $region79: #{tpu_custom_call.1} parent=1 // pred_check_branch
      %6795 = sbr.rel (0) target = $region81
    $region80: #{tpu_custom_call.1} parent=1 // pred_region
      _
    $region81: #{tpu_custom_call.1} parent=1 // pred_fallthru
      _
    // Predicated region
    $region82: #{tpu_custom_call.1} parent=1 // pred_check
      _
    $region83: #{tpu_custom_call.1} parent=1 // pred_check_branch
      %6797 = sbr.rel (0) target = $region85
    $region84: #{tpu_custom_call.1} parent=1 // pred_region
      _
    $region85: #{tpu_custom_call.1} parent=1 // pred_fallthru
      _
    %6798 = vsyncpa [#allocation4], 1
    %6799 = vsyncpa [#allocation6], 1
    %6800 = vsyncpa [#allocation9], 1
    %6801 = vsyncpa [#allocation12], 1

</llo_original>
